<compile_context>
chip_gen: v7x
topology: tpu7x:2x2x1
jax: 0.10.0
libtpu: 0.0.40
codegen_flags: <defaults>
</compile_context>

<pallas_src>
import functools

import jax
import jax.numpy as jnp
from jax.experimental import pallas as pl
from jax.experimental.pallas import tpu as pltpu

# ----------------------------- scaled-down config ---------------------------
# (original wav2vec2-large-960h values in comments)
CONV_DIM = 64                    # 512
CONV_KERNELS = (10, 3, 3, 3, 3, 2, 2)
CONV_STRIDES = (5, 2, 2, 2, 2, 2, 2)
HIDDEN = 128                     # 1024  (== SSLModel.out_dim)
NUM_HEADS = 4                    # 16
HEAD_DIM = HIDDEN // NUM_HEADS
FFN = 256                        # 4096
NUM_LAYERS = 2                   # 24
POS_CONV_KERNEL = 16             # 128
POS_CONV_GROUPS = 4              # 16
EPS = 1e-5

VMEM_LIMIT = 32 * 1024 * 1024    # explicit VMEM budget (safe on v5e/v6e/v7x)


def conv_out_lens(L):
    t, out = L, []
    for k, s in zip(CONV_KERNELS, CONV_STRIDES):
        t = (t - k) // s + 1
        out.append(t)
    return tuple(out)


def expected_out_len(L):
    return conv_out_lens(L)[-1]


# --------------------------- in-kernel helpers -------------------------------

def _gelu(x):
    # tanh-approximate GELU (EUP tanh ~free under MXU-bound bundles); deviates from
    # PyTorch's exact erf-GELU by < ~1e-3.
    c = jnp.float32(0.7978845608028654)   # sqrt(2/pi)
    return 0.5 * x * (1.0 + jnp.tanh(c * (x + 0.044715 * x * x * x)))


def _layernorm(x, gamma, beta):
    mu = jnp.mean(x, axis=-1, keepdims=True)
    var = jnp.mean(jnp.square(x - mu), axis=-1, keepdims=True)
    return (x - mu) * jax.lax.rsqrt(var + EPS) * gamma + beta


# ------------- fused feature extractor + feature projection + pos-conv -------
# One grid step per batch element; all intermediates live in VMEM scratch.

def _feature_encoder_kernel(x5_ref, w0_ref, gng_ref, gnb_ref, wk3_ref, wk2_ref,
                            fplg_ref, fplb_ref, fpw_ref, fpb_ref,
                            pcw_ref, pcb_ref, elng_ref, elnb_ref,
                            o_ref, buf_a, buf_b, pbuf, *, t_sizes):
    c = CONV_DIM

    # ---- conv layer 0 (kernel 10, stride 5) on the (rows, taps) reshaped waveform ----
    t0 = t_sizes[0]
    x5 = x5_ref[0].astype(jnp.float32)                    # (rows, 8): row t = x[5t:5t+5]
    y = (jnp.dot(x5[0:t0, :], w0_ref[0], preferred_element_type=jnp.float32)
         + jnp.dot(x5[1:t0 + 1, :], w0_ref[1], preferred_element_type=jnp.float32))
    # GroupNorm(num_groups == num_channels): per-channel stats over time, affine, GELU.
    mu = jnp.mean(y, axis=0, keepdims=True)
    var = jnp.mean(jnp.square(y - mu), axis=0, keepdims=True)
    y = (y - mu) * jax.lax.rsqrt(var + EPS) * gng_ref[...] + gnb_ref[...]
    y = _gelu(y)
    buf_a[0:t0, :] = y

    # ---- conv layers 1..6: K accumulated strided-tap matmuls, VMEM ping-pong ----
    bufs = (buf_a, buf_b)
    for li in range(1, 7):
        k, s = CONV_KERNELS[li], CONV_STRIDES[li]
        t_out = t_sizes[li]
        src = bufs[(li - 1) % 2]
        w_ref, w_idx = (wk3_ref, li - 1) if k == 3 else (wk2_ref, li - 5)
        acc = jnp.zeros((t_out, c), jnp.float32)
        for kk in range(k):
            tap = src[pl.ds(kk, t_out, stride=s), :].astype(jnp.bfloat16)
            acc = acc + jnp.dot(tap, w_ref[w_idx, kk],
                                preferred_element_type=jnp.float32)
        y = _gelu(acc)
        if li < 6:
            bufs[li % 2][0:t_out, :] = y
    # y: (T, CONV_DIM) final conv-extractor features (kept as a value, no HBM bounce).

    # ---- feature projection: LayerNorm(CONV_DIM) + Linear(CONV_DIM -> HIDDEN) ----
    h = _layernorm(y, fplg_ref[...], fplb_ref[...])
    h = (jnp.dot(h.astype(jnp.bfloat16), fpw_ref[...],
                 preferred_element_type=jnp.float32) + fpb_ref[...])   # (T, H)

    # ---- grouped positional conv + SamePad + GELU + residual + encoder LayerNorm ----
    t = t_sizes[-1]
    pad = POS_CONV_KERNEL // 2
    t_conv = t + 2 * pad - POS_CONV_KERNEL + 1            # == t + 1 for even kernel
    cg = HIDDEN // POS_CONV_GROUPS
    pbuf[...] = jnp.zeros(pbuf.shape, jnp.float32)        # zero-padded time buffer
    pbuf[pad:pad + t, :] = h
    groups = []
    for g in range(POS_CONV_GROUPS):
        c0 = g * cg
        taps = jnp.concatenate(
            [pbuf[kk:kk + t_conv, c0:c0 + cg] for kk in range(POS_CONV_KERNEL)],
            axis=1).astype(jnp.bfloat16)                  # (t_conv, K*cg), tap-major
        groups.append(jnp.dot(taps, pcw_ref[g], preferred_element_type=jnp.float32))
    pos = _gelu(jnp.concatenate(groups, axis=1) + pcb_ref[...])
    out = h + pos[0:t, :]                                 # Wav2Vec2SamePadLayer: drop last
    o_ref[0] = _layernorm(out, elng_ref[...], elnb_ref[...]).astype(o_ref.dtype)


def _feature_encoder(params, x5, t_sizes):
    B, rows, kw = x5.shape
    T = t_sizes[-1]
    kernel = functools.partial(_feature_encoder_kernel, t_sizes=t_sizes)

    def bcast(arr):
        nd = arr.ndim
        return pl.BlockSpec(arr.shape, lambda b, _n=nd: (0,) * _n)

    weights = (params['conv0_w'], params['gn_g'], params['gn_b'],
               params['conv_k3_w'], params['conv_k2_w'],
               params['fp_ln_g'], params['fp_ln_b'], params['fp_w'], params['fp_b'],
               params['pc_w'], params['pc_b'], params['enc_ln_g'], params['enc_ln_b'])
    return pl.pallas_call(
        kernel,
        out_shape=jax.ShapeDtypeStruct((B, T, HIDDEN), jnp.float32),
        grid=(B,),
        in_specs=[pl.BlockSpec((1, rows, kw), lambda b: (b, 0, 0))]
                 + [bcast(w) for w in weights],
        out_specs=pl.BlockSpec((1, T, HIDDEN), lambda b: (b, 0, 0)),
        scratch_shapes=[pltpu.VMEM((t_sizes[0], CONV_DIM), jnp.float32),
                        pltpu.VMEM((t_sizes[1], CONV_DIM), jnp.float32),
                        pltpu.VMEM((T + POS_CONV_KERNEL, HIDDEN), jnp.float32)],
        compiler_params=pltpu.CompilerParams(
            dimension_semantics=("parallel",),
            vmem_limit_bytes=VMEM_LIMIT),
    )(x5, *weights)


# ------------------------ transformer layer megakernel -----------------------
# Whole batch in one invocation (rows = B*T, lane-dense H=128); fused QKV and
# output projection; per-head work is only the tiny (T,T) score/softmax/PV step.

def _transformer_layer_kernel(x_ref, qkvw_ref, qkvb_ref, ow_ref, ob_ref,
                              ln1g_ref, ln1b_ref, f1w_ref, f1b_ref,
                              f2w_ref, f2b_ref, ln2g_ref, ln2b_ref, o_ref,
                              *, batch, seq, num_heads):
    x = x_ref[...].astype(jnp.float32)                    # (B*T, H)
    H = x.shape[-1]
    dh = H // num_heads
    scale = jnp.float32(dh ** -0.5)

    qkv = (jnp.dot(x.astype(jnp.bfloat16), qkvw_ref[...],
                   preferred_element_type=jnp.float32) + qkvb_ref[...])   # (B*T, 3H)
    q = qkv[:, 0:H] * scale
    k = qkv[:, H:2 * H]
    v = qkv[:, 2 * H:3 * H]

    ctx_rows = []
    for b in range(batch):                                # static unroll (no cross-batch attn)
        r0 = b * seq
        heads = []
        for hd in range(num_heads):
            c0 = hd * dh
            qh = q[r0:r0 + seq, c0:c0 + dh]
            kh = k[r0:r0 + seq, c0:c0 + dh]
            vh = v[r0:r0 + seq, c0:c0 + dh]
            s = jax.lax.dot_general(qh, kh, (((1,), (1,)), ((), ())),
                                    preferred_element_type=jnp.float32)   # (T, T)
            s = s - jnp.max(s, axis=-1, keepdims=True)
            p = jnp.exp(s)
            p = p * pl.reciprocal(jnp.sum(p, axis=-1, keepdims=True), approx=True)
            heads.append(jnp.dot(p, vh, preferred_element_type=jnp.float32))
        ctx_rows.append(jnp.concatenate(heads, axis=1))   # (T, H)
    ctx = jnp.concatenate(ctx_rows, axis=0)               # (B*T, H)

    attn = (jnp.dot(ctx.astype(jnp.bfloat16), ow_ref[...],
                    preferred_element_type=jnp.float32) + ob_ref[...])
    h1 = _layernorm(x + attn, ln1g_ref[...], ln1b_ref[...])
    ff = _gelu(jnp.dot(h1.astype(jnp.bfloat16), f1w_ref[...],
                       preferred_element_type=jnp.float32) + f1b_ref[...])
    ff = (jnp.dot(ff.astype(jnp.bfloat16), f2w_ref[...],
                  preferred_element_type=jnp.float32) + f2b_ref[...])
    h2 = _layernorm(h1 + ff, ln2g_ref[...], ln2b_ref[...])
    o_ref[...] = h2.astype(o_ref.dtype)


def _transformer_layer(lp, h2d, batch, seq):
    kernel = functools.partial(_transformer_layer_kernel, batch=batch, seq=seq,
                               num_heads=NUM_HEADS)
    return pl.pallas_call(
        kernel,
        out_shape=jax.ShapeDtypeStruct(h2d.shape, jnp.float32),
        compiler_params=pltpu.CompilerParams(vmem_limit_bytes=VMEM_LIMIT),
    )(h2d, lp['qkv_w'], lp['qkv_b'], lp['o_w'], lp['o_b'],
      lp['ln1_g'], lp['ln1_b'], lp['ff1_w'], lp['ff1_b'],
      lp['ff2_w'], lp['ff2_b'], lp['ln2_g'], lp['ln2_b'])


# ----------------------------- forward pass -----------------------------------

def ssl_model_forward(params, x, is_train=True):
    """x: (B, L) raw waveform  ->  last_hidden_state (B, T, HIDDEN)."""
    del is_train   # TODO(synk): dropout / SpecAugment / LayerDrop are stochastic train-time ops; identity here.
    B, L = x.shape
    t_sizes = conv_out_lens(L)
    T = t_sizes[-1]
    s0 = CONV_STRIDES[0]
    rows = L // s0
    assert rows >= t_sizes[0] + 1, "waveform too short for conv layer 0"
    # stride-width reshape of the raw waveform (no inflation) + lane-pad taps to 8
    x5 = x[:, :rows * s0].reshape(B, rows, s0).astype(jnp.float32)
    x5 = jnp.pad(x5, ((0, 0), (0, 0), (0, 8 - s0)))

    h = _feature_encoder(params, x5, t_sizes)              # (B, T, HIDDEN)

    h2 = h.reshape(B * T, HIDDEN)                          # batch-merged, lane-dense rows
    for lp in params['layers']:
        h2 = _transformer_layer(lp, h2, B, T)
    return h2.reshape(B, T, HIDDEN)


# ----------------------------- deterministic init ----------------------------
# All weight re-layout (tap-major conv weights, per-group pos-conv weights, fused QKV,
# (1, N) biases) is done here, once, outside the jitted forward.  Matmul weights are
# stored bf16 intentionally (MXU-native, halves weight DMA); LN/bias params stay f32.

def init_params(key):
    keys = iter(jax.random.split(key, 64))

    def nrm(shape, scale=0.05):
        return jax.random.normal(next(keys), shape, jnp.float32) * scale

    p = {}

    # conv feature extractor (generated in PyTorch (C_out, C_in, K) layout, re-laid)
    k0, s0 = CONV_KERNELS[0], CONV_STRIDES[0]
    assert k0 == 2 * s0
    w0 = nrm((CONV_DIM, 1, k0), scale=0.1)
    w0t = jnp.transpose(w0[:, 0, :], (1, 0))               # (K0, C), tap-major
    w0p = jnp.zeros((2, 8, CONV_DIM), jnp.float32)         # two stride-width halves, lane-padded
    w0p = w0p.at[0, :s0, :].set(w0t[:s0])
    w0p = w0p.at[1, :s0, :].set(w0t[s0:])
    p['conv0_w'] = w0p                                     # f32 (waveform front end)
    p['gn_g'] = jnp.ones((1, CONV_DIM), jnp.float32)
    p['gn_b'] = jnp.zeros((1, CONV_DIM), jnp.float32)
    k3, k2 = [], []
    for kern in CONV_KERNELS[1:]:
        w = nrm((CONV_DIM, CONV_DIM, kern), scale=0.1)
        (k3 if kern == 3 else k2).append(jnp.transpose(w, (2, 1, 0)))   # (K, Cin, Cout)
    p['conv_k3_w'] = jnp.stack(k3, 0).astype(jnp.bfloat16)              # (4, 3, C, C)
    p['conv_k2_w'] = jnp.stack(k2, 0).astype(jnp.bfloat16)              # (2, 2, C, C)

    # feature projection
    p['fp_ln_g'] = jnp.ones((1, CONV_DIM), jnp.float32)
    p['fp_ln_b'] = jnp.zeros((1, CONV_DIM), jnp.float32)
    p['fp_w'] = nrm((CONV_DIM, HIDDEN)).astype(jnp.bfloat16)
    p['fp_b'] = jnp.zeros((1, HIDDEN), jnp.float32)

    # grouped positional conv: (H, H//G, K) torch layout -> per-group (K*Cg, Cg)
    cg = HIDDEN // POS_CONV_GROUPS
    pw = nrm((HIDDEN, cg, POS_CONV_KERNEL))
    groups = []
    for g in range(POS_CONV_GROUPS):
        wg = pw[g * cg:(g + 1) * cg]                       # (Cg_out, Cg_in, K)
        groups.append(jnp.transpose(wg, (2, 1, 0)).reshape(POS_CONV_KERNEL * cg, cg))
    p['pc_w'] = jnp.stack(groups, 0).astype(jnp.bfloat16)  # (G, K*Cg, Cg)
    p['pc_b'] = jnp.zeros((1, HIDDEN), jnp.float32)
    p['enc_ln_g'] = jnp.ones((1, HIDDEN), jnp.float32)
    p['enc_ln_b'] = jnp.zeros((1, HIDDEN), jnp.float32)

    # transformer layers (fused QKV weights)
    layers = []
    for _ in range(NUM_LAYERS):
        qw, kw, vw = nrm((HIDDEN, HIDDEN)), nrm((HIDDEN, HIDDEN)), nrm((HIDDEN, HIDDEN))
        layers.append({
            'qkv_w': jnp.concatenate([qw, kw, vw], axis=1).astype(jnp.bfloat16),
            'qkv_b': jnp.zeros((1, 3 * HIDDEN), jnp.float32),
            'o_w': nrm((HIDDEN, HIDDEN)).astype(jnp.bfloat16),
            'o_b': jnp.zeros((1, HIDDEN), jnp.float32),
            'ln1_g': jnp.ones((1, HIDDEN), jnp.float32),
            'ln1_b': jnp.zeros((1, HIDDEN), jnp.float32),
            'ff1_w': nrm((HIDDEN, FFN)).astype(jnp.bfloat16),
            'ff1_b': jnp.zeros((1, FFN), jnp.float32),
            'ff2_w': nrm((FFN, HIDDEN)).astype(jnp.bfloat16),
            'ff2_b': jnp.zeros((1, HIDDEN), jnp.float32),
            'ln2_g': jnp.ones((1, HIDDEN), jnp.float32),
            'ln2_b': jnp.zeros((1, HIDDEN), jnp.float32),
        })
    p['layers'] = layers
    return p


# ----------------------------- main ------------------------------------------

if __name__ == "__main__":
    key = jax.random.PRNGKey(0)
    pkey, xkey = jax.random.split(key)
    params = init_params(pkey)

    B, L = 2, 2000                               # small waveform: (batch, length)
    x = jax.random.normal(xkey, (B, L), jnp.float32)

    fwd = jax.jit(functools.partial(ssl_model_forward, is_train=True))
    out = jax.block_until_ready(fwd(params, x))

    T = expected_out_len(L)
    assert out.shape == (B, T, HIDDEN), out.shape
    assert bool(jnp.all(jnp.isfinite(out)))
    print("KERNEL_OK")
</pallas_src>

<mosaic_0001>
module attributes {stable_mosaic.version = 11 : i64} {
  func.func @_feature_encoder_kernel(%arg0: i32, %arg1: memref<1x400x8xf32, #tpu.memory_space<vmem>>, %arg2: memref<2x8x64xf32, #tpu.memory_space<vmem>>, %arg3: memref<1x64xf32, #tpu.memory_space<vmem>>, %arg4: memref<1x64xf32, #tpu.memory_space<vmem>>, %arg5: memref<4x3x64x64xbf16, #tpu.memory_space<vmem>>, %arg6: memref<2x2x64x64xbf16, #tpu.memory_space<vmem>>, %arg7: memref<1x64xf32, #tpu.memory_space<vmem>>, %arg8: memref<1x64xf32, #tpu.memory_space<vmem>>, %arg9: memref<64x128xbf16, #tpu.memory_space<vmem>>, %arg10: memref<1x128xf32, #tpu.memory_space<vmem>>, %arg11: memref<4x512x32xbf16, #tpu.memory_space<vmem>>, %arg12: memref<1x128xf32, #tpu.memory_space<vmem>>, %arg13: memref<1x128xf32, #tpu.memory_space<vmem>>, %arg14: memref<1x128xf32, #tpu.memory_space<vmem>>, %arg15: memref<1x6x128xf32, #tpu.memory_space<vmem>>, %arg16: memref<399x64xf32, #tpu.memory_space<vmem>>, %arg17: memref<199x64xf32, #tpu.memory_space<vmem>>, %arg18: memref<22x128xf32, #tpu.memory_space<vmem>>) attributes {dimension_semantics = [#tpu.dimension_semantics<parallel>], iteration_bounds = array<i64: 2>, scalar_prefetch = 0 : i64, scratch_operands = 3 : i64, tpu.core_type = #tpu.core_type<tc>, window_params = [{transform_indices = @transform_0, window_bounds = array<i64: 1, 400, 8>}, {pipeline_mode = #tpu.pipeline_mode<synchronous>, transform_indices = @transform_1, window_bounds = array<i64: 2, 8, 64>}, {pipeline_mode = #tpu.pipeline_mode<synchronous>, transform_indices = @transform_2, window_bounds = array<i64: 1, 64>}, {pipeline_mode = #tpu.pipeline_mode<synchronous>, transform_indices = @transform_3, window_bounds = array<i64: 1, 64>}, {pipeline_mode = #tpu.pipeline_mode<synchronous>, transform_indices = @transform_4, window_bounds = array<i64: 4, 3, 64, 64>}, {pipeline_mode = #tpu.pipeline_mode<synchronous>, transform_indices = @transform_5, window_bounds = array<i64: 2, 2, 64, 64>}, {pipeline_mode = #tpu.pipeline_mode<synchronous>, transform_indices = @transform_6, window_bounds = array<i64: 1, 64>}, {pipeline_mode = #tpu.pipeline_mode<synchronous>, transform_indices = @transform_7, window_bounds = array<i64: 1, 64>}, {pipeline_mode = #tpu.pipeline_mode<synchronous>, transform_indices = @transform_8, window_bounds = array<i64: 64, 128>}, {pipeline_mode = #tpu.pipeline_mode<synchronous>, transform_indices = @transform_9, window_bounds = array<i64: 1, 128>}, {pipeline_mode = #tpu.pipeline_mode<synchronous>, transform_indices = @transform_10, window_bounds = array<i64: 4, 512, 32>}, {pipeline_mode = #tpu.pipeline_mode<synchronous>, transform_indices = @transform_11, window_bounds = array<i64: 1, 128>}, {pipeline_mode = #tpu.pipeline_mode<synchronous>, transform_indices = @transform_12, window_bounds = array<i64: 1, 128>}, {pipeline_mode = #tpu.pipeline_mode<synchronous>, transform_indices = @transform_13, window_bounds = array<i64: 1, 128>}, {transform_indices = @transform_14, window_bounds = array<i64: 1, 6, 128>}]} {
    %c0 = arith.constant 0 : index
    %c0_0 = arith.constant 0 : index
    %c0_1 = arith.constant 0 : index
    %0 = vector.load %arg1[%c0, %c0_0, %c0_1] : memref<1x400x8xf32, #tpu.memory_space<vmem>>, vector<1x400x8xf32>
    %1 = vector.shape_cast %0 : vector<1x400x8xf32> to vector<400x8xf32>
    %2 = vector.extract_strided_slice %1 {offsets = [0, 0], sizes = [399, 8], strides = [1, 1]} : vector<400x8xf32> to vector<399x8xf32>
    %c0_2 = arith.constant 0 : index
    %c0_3 = arith.constant 0 : index
    %c0_4 = arith.constant 0 : index
    %3 = vector.load %arg2[%c0_2, %c0_3, %c0_4] : memref<2x8x64xf32, #tpu.memory_space<vmem>>, vector<1x8x64xf32>
    %4 = vector.shape_cast %3 : vector<1x8x64xf32> to vector<8x64xf32>
    %cst = arith.constant dense<0.000000e+00> : vector<399x64xf32>
    %5 = tpu.matmul %2, %4, %cst {dimension_numbers = #tpu.dot_dimension_numbers<[1], [0], [0], [1], [0, 0, 1, 1], [], []>} : vector<399x8xf32>, vector<8x64xf32>, vector<399x64xf32> -> vector<399x64xf32>
    %6 = vector.extract_strided_slice %1 {offsets = [1, 0], sizes = [399, 8], strides = [1, 1]} : vector<400x8xf32> to vector<399x8xf32>
    %c1 = arith.constant 1 : index
    %c0_5 = arith.constant 0 : index
    %c0_6 = arith.constant 0 : index
    %7 = vector.load %arg2[%c1, %c0_5, %c0_6] : memref<2x8x64xf32, #tpu.memory_space<vmem>>, vector<1x8x64xf32>
    %8 = vector.shape_cast %7 : vector<1x8x64xf32> to vector<8x64xf32>
    %cst_7 = arith.constant dense<0.000000e+00> : vector<399x64xf32>
    %9 = tpu.matmul %6, %8, %cst_7 {dimension_numbers = #tpu.dot_dimension_numbers<[1], [0], [0], [1], [0, 0, 1, 1], [], []>} : vector<399x8xf32>, vector<8x64xf32>, vector<399x64xf32> -> vector<399x64xf32>
    %10 = arith.addf %5, %9 : vector<399x64xf32>
    %cst_8 = arith.constant dense<0.000000e+00> : vector<64xf32>
    %11 = vector.multi_reduction <add>, %10, %cst_8 [0] : vector<399x64xf32> to vector<64xf32>
    %12 = vector.shape_cast %11 : vector<64xf32> to vector<1x64xf32>
    %cst_9 = arith.constant 3.990000e+02 : f32
    %13 = vector.broadcast %cst_9 : f32 to vector<1x64xf32>
    %14 = arith.divf %12, %13 : vector<1x64xf32>
    %15 = vector.broadcast %14 : vector<1x64xf32> to vector<399x64xf32>
    %16 = arith.subf %10, %15 : vector<399x64xf32>
    %17 = arith.mulf %16, %16 : vector<399x64xf32>
    %cst_10 = arith.constant dense<0.000000e+00> : vector<64xf32>
    %18 = vector.multi_reduction <add>, %17, %cst_10 [0] : vector<399x64xf32> to vector<64xf32>
    %19 = vector.shape_cast %18 : vector<64xf32> to vector<1x64xf32>
    %cst_11 = arith.constant 3.990000e+02 : f32
    %20 = vector.broadcast %cst_11 : f32 to vector<1x64xf32>
    %21 = arith.divf %19, %20 : vector<1x64xf32>
    %22 = vector.broadcast %14 : vector<1x64xf32> to vector<399x64xf32>
    %23 = arith.subf %10, %22 : vector<399x64xf32>
    %cst_12 = arith.constant 9.99999974E-6 : f32
    %24 = vector.broadcast %cst_12 : f32 to vector<1x64xf32>
    %25 = arith.addf %21, %24 : vector<1x64xf32>
    %26 = math.rsqrt %25 : vector<1x64xf32>
    %27 = vector.broadcast %26 : vector<1x64xf32> to vector<399x64xf32>
    %28 = arith.mulf %23, %27 : vector<399x64xf32>
    %c0_13 = arith.constant 0 : index
    %c0_14 = arith.constant 0 : index
    %29 = vector.load %arg3[%c0_13, %c0_14] : memref<1x64xf32, #tpu.memory_space<vmem>>, vector<1x64xf32>
    %30 = vector.broadcast %29 : vector<1x64xf32> to vector<399x64xf32>
    %31 = arith.mulf %28, %30 : vector<399x64xf32>
    %c0_15 = arith.constant 0 : index
    %c0_16 = arith.constant 0 : index
    %32 = vector.load %arg4[%c0_15, %c0_16] : memref<1x64xf32, #tpu.memory_space<vmem>>, vector<1x64xf32>
    %33 = vector.broadcast %32 : vector<1x64xf32> to vector<399x64xf32>
    %34 = arith.addf %31, %33 : vector<399x64xf32>
    %cst_17 = arith.constant 5.000000e-01 : f32
    %35 = vector.broadcast %cst_17 : f32 to vector<399x64xf32>
    %36 = arith.mulf %35, %34 : vector<399x64xf32>
    %cst_18 = arith.constant 4.471500e-02 : f32
    %37 = vector.broadcast %cst_18 : f32 to vector<399x64xf32>
    %38 = arith.mulf %37, %34 : vector<399x64xf32>
    %39 = arith.mulf %38, %34 : vector<399x64xf32>
    %40 = arith.mulf %39, %34 : vector<399x64xf32>
    %41 = arith.addf %34, %40 : vector<399x64xf32>
    %cst_19 = arith.constant 0.797884583 : f32
    %42 = vector.broadcast %cst_19 : f32 to vector<399x64xf32>
    %43 = arith.mulf %42, %41 : vector<399x64xf32>
    %44 = math.tanh %43 : vector<399x64xf32>
    %cst_20 = arith.constant 1.000000e+00 : f32
    %45 = vector.broadcast %cst_20 : f32 to vector<399x64xf32>
    %46 = arith.addf %45, %44 : vector<399x64xf32>
    %47 = arith.mulf %36, %46 : vector<399x64xf32>
    %c0_21 = arith.constant 0 : index
    %c0_22 = arith.constant 0 : index
    %48 = vector.load %arg16[%c0_21, %c0_22] : memref<399x64xf32, #tpu.memory_space<vmem>>, vector<399x64xf32>
    tpu.vector_store %arg16[%c0_21, %c0_22], %47 {strides = array<i32>} : memref<399x64xf32, #tpu.memory_space<vmem>>, vector<399x64xf32>,
    %cst_23 = arith.constant 0.000000e+00 : f32
    %49 = vector.broadcast %cst_23 : f32 to vector<199x64xf32>
    %c0_24 = arith.constant 0 : index
    %c0_25 = arith.constant 0 : index
    %50 = tpu.strided_load %arg16[%c0_24, %c0_25] {strides = array<i32: 2, 1>} : memref<399x64xf32, #tpu.memory_space<vmem>>, vector<199x64xf32>
    %51 = arith.truncf %50 : vector<199x64xf32> to vector<199x64xbf16>
    %c0_26 = arith.constant 0 : index
    %c0_27 = arith.constant 0 : index
    %c0_28 = arith.constant 0 : index
    %c0_29 = arith.constant 0 : index
    %52 = vector.load %arg5[%c0_26, %c0_27, %c0_28, %c0_29] : memref<4x3x64x64xbf16, #tpu.memory_space<vmem>>, vector<1x1x64x64xbf16>
    %53 = vector.shape_cast %52 : vector<1x1x64x64xbf16> to vector<64x64xbf16>
    %cst_30 = arith.constant dense<0.000000e+00> : vector<199x64xf32>
    %54 = tpu.matmul %51, %53, %cst_30 {dimension_numbers = #tpu.dot_dimension_numbers<[1], [0], [0], [1], [0, 0, 1, 1], [], []>} : vector<199x64xbf16>, vector<64x64xbf16>, vector<199x64xf32> -> vector<199x64xf32>
    %55 = arith.addf %49, %54 : vector<199x64xf32>
    %c1_31 = arith.constant 1 : index
    %c0_32 = arith.constant 0 : index
    %56 = tpu.strided_load %arg16[%c1_31, %c0_32] {strides = array<i32: 2, 1>} : memref<399x64xf32, #tpu.memory_space<vmem>>, vector<199x64xf32>
    %57 = arith.truncf %56 : vector<199x64xf32> to vector<199x64xbf16>
    %c0_33 = arith.constant 0 : index
    %c1_34 = arith.constant 1 : index
    %c0_35 = arith.constant 0 : index
    %c0_36 = arith.constant 0 : index
    %58 = vector.load %arg5[%c0_33, %c1_34, %c0_35, %c0_36] : memref<4x3x64x64xbf16, #tpu.memory_space<vmem>>, vector<1x1x64x64xbf16>
    %59 = vector.shape_cast %58 : vector<1x1x64x64xbf16> to vector<64x64xbf16>
    %cst_37 = arith.constant dense<0.000000e+00> : vector<199x64xf32>
    %60 = tpu.matmul %57, %59, %cst_37 {dimension_numbers = #tpu.dot_dimension_numbers<[1], [0], [0], [1], [0, 0, 1, 1], [], []>} : vector<199x64xbf16>, vector<64x64xbf16>, vector<199x64xf32> -> vector<199x64xf32>
    %61 = arith.addf %55, %60 : vector<199x64xf32>
    %c2 = arith.constant 2 : index
    %c0_38 = arith.constant 0 : index
    %62 = tpu.strided_load %arg16[%c2, %c0_38] {strides = array<i32: 2, 1>} : memref<399x64xf32, #tpu.memory_space<vmem>>, vector<199x64xf32>
    %63 = arith.truncf %62 : vector<199x64xf32> to vector<199x64xbf16>
    %c0_39 = arith.constant 0 : index
    %c2_40 = arith.constant 2 : index
    %c0_41 = arith.constant 0 : index
    %c0_42 = arith.constant 0 : index
    %64 = vector.load %arg5[%c0_39, %c2_40, %c0_41, %c0_42] : memref<4x3x64x64xbf16, #tpu.memory_space<vmem>>, vector<1x1x64x64xbf16>
    %65 = vector.shape_cast %64 : vector<1x1x64x64xbf16> to vector<64x64xbf16>
    %cst_43 = arith.constant dense<0.000000e+00> : vector<199x64xf32>
    %66 = tpu.matmul %63, %65, %cst_43 {dimension_numbers = #tpu.dot_dimension_numbers<[1], [0], [0], [1], [0, 0, 1, 1], [], []>} : vector<199x64xbf16>, vector<64x64xbf16>, vector<199x64xf32> -> vector<199x64xf32>
    %67 = arith.addf %61, %66 : vector<199x64xf32>
    %cst_44 = arith.constant 5.000000e-01 : f32
    %68 = vector.broadcast %cst_44 : f32 to vector<199x64xf32>
    %69 = arith.mulf %68, %67 : vector<199x64xf32>
    %cst_45 = arith.constant 4.471500e-02 : f32
    %70 = vector.broadcast %cst_45 : f32 to vector<199x64xf32>
    %71 = arith.mulf %70, %67 : vector<199x64xf32>
    %72 = arith.mulf %71, %67 : vector<199x64xf32>
    %73 = arith.mulf %72, %67 : vector<199x64xf32>
    %74 = arith.addf %67, %73 : vector<199x64xf32>
    %cst_46 = arith.constant 0.797884583 : f32
    %75 = vector.broadcast %cst_46 : f32 to vector<199x64xf32>
    %76 = arith.mulf %75, %74 : vector<199x64xf32>
    %77 = math.tanh %76 : vector<199x64xf32>
    %cst_47 = arith.constant 1.000000e+00 : f32
    %78 = vector.broadcast %cst_47 : f32 to vector<199x64xf32>
    %79 = arith.addf %78, %77 : vector<199x64xf32>
    %80 = arith.mulf %69, %79 : vector<199x64xf32>
    %c0_48 = arith.constant 0 : index
    %c0_49 = arith.constant 0 : index
    %81 = vector.load %arg17[%c0_48, %c0_49] : memref<199x64xf32, #tpu.memory_space<vmem>>, vector<199x64xf32>
    tpu.vector_store %arg17[%c0_48, %c0_49], %80 {strides = array<i32>} : memref<199x64xf32, #tpu.memory_space<vmem>>, vector<199x64xf32>,
    %cst_50 = arith.constant 0.000000e+00 : f32
    %82 = vector.broadcast %cst_50 : f32 to vector<99x64xf32>
    %c0_51 = arith.constant 0 : index
    %c0_52 = arith.constant 0 : index
    %83 = tpu.strided_load %arg17[%c0_51, %c0_52] {strides = array<i32: 2, 1>} : memref<199x64xf32, #tpu.memory_space<vmem>>, vector<99x64xf32>
    %84 = arith.truncf %83 : vector<99x64xf32> to vector<99x64xbf16>
    %c1_53 = arith.constant 1 : index
    %c0_54 = arith.constant 0 : index
    %c0_55 = arith.constant 0 : index
    %c0_56 = arith.constant 0 : index
    %85 = vector.load %arg5[%c1_53, %c0_54, %c0_55, %c0_56] : memref<4x3x64x64xbf16, #tpu.memory_space<vmem>>, vector<1x1x64x64xbf16>
    %86 = vector.shape_cast %85 : vector<1x1x64x64xbf16> to vector<64x64xbf16>
    %cst_57 = arith.constant dense<0.000000e+00> : vector<99x64xf32>
    %87 = tpu.matmul %84, %86, %cst_57 {dimension_numbers = #tpu.dot_dimension_numbers<[1], [0], [0], [1], [0, 0, 1, 1], [], []>} : vector<99x64xbf16>, vector<64x64xbf16>, vector<99x64xf32> -> vector<99x64xf32>
    %88 = arith.addf %82, %87 : vector<99x64xf32>
    %c1_58 = arith.constant 1 : index
    %c0_59 = arith.constant 0 : index
    %89 = tpu.strided_load %arg17[%c1_58, %c0_59] {strides = array<i32: 2, 1>} : memref<199x64xf32, #tpu.memory_space<vmem>>, vector<99x64xf32>
    %90 = arith.truncf %89 : vector<99x64xf32> to vector<99x64xbf16>
    %c1_60 = arith.constant 1 : index
    %c1_61 = arith.constant 1 : index
    %c0_62 = arith.constant 0 : index
    %c0_63 = arith.constant 0 : index
    %91 = vector.load %arg5[%c1_60, %c1_61, %c0_62, %c0_63] : memref<4x3x64x64xbf16, #tpu.memory_space<vmem>>, vector<1x1x64x64xbf16>
    %92 = vector.shape_cast %91 : vector<1x1x64x64xbf16> to vector<64x64xbf16>
    %cst_64 = arith.constant dense<0.000000e+00> : vector<99x64xf32>
    %93 = tpu.matmul %90, %92, %cst_64 {dimension_numbers = #tpu.dot_dimension_numbers<[1], [0], [0], [1], [0, 0, 1, 1], [], []>} : vector<99x64xbf16>, vector<64x64xbf16>, vector<99x64xf32> -> vector<99x64xf32>
    %94 = arith.addf %88, %93 : vector<99x64xf32>
    %c2_65 = arith.constant 2 : index
    %c0_66 = arith.constant 0 : index
    %95 = tpu.strided_load %arg17[%c2_65, %c0_66] {strides = array<i32: 2, 1>} : memref<199x64xf32, #tpu.memory_space<vmem>>, vector<99x64xf32>
    %96 = arith.truncf %95 : vector<99x64xf32> to vector<99x64xbf16>
    %c1_67 = arith.constant 1 : index
    %c2_68 = arith.constant 2 : index
    %c0_69 = arith.constant 0 : index
    %c0_70 = arith.constant 0 : index
    %97 = vector.load %arg5[%c1_67, %c2_68, %c0_69, %c0_70] : memref<4x3x64x64xbf16, #tpu.memory_space<vmem>>, vector<1x1x64x64xbf16>
    %98 = vector.shape_cast %97 : vector<1x1x64x64xbf16> to vector<64x64xbf16>
    %cst_71 = arith.constant dense<0.000000e+00> : vector<99x64xf32>
    %99 = tpu.matmul %96, %98, %cst_71 {dimension_numbers = #tpu.dot_dimension_numbers<[1], [0], [0], [1], [0, 0, 1, 1], [], []>} : vector<99x64xbf16>, vector<64x64xbf16>, vector<99x64xf32> -> vector<99x64xf32>
    %100 = arith.addf %94, %99 : vector<99x64xf32>
    %cst_72 = arith.constant 5.000000e-01 : f32
    %101 = vector.broadcast %cst_72 : f32 to vector<99x64xf32>
    %102 = arith.mulf %101, %100 : vector<99x64xf32>
    %cst_73 = arith.constant 4.471500e-02 : f32
    %103 = vector.broadcast %cst_73 : f32 to vector<99x64xf32>
    %104 = arith.mulf %103, %100 : vector<99x64xf32>
    %105 = arith.mulf %104, %100 : vector<99x64xf32>
    %106 = arith.mulf %105, %100 : vector<99x64xf32>
    %107 = arith.addf %100, %106 : vector<99x64xf32>
    %cst_74 = arith.constant 0.797884583 : f32
    %108 = vector.broadcast %cst_74 : f32 to vector<99x64xf32>
    %109 = arith.mulf %108, %107 : vector<99x64xf32>
    %110 = math.tanh %109 : vector<99x64xf32>
    %cst_75 = arith.constant 1.000000e+00 : f32
    %111 = vector.broadcast %cst_75 : f32 to vector<99x64xf32>
    %112 = arith.addf %111, %110 : vector<99x64xf32>
    %113 = arith.mulf %102, %112 : vector<99x64xf32>
    %c0_76 = arith.constant 0 : index
    %c0_77 = arith.constant 0 : index
    %114 = vector.load %arg16[%c0_76, %c0_77] : memref<399x64xf32, #tpu.memory_space<vmem>>, vector<99x64xf32>
    tpu.vector_store %arg16[%c0_76, %c0_77], %113 {strides = array<i32>} : memref<399x64xf32, #tpu.memory_space<vmem>>, vector<99x64xf32>,
    %cst_78 = arith.constant 0.000000e+00 : f32
    %115 = vector.broadcast %cst_78 : f32 to vector<49x64xf32>
    %c0_79 = arith.constant 0 : index
    %c0_80 = arith.constant 0 : index
    %116 = tpu.strided_load %arg16[%c0_79, %c0_80] {strides = array<i32: 2, 1>} : memref<399x64xf32, #tpu.memory_space<vmem>>, vector<49x64xf32>
    %117 = arith.truncf %116 : vector<49x64xf32> to vector<49x64xbf16>
    %c2_81 = arith.constant 2 : index
    %c0_82 = arith.constant 0 : index
    %c0_83 = arith.constant 0 : index
    %c0_84 = arith.constant 0 : index
    %118 = vector.load %arg5[%c2_81, %c0_82, %c0_83, %c0_84] : memref<4x3x64x64xbf16, #tpu.memory_space<vmem>>, vector<1x1x64x64xbf16>
    %119 = vector.shape_cast %118 : vector<1x1x64x64xbf16> to vector<64x64xbf16>
    %cst_85 = arith.constant dense<0.000000e+00> : vector<49x64xf32>
    %120 = tpu.matmul %117, %119, %cst_85 {dimension_numbers = #tpu.dot_dimension_numbers<[1], [0], [0], [1], [0, 0, 1, 1], [], []>} : vector<49x64xbf16>, vector<64x64xbf16>, vector<49x64xf32> -> vector<49x64xf32>
    %121 = arith.addf %115, %120 : vector<49x64xf32>
    %c1_86 = arith.constant 1 : index
    %c0_87 = arith.constant 0 : index
    %122 = tpu.strided_load %arg16[%c1_86, %c0_87] {strides = array<i32: 2, 1>} : memref<399x64xf32, #tpu.memory_space<vmem>>, vector<49x64xf32>
    %123 = arith.truncf %122 : vector<49x64xf32> to vector<49x64xbf16>
    %c2_88 = arith.constant 2 : index
    %c1_89 = arith.constant 1 : index
    %c0_90 = arith.constant 0 : index
    %c0_91 = arith.constant 0 : index
    %124 = vector.load %arg5[%c2_88, %c1_89, %c0_90, %c0_91] : memref<4x3x64x64xbf16, #tpu.memory_space<vmem>>, vector<1x1x64x64xbf16>
    %125 = vector.shape_cast %124 : vector<1x1x64x64xbf16> to vector<64x64xbf16>
    %cst_92 = arith.constant dense<0.000000e+00> : vector<49x64xf32>
    %126 = tpu.matmul %123, %125, %cst_92 {dimension_numbers = #tpu.dot_dimension_numbers<[1], [0], [0], [1], [0, 0, 1, 1], [], []>} : vector<49x64xbf16>, vector<64x64xbf16>, vector<49x64xf32> -> vector<49x64xf32>
    %127 = arith.addf %121, %126 : vector<49x64xf32>
    %c2_93 = arith.constant 2 : index
    %c0_94 = arith.constant 0 : index
    %128 = tpu.strided_load %arg16[%c2_93, %c0_94] {strides = array<i32: 2, 1>} : memref<399x64xf32, #tpu.memory_space<vmem>>, vector<49x64xf32>
    %129 = arith.truncf %128 : vector<49x64xf32> to vector<49x64xbf16>
    %c2_95 = arith.constant 2 : index
    %c2_96 = arith.constant 2 : index
    %c0_97 = arith.constant 0 : index
    %c0_98 = arith.constant 0 : index
    %130 = vector.load %arg5[%c2_95, %c2_96, %c0_97, %c0_98] : memref<4x3x64x64xbf16, #tpu.memory_space<vmem>>, vector<1x1x64x64xbf16>
    %131 = vector.shape_cast %130 : vector<1x1x64x64xbf16> to vector<64x64xbf16>
    %cst_99 = arith.constant dense<0.000000e+00> : vector<49x64xf32>
    %132 = tpu.matmul %129, %131, %cst_99 {dimension_numbers = #tpu.dot_dimension_numbers<[1], [0], [0], [1], [0, 0, 1, 1], [], []>} : vector<49x64xbf16>, vector<64x64xbf16>, vector<49x64xf32> -> vector<49x64xf32>
    %133 = arith.addf %127, %132 : vector<49x64xf32>
    %cst_100 = arith.constant 5.000000e-01 : f32
    %134 = vector.broadcast %cst_100 : f32 to vector<49x64xf32>
    %135 = arith.mulf %134, %133 : vector<49x64xf32>
    %cst_101 = arith.constant 4.471500e-02 : f32
    %136 = vector.broadcast %cst_101 : f32 to vector<49x64xf32>
    %137 = arith.mulf %136, %133 : vector<49x64xf32>
    %138 = arith.mulf %137, %133 : vector<49x64xf32>
    %139 = arith.mulf %138, %133 : vector<49x64xf32>
    %140 = arith.addf %133, %139 : vector<49x64xf32>
    %cst_102 = arith.constant 0.797884583 : f32
    %141 = vector.broadcast %cst_102 : f32 to vector<49x64xf32>
    %142 = arith.mulf %141, %140 : vector<49x64xf32>
    %143 = math.tanh %142 : vector<49x64xf32>
    %cst_103 = arith.constant 1.000000e+00 : f32
    %144 = vector.broadcast %cst_103 : f32 to vector<49x64xf32>
    %145 = arith.addf %144, %143 : vector<49x64xf32>
    %146 = arith.mulf %135, %145 : vector<49x64xf32>
    %c0_104 = arith.constant 0 : index
    %c0_105 = arith.constant 0 : index
    %147 = vector.load %arg17[%c0_104, %c0_105] : memref<199x64xf32, #tpu.memory_space<vmem>>, vector<49x64xf32>
    tpu.vector_store %arg17[%c0_104, %c0_105], %146 {strides = array<i32>} : memref<199x64xf32, #tpu.memory_space<vmem>>, vector<49x64xf32>,
    %cst_106 = arith.constant 0.000000e+00 : f32
    %148 = vector.broadcast %cst_106 : f32 to vector<24x64xf32>
    %c0_107 = arith.constant 0 : index
    %c0_108 = arith.constant 0 : index
    %149 = tpu.strided_load %arg17[%c0_107, %c0_108] {strides = array<i32: 2, 1>} : memref<199x64xf32, #tpu.memory_space<vmem>>, vector<24x64xf32>
    %150 = arith.truncf %149 : vector<24x64xf32> to vector<24x64xbf16>
    %c3 = arith.constant 3 : index
    %c0_109 = arith.constant 0 : index
    %c0_110 = arith.constant 0 : index
    %c0_111 = arith.constant 0 : index
    %151 = vector.load %arg5[%c3, %c0_109, %c0_110, %c0_111] : memref<4x3x64x64xbf16, #tpu.memory_space<vmem>>, vector<1x1x64x64xbf16>
    %152 = vector.shape_cast %151 : vector<1x1x64x64xbf16> to vector<64x64xbf16>
    %cst_112 = arith.constant dense<0.000000e+00> : vector<24x64xf32>
    %153 = tpu.matmul %150, %152, %cst_112 {dimension_numbers = #tpu.dot_dimension_numbers<[1], [0], [0], [1], [0, 0, 1, 1], [], []>} : vector<24x64xbf16>, vector<64x64xbf16>, vector<24x64xf32> -> vector<24x64xf32>
    %154 = arith.addf %148, %153 : vector<24x64xf32>
    %c1_113 = arith.constant 1 : index
    %c0_114 = arith.constant 0 : index
    %155 = tpu.strided_load %arg17[%c1_113, %c0_114] {strides = array<i32: 2, 1>} : memref<199x64xf32, #tpu.memory_space<vmem>>, vector<24x64xf32>
    %156 = arith.truncf %155 : vector<24x64xf32> to vector<24x64xbf16>
    %c3_115 = arith.constant 3 : index
    %c1_116 = arith.constant 1 : index
    %c0_117 = arith.constant 0 : index
    %c0_118 = arith.constant 0 : index
    %157 = vector.load %arg5[%c3_115, %c1_116, %c0_117, %c0_118] : memref<4x3x64x64xbf16, #tpu.memory_space<vmem>>, vector<1x1x64x64xbf16>
    %158 = vector.shape_cast %157 : vector<1x1x64x64xbf16> to vector<64x64xbf16>
    %cst_119 = arith.constant dense<0.000000e+00> : vector<24x64xf32>
    %159 = tpu.matmul %156, %158, %cst_119 {dimension_numbers = #tpu.dot_dimension_numbers<[1], [0], [0], [1], [0, 0, 1, 1], [], []>} : vector<24x64xbf16>, vector<64x64xbf16>, vector<24x64xf32> -> vector<24x64xf32>
    %160 = arith.addf %154, %159 : vector<24x64xf32>
    %c2_120 = arith.constant 2 : index
    %c0_121 = arith.constant 0 : index
    %161 = tpu.strided_load %arg17[%c2_120, %c0_121] {strides = array<i32: 2, 1>} : memref<199x64xf32, #tpu.memory_space<vmem>>, vector<24x64xf32>
    %162 = arith.truncf %161 : vector<24x64xf32> to vector<24x64xbf16>
    %c3_122 = arith.constant 3 : index
    %c2_123 = arith.constant 2 : index
    %c0_124 = arith.constant 0 : index
    %c0_125 = arith.constant 0 : index
    %163 = vector.load %arg5[%c3_122, %c2_123, %c0_124, %c0_125] : memref<4x3x64x64xbf16, #tpu.memory_space<vmem>>, vector<1x1x64x64xbf16>
    %164 = vector.shape_cast %163 : vector<1x1x64x64xbf16> to vector<64x64xbf16>
    %cst_126 = arith.constant dense<0.000000e+00> : vector<24x64xf32>
    %165 = tpu.matmul %162, %164, %cst_126 {dimension_numbers = #tpu.dot_dimension_numbers<[1], [0], [0], [1], [0, 0, 1, 1], [], []>} : vector<24x64xbf16>, vector<64x64xbf16>, vector<24x64xf32> -> vector<24x64xf32>
    %166 = arith.addf %160, %165 : vector<24x64xf32>
    %cst_127 = arith.constant 5.000000e-01 : f32
    %167 = vector.broadcast %cst_127 : f32 to vector<24x64xf32>
    %168 = arith.mulf %167, %166 : vector<24x64xf32>
    %cst_128 = arith.constant 4.471500e-02 : f32
    %169 = vector.broadcast %cst_128 : f32 to vector<24x64xf32>
    %170 = arith.mulf %169, %166 : vector<24x64xf32>
    %171 = arith.mulf %170, %166 : vector<24x64xf32>
    %172 = arith.mulf %171, %166 : vector<24x64xf32>
    %173 = arith.addf %166, %172 : vector<24x64xf32>
    %cst_129 = arith.constant 0.797884583 : f32
    %174 = vector.broadcast %cst_129 : f32 to vector<24x64xf32>
    %175 = arith.mulf %174, %173 : vector<24x64xf32>
    %176 = math.tanh %175 : vector<24x64xf32>
    %cst_130 = arith.constant 1.000000e+00 : f32
    %177 = vector.broadcast %cst_130 : f32 to vector<24x64xf32>
    %178 = arith.addf %177, %176 : vector<24x64xf32>
    %179 = arith.mulf %168, %178 : vector<24x64xf32>
    %c0_131 = arith.constant 0 : index
    %c0_132 = arith.constant 0 : index
    %180 = vector.load %arg16[%c0_131, %c0_132] : memref<399x64xf32, #tpu.memory_space<vmem>>, vector<24x64xf32>
    tpu.vector_store %arg16[%c0_131, %c0_132], %179 {strides = array<i32>} : memref<399x64xf32, #tpu.memory_space<vmem>>, vector<24x64xf32>,
    %cst_133 = arith.constant 0.000000e+00 : f32
    %181 = vector.broadcast %cst_133 : f32 to vector<12x64xf32>
    %c0_134 = arith.constant 0 : index
    %c0_135 = arith.constant 0 : index
    %182 = tpu.strided_load %arg16[%c0_134, %c0_135] {strides = array<i32: 2, 1>} : memref<399x64xf32, #tpu.memory_space<vmem>>, vector<12x64xf32>
    %183 = arith.truncf %182 : vector<12x64xf32> to vector<12x64xbf16>
    %c0_136 = arith.constant 0 : index
    %c0_137 = arith.constant 0 : index
    %c0_138 = arith.constant 0 : index
    %c0_139 = arith.constant 0 : index
    %184 = vector.load %arg6[%c0_136, %c0_137, %c0_138, %c0_139] : memref<2x2x64x64xbf16, #tpu.memory_space<vmem>>, vector<1x1x64x64xbf16>
    %185 = vector.shape_cast %184 : vector<1x1x64x64xbf16> to vector<64x64xbf16>
    %cst_140 = arith.constant dense<0.000000e+00> : vector<12x64xf32>
    %186 = tpu.matmul %183, %185, %cst_140 {dimension_numbers = #tpu.dot_dimension_numbers<[1], [0], [0], [1], [0, 0, 1, 1], [], []>} : vector<12x64xbf16>, vector<64x64xbf16>, vector<12x64xf32> -> vector<12x64xf32>
    %187 = arith.addf %181, %186 : vector<12x64xf32>
    %c1_141 = arith.constant 1 : index
    %c0_142 = arith.constant 0 : index
    %188 = tpu.strided_load %arg16[%c1_141, %c0_142] {strides = array<i32: 2, 1>} : memref<399x64xf32, #tpu.memory_space<vmem>>, vector<12x64xf32>
    %189 = arith.truncf %188 : vector<12x64xf32> to vector<12x64xbf16>
    %c0_143 = arith.constant 0 : index
    %c1_144 = arith.constant 1 : index
    %c0_145 = arith.constant 0 : index
    %c0_146 = arith.constant 0 : index
    %190 = vector.load %arg6[%c0_143, %c1_144, %c0_145, %c0_146] : memref<2x2x64x64xbf16, #tpu.memory_space<vmem>>, vector<1x1x64x64xbf16>
    %191 = vector.shape_cast %190 : vector<1x1x64x64xbf16> to vector<64x64xbf16>
    %cst_147 = arith.constant dense<0.000000e+00> : vector<12x64xf32>
    %192 = tpu.matmul %189, %191, %cst_147 {dimension_numbers = #tpu.dot_dimension_numbers<[1], [0], [0], [1], [0, 0, 1, 1], [], []>} : vector<12x64xbf16>, vector<64x64xbf16>, vector<12x64xf32> -> vector<12x64xf32>
    %193 = arith.addf %187, %192 : vector<12x64xf32>
    %cst_148 = arith.constant 5.000000e-01 : f32
    %194 = vector.broadcast %cst_148 : f32 to vector<12x64xf32>
    %195 = arith.mulf %194, %193 : vector<12x64xf32>
    %cst_149 = arith.constant 4.471500e-02 : f32
    %196 = vector.broadcast %cst_149 : f32 to vector<12x64xf32>
    %197 = arith.mulf %196, %193 : vector<12x64xf32>
    %198 = arith.mulf %197, %193 : vector<12x64xf32>
    %199 = arith.mulf %198, %193 : vector<12x64xf32>
    %200 = arith.addf %193, %199 : vector<12x64xf32>
    %cst_150 = arith.constant 0.797884583 : f32
    %201 = vector.broadcast %cst_150 : f32 to vector<12x64xf32>
    %202 = arith.mulf %201, %200 : vector<12x64xf32>
    %203 = math.tanh %202 : vector<12x64xf32>
    %cst_151 = arith.constant 1.000000e+00 : f32
    %204 = vector.broadcast %cst_151 : f32 to vector<12x64xf32>
    %205 = arith.addf %204, %203 : vector<12x64xf32>
    %206 = arith.mulf %195, %205 : vector<12x64xf32>
    %c0_152 = arith.constant 0 : index
    %c0_153 = arith.constant 0 : index
    %207 = vector.load %arg17[%c0_152, %c0_153] : memref<199x64xf32, #tpu.memory_space<vmem>>, vector<12x64xf32>
    tpu.vector_store %arg17[%c0_152, %c0_153], %206 {strides = array<i32>} : memref<199x64xf32, #tpu.memory_space<vmem>>, vector<12x64xf32>,
    %cst_154 = arith.constant 0.000000e+00 : f32
    %208 = vector.broadcast %cst_154 : f32 to vector<6x64xf32>
    %c0_155 = arith.constant 0 : index
    %c0_156 = arith.constant 0 : index
    %209 = tpu.strided_load %arg17[%c0_155, %c0_156] {strides = array<i32: 2, 1>} : memref<199x64xf32, #tpu.memory_space<vmem>>, vector<6x64xf32>
    %210 = arith.truncf %209 : vector<6x64xf32> to vector<6x64xbf16>
    %c1_157 = arith.constant 1 : index
    %c0_158 = arith.constant 0 : index
    %c0_159 = arith.constant 0 : index
    %c0_160 = arith.constant 0 : index
    %211 = vector.load %arg6[%c1_157, %c0_158, %c0_159, %c0_160] : memref<2x2x64x64xbf16, #tpu.memory_space<vmem>>, vector<1x1x64x64xbf16>
    %212 = vector.shape_cast %211 : vector<1x1x64x64xbf16> to vector<64x64xbf16>
    %cst_161 = arith.constant dense<0.000000e+00> : vector<6x64xf32>
    %213 = tpu.matmul %210, %212, %cst_161 {dimension_numbers = #tpu.dot_dimension_numbers<[1], [0], [0], [1], [0, 0, 1, 1], [], []>} : vector<6x64xbf16>, vector<64x64xbf16>, vector<6x64xf32> -> vector<6x64xf32>
    %214 = arith.addf %208, %213 : vector<6x64xf32>
    %c1_162 = arith.constant 1 : index
    %c0_163 = arith.constant 0 : index
    %215 = tpu.strided_load %arg17[%c1_162, %c0_163] {strides = array<i32: 2, 1>} : memref<199x64xf32, #tpu.memory_space<vmem>>, vector<6x64xf32>
    %216 = arith.truncf %215 : vector<6x64xf32> to vector<6x64xbf16>
    %c1_164 = arith.constant 1 : index
    %c1_165 = arith.constant 1 : index
    %c0_166 = arith.constant 0 : index
    %c0_167 = arith.constant 0 : index
    %217 = vector.load %arg6[%c1_164, %c1_165, %c0_166, %c0_167] : memref<2x2x64x64xbf16, #tpu.memory_space<vmem>>, vector<1x1x64x64xbf16>
    %218 = vector.shape_cast %217 : vector<1x1x64x64xbf16> to vector<64x64xbf16>
    %cst_168 = arith.constant dense<0.000000e+00> : vector<6x64xf32>
    %219 = tpu.matmul %216, %218, %cst_168 {dimension_numbers = #tpu.dot_dimension_numbers<[1], [0], [0], [1], [0, 0, 1, 1], [], []>} : vector<6x64xbf16>, vector<64x64xbf16>, vector<6x64xf32> -> vector<6x64xf32>
    %220 = arith.addf %214, %219 : vector<6x64xf32>
    %cst_169 = arith.constant 5.000000e-01 : f32
    %221 = vector.broadcast %cst_169 : f32 to vector<6x64xf32>
    %222 = arith.mulf %221, %220 : vector<6x64xf32>
    %cst_170 = arith.constant 4.471500e-02 : f32
    %223 = vector.broadcast %cst_170 : f32 to vector<6x64xf32>
    %224 = arith.mulf %223, %220 : vector<6x64xf32>
    %225 = arith.mulf %224, %220 : vector<6x64xf32>
    %226 = arith.mulf %225, %220 : vector<6x64xf32>
    %227 = arith.addf %220, %226 : vector<6x64xf32>
    %cst_171 = arith.constant 0.797884583 : f32
    %228 = vector.broadcast %cst_171 : f32 to vector<6x64xf32>
    %229 = arith.mulf %228, %227 : vector<6x64xf32>
    %230 = math.tanh %229 : vector<6x64xf32>
    %cst_172 = arith.constant 1.000000e+00 : f32
    %231 = vector.broadcast %cst_172 : f32 to vector<6x64xf32>
    %232 = arith.addf %231, %230 : vector<6x64xf32>
    %233 = arith.mulf %222, %232 : vector<6x64xf32>
    %c0_173 = arith.constant 0 : index
    %c0_174 = arith.constant 0 : index
    %234 = vector.load %arg7[%c0_173, %c0_174] : memref<1x64xf32, #tpu.memory_space<vmem>>, vector<1x64xf32>
    %c0_175 = arith.constant 0 : index
    %c0_176 = arith.constant 0 : index
    %235 = vector.load %arg8[%c0_175, %c0_176] : memref<1x64xf32, #tpu.memory_space<vmem>>, vector<1x64xf32>
    %cst_177 = arith.constant dense<0.000000e+00> : vector<6xf32>
    %236 = vector.multi_reduction <add>, %233, %cst_177 [1] : vector<6x64xf32> to vector<6xf32>
    %237 = vector.shape_cast %236 : vector<6xf32> to vector<6x1xf32>
    %cst_178 = arith.constant 6.400000e+01 : f32
    %238 = vector.broadcast %cst_178 : f32 to vector<6x1xf32>
    %239 = arith.divf %237, %238 : vector<6x1xf32>
    %240 = vector.broadcast %239 : vector<6x1xf32> to vector<6x64xf32>
    %241 = arith.subf %233, %240 : vector<6x64xf32>
    %242 = arith.mulf %241, %241 : vector<6x64xf32>
    %cst_179 = arith.constant dense<0.000000e+00> : vector<6xf32>
    %243 = vector.multi_reduction <add>, %242, %cst_179 [1] : vector<6x64xf32> to vector<6xf32>
    %244 = vector.shape_cast %243 : vector<6xf32> to vector<6x1xf32>
    %cst_180 = arith.constant 6.400000e+01 : f32
    %245 = vector.broadcast %cst_180 : f32 to vector<6x1xf32>
    %246 = arith.divf %244, %245 : vector<6x1xf32>
    %247 = vector.broadcast %239 : vector<6x1xf32> to vector<6x64xf32>
    %248 = arith.subf %233, %247 : vector<6x64xf32>
    %cst_181 = arith.constant 9.99999974E-6 : f32
    %249 = vector.broadcast %cst_181 : f32 to vector<6x1xf32>
    %250 = arith.addf %246, %249 : vector<6x1xf32>
    %251 = math.rsqrt %250 : vector<6x1xf32>
    %252 = vector.broadcast %251 : vector<6x1xf32> to vector<6x64xf32>
    %253 = arith.mulf %248, %252 : vector<6x64xf32>
    %254 = vector.broadcast %234 : vector<1x64xf32> to vector<6x64xf32>
    %255 = arith.mulf %253, %254 : vector<6x64xf32>
    %256 = vector.broadcast %235 : vector<1x64xf32> to vector<6x64xf32>
    %257 = arith.addf %255, %256 : vector<6x64xf32>
    %258 = arith.truncf %257 : vector<6x64xf32> to vector<6x64xbf16>
    %c0_182 = arith.constant 0 : index
    %c0_183 = arith.constant 0 : index
    %259 = vector.load %arg9[%c0_182, %c0_183] : memref<64x128xbf16, #tpu.memory_space<vmem>>, vector<64x128xbf16>
    %cst_184 = arith.constant dense<0.000000e+00> : vector<6x128xf32>
    %260 = tpu.matmul %258, %259, %cst_184 {dimension_numbers = #tpu.dot_dimension_numbers<[1], [0], [0], [1], [0, 0, 1, 1], [], []>} : vector<6x64xbf16>, vector<64x128xbf16>, vector<6x128xf32> -> vector<6x128xf32>
    %c0_185 = arith.constant 0 : index
    %c0_186 = arith.constant 0 : index
    %261 = vector.load %arg10[%c0_185, %c0_186] : memref<1x128xf32, #tpu.memory_space<vmem>>, vector<1x128xf32>
    %262 = vector.broadcast %261 : vector<1x128xf32> to vector<6x128xf32>
    %263 = arith.addf %260, %262 : vector<6x128xf32>
    %cst_187 = arith.constant 0.000000e+00 : f32
    %264 = vector.broadcast %cst_187 : f32 to vector<22x128xf32>
    %c0_188 = arith.constant 0 : index
    %c0_189 = arith.constant 0 : index
    %265 = vector.load %arg18[%c0_188, %c0_189] : memref<22x128xf32, #tpu.memory_space<vmem>>, vector<22x128xf32>
    tpu.vector_store %arg18[%c0_188, %c0_189], %264 {strides = array<i32>} : memref<22x128xf32, #tpu.memory_space<vmem>>, vector<22x128xf32>,
    %c8 = arith.constant 8 : index
    %c0_190 = arith.constant 0 : index
    %266 = vector.load %arg18[%c8, %c0_190] : memref<22x128xf32, #tpu.memory_space<vmem>>, vector<6x128xf32>
    tpu.vector_store %arg18[%c8, %c0_190], %263 {strides = array<i32>} : memref<22x128xf32, #tpu.memory_space<vmem>>, vector<6x128xf32>,
    %c0_191 = arith.constant 0 : index
    %c0_192 = arith.constant 0 : index
    %267 = vector.load %arg18[%c0_191, %c0_192] : memref<22x128xf32, #tpu.memory_space<vmem>>, vector<7x32xf32>
    %c1_193 = arith.constant 1 : index
    %c0_194 = arith.constant 0 : index
    %268 = vector.load %arg18[%c1_193, %c0_194] : memref<22x128xf32, #tpu.memory_space<vmem>>, vector<7x32xf32>
    %c2_195 = arith.constant 2 : index
    %c0_196 = arith.constant 0 : index
    %269 = vector.load %arg18[%c2_195, %c0_196] : memref<22x128xf32, #tpu.memory_space<vmem>>, vector<7x32xf32>
    %c3_197 = arith.constant 3 : index
    %c0_198 = arith.constant 0 : index
    %270 = vector.load %arg18[%c3_197, %c0_198] : memref<22x128xf32, #tpu.memory_space<vmem>>, vector<7x32xf32>
    %c4 = arith.constant 4 : index
    %c0_199 = arith.constant 0 : index
    %271 = vector.load %arg18[%c4, %c0_199] : memref<22x128xf32, #tpu.memory_space<vmem>>, vector<7x32xf32>
    %c5 = arith.constant 5 : index
    %c0_200 = arith.constant 0 : index
    %272 = vector.load %arg18[%c5, %c0_200] : memref<22x128xf32, #tpu.memory_space<vmem>>, vector<7x32xf32>
    %c6 = arith.constant 6 : index
    %c0_201 = arith.constant 0 : index
    %273 = vector.load %arg18[%c6, %c0_201] : memref<22x128xf32, #tpu.memory_space<vmem>>, vector<7x32xf32>
    %c7 = arith.constant 7 : index
    %c0_202 = arith.constant 0 : index
    %274 = vector.load %arg18[%c7, %c0_202] : memref<22x128xf32, #tpu.memory_space<vmem>>, vector<7x32xf32>
    %c8_203 = arith.constant 8 : index
    %c0_204 = arith.constant 0 : index
    %275 = vector.load %arg18[%c8_203, %c0_204] : memref<22x128xf32, #tpu.memory_space<vmem>>, vector<7x32xf32>
    %c9 = arith.constant 9 : index
    %c0_205 = arith.constant 0 : index
    %276 = vector.load %arg18[%c9, %c0_205] : memref<22x128xf32, #tpu.memory_space<vmem>>, vector<7x32xf32>
    %c10 = arith.constant 10 : index
    %c0_206 = arith.constant 0 : index
    %277 = vector.load %arg18[%c10, %c0_206] : memref<22x128xf32, #tpu.memory_space<vmem>>, vector<7x32xf32>
    %c11 = arith.constant 11 : index
    %c0_207 = arith.constant 0 : index
    %278 = vector.load %arg18[%c11, %c0_207] : memref<22x128xf32, #tpu.memory_space<vmem>>, vector<7x32xf32>
    %c12 = arith.constant 12 : index
    %c0_208 = arith.constant 0 : index
    %279 = vector.load %arg18[%c12, %c0_208] : memref<22x128xf32, #tpu.memory_space<vmem>>, vector<7x32xf32>
    %c13 = arith.constant 13 : index
    %c0_209 = arith.constant 0 : index
    %280 = vector.load %arg18[%c13, %c0_209] : memref<22x128xf32, #tpu.memory_space<vmem>>, vector<7x32xf32>
    %c14 = arith.constant 14 : index
    %c0_210 = arith.constant 0 : index
    %281 = vector.load %arg18[%c14, %c0_210] : memref<22x128xf32, #tpu.memory_space<vmem>>, vector<7x32xf32>
    %c15 = arith.constant 15 : index
    %c0_211 = arith.constant 0 : index
    %282 = vector.load %arg18[%c15, %c0_211] : memref<22x128xf32, #tpu.memory_space<vmem>>, vector<7x32xf32>
    %283 = tpu.concatenate %267, %268, %269, %270, %271, %272, %273, %274, %275, %276, %277, %278, %279, %280, %281, %282 in 1 : vector<7x32xf32>, vector<7x32xf32>, vector<7x32xf32>, vector<7x32xf32>, vector<7x32xf32>, vector<7x32xf32>, vector<7x32xf32>, vector<7x32xf32>, vector<7x32xf32>, vector<7x32xf32>, vector<7x32xf32>, vector<7x32xf32>, vector<7x32xf32>, vector<7x32xf32>, vector<7x32xf32>, vector<7x32xf32> -> vector<7x512xf32>
    %284 = arith.truncf %283 : vector<7x512xf32> to vector<7x512xbf16>
    %c0_212 = arith.constant 0 : index
    %c0_213 = arith.constant 0 : index
    %c0_214 = arith.constant 0 : index
    %285 = vector.load %arg11[%c0_212, %c0_213, %c0_214] : memref<4x512x32xbf16, #tpu.memory_space<vmem>>, vector<1x512x32xbf16>
    %286 = vector.shape_cast %285 : vector<1x512x32xbf16> to vector<512x32xbf16>
    %cst_215 = arith.constant dense<0.000000e+00> : vector<7x32xf32>
    %287 = tpu.matmul %284, %286, %cst_215 {dimension_numbers = #tpu.dot_dimension_numbers<[1], [0], [0], [1], [0, 0, 1, 1], [], []>} : vector<7x512xbf16>, vector<512x32xbf16>, vector<7x32xf32> -> vector<7x32xf32>
    %c0_216 = arith.constant 0 : index
    %c32 = arith.constant 32 : index
    %288 = vector.load %arg18[%c0_216, %c32] : memref<22x128xf32, #tpu.memory_space<vmem>>, vector<7x32xf32>
    %c1_217 = arith.constant 1 : index
    %c32_218 = arith.constant 32 : index
    %289 = vector.load %arg18[%c1_217, %c32_218] : memref<22x128xf32, #tpu.memory_space<vmem>>, vector<7x32xf32>
    %c2_219 = arith.constant 2 : index
    %c32_220 = arith.constant 32 : index
    %290 = vector.load %arg18[%c2_219, %c32_220] : memref<22x128xf32, #tpu.memory_space<vmem>>, vector<7x32xf32>
    %c3_221 = arith.constant 3 : index
    %c32_222 = arith.constant 32 : index
    %291 = vector.load %arg18[%c3_221, %c32_222] : memref<22x128xf32, #tpu.memory_space<vmem>>, vector<7x32xf32>
    %c4_223 = arith.constant 4 : index
    %c32_224 = arith.constant 32 : index
    %292 = vector.load %arg18[%c4_223, %c32_224] : memref<22x128xf32, #tpu.memory_space<vmem>>, vector<7x32xf32>
    %c5_225 = arith.constant 5 : index
    %c32_226 = arith.constant 32 : index
    %293 = vector.load %arg18[%c5_225, %c32_226] : memref<22x128xf32, #tpu.memory_space<vmem>>, vector<7x32xf32>
    %c6_227 = arith.constant 6 : index
    %c32_228 = arith.constant 32 : index
    %294 = vector.load %arg18[%c6_227, %c32_228] : memref<22x128xf32, #tpu.memory_space<vmem>>, vector<7x32xf32>
    %c7_229 = arith.constant 7 : index
    %c32_230 = arith.constant 32 : index
    %295 = vector.load %arg18[%c7_229, %c32_230] : memref<22x128xf32, #tpu.memory_space<vmem>>, vector<7x32xf32>
    %c8_231 = arith.constant 8 : index
    %c32_232 = arith.constant 32 : index
    %296 = vector.load %arg18[%c8_231, %c32_232] : memref<22x128xf32, #tpu.memory_space<vmem>>, vector<7x32xf32>
    %c9_233 = arith.constant 9 : index
    %c32_234 = arith.constant 32 : index
    %297 = vector.load %arg18[%c9_233, %c32_234] : memref<22x128xf32, #tpu.memory_space<vmem>>, vector<7x32xf32>
    %c10_235 = arith.constant 10 : index
    %c32_236 = arith.constant 32 : index
    %298 = vector.load %arg18[%c10_235, %c32_236] : memref<22x128xf32, #tpu.memory_space<vmem>>, vector<7x32xf32>
    %c11_237 = arith.constant 11 : index
    %c32_238 = arith.constant 32 : index
    %299 = vector.load %arg18[%c11_237, %c32_238] : memref<22x128xf32, #tpu.memory_space<vmem>>, vector<7x32xf32>
    %c12_239 = arith.constant 12 : index
    %c32_240 = arith.constant 32 : index
    %300 = vector.load %arg18[%c12_239, %c32_240] : memref<22x128xf32, #tpu.memory_space<vmem>>, vector<7x32xf32>
    %c13_241 = arith.constant 13 : index
    %c32_242 = arith.constant 32 : index
    %301 = vector.load %arg18[%c13_241, %c32_242] : memref<22x128xf32, #tpu.memory_space<vmem>>, vector<7x32xf32>
    %c14_243 = arith.constant 14 : index
    %c32_244 = arith.constant 32 : index
    %302 = vector.load %arg18[%c14_243, %c32_244] : memref<22x128xf32, #tpu.memory_space<vmem>>, vector<7x32xf32>
    %c15_245 = arith.constant 15 : index
    %c32_246 = arith.constant 32 : index
    %303 = vector.load %arg18[%c15_245, %c32_246] : memref<22x128xf32, #tpu.memory_space<vmem>>, vector<7x32xf32>
    %304 = tpu.concatenate %288, %289, %290, %291, %292, %293, %294, %295, %296, %297, %298, %299, %300, %301, %302, %303 in 1 : vector<7x32xf32>, vector<7x32xf32>, vector<7x32xf32>, vector<7x32xf32>, vector<7x32xf32>, vector<7x32xf32>, vector<7x32xf32>, vector<7x32xf32>, vector<7x32xf32>, vector<7x32xf32>, vector<7x32xf32>, vector<7x32xf32>, vector<7x32xf32>, vector<7x32xf32>, vector<7x32xf32>, vector<7x32xf32> -> vector<7x512xf32>
    %305 = arith.truncf %304 : vector<7x512xf32> to vector<7x512xbf16>
    %c1_247 = arith.constant 1 : index
    %c0_248 = arith.constant 0 : index
    %c0_249 = arith.constant 0 : index
    %306 = vector.load %arg11[%c1_247, %c0_248, %c0_249] : memref<4x512x32xbf16, #tpu.memory_space<vmem>>, vector<1x512x32xbf16>
    %307 = vector.shape_cast %306 : vector<1x512x32xbf16> to vector<512x32xbf16>
    %cst_250 = arith.constant dense<0.000000e+00> : vector<7x32xf32>
    %308 = tpu.matmul %305, %307, %cst_250 {dimension_numbers = #tpu.dot_dimension_numbers<[1], [0], [0], [1], [0, 0, 1, 1], [], []>} : vector<7x512xbf16>, vector<512x32xbf16>, vector<7x32xf32> -> vector<7x32xf32>
    %c0_251 = arith.constant 0 : index
    %c64 = arith.constant 64 : index
    %309 = vector.load %arg18[%c0_251, %c64] : memref<22x128xf32, #tpu.memory_space<vmem>>, vector<7x32xf32>
    %c1_252 = arith.constant 1 : index
    %c64_253 = arith.constant 64 : index
    %310 = vector.load %arg18[%c1_252, %c64_253] : memref<22x128xf32, #tpu.memory_space<vmem>>, vector<7x32xf32>
    %c2_254 = arith.constant 2 : index
    %c64_255 = arith.constant 64 : index
    %311 = vector.load %arg18[%c2_254, %c64_255] : memref<22x128xf32, #tpu.memory_space<vmem>>, vector<7x32xf32>
    %c3_256 = arith.constant 3 : index
    %c64_257 = arith.constant 64 : index
    %312 = vector.load %arg18[%c3_256, %c64_257] : memref<22x128xf32, #tpu.memory_space<vmem>>, vector<7x32xf32>
    %c4_258 = arith.constant 4 : index
    %c64_259 = arith.constant 64 : index
    %313 = vector.load %arg18[%c4_258, %c64_259] : memref<22x128xf32, #tpu.memory_space<vmem>>, vector<7x32xf32>
    %c5_260 = arith.constant 5 : index
    %c64_261 = arith.constant 64 : index
    %314 = vector.load %arg18[%c5_260, %c64_261] : memref<22x128xf32, #tpu.memory_space<vmem>>, vector<7x32xf32>
    %c6_262 = arith.constant 6 : index
    %c64_263 = arith.constant 64 : index
    %315 = vector.load %arg18[%c6_262, %c64_263] : memref<22x128xf32, #tpu.memory_space<vmem>>, vector<7x32xf32>
    %c7_264 = arith.constant 7 : index
    %c64_265 = arith.constant 64 : index
    %316 = vector.load %arg18[%c7_264, %c64_265] : memref<22x128xf32, #tpu.memory_space<vmem>>, vector<7x32xf32>
    %c8_266 = arith.constant 8 : index
    %c64_267 = arith.constant 64 : index
    %317 = vector.load %arg18[%c8_266, %c64_267] : memref<22x128xf32, #tpu.memory_space<vmem>>, vector<7x32xf32>
    %c9_268 = arith.constant 9 : index
    %c64_269 = arith.constant 64 : index
    %318 = vector.load %arg18[%c9_268, %c64_269] : memref<22x128xf32, #tpu.memory_space<vmem>>, vector<7x32xf32>
    %c10_270 = arith.constant 10 : index
    %c64_271 = arith.constant 64 : index
    %319 = vector.load %arg18[%c10_270, %c64_271] : memref<22x128xf32, #tpu.memory_space<vmem>>, vector<7x32xf32>
    %c11_272 = arith.constant 11 : index
    %c64_273 = arith.constant 64 : index
    %320 = vector.load %arg18[%c11_272, %c64_273] : memref<22x128xf32, #tpu.memory_space<vmem>>, vector<7x32xf32>
    %c12_274 = arith.constant 12 : index
    %c64_275 = arith.constant 64 : index
    %321 = vector.load %arg18[%c12_274, %c64_275] : memref<22x128xf32, #tpu.memory_space<vmem>>, vector<7x32xf32>
    %c13_276 = arith.constant 13 : index
    %c64_277 = arith.constant 64 : index
    %322 = vector.load %arg18[%c13_276, %c64_277] : memref<22x128xf32, #tpu.memory_space<vmem>>, vector<7x32xf32>
    %c14_278 = arith.constant 14 : index
    %c64_279 = arith.constant 64 : index
    %323 = vector.load %arg18[%c14_278, %c64_279] : memref<22x128xf32, #tpu.memory_space<vmem>>, vector<7x32xf32>
    %c15_280 = arith.constant 15 : index
    %c64_281 = arith.constant 64 : index
    %324 = vector.load %arg18[%c15_280, %c64_281] : memref<22x128xf32, #tpu.memory_space<vmem>>, vector<7x32xf32>
    %325 = tpu.concatenate %309, %310, %311, %312, %313, %314, %315, %316, %317, %318, %319, %320, %321, %322, %323, %324 in 1 : vector<7x32xf32>, vector<7x32xf32>, vector<7x32xf32>, vector<7x32xf32>, vector<7x32xf32>, vector<7x32xf32>, vector<7x32xf32>, vector<7x32xf32>, vector<7x32xf32>, vector<7x32xf32>, vector<7x32xf32>, vector<7x32xf32>, vector<7x32xf32>, vector<7x32xf32>, vector<7x32xf32>, vector<7x32xf32> -> vector<7x512xf32>
    %326 = arith.truncf %325 : vector<7x512xf32> to vector<7x512xbf16>
    %c2_282 = arith.constant 2 : index
    %c0_283 = arith.constant 0 : index
    %c0_284 = arith.constant 0 : index
    %327 = vector.load %arg11[%c2_282, %c0_283, %c0_284] : memref<4x512x32xbf16, #tpu.memory_space<vmem>>, vector<1x512x32xbf16>
    %328 = vector.shape_cast %327 : vector<1x512x32xbf16> to vector<512x32xbf16>
    %cst_285 = arith.constant dense<0.000000e+00> : vector<7x32xf32>
    %329 = tpu.matmul %326, %328, %cst_285 {dimension_numbers = #tpu.dot_dimension_numbers<[1], [0], [0], [1], [0, 0, 1, 1], [], []>} : vector<7x512xbf16>, vector<512x32xbf16>, vector<7x32xf32> -> vector<7x32xf32>
    %c0_286 = arith.constant 0 : index
    %c96 = arith.constant 96 : index
    %330 = vector.load %arg18[%c0_286, %c96] : memref<22x128xf32, #tpu.memory_space<vmem>>, vector<7x32xf32>
    %c1_287 = arith.constant 1 : index
    %c96_288 = arith.constant 96 : index
    %331 = vector.load %arg18[%c1_287, %c96_288] : memref<22x128xf32, #tpu.memory_space<vmem>>, vector<7x32xf32>
    %c2_289 = arith.constant 2 : index
    %c96_290 = arith.constant 96 : index
    %332 = vector.load %arg18[%c2_289, %c96_290] : memref<22x128xf32, #tpu.memory_space<vmem>>, vector<7x32xf32>
    %c3_291 = arith.constant 3 : index
    %c96_292 = arith.constant 96 : index
    %333 = vector.load %arg18[%c3_291, %c96_292] : memref<22x128xf32, #tpu.memory_space<vmem>>, vector<7x32xf32>
    %c4_293 = arith.constant 4 : index
    %c96_294 = arith.constant 96 : index
    %334 = vector.load %arg18[%c4_293, %c96_294] : memref<22x128xf32, #tpu.memory_space<vmem>>, vector<7x32xf32>
    %c5_295 = arith.constant 5 : index
    %c96_296 = arith.constant 96 : index
    %335 = vector.load %arg18[%c5_295, %c96_296] : memref<22x128xf32, #tpu.memory_space<vmem>>, vector<7x32xf32>
    %c6_297 = arith.constant 6 : index
    %c96_298 = arith.constant 96 : index
    %336 = vector.load %arg18[%c6_297, %c96_298] : memref<22x128xf32, #tpu.memory_space<vmem>>, vector<7x32xf32>
    %c7_299 = arith.constant 7 : index
    %c96_300 = arith.constant 96 : index
    %337 = vector.load %arg18[%c7_299, %c96_300] : memref<22x128xf32, #tpu.memory_space<vmem>>, vector<7x32xf32>
    %c8_301 = arith.constant 8 : index
    %c96_302 = arith.constant 96 : index
    %338 = vector.load %arg18[%c8_301, %c96_302] : memref<22x128xf32, #tpu.memory_space<vmem>>, vector<7x32xf32>
    %c9_303 = arith.constant 9 : index
    %c96_304 = arith.constant 96 : index
    %339 = vector.load %arg18[%c9_303, %c96_304] : memref<22x128xf32, #tpu.memory_space<vmem>>, vector<7x32xf32>
    %c10_305 = arith.constant 10 : index
    %c96_306 = arith.constant 96 : index
    %340 = vector.load %arg18[%c10_305, %c96_306] : memref<22x128xf32, #tpu.memory_space<vmem>>, vector<7x32xf32>
    %c11_307 = arith.constant 11 : index
    %c96_308 = arith.constant 96 : index
    %341 = vector.load %arg18[%c11_307, %c96_308] : memref<22x128xf32, #tpu.memory_space<vmem>>, vector<7x32xf32>
    %c12_309 = arith.constant 12 : index
    %c96_310 = arith.constant 96 : index
    %342 = vector.load %arg18[%c12_309, %c96_310] : memref<22x128xf32, #tpu.memory_space<vmem>>, vector<7x32xf32>
    %c13_311 = arith.constant 13 : index
    %c96_312 = arith.constant 96 : index
    %343 = vector.load %arg18[%c13_311, %c96_312] : memref<22x128xf32, #tpu.memory_space<vmem>>, vector<7x32xf32>
    %c14_313 = arith.constant 14 : index
    %c96_314 = arith.constant 96 : index
    %344 = vector.load %arg18[%c14_313, %c96_314] : memref<22x128xf32, #tpu.memory_space<vmem>>, vector<7x32xf32>
    %c15_315 = arith.constant 15 : index
    %c96_316 = arith.constant 96 : index
    %345 = vector.load %arg18[%c15_315, %c96_316] : memref<22x128xf32, #tpu.memory_space<vmem>>, vector<7x32xf32>
    %346 = tpu.concatenate %330, %331, %332, %333, %334, %335, %336, %337, %338, %339, %340, %341, %342, %343, %344, %345 in 1 : vector<7x32xf32>, vector<7x32xf32>, vector<7x32xf32>, vector<7x32xf32>, vector<7x32xf32>, vector<7x32xf32>, vector<7x32xf32>, vector<7x32xf32>, vector<7x32xf32>, vector<7x32xf32>, vector<7x32xf32>, vector<7x32xf32>, vector<7x32xf32>, vector<7x32xf32>, vector<7x32xf32>, vector<7x32xf32> -> vector<7x512xf32>
    %347 = arith.truncf %346 : vector<7x512xf32> to vector<7x512xbf16>
    %c3_317 = arith.constant 3 : index
    %c0_318 = arith.constant 0 : index
    %c0_319 = arith.constant 0 : index
    %348 = vector.load %arg11[%c3_317, %c0_318, %c0_319] : memref<4x512x32xbf16, #tpu.memory_space<vmem>>, vector<1x512x32xbf16>
    %349 = vector.shape_cast %348 : vector<1x512x32xbf16> to vector<512x32xbf16>
    %cst_320 = arith.constant dense<0.000000e+00> : vector<7x32xf32>
    %350 = tpu.matmul %347, %349, %cst_320 {dimension_numbers = #tpu.dot_dimension_numbers<[1], [0], [0], [1], [0, 0, 1, 1], [], []>} : vector<7x512xbf16>, vector<512x32xbf16>, vector<7x32xf32> -> vector<7x32xf32>
    %351 = tpu.concatenate %287, %308, %329, %350 in 1 : vector<7x32xf32>, vector<7x32xf32>, vector<7x32xf32>, vector<7x32xf32> -> vector<7x128xf32>
    %c0_321 = arith.constant 0 : index
    %c0_322 = arith.constant 0 : index
    %352 = vector.load %arg12[%c0_321, %c0_322] : memref<1x128xf32, #tpu.memory_space<vmem>>, vector<1x128xf32>
    %353 = vector.broadcast %352 : vector<1x128xf32> to vector<7x128xf32>
    %354 = arith.addf %351, %353 : vector<7x128xf32>
    %cst_323 = arith.constant 5.000000e-01 : f32
    %355 = vector.broadcast %cst_323 : f32 to vector<7x128xf32>
    %356 = arith.mulf %355, %354 : vector<7x128xf32>
    %cst_324 = arith.constant 4.471500e-02 : f32
    %357 = vector.broadcast %cst_324 : f32 to vector<7x128xf32>
    %358 = arith.mulf %357, %354 : vector<7x128xf32>
    %359 = arith.mulf %358, %354 : vector<7x128xf32>
    %360 = arith.mulf %359, %354 : vector<7x128xf32>
    %361 = arith.addf %354, %360 : vector<7x128xf32>
    %cst_325 = arith.constant 0.797884583 : f32
    %362 = vector.broadcast %cst_325 : f32 to vector<7x128xf32>
    %363 = arith.mulf %362, %361 : vector<7x128xf32>
    %364 = math.tanh %363 : vector<7x128xf32>
    %cst_326 = arith.constant 1.000000e+00 : f32
    %365 = vector.broadcast %cst_326 : f32 to vector<7x128xf32>
    %366 = arith.addf %365, %364 : vector<7x128xf32>
    %367 = arith.mulf %356, %366 : vector<7x128xf32>
    %368 = vector.extract_strided_slice %367 {offsets = [0, 0], sizes = [6, 128], strides = [1, 1]} : vector<7x128xf32> to vector<6x128xf32>
    %369 = arith.addf %263, %368 : vector<6x128xf32>
    %c0_327 = arith.constant 0 : index
    %c0_328 = arith.constant 0 : index
    %370 = vector.load %arg13[%c0_327, %c0_328] : memref<1x128xf32, #tpu.memory_space<vmem>>, vector<1x128xf32>
    %c0_329 = arith.constant 0 : index
    %c0_330 = arith.constant 0 : index
    %371 = vector.load %arg14[%c0_329, %c0_330] : memref<1x128xf32, #tpu.memory_space<vmem>>, vector<1x128xf32>
    %cst_331 = arith.constant dense<0.000000e+00> : vector<6xf32>
    %372 = vector.multi_reduction <add>, %369, %cst_331 [1] : vector<6x128xf32> to vector<6xf32>
    %373 = vector.shape_cast %372 : vector<6xf32> to vector<6x1xf32>
    %cst_332 = arith.constant 1.280000e+02 : f32
    %374 = vector.broadcast %cst_332 : f32 to vector<6x1xf32>
    %375 = arith.divf %373, %374 : vector<6x1xf32>
    %376 = vector.broadcast %375 : vector<6x1xf32> to vector<6x128xf32>
    %377 = arith.subf %369, %376 : vector<6x128xf32>
    %378 = arith.mulf %377, %377 : vector<6x128xf32>
    %cst_333 = arith.constant dense<0.000000e+00> : vector<6xf32>
    %379 = vector.multi_reduction <add>, %378, %cst_333 [1] : vector<6x128xf32> to vector<6xf32>
    %380 = vector.shape_cast %379 : vector<6xf32> to vector<6x1xf32>
    %cst_334 = arith.constant 1.280000e+02 : f32
    %381 = vector.broadcast %cst_334 : f32 to vector<6x1xf32>
    %382 = arith.divf %380, %381 : vector<6x1xf32>
    %383 = vector.broadcast %375 : vector<6x1xf32> to vector<6x128xf32>
    %384 = arith.subf %369, %383 : vector<6x128xf32>
    %cst_335 = arith.constant 9.99999974E-6 : f32
    %385 = vector.broadcast %cst_335 : f32 to vector<6x1xf32>
    %386 = arith.addf %382, %385 : vector<6x1xf32>
    %387 = math.rsqrt %386 : vector<6x1xf32>
    %388 = vector.broadcast %387 : vector<6x1xf32> to vector<6x128xf32>
    %389 = arith.mulf %384, %388 : vector<6x128xf32>
    %390 = vector.broadcast %370 : vector<1x128xf32> to vector<6x128xf32>
    %391 = arith.mulf %389, %390 : vector<6x128xf32>
    %392 = vector.broadcast %371 : vector<1x128xf32> to vector<6x128xf32>
    %393 = arith.addf %391, %392 : vector<6x128xf32>
    %c0_336 = arith.constant 0 : index
    %c0_337 = arith.constant 0 : index
    %c0_338 = arith.constant 0 : index
    %394 = vector.load %arg15[%c0_336, %c0_337, %c0_338] : memref<1x6x128xf32, #tpu.memory_space<vmem>>, vector<1x6x128xf32>
    %395 = vector.shape_cast %394 : vector<1x6x128xf32> to vector<6x128xf32>
    %396 = vector.shape_cast %393 : vector<6x128xf32> to vector<1x6x128xf32>
    tpu.vector_store %arg15[%c0_336, %c0_337, %c0_338], %396 {strides = array<i32>} : memref<1x6x128xf32, #tpu.memory_space<vmem>>, vector<1x6x128xf32>,
    return
  }
  func.func @transform_0(%arg0: i32) -> (i32, i32, i32) {
    %c0_i32 = arith.constant 0 : i32
    %c0_i32_0 = arith.constant 0 : i32
    %c0_i32_1 = arith.constant 0 : i32
    return %arg0, %c0_i32, %c0_i32_0 : i32, i32, i32
  }
  func.func @transform_1(%arg0: i32) -> (i32, i32, i32) {
    %c0_i32 = arith.constant 0 : i32
    %c0_i32_0 = arith.constant 0 : i32
    %c0_i32_1 = arith.constant 0 : i32
    %c0_i32_2 = arith.constant 0 : i32
    return %c0_i32, %c0_i32_0, %c0_i32_1 : i32, i32, i32
  }
  func.func @transform_2(%arg0: i32) -> (i32, i32) {
    %c0_i32 = arith.constant 0 : i32
    %c0_i32_0 = arith.constant 0 : i32
    %c0_i32_1 = arith.constant 0 : i32
    return %c0_i32, %c0_i32_0 : i32, i32
  }
  func.func @transform_3(%arg0: i32) -> (i32, i32) {
    %c0_i32 = arith.constant 0 : i32
    %c0_i32_0 = arith.constant 0 : i32
    %c0_i32_1 = arith.constant 0 : i32
    return %c0_i32, %c0_i32_0 : i32, i32
  }
  func.func @transform_4(%arg0: i32) -> (i32, i32, i32, i32) {
    %c0_i32 = arith.constant 0 : i32
    %c0_i32_0 = arith.constant 0 : i32
    %c0_i32_1 = arith.constant 0 : i32
    %c0_i32_2 = arith.constant 0 : i32
    %c0_i32_3 = arith.constant 0 : i32
    return %c0_i32, %c0_i32_0, %c0_i32_1, %c0_i32_2 : i32, i32, i32, i32
  }
  func.func @transform_5(%arg0: i32) -> (i32, i32, i32, i32) {
    %c0_i32 = arith.constant 0 : i32
    %c0_i32_0 = arith.constant 0 : i32
    %c0_i32_1 = arith.constant 0 : i32
    %c0_i32_2 = arith.constant 0 : i32
    %c0_i32_3 = arith.constant 0 : i32
    return %c0_i32, %c0_i32_0, %c0_i32_1, %c0_i32_2 : i32, i32, i32, i32
  }
  func.func @transform_6(%arg0: i32) -> (i32, i32) {
    %c0_i32 = arith.constant 0 : i32
    %c0_i32_0 = arith.constant 0 : i32
    %c0_i32_1 = arith.constant 0 : i32
    return %c0_i32, %c0_i32_0 : i32, i32
  }
  func.func @transform_7(%arg0: i32) -> (i32, i32) {
    %c0_i32 = arith.constant 0 : i32
    %c0_i32_0 = arith.constant 0 : i32
    %c0_i32_1 = arith.constant 0 : i32
    return %c0_i32, %c0_i32_0 : i32, i32
  }
  func.func @transform_8(%arg0: i32) -> (i32, i32) {
    %c0_i32 = arith.constant 0 : i32
    %c0_i32_0 = arith.constant 0 : i32
    %c0_i32_1 = arith.constant 0 : i32
    return %c0_i32, %c0_i32_0 : i32, i32
  }
  func.func @transform_9(%arg0: i32) -> (i32, i32) {
    %c0_i32 = arith.constant 0 : i32
    %c0_i32_0 = arith.constant 0 : i32
    %c0_i32_1 = arith.constant 0 : i32
    return %c0_i32, %c0_i32_0 : i32, i32
  }
  func.func @transform_10(%arg0: i32) -> (i32, i32, i32) {
    %c0_i32 = arith.constant 0 : i32
    %c0_i32_0 = arith.constant 0 : i32
    %c0_i32_1 = arith.constant 0 : i32
    %c0_i32_2 = arith.constant 0 : i32
    return %c0_i32, %c0_i32_0, %c0_i32_1 : i32, i32, i32
  }
  func.func @transform_11(%arg0: i32) -> (i32, i32) {
    %c0_i32 = arith.constant 0 : i32
    %c0_i32_0 = arith.constant 0 : i32
    %c0_i32_1 = arith.constant 0 : i32
    return %c0_i32, %c0_i32_0 : i32, i32
  }
  func.func @transform_12(%arg0: i32) -> (i32, i32) {
    %c0_i32 = arith.constant 0 : i32
    %c0_i32_0 = arith.constant 0 : i32
    %c0_i32_1 = arith.constant 0 : i32
    return %c0_i32, %c0_i32_0 : i32, i32
  }
  func.func @transform_13(%arg0: i32) -> (i32, i32) {
    %c0_i32 = arith.constant 0 : i32
    %c0_i32_0 = arith.constant 0 : i32
    %c0_i32_1 = arith.constant 0 : i32
    return %c0_i32, %c0_i32_0 : i32, i32
  }
  func.func @transform_14(%arg0: i32) -> (i32, i32, i32) {
    %c0_i32 = arith.constant 0 : i32
    %c0_i32_0 = arith.constant 0 : i32
    %c0_i32_1 = arith.constant 0 : i32
    return %arg0, %c0_i32, %c0_i32_0 : i32, i32, i32
  }
}

module attributes {stable_mosaic.version = 11 : i64} {
  func.func @_transformer_layer_kernel(%arg0: memref<12x128xf32, #tpu.memory_space<vmem>>, %arg1: memref<128x384xbf16, #tpu.memory_space<vmem>>, %arg2: memref<1x384xf32, #tpu.memory_space<vmem>>, %arg3: memref<128x128xbf16, #tpu.memory_space<vmem>>, %arg4: memref<1x128xf32, #tpu.memory_space<vmem>>, %arg5: memref<1x128xf32, #tpu.memory_space<vmem>>, %arg6: memref<1x128xf32, #tpu.memory_space<vmem>>, %arg7: memref<128x256xbf16, #tpu.memory_space<vmem>>, %arg8: memref<1x256xf32, #tpu.memory_space<vmem>>, %arg9: memref<256x128xbf16, #tpu.memory_space<vmem>>, %arg10: memref<1x128xf32, #tpu.memory_space<vmem>>, %arg11: memref<1x128xf32, #tpu.memory_space<vmem>>, %arg12: memref<1x128xf32, #tpu.memory_space<vmem>>, %arg13: memref<12x128xf32, #tpu.memory_space<vmem>>) attributes {dimension_semantics = [], scalar_prefetch = 0 : i64, scratch_operands = 0 : i64, tpu.core_type = #tpu.core_type<tc>} {
    %c0 = arith.constant 0 : index
    %c0_0 = arith.constant 0 : index
    %0 = vector.load %arg0[%c0, %c0_0] : memref<12x128xf32, #tpu.memory_space<vmem>>, vector<12x128xf32>
    %1 = arith.truncf %0 : vector<12x128xf32> to vector<12x128xbf16>
    %c0_1 = arith.constant 0 : index
    %c0_2 = arith.constant 0 : index
    %2 = vector.load %arg1[%c0_1, %c0_2] : memref<128x384xbf16, #tpu.memory_space<vmem>>, vector<128x384xbf16>
    %cst = arith.constant dense<0.000000e+00> : vector<12x384xf32>
    %3 = tpu.matmul %1, %2, %cst {dimension_numbers = #tpu.dot_dimension_numbers<[1], [0], [0], [1], [0, 0, 1, 1], [], []>} : vector<12x128xbf16>, vector<128x384xbf16>, vector<12x384xf32> -> vector<12x384xf32>
    %c0_3 = arith.constant 0 : index
    %c0_4 = arith.constant 0 : index
    %4 = vector.load %arg2[%c0_3, %c0_4] : memref<1x384xf32, #tpu.memory_space<vmem>>, vector<1x384xf32>
    %5 = vector.broadcast %4 : vector<1x384xf32> to vector<12x384xf32>
    %6 = arith.addf %3, %5 : vector<12x384xf32>
    %7 = vector.extract_strided_slice %6 {offsets = [0, 0], sizes = [12, 128], strides = [1, 1]} : vector<12x384xf32> to vector<12x128xf32>
    %cst_5 = arith.constant 0.176776692 : f32
    %8 = vector.broadcast %cst_5 : f32 to vector<12x128xf32>
    %9 = arith.mulf %7, %8 : vector<12x128xf32>
    %10 = vector.extract_strided_slice %6 {offsets = [0, 128], sizes = [12, 128], strides = [1, 1]} : vector<12x384xf32> to vector<12x128xf32>
    %11 = vector.extract_strided_slice %6 {offsets = [0, 256], sizes = [12, 128], strides = [1, 1]} : vector<12x384xf32> to vector<12x128xf32>
    %12 = vector.extract_strided_slice %9 {offsets = [0, 0], sizes = [6, 32], strides = [1, 1]} : vector<12x128xf32> to vector<6x32xf32>
    %13 = vector.extract_strided_slice %10 {offsets = [0, 0], sizes = [6, 32], strides = [1, 1]} : vector<12x128xf32> to vector<6x32xf32>
    %14 = vector.extract_strided_slice %11 {offsets = [0, 0], sizes = [6, 32], strides = [1, 1]} : vector<12x128xf32> to vector<6x32xf32>
    %cst_6 = arith.constant dense<0.000000e+00> : vector<6x6xf32>
    %15 = tpu.matmul %12, %13, %cst_6 {dimension_numbers = #tpu.dot_dimension_numbers<[1], [1], [0], [0], [0, 0, 1, 0], [], []>} : vector<6x32xf32>, vector<6x32xf32>, vector<6x6xf32> -> vector<6x6xf32>
    %cst_7 = arith.constant dense<0xFF800000> : vector<6xf32>
    %16 = vector.multi_reduction <maximumf>, %15, %cst_7 [1] : vector<6x6xf32> to vector<6xf32>
    %17 = vector.shape_cast %16 : vector<6xf32> to vector<6x1xf32>
    %18 = vector.broadcast %17 : vector<6x1xf32> to vector<6x6xf32>
    %19 = arith.subf %15, %18 : vector<6x6xf32>
    %20 = math.exp %19 : vector<6x6xf32>
    %cst_8 = arith.constant dense<0.000000e+00> : vector<6xf32>
    %21 = vector.multi_reduction <add>, %20, %cst_8 [1] : vector<6x6xf32> to vector<6xf32>
    %22 = vector.shape_cast %21 : vector<6xf32> to vector<6x1xf32>
    %23 = tpu.reciprocal %22 {approx = true} : vector<6x1xf32> -> vector<6x1xf32>
    %24 = vector.broadcast %23 : vector<6x1xf32> to vector<6x6xf32>
    %25 = arith.mulf %20, %24 : vector<6x6xf32>
    %cst_9 = arith.constant dense<0.000000e+00> : vector<6x32xf32>
    %26 = tpu.matmul %25, %14, %cst_9 {dimension_numbers = #tpu.dot_dimension_numbers<[1], [0], [0], [1], [0, 0, 1, 1], [], []>} : vector<6x6xf32>, vector<6x32xf32>, vector<6x32xf32> -> vector<6x32xf32>
    %27 = vector.extract_strided_slice %9 {offsets = [0, 32], sizes = [6, 32], strides = [1, 1]} : vector<12x128xf32> to vector<6x32xf32>
    %28 = vector.extract_strided_slice %10 {offsets = [0, 32], sizes = [6, 32], strides = [1, 1]} : vector<12x128xf32> to vector<6x32xf32>
    %29 = vector.extract_strided_slice %11 {offsets = [0, 32], sizes = [6, 32], strides = [1, 1]} : vector<12x128xf32> to vector<6x32xf32>
    %cst_10 = arith.constant dense<0.000000e+00> : vector<6x6xf32>
    %30 = tpu.matmul %27, %28, %cst_10 {dimension_numbers = #tpu.dot_dimension_numbers<[1], [1], [0], [0], [0, 0, 1, 0], [], []>} : vector<6x32xf32>, vector<6x32xf32>, vector<6x6xf32> -> vector<6x6xf32>
    %cst_11 = arith.constant dense<0xFF800000> : vector<6xf32>
    %31 = vector.multi_reduction <maximumf>, %30, %cst_11 [1] : vector<6x6xf32> to vector<6xf32>
    %32 = vector.shape_cast %31 : vector<6xf32> to vector<6x1xf32>
    %33 = vector.broadcast %32 : vector<6x1xf32> to vector<6x6xf32>
    %34 = arith.subf %30, %33 : vector<6x6xf32>
    %35 = math.exp %34 : vector<6x6xf32>
    %cst_12 = arith.constant dense<0.000000e+00> : vector<6xf32>
    %36 = vector.multi_reduction <add>, %35, %cst_12 [1] : vector<6x6xf32> to vector<6xf32>
    %37 = vector.shape_cast %36 : vector<6xf32> to vector<6x1xf32>
    %38 = tpu.reciprocal %37 {approx = true} : vector<6x1xf32> -> vector<6x1xf32>
    %39 = vector.broadcast %38 : vector<6x1xf32> to vector<6x6xf32>
    %40 = arith.mulf %35, %39 : vector<6x6xf32>
    %cst_13 = arith.constant dense<0.000000e+00> : vector<6x32xf32>
    %41 = tpu.matmul %40, %29, %cst_13 {dimension_numbers = #tpu.dot_dimension_numbers<[1], [0], [0], [1], [0, 0, 1, 1], [], []>} : vector<6x6xf32>, vector<6x32xf32>, vector<6x32xf32> -> vector<6x32xf32>
    %42 = vector.extract_strided_slice %9 {offsets = [0, 64], sizes = [6, 32], strides = [1, 1]} : vector<12x128xf32> to vector<6x32xf32>
    %43 = vector.extract_strided_slice %10 {offsets = [0, 64], sizes = [6, 32], strides = [1, 1]} : vector<12x128xf32> to vector<6x32xf32>
    %44 = vector.extract_strided_slice %11 {offsets = [0, 64], sizes = [6, 32], strides = [1, 1]} : vector<12x128xf32> to vector<6x32xf32>
    %cst_14 = arith.constant dense<0.000000e+00> : vector<6x6xf32>
    %45 = tpu.matmul %42, %43, %cst_14 {dimension_numbers = #tpu.dot_dimension_numbers<[1], [1], [0], [0], [0, 0, 1, 0], [], []>} : vector<6x32xf32>, vector<6x32xf32>, vector<6x6xf32> -> vector<6x6xf32>
    %cst_15 = arith.constant dense<0xFF800000> : vector<6xf32>
    %46 = vector.multi_reduction <maximumf>, %45, %cst_15 [1] : vector<6x6xf32> to vector<6xf32>
    %47 = vector.shape_cast %46 : vector<6xf32> to vector<6x1xf32>
    %48 = vector.broadcast %47 : vector<6x1xf32> to vector<6x6xf32>
    %49 = arith.subf %45, %48 : vector<6x6xf32>
    %50 = math.exp %49 : vector<6x6xf32>
    %cst_16 = arith.constant dense<0.000000e+00> : vector<6xf32>
    %51 = vector.multi_reduction <add>, %50, %cst_16 [1] : vector<6x6xf32> to vector<6xf32>
    %52 = vector.shape_cast %51 : vector<6xf32> to vector<6x1xf32>
    %53 = tpu.reciprocal %52 {approx = true} : vector<6x1xf32> -> vector<6x1xf32>
    %54 = vector.broadcast %53 : vector<6x1xf32> to vector<6x6xf32>
    %55 = arith.mulf %50, %54 : vector<6x6xf32>
    %cst_17 = arith.constant dense<0.000000e+00> : vector<6x32xf32>
    %56 = tpu.matmul %55, %44, %cst_17 {dimension_numbers = #tpu.dot_dimension_numbers<[1], [0], [0], [1], [0, 0, 1, 1], [], []>} : vector<6x6xf32>, vector<6x32xf32>, vector<6x32xf32> -> vector<6x32xf32>
    %57 = vector.extract_strided_slice %9 {offsets = [0, 96], sizes = [6, 32], strides = [1, 1]} : vector<12x128xf32> to vector<6x32xf32>
    %58 = vector.extract_strided_slice %10 {offsets = [0, 96], sizes = [6, 32], strides = [1, 1]} : vector<12x128xf32> to vector<6x32xf32>
    %59 = vector.extract_strided_slice %11 {offsets = [0, 96], sizes = [6, 32], strides = [1, 1]} : vector<12x128xf32> to vector<6x32xf32>
    %cst_18 = arith.constant dense<0.000000e+00> : vector<6x6xf32>
    %60 = tpu.matmul %57, %58, %cst_18 {dimension_numbers = #tpu.dot_dimension_numbers<[1], [1], [0], [0], [0, 0, 1, 0], [], []>} : vector<6x32xf32>, vector<6x32xf32>, vector<6x6xf32> -> vector<6x6xf32>
    %cst_19 = arith.constant dense<0xFF800000> : vector<6xf32>
    %61 = vector.multi_reduction <maximumf>, %60, %cst_19 [1] : vector<6x6xf32> to vector<6xf32>
    %62 = vector.shape_cast %61 : vector<6xf32> to vector<6x1xf32>
    %63 = vector.broadcast %62 : vector<6x1xf32> to vector<6x6xf32>
    %64 = arith.subf %60, %63 : vector<6x6xf32>
    %65 = math.exp %64 : vector<6x6xf32>
    %cst_20 = arith.constant dense<0.000000e+00> : vector<6xf32>
    %66 = vector.multi_reduction <add>, %65, %cst_20 [1] : vector<6x6xf32> to vector<6xf32>
    %67 = vector.shape_cast %66 : vector<6xf32> to vector<6x1xf32>
    %68 = tpu.reciprocal %67 {approx = true} : vector<6x1xf32> -> vector<6x1xf32>
    %69 = vector.broadcast %68 : vector<6x1xf32> to vector<6x6xf32>
    %70 = arith.mulf %65, %69 : vector<6x6xf32>
    %cst_21 = arith.constant dense<0.000000e+00> : vector<6x32xf32>
    %71 = tpu.matmul %70, %59, %cst_21 {dimension_numbers = #tpu.dot_dimension_numbers<[1], [0], [0], [1], [0, 0, 1, 1], [], []>} : vector<6x6xf32>, vector<6x32xf32>, vector<6x32xf32> -> vector<6x32xf32>
    %72 = tpu.concatenate %26, %41, %56, %71 in 1 : vector<6x32xf32>, vector<6x32xf32>, vector<6x32xf32>, vector<6x32xf32> -> vector<6x128xf32>
    %73 = vector.extract_strided_slice %9 {offsets = [6, 0], sizes = [6, 32], strides = [1, 1]} : vector<12x128xf32> to vector<6x32xf32>
    %74 = vector.extract_strided_slice %10 {offsets = [6, 0], sizes = [6, 32], strides = [1, 1]} : vector<12x128xf32> to vector<6x32xf32>
    %75 = vector.extract_strided_slice %11 {offsets = [6, 0], sizes = [6, 32], strides = [1, 1]} : vector<12x128xf32> to vector<6x32xf32>
    %cst_22 = arith.constant dense<0.000000e+00> : vector<6x6xf32>
    %76 = tpu.matmul %73, %74, %cst_22 {dimension_numbers = #tpu.dot_dimension_numbers<[1], [1], [0], [0], [0, 0, 1, 0], [], []>} : vector<6x32xf32>, vector<6x32xf32>, vector<6x6xf32> -> vector<6x6xf32>
    %cst_23 = arith.constant dense<0xFF800000> : vector<6xf32>
    %77 = vector.multi_reduction <maximumf>, %76, %cst_23 [1] : vector<6x6xf32> to vector<6xf32>
    %78 = vector.shape_cast %77 : vector<6xf32> to vector<6x1xf32>
    %79 = vector.broadcast %78 : vector<6x1xf32> to vector<6x6xf32>
    %80 = arith.subf %76, %79 : vector<6x6xf32>
    %81 = math.exp %80 : vector<6x6xf32>
    %cst_24 = arith.constant dense<0.000000e+00> : vector<6xf32>
    %82 = vector.multi_reduction <add>, %81, %cst_24 [1] : vector<6x6xf32> to vector<6xf32>
    %83 = vector.shape_cast %82 : vector<6xf32> to vector<6x1xf32>
    %84 = tpu.reciprocal %83 {approx = true} : vector<6x1xf32> -> vector<6x1xf32>
    %85 = vector.broadcast %84 : vector<6x1xf32> to vector<6x6xf32>
    %86 = arith.mulf %81, %85 : vector<6x6xf32>
    %cst_25 = arith.constant dense<0.000000e+00> : vector<6x32xf32>
    %87 = tpu.matmul %86, %75, %cst_25 {dimension_numbers = #tpu.dot_dimension_numbers<[1], [0], [0], [1], [0, 0, 1, 1], [], []>} : vector<6x6xf32>, vector<6x32xf32>, vector<6x32xf32> -> vector<6x32xf32>
    %88 = vector.extract_strided_slice %9 {offsets = [6, 32], sizes = [6, 32], strides = [1, 1]} : vector<12x128xf32> to vector<6x32xf32>
    %89 = vector.extract_strided_slice %10 {offsets = [6, 32], sizes = [6, 32], strides = [1, 1]} : vector<12x128xf32> to vector<6x32xf32>
    %90 = vector.extract_strided_slice %11 {offsets = [6, 32], sizes = [6, 32], strides = [1, 1]} : vector<12x128xf32> to vector<6x32xf32>
    %cst_26 = arith.constant dense<0.000000e+00> : vector<6x6xf32>
    %91 = tpu.matmul %88, %89, %cst_26 {dimension_numbers = #tpu.dot_dimension_numbers<[1], [1], [0], [0], [0, 0, 1, 0], [], []>} : vector<6x32xf32>, vector<6x32xf32>, vector<6x6xf32> -> vector<6x6xf32>
    %cst_27 = arith.constant dense<0xFF800000> : vector<6xf32>
    %92 = vector.multi_reduction <maximumf>, %91, %cst_27 [1] : vector<6x6xf32> to vector<6xf32>
    %93 = vector.shape_cast %92 : vector<6xf32> to vector<6x1xf32>
    %94 = vector.broadcast %93 : vector<6x1xf32> to vector<6x6xf32>
    %95 = arith.subf %91, %94 : vector<6x6xf32>
    %96 = math.exp %95 : vector<6x6xf32>
    %cst_28 = arith.constant dense<0.000000e+00> : vector<6xf32>
    %97 = vector.multi_reduction <add>, %96, %cst_28 [1] : vector<6x6xf32> to vector<6xf32>
    %98 = vector.shape_cast %97 : vector<6xf32> to vector<6x1xf32>
    %99 = tpu.reciprocal %98 {approx = true} : vector<6x1xf32> -> vector<6x1xf32>
    %100 = vector.broadcast %99 : vector<6x1xf32> to vector<6x6xf32>
    %101 = arith.mulf %96, %100 : vector<6x6xf32>
    %cst_29 = arith.constant dense<0.000000e+00> : vector<6x32xf32>
    %102 = tpu.matmul %101, %90, %cst_29 {dimension_numbers = #tpu.dot_dimension_numbers<[1], [0], [0], [1], [0, 0, 1, 1], [], []>} : vector<6x6xf32>, vector<6x32xf32>, vector<6x32xf32> -> vector<6x32xf32>
    %103 = vector.extract_strided_slice %9 {offsets = [6, 64], sizes = [6, 32], strides = [1, 1]} : vector<12x128xf32> to vector<6x32xf32>
    %104 = vector.extract_strided_slice %10 {offsets = [6, 64], sizes = [6, 32], strides = [1, 1]} : vector<12x128xf32> to vector<6x32xf32>
    %105 = vector.extract_strided_slice %11 {offsets = [6, 64], sizes = [6, 32], strides = [1, 1]} : vector<12x128xf32> to vector<6x32xf32>
    %cst_30 = arith.constant dense<0.000000e+00> : vector<6x6xf32>
    %106 = tpu.matmul %103, %104, %cst_30 {dimension_numbers = #tpu.dot_dimension_numbers<[1], [1], [0], [0], [0, 0, 1, 0], [], []>} : vector<6x32xf32>, vector<6x32xf32>, vector<6x6xf32> -> vector<6x6xf32>
    %cst_31 = arith.constant dense<0xFF800000> : vector<6xf32>
    %107 = vector.multi_reduction <maximumf>, %106, %cst_31 [1] : vector<6x6xf32> to vector<6xf32>
    %108 = vector.shape_cast %107 : vector<6xf32> to vector<6x1xf32>
    %109 = vector.broadcast %108 : vector<6x1xf32> to vector<6x6xf32>
    %110 = arith.subf %106, %109 : vector<6x6xf32>
    %111 = math.exp %110 : vector<6x6xf32>
    %cst_32 = arith.constant dense<0.000000e+00> : vector<6xf32>
    %112 = vector.multi_reduction <add>, %111, %cst_32 [1] : vector<6x6xf32> to vector<6xf32>
    %113 = vector.shape_cast %112 : vector<6xf32> to vector<6x1xf32>
    %114 = tpu.reciprocal %113 {approx = true} : vector<6x1xf32> -> vector<6x1xf32>
    %115 = vector.broadcast %114 : vector<6x1xf32> to vector<6x6xf32>
    %116 = arith.mulf %111, %115 : vector<6x6xf32>
    %cst_33 = arith.constant dense<0.000000e+00> : vector<6x32xf32>
    %117 = tpu.matmul %116, %105, %cst_33 {dimension_numbers = #tpu.dot_dimension_numbers<[1], [0], [0], [1], [0, 0, 1, 1], [], []>} : vector<6x6xf32>, vector<6x32xf32>, vector<6x32xf32> -> vector<6x32xf32>
    %118 = vector.extract_strided_slice %9 {offsets = [6, 96], sizes = [6, 32], strides = [1, 1]} : vector<12x128xf32> to vector<6x32xf32>
    %119 = vector.extract_strided_slice %10 {offsets = [6, 96], sizes = [6, 32], strides = [1, 1]} : vector<12x128xf32> to vector<6x32xf32>
    %120 = vector.extract_strided_slice %11 {offsets = [6, 96], sizes = [6, 32], strides = [1, 1]} : vector<12x128xf32> to vector<6x32xf32>
    %cst_34 = arith.constant dense<0.000000e+00> : vector<6x6xf32>
    %121 = tpu.matmul %118, %119, %cst_34 {dimension_numbers = #tpu.dot_dimension_numbers<[1], [1], [0], [0], [0, 0, 1, 0], [], []>} : vector<6x32xf32>, vector<6x32xf32>, vector<6x6xf32> -> vector<6x6xf32>
    %cst_35 = arith.constant dense<0xFF800000> : vector<6xf32>
    %122 = vector.multi_reduction <maximumf>, %121, %cst_35 [1] : vector<6x6xf32> to vector<6xf32>
    %123 = vector.shape_cast %122 : vector<6xf32> to vector<6x1xf32>
    %124 = vector.broadcast %123 : vector<6x1xf32> to vector<6x6xf32>
    %125 = arith.subf %121, %124 : vector<6x6xf32>
    %126 = math.exp %125 : vector<6x6xf32>
    %cst_36 = arith.constant dense<0.000000e+00> : vector<6xf32>
    %127 = vector.multi_reduction <add>, %126, %cst_36 [1] : vector<6x6xf32> to vector<6xf32>
    %128 = vector.shape_cast %127 : vector<6xf32> to vector<6x1xf32>
    %129 = tpu.reciprocal %128 {approx = true} : vector<6x1xf32> -> vector<6x1xf32>
    %130 = vector.broadcast %129 : vector<6x1xf32> to vector<6x6xf32>
    %131 = arith.mulf %126, %130 : vector<6x6xf32>
    %cst_37 = arith.constant dense<0.000000e+00> : vector<6x32xf32>
    %132 = tpu.matmul %131, %120, %cst_37 {dimension_numbers = #tpu.dot_dimension_numbers<[1], [0], [0], [1], [0, 0, 1, 1], [], []>} : vector<6x6xf32>, vector<6x32xf32>, vector<6x32xf32> -> vector<6x32xf32>
    %133 = tpu.concatenate %87, %102, %117, %132 in 1 : vector<6x32xf32>, vector<6x32xf32>, vector<6x32xf32>, vector<6x32xf32> -> vector<6x128xf32>
    %134 = tpu.concatenate %72, %133 in 0 : vector<6x128xf32>, vector<6x128xf32> -> vector<12x128xf32>
    %135 = arith.truncf %134 : vector<12x128xf32> to vector<12x128xbf16>
    %c0_38 = arith.constant 0 : index
    %c0_39 = arith.constant 0 : index
    %136 = vector.load %arg3[%c0_38, %c0_39] : memref<128x128xbf16, #tpu.memory_space<vmem>>, vector<128x128xbf16>
    %cst_40 = arith.constant dense<0.000000e+00> : vector<12x128xf32>
    %137 = tpu.matmul %135, %136, %cst_40 {dimension_numbers = #tpu.dot_dimension_numbers<[1], [0], [0], [1], [0, 0, 1, 1], [], []>} : vector<12x128xbf16>, vector<128x128xbf16>, vector<12x128xf32> -> vector<12x128xf32>
    %c0_41 = arith.constant 0 : index
    %c0_42 = arith.constant 0 : index
    %138 = vector.load %arg4[%c0_41, %c0_42] : memref<1x128xf32, #tpu.memory_space<vmem>>, vector<1x128xf32>
    %139 = vector.broadcast %138 : vector<1x128xf32> to vector<12x128xf32>
    %140 = arith.addf %137, %139 : vector<12x128xf32>
    %141 = arith.addf %0, %140 : vector<12x128xf32>
    %c0_43 = arith.constant 0 : index
    %c0_44 = arith.constant 0 : index
    %142 = vector.load %arg5[%c0_43, %c0_44] : memref<1x128xf32, #tpu.memory_space<vmem>>, vector<1x128xf32>
    %c0_45 = arith.constant 0 : index
    %c0_46 = arith.constant 0 : index
    %143 = vector.load %arg6[%c0_45, %c0_46] : memref<1x128xf32, #tpu.memory_space<vmem>>, vector<1x128xf32>
    %cst_47 = arith.constant dense<0.000000e+00> : vector<12xf32>
    %144 = vector.multi_reduction <add>, %141, %cst_47 [1] : vector<12x128xf32> to vector<12xf32>
    %145 = vector.shape_cast %144 : vector<12xf32> to vector<12x1xf32>
    %cst_48 = arith.constant 1.280000e+02 : f32
    %146 = vector.broadcast %cst_48 : f32 to vector<12x1xf32>
    %147 = arith.divf %145, %146 : vector<12x1xf32>
    %148 = vector.broadcast %147 : vector<12x1xf32> to vector<12x128xf32>
    %149 = arith.subf %141, %148 : vector<12x128xf32>
    %150 = arith.mulf %149, %149 : vector<12x128xf32>
    %cst_49 = arith.constant dense<0.000000e+00> : vector<12xf32>
    %151 = vector.multi_reduction <add>, %150, %cst_49 [1] : vector<12x128xf32> to vector<12xf32>
    %152 = vector.shape_cast %151 : vector<12xf32> to vector<12x1xf32>
    %cst_50 = arith.constant 1.280000e+02 : f32
    %153 = vector.broadcast %cst_50 : f32 to vector<12x1xf32>
    %154 = arith.divf %152, %153 : vector<12x1xf32>
    %155 = vector.broadcast %147 : vector<12x1xf32> to vector<12x128xf32>
    %156 = arith.subf %141, %155 : vector<12x128xf32>
    %cst_51 = arith.constant 9.99999974E-6 : f32
    %157 = vector.broadcast %cst_51 : f32 to vector<12x1xf32>
    %158 = arith.addf %154, %157 : vector<12x1xf32>
    %159 = math.rsqrt %158 : vector<12x1xf32>
    %160 = vector.broadcast %159 : vector<12x1xf32> to vector<12x128xf32>
    %161 = arith.mulf %156, %160 : vector<12x128xf32>
    %162 = vector.broadcast %142 : vector<1x128xf32> to vector<12x128xf32>
    %163 = arith.mulf %161, %162 : vector<12x128xf32>
    %164 = vector.broadcast %143 : vector<1x128xf32> to vector<12x128xf32>
    %165 = arith.addf %163, %164 : vector<12x128xf32>
    %166 = arith.truncf %165 : vector<12x128xf32> to vector<12x128xbf16>
    %c0_52 = arith.constant 0 : index
    %c0_53 = arith.constant 0 : index
    %167 = vector.load %arg7[%c0_52, %c0_53] : memref<128x256xbf16, #tpu.memory_space<vmem>>, vector<128x256xbf16>
    %cst_54 = arith.constant dense<0.000000e+00> : vector<12x256xf32>
    %168 = tpu.matmul %166, %167, %cst_54 {dimension_numbers = #tpu.dot_dimension_numbers<[1], [0], [0], [1], [0, 0, 1, 1], [], []>} : vector<12x128xbf16>, vector<128x256xbf16>, vector<12x256xf32> -> vector<12x256xf32>
    %c0_55 = arith.constant 0 : index
    %c0_56 = arith.constant 0 : index
    %169 = vector.load %arg8[%c0_55, %c0_56] : memref<1x256xf32, #tpu.memory_space<vmem>>, vector<1x256xf32>
    %170 = vector.broadcast %169 : vector<1x256xf32> to vector<12x256xf32>
    %171 = arith.addf %168, %170 : vector<12x256xf32>
    %cst_57 = arith.constant 5.000000e-01 : f32
    %172 = vector.broadcast %cst_57 : f32 to vector<12x256xf32>
    %173 = arith.mulf %172, %171 : vector<12x256xf32>
    %cst_58 = arith.constant 4.471500e-02 : f32
    %174 = vector.broadcast %cst_58 : f32 to vector<12x256xf32>
    %175 = arith.mulf %174, %171 : vector<12x256xf32>
    %176 = arith.mulf %175, %171 : vector<12x256xf32>
    %177 = arith.mulf %176, %171 : vector<12x256xf32>
    %178 = arith.addf %171, %177 : vector<12x256xf32>
    %cst_59 = arith.constant 0.797884583 : f32
    %179 = vector.broadcast %cst_59 : f32 to vector<12x256xf32>
    %180 = arith.mulf %179, %178 : vector<12x256xf32>
    %181 = math.tanh %180 : vector<12x256xf32>
    %cst_60 = arith.constant 1.000000e+00 : f32
    %182 = vector.broadcast %cst_60 : f32 to vector<12x256xf32>
    %183 = arith.addf %182, %181 : vector<12x256xf32>
    %184 = arith.mulf %173, %183 : vector<12x256xf32>
    %185 = arith.truncf %184 : vector<12x256xf32> to vector<12x256xbf16>
    %c0_61 = arith.constant 0 : index
    %c0_62 = arith.constant 0 : index
    %186 = vector.load %arg9[%c0_61, %c0_62] : memref<256x128xbf16, #tpu.memory_space<vmem>>, vector<256x128xbf16>
    %cst_63 = arith.constant dense<0.000000e+00> : vector<12x128xf32>
    %187 = tpu.matmul %185, %186, %cst_63 {dimension_numbers = #tpu.dot_dimension_numbers<[1], [0], [0], [1], [0, 0, 1, 1], [], []>} : vector<12x256xbf16>, vector<256x128xbf16>, vector<12x128xf32> -> vector<12x128xf32>
    %c0_64 = arith.constant 0 : index
    %c0_65 = arith.constant 0 : index
    %188 = vector.load %arg10[%c0_64, %c0_65] : memref<1x128xf32, #tpu.memory_space<vmem>>, vector<1x128xf32>
    %189 = vector.broadcast %188 : vector<1x128xf32> to vector<12x128xf32>
    %190 = arith.addf %187, %189 : vector<12x128xf32>
    %191 = arith.addf %165, %190 : vector<12x128xf32>
    %c0_66 = arith.constant 0 : index
    %c0_67 = arith.constant 0 : index
    %192 = vector.load %arg11[%c0_66, %c0_67] : memref<1x128xf32, #tpu.memory_space<vmem>>, vector<1x128xf32>
    %c0_68 = arith.constant 0 : index
    %c0_69 = arith.constant 0 : index
    %193 = vector.load %arg12[%c0_68, %c0_69] : memref<1x128xf32, #tpu.memory_space<vmem>>, vector<1x128xf32>
    %cst_70 = arith.constant dense<0.000000e+00> : vector<12xf32>
    %194 = vector.multi_reduction <add>, %191, %cst_70 [1] : vector<12x128xf32> to vector<12xf32>
    %195 = vector.shape_cast %194 : vector<12xf32> to vector<12x1xf32>
    %cst_71 = arith.constant 1.280000e+02 : f32
    %196 = vector.broadcast %cst_71 : f32 to vector<12x1xf32>
    %197 = arith.divf %195, %196 : vector<12x1xf32>
    %198 = vector.broadcast %197 : vector<12x1xf32> to vector<12x128xf32>
    %199 = arith.subf %191, %198 : vector<12x128xf32>
    %200 = arith.mulf %199, %199 : vector<12x128xf32>
    %cst_72 = arith.constant dense<0.000000e+00> : vector<12xf32>
    %201 = vector.multi_reduction <add>, %200, %cst_72 [1] : vector<12x128xf32> to vector<12xf32>
    %202 = vector.shape_cast %201 : vector<12xf32> to vector<12x1xf32>
    %cst_73 = arith.constant 1.280000e+02 : f32
    %203 = vector.broadcast %cst_73 : f32 to vector<12x1xf32>
    %204 = arith.divf %202, %203 : vector<12x1xf32>
    %205 = vector.broadcast %197 : vector<12x1xf32> to vector<12x128xf32>
    %206 = arith.subf %191, %205 : vector<12x128xf32>
    %cst_74 = arith.constant 9.99999974E-6 : f32
    %207 = vector.broadcast %cst_74 : f32 to vector<12x1xf32>
    %208 = arith.addf %204, %207 : vector<12x1xf32>
    %209 = math.rsqrt %208 : vector<12x1xf32>
    %210 = vector.broadcast %209 : vector<12x1xf32> to vector<12x128xf32>
    %211 = arith.mulf %206, %210 : vector<12x128xf32>
    %212 = vector.broadcast %192 : vector<1x128xf32> to vector<12x128xf32>
    %213 = arith.mulf %211, %212 : vector<12x128xf32>
    %214 = vector.broadcast %193 : vector<1x128xf32> to vector<12x128xf32>
    %215 = arith.addf %213, %214 : vector<12x128xf32>
    %c0_75 = arith.constant 0 : index
    %c0_76 = arith.constant 0 : index
    %216 = vector.load %arg13[%c0_75, %c0_76] : memref<12x128xf32, #tpu.memory_space<vmem>>, vector<12x128xf32>
    tpu.vector_store %arg13[%c0_75, %c0_76], %215 {strides = array<i32>} : memref<12x128xf32, #tpu.memory_space<vmem>>, vector<12x128xf32>,
    return
  }
}

</mosaic_0001>

<llo_original>
// kernel: ssl_model_forward.4
$region0: #{ssl_model_forward.4}
  #allocation0 [shape = 'u32[]', space=smem, size = 0x4, offset = 0x4, fixed_abs, tag = 'smem constant byte address 0x4 - core index']
  #allocation1 [shape = 'u32[144,128]{1,0:T(1,128)}', space=vmem, size = 0x12000, scoped, tag = 'internal scratch']
  %s0 = inlined_call_operand.vmem [shape: f32[12,128], index: 0, kind: input, shape index: {}]
  %s1 = inlined_call_operand.vmem [shape: bf16[128,384], index: 1, kind: input, shape index: {}]
  %s2 = inlined_call_operand.vmem [shape: f32[1,384], index: 2, kind: input, shape index: {}]
  %s3 = inlined_call_operand.vmem [shape: bf16[128,128], index: 3, kind: input, shape index: {}]
  %s4 = inlined_call_operand.vmem [shape: f32[1,128], index: 4, kind: input, shape index: {}]
  %s5 = inlined_call_operand.vmem [shape: f32[1,128], index: 5, kind: input, shape index: {}]
  %s6 = inlined_call_operand.vmem [shape: f32[1,128], index: 6, kind: input, shape index: {}]
  %s7 = inlined_call_operand.vmem [shape: bf16[128,256], index: 7, kind: input, shape index: {}]
  %s8 = inlined_call_operand.vmem [shape: f32[1,256], index: 8, kind: input, shape index: {}]
  %s9 = inlined_call_operand.vmem [shape: bf16[256,128], index: 9, kind: input, shape index: {}]
  %s10 = inlined_call_operand.vmem [shape: f32[1,128], index: 10, kind: input, shape index: {}]
  %s11 = inlined_call_operand.vmem [shape: f32[1,128], index: 11, kind: input, shape index: {}]
  %s12 = inlined_call_operand.vmem [shape: f32[1,128], index: 12, kind: input, shape index: {}]
  %s13 = inlined_call_operand.vmem [shape: f32[12,128], index: 13, kind: output, shape index: {}]
  %s14 = sld [smem:[#allocation0]]
  $region62: #{ssl_model_forward.4} parent=0
    _
  %s16 = ssub.s32 1, %s14
  %s17 = scalar_select 0, %s16, %s14
  // Predicated region
  $region2: #{ssl_model_forward.4} parent=0 // pred_check
    _
  $region3: #{ssl_model_forward.4} parent=0 // pred_check_branch
    %19 = sbr.rel (0) target = $region5
  $region4: #{ssl_model_forward.4} parent=0 // pred_region
    _
  $region5: #{ssl_model_forward.4} parent=0 // pred_fallthru
    _
  // Predicated region
  $region6: #{ssl_model_forward.4} parent=0 // pred_check
    _
  $region7: #{ssl_model_forward.4} parent=0 // pred_check_branch
    %21 = sbr.rel (0) target = $region9
  $region8: #{ssl_model_forward.4} parent=0 // pred_region
    _
  $region9: #{ssl_model_forward.4} parent=0 // pred_fallthru
    _
  // Predicated region
  $region10: #{ssl_model_forward.4} parent=0 // pred_check
    _
  $region11: #{ssl_model_forward.4} parent=0 // pred_check_branch
    %23 = sbr.rel (0) target = $region13
  $region12: #{ssl_model_forward.4} parent=0 // pred_region
    _
  $region13: #{ssl_model_forward.4} parent=0 // pred_fallthru
    _
  // Predicated region
  $region14: #{ssl_model_forward.4} parent=0 // pred_check
    _
  $region15: #{ssl_model_forward.4} parent=0 // pred_check_branch
    %25 = sbr.rel (0) target = $region17
  $region16: #{ssl_model_forward.4} parent=0 // pred_region
    _
  $region17: #{ssl_model_forward.4} parent=0 // pred_fallthru
    _
  // Predicated region
  $region18: #{ssl_model_forward.4} parent=0 // pred_check
    _
  $region19: #{ssl_model_forward.4} parent=0 // pred_check_branch
    %27 = sbr.rel (0) target = $region21
  $region20: #{ssl_model_forward.4} parent=0 // pred_region
    _
  $region21: #{ssl_model_forward.4} parent=0 // pred_fallthru
    _
  // Predicated region
  $region22: #{ssl_model_forward.4} parent=0 // pred_check
    _
  $region23: #{ssl_model_forward.4} parent=0 // pred_check_branch
    %29 = sbr.rel (0) target = $region25
  $region24: #{ssl_model_forward.4} parent=0 // pred_region
    _
  $region25: #{ssl_model_forward.4} parent=0 // pred_fallthru
    _
  // Predicated region
  $region26: #{ssl_model_forward.4} parent=0 // pred_check
    _
  $region27: #{ssl_model_forward.4} parent=0 // pred_check_branch
    %31 = sbr.rel (0) target = $region29
  $region28: #{ssl_model_forward.4} parent=0 // pred_region
    _
  $region29: #{ssl_model_forward.4} parent=0 // pred_fallthru
    _
  // Predicated region
  $region30: #{ssl_model_forward.4} parent=0 // pred_check
    _
  $region31: #{ssl_model_forward.4} parent=0 // pred_check_branch
    %33 = sbr.rel (0) target = $region33
  $region32: #{ssl_model_forward.4} parent=0 // pred_region
    _
  $region33: #{ssl_model_forward.4} parent=0 // pred_fallthru
    _
  // Predicated region
  $region34: #{ssl_model_forward.4} parent=0 // pred_check
    _
  $region35: #{ssl_model_forward.4} parent=0 // pred_check_branch
    %35 = sbr.rel (0) target = $region37
  $region36: #{ssl_model_forward.4} parent=0 // pred_region
    _
  $region37: #{ssl_model_forward.4} parent=0 // pred_fallthru
    _
  // Predicated region
  $region38: #{ssl_model_forward.4} parent=0 // pred_check
    _
  $region39: #{ssl_model_forward.4} parent=0 // pred_check_branch
    %37 = sbr.rel (0) target = $region41
  $region40: #{ssl_model_forward.4} parent=0 // pred_region
    _
  $region41: #{ssl_model_forward.4} parent=0 // pred_fallthru
    _
  // Predicated region
  $region42: #{ssl_model_forward.4} parent=0 // pred_check
    _
  $region43: #{ssl_model_forward.4} parent=0 // pred_check_branch
    %39 = sbr.rel (0) target = $region45
  $region44: #{ssl_model_forward.4} parent=0 // pred_region
    _
  $region45: #{ssl_model_forward.4} parent=0 // pred_fallthru
    _
  // Predicated region
  $region46: #{ssl_model_forward.4} parent=0 // pred_check
    _
  $region47: #{ssl_model_forward.4} parent=0 // pred_check_branch
    %41 = sbr.rel (0) target = $region49
  $region48: #{ssl_model_forward.4} parent=0 // pred_region
    _
  $region49: #{ssl_model_forward.4} parent=0 // pred_fallthru
    _
  // Predicated region
  $region50: #{ssl_model_forward.4} parent=0 // pred_check
    _
  $region51: #{ssl_model_forward.4} parent=0 // pred_check_branch
    %43 = sbr.rel (0) target = $region53
  $region52: #{ssl_model_forward.4} parent=0 // pred_region
    _
  $region53: #{ssl_model_forward.4} parent=0 // pred_fallthru
    _
  %v45 = vld [vmem:[%s0] sm:$0xff]
  %v46 = vld [vmem:[%s0 + $0x8] sm:$0xf]
  %v47 = vpack.c.bf16 %v46, %v45
  %v48 = vld [vmem:[%s1] sm:$0xff]
  %v49 = vld [vmem:[%s1 + $0x8] sm:$0xf]
  %v50 = vld [vmem:[%s1 + $0xc] sm:$0xff]
  %v51 = vld [vmem:[%s1 + $0x14] sm:$0xf]
  %v52 = vld [vmem:[%s1 + $0x18] sm:$0xff]
  %v53 = vld [vmem:[%s1 + $0x20] sm:$0xf]
  %v54 = vld [vmem:[%s1 + $0x24] sm:$0xff]
  %v55 = vld [vmem:[%s1 + $0x2c] sm:$0xf]
  %v56 = vld [vmem:[%s1 + $0x30] sm:$0xff]
  %v57 = vld [vmem:[%s1 + $0x38] sm:$0xf]
  %v58 = vld [vmem:[%s1 + $0x3c] sm:$0xff]
  %v59 = vld [vmem:[%s1 + $0x44] sm:$0xf]
  %v60 = vld [vmem:[%s1 + $0x48] sm:$0xff]
  %v61 = vld [vmem:[%s1 + $0x50] sm:$0xf]
  %v62 = vld [vmem:[%s1 + $0x54] sm:$0xff]
  %v63 = vld [vmem:[%s1 + $0x5c] sm:$0xf]
  %v64 = vld [vmem:[%s1 + $0x60] sm:$0xff]
  %v65 = vld [vmem:[%s1 + $0x68] sm:$0xf]
  %v66 = vld [vmem:[%s1 + $0x6c] sm:$0xff]
  %v67 = vld [vmem:[%s1 + $0x74] sm:$0xf]
  %v68 = vld [vmem:[%s1 + $0x78] sm:$0xff]
  %v69 = vld [vmem:[%s1 + $0x80] sm:$0xf]
  %v70 = vld [vmem:[%s1 + $0x84] sm:$0xff]
  %v71 = vld [vmem:[%s1 + $0x8c] sm:$0xf]
  %v72 = vld [vmem:[%s1 + $0x90] sm:$0xff]
  %v73 = vld [vmem:[%s1 + $0x98] sm:$0xf]
  %v74 = vld [vmem:[%s1 + $0x9c] sm:$0xff]
  %v75 = vld [vmem:[%s1 + $0xa4] sm:$0xf]
  %v76 = vld [vmem:[%s1 + $0xa8] sm:$0xff]
  %v77 = vld [vmem:[%s1 + $0xb0] sm:$0xf]
  %v78 = vld [vmem:[%s1 + $0xb4] sm:$0xff]
  %v79 = vld [vmem:[%s1 + $0xbc] sm:$0xf]
  %v80 = vld [vmem:[%s2] sm:$0x7]
  %v82 = vlaneseq
  %v83 = vshrl.u32 %v82, 7
  %v84 = vsub.s32 0, %v83
  %v85 = vrot.slane %v80, %v84
  %v86 = vlaneseq
  %v87 = vshrl.u32 %v86, 7
  %v88 = vsub.s32 1, %v87
  %v89 = vrot.slane %v80, %v88
  %v90 = vlaneseq
  %v91 = vshrl.u32 %v90, 7
  %v92 = vsub.s32 2, %v91
  %v93 = vrot.slane %v80, %v92
  %v129 = vunpack.c.l.b16 %v48
  %v130 = vunpack.c.h.b16 %v48
  %v131 = vunpack.c.l.b16 %v49
  %v132 = vunpack.c.l.b16 %v50
  %v133 = vunpack.c.h.b16 %v50
  %v134 = vunpack.c.l.b16 %v51
  %v135 = vunpack.c.l.b16 %v52
  %v136 = vunpack.c.h.b16 %v52
  %v137 = vunpack.c.l.b16 %v53
  %v138 = vunpack.c.l.b16 %v54
  %v139 = vunpack.c.h.b16 %v54
  %v140 = vunpack.c.l.b16 %v55
  %v141 = vunpack.c.l.b16 %v56
  %v142 = vunpack.c.h.b16 %v56
  %v143 = vunpack.c.l.b16 %v57
  %v144 = vunpack.c.l.b16 %v58
  %v145 = vunpack.c.h.b16 %v58
  %v146 = vunpack.c.l.b16 %v59
  %v147 = vunpack.c.l.b16 %v60
  %v148 = vunpack.c.h.b16 %v60
  %v149 = vunpack.c.l.b16 %v61
  %v150 = vunpack.c.l.b16 %v62
  %v151 = vunpack.c.h.b16 %v62
  %v152 = vunpack.c.l.b16 %v63
  %v153 = vunpack.c.l.b16 %v64
  %v154 = vunpack.c.h.b16 %v64
  %v155 = vunpack.c.l.b16 %v65
  %v156 = vunpack.c.l.b16 %v66
  %v157 = vunpack.c.h.b16 %v66
  %v158 = vunpack.c.l.b16 %v67
  %v159 = vunpack.c.l.b16 %v68
  %v160 = vunpack.c.h.b16 %v68
  %v161 = vunpack.c.l.b16 %v69
  %v162 = vunpack.c.l.b16 %v70
  %v163 = vunpack.c.h.b16 %v70
  %v164 = vunpack.c.l.b16 %v71
  %v165 = vunpack.c.l.b16 %v72
  %v166 = vunpack.c.h.b16 %v72
  %v167 = vunpack.c.l.b16 %v73
  %v168 = vunpack.c.l.b16 %v74
  %v169 = vunpack.c.h.b16 %v74
  %v170 = vunpack.c.l.b16 %v75
  %v171 = vunpack.c.l.b16 %v76
  %v172 = vunpack.c.h.b16 %v76
  %v173 = vunpack.c.l.b16 %v77
  %v174 = vunpack.c.l.b16 %v78
  %v175 = vunpack.c.h.b16 %v78
  %v176 = vunpack.c.l.b16 %v79
  %v177 = vpack.c.b16 %v132, %v129
  %v178 = vpack.c.b16 %v133, %v130
  %v179 = vpack.c.b16 %v134, %v131
  %v180 = vpack.c.b16 %v138, %v135
  %v181 = vpack.c.b16 %v139, %v136
  %v182 = vpack.c.b16 %v140, %v137
  %v183 = vpack.c.b16 %v144, %v141
  %v184 = vpack.c.b16 %v145, %v142
  %v185 = vpack.c.b16 %v146, %v143
  %v186 = vpack.c.b16 %v150, %v147
  %v187 = vpack.c.b16 %v151, %v148
  %v188 = vpack.c.b16 %v152, %v149
  %v189 = vpack.c.b16 %v156, %v153
  %v190 = vpack.c.b16 %v157, %v154
  %v191 = vpack.c.b16 %v158, %v155
  %v192 = vpack.c.b16 %v162, %v159
  %v193 = vpack.c.b16 %v163, %v160
  %v194 = vpack.c.b16 %v164, %v161
  %v195 = vpack.c.b16 %v168, %v165
  %v196 = vpack.c.b16 %v169, %v166
  %v197 = vpack.c.b16 %v170, %v167
  %v198 = vpack.c.b16 %v174, %v171
  %v199 = vpack.c.b16 %v175, %v172
  %v200 = vpack.c.b16 %v176, %v173
  %225 = vmatprep.subr.bf16.mxu0 %v178
  %226 = vmatpush1.bf16.msra.mxu0 %v177
  %227 = vmatprep.subr.bf16.mxu0 %v181
  %228 = vmatpush1.bf16.msra.mxu0 %v180
  %229 = vmatprep.subr.bf16.mxu0 %v184
  %230 = vmatpush1.bf16.msra.mxu0 %v183
  %231 = vmatprep.subr.bf16.mxu0 %v187
  %232 = vmatpush1.bf16.msra.mxu0 %v186
  %233 = vmatprep.subr.bf16.mxu0 %v190
  %234 = vmatpush1.bf16.msra.mxu0 %v189
  %235 = vmatprep.subr.bf16.mxu0 %v193
  %236 = vmatpush1.bf16.msra.mxu0 %v192
  %237 = vmatprep.subr.bf16.mxu0 %v196
  %238 = vmatpush1.bf16.msra.mxu0 %v195
  %239 = vmatprep.subr.bf16.mxu0 %v199
  %240 = vmatpush1.bf16.msra.mxu0 %v198
  %241 = vmatprep.subr.bf16.mxu0 0
  %242 = vmatpush1.bf16.msra.mxu0 0
  %243 = vmatprep.subr.bf16.mxu0 0
  %244 = vmatpush1.bf16.msra.mxu0 0
  %245 = vmatprep.subr.bf16.mxu0 0
  %246 = vmatpush1.bf16.msra.mxu0 0
  %247 = vmatprep.subr.bf16.mxu0 0
  %248 = vmatpush1.bf16.msra.mxu0 0
  %249 = vmatprep.subr.bf16.mxu0 0
  %250 = vmatpush1.bf16.msra.mxu0 0
  %251 = vmatprep.subr.bf16.mxu0 0
  %252 = vmatpush1.bf16.msra.mxu0 0
  %253 = vmatprep.subr.bf16.mxu0 0
  %254 = vmatpush1.bf16.msra.mxu0 0
  %255 = vmatprep.subr.bf16.mxu0 0
  %256 = vmatpush1.bf16.msra.mxu0 0
  %257 = vmatprep.mubr.bf16.mxu0 0
  %258 = vmatmul.mubr.bf16.gmra.mrb[0].mxu0 %v47
  %v259 = vpop.f32.mrb[0].mxu0
  %v260 = vadd.f32 %v85, %v259
  %v261 = vpop.f32.mrb[0].mxu0
  %v262 = vadd.f32 %v89, %v261
  %v263 = vpop.f32.mrb[0].mxu0
  %v264 = vadd.f32 %v85, %v263
  %v265 = vpop.f32.mrb[0].mxu0
  %v266 = vadd.f32 %v89, %v265
  %267 = vdwg.mxu0
  %268 = vmatprep.subr.bf16.mxu0 0
  %269 = vmatpush1.bf16.msra.mxu0 %v179
  %270 = vmatprep.subr.bf16.mxu0 0
  %271 = vmatpush1.bf16.msra.mxu0 %v182
  %272 = vmatprep.subr.bf16.mxu0 0
  %273 = vmatpush1.bf16.msra.mxu0 %v185
  %274 = vmatprep.subr.bf16.mxu0 0
  %275 = vmatpush1.bf16.msra.mxu0 %v188
  %276 = vmatprep.subr.bf16.mxu0 0
  %277 = vmatpush1.bf16.msra.mxu0 %v191
  %278 = vmatprep.subr.bf16.mxu0 0
  %279 = vmatpush1.bf16.msra.mxu0 %v194
  %280 = vmatprep.subr.bf16.mxu0 0
  %281 = vmatpush1.bf16.msra.mxu0 %v197
  %282 = vmatprep.subr.bf16.mxu0 0
  %283 = vmatpush1.bf16.msra.mxu0 %v200
  %284 = vmatprep.subr.bf16.mxu0 0
  %285 = vmatpush1.bf16.msra.mxu0 0
  %286 = vmatprep.subr.bf16.mxu0 0
  %287 = vmatpush1.bf16.msra.mxu0 0
  %288 = vmatprep.subr.bf16.mxu0 0
  %289 = vmatpush1.bf16.msra.mxu0 0
  %290 = vmatprep.subr.bf16.mxu0 0
  %291 = vmatpush1.bf16.msra.mxu0 0
  %292 = vmatprep.subr.bf16.mxu0 0
  %293 = vmatpush1.bf16.msra.mxu0 0
  %294 = vmatprep.subr.bf16.mxu0 0
  %295 = vmatpush1.bf16.msra.mxu0 0
  %296 = vmatprep.subr.bf16.mxu0 0
  %297 = vmatpush1.bf16.msra.mxu0 0
  %298 = vmatprep.subr.bf16.mxu0 0
  %299 = vmatpush1.bf16.msra.mxu0 0
  %300 = vmatprep.mubr.bf16.mxu0 0
  %301 = vmatmul.mubr.bf16.gmra.mrb[0].mxu0 %v47
  %v302 = vpop.f32.mrb[0].mxu0
  %v303 = vadd.f32 %v93, %v302
  %v304 = vpop.f32.mrb[0].mxu0
  %v305 = vpop.f32.mrb[0].mxu0
  %v306 = vadd.f32 %v93, %v305
  %v307 = vpop.f32.mrb[0].mxu0
  %308 = vdwg.mxu0
  %v309 = vmul.f32 %v260, 0.17677669
  %v310 = vmul.f32 %v264, 0.17677669
  %vm311 = vcmask 261120
  %v313 = vsel %vm311, %v309, 0
  %v316 = vsel %vm311, %v262, 0
  %318 = vmatprep.subr.mxu0 0.0
  %319 = vmatpush1.xpose.msra.mxu0 %v316
  %320 = vmatprep.subr.mxu0 0.0
  %321 = vmatpush1.xpose.msra.mxu0 0.0
  %322 = vmatprep.subr.mxu0 0.0
  %323 = vmatpush1.xpose.msra.mxu0 0.0
  %324 = vmatprep.subr.mxu0 0.0
  %325 = vmatpush1.xpose.msra.mxu0 0.0
  %326 = vmatprep.subr.mxu0 0.0
  %327 = vmatpush1.xpose.msra.mxu0 0.0
  %328 = vmatprep.subr.mxu0 0.0
  %329 = vmatpush1.xpose.msra.mxu0 0.0
  %330 = vmatprep.subr.mxu0 0.0
  %331 = vmatpush1.xpose.msra.mxu0 0.0
  %332 = vmatprep.subr.mxu0 0.0
  %333 = vmatpush1.xpose.msra.mxu0 0.0
  %334 = vmatprep.subr.mxu0 0.0
  %335 = vmatpush1.xpose.msra.mxu0 0.0
  %336 = vmatprep.subr.mxu0 0.0
  %337 = vmatpush1.xpose.msra.mxu0 0.0
  %338 = vmatprep.subr.mxu0 0.0
  %339 = vmatpush1.xpose.msra.mxu0 0.0
  %340 = vmatprep.subr.mxu0 0.0
  %341 = vmatpush1.xpose.msra.mxu0 0.0
  %342 = vmatprep.subr.mxu0 0.0
  %343 = vmatpush1.xpose.msra.mxu0 0.0
  %344 = vmatprep.subr.mxu0 0.0
  %345 = vmatpush1.xpose.msra.mxu0 0.0
  %346 = vmatprep.subr.mxu0 0.0
  %347 = vmatpush1.xpose.msra.mxu0 0.0
  %348 = vmatprep.subr.mxu0 0.0
  %349 = vmatpush1.xpose.msra.mxu0 0.0
  %350 = vmatprep.subr.mxu0 0.0
  %351 = vmatpush1.xpose.msra.mxu0 0.0
  %352 = vmatprep.subr.mxu0 0.0
  %353 = vmatpush1.xpose.msra.mxu0 0.0
  %354 = vmatprep.subr.mxu0 0.0
  %355 = vmatpush1.xpose.msra.mxu0 0.0
  %356 = vmatprep.subr.mxu0 0.0
  %357 = vmatpush1.xpose.msra.mxu0 0.0
  %358 = vmatprep.subr.mxu0 0.0
  %359 = vmatpush1.xpose.msra.mxu0 0.0
  %360 = vmatprep.subr.mxu0 0.0
  %361 = vmatpush1.xpose.msra.mxu0 0.0
  %362 = vmatprep.subr.mxu0 0.0
  %363 = vmatpush1.xpose.msra.mxu0 0.0
  %364 = vmatprep.subr.mxu0 0.0
  %365 = vmatpush1.xpose.msra.mxu0 0.0
  %366 = vmatprep.subr.mxu0 0.0
  %367 = vmatpush1.xpose.msra.mxu0 0.0
  %368 = vmatprep.subr.mxu0 0.0
  %369 = vmatpush1.xpose.msra.mxu0 0.0
  %370 = vmatprep.subr.mxu0 0.0
  %371 = vmatpush1.xpose.msra.mxu0 0.0
  %372 = vmatprep.subr.mxu0 0.0
  %373 = vmatpush1.xpose.msra.mxu0 0.0
  %374 = vmatprep.subr.mxu0 0.0
  %375 = vmatpush1.xpose.msra.mxu0 0.0
  %376 = vmatprep.subr.mxu0 0.0
  %377 = vmatpush1.xpose.msra.mxu0 0.0
  %378 = vmatprep.subr.mxu0 0.0
  %379 = vmatpush1.xpose.msra.mxu0 0.0
  %380 = vmatprep.subr.mxu0 0.0
  %381 = vmatpush1.xpose.msra.mxu0 0.0
  %382 = vmatprep.mubr.f32.mxu0 0.0
  %383 = vmatmul.mubr.f32.gmra.mrb[0].mxu0 %v313
  %v384 = vpop.f32.mrb[0].mxu0
  %v385 = vadd.f32 0.0, %v384
  %v386 = vpop.f32.mrb[0].mxu0
  %387 = vdwg.mxu0
  %vm388 = vcmask 46080
  %v389 = vsel %vm388, %v385, -inf
  %390 = vmax.xlane.f32.xlu0 %v389
  %v391 = vpop.xlane.xlu0 %390
  %v392 = vsub.f32 %v385, %v391
  %v393 = vmul.f32 %v392, 1.442695
  %v394 = vpow.pop %v393
  %v395 = vsel %vm388, %v394, 0.0
  %396 = vadd.xlane.f32.xlu0 %v395
  %v397 = vpop.xlane.xlu0 %396
  %v398 = vrcp.pop %v397
  %v399 = vmul.f32 %v394, %v398
  %vm400 = vcmask 48128
  %v402 = vsel %vm400, %v399, 0
  %vm404 = vcmask 1045504
  %v406 = vsel %vm404, %v303, 0
  %408 = vmatprep.subr.mxu0 0.0
  %409 = vmatpush1.msra.mxu0 %v406
  %410 = vmatprep.subr.mxu0 0.0
  %411 = vmatpush1.msra.mxu0 0.0
  %412 = vmatprep.subr.mxu0 0.0
  %413 = vmatpush1.msra.mxu0 0.0
  %414 = vmatprep.subr.mxu0 0.0
  %415 = vmatpush1.msra.mxu0 0.0
  %416 = vmatprep.subr.mxu0 0.0
  %417 = vmatpush1.msra.mxu0 0.0
  %418 = vmatprep.subr.mxu0 0.0
  %419 = vmatpush1.msra.mxu0 0.0
  %420 = vmatprep.subr.mxu0 0.0
  %421 = vmatpush1.msra.mxu0 0.0
  %422 = vmatprep.subr.mxu0 0.0
  %423 = vmatpush1.msra.mxu0 0.0
  %424 = vmatprep.subr.mxu0 0.0
  %425 = vmatpush1.msra.mxu0 0.0
  %426 = vmatprep.subr.mxu0 0.0
  %427 = vmatpush1.msra.mxu0 0.0
  %428 = vmatprep.subr.mxu0 0.0
  %429 = vmatpush1.msra.mxu0 0.0
  %430 = vmatprep.subr.mxu0 0.0
  %431 = vmatpush1.msra.mxu0 0.0
  %432 = vmatprep.subr.mxu0 0.0
  %433 = vmatpush1.msra.mxu0 0.0
  %434 = vmatprep.subr.mxu0 0.0
  %435 = vmatpush1.msra.mxu0 0.0
  %436 = vmatprep.subr.mxu0 0.0
  %437 = vmatpush1.msra.mxu0 0.0
  %438 = vmatprep.subr.mxu0 0.0
  %439 = vmatpush1.msra.mxu0 0.0
  %440 = vmatprep.subr.mxu0 0.0
  %441 = vmatpush1.msra.mxu0 0.0
  %442 = vmatprep.subr.mxu0 0.0
  %443 = vmatpush1.msra.mxu0 0.0
  %444 = vmatprep.subr.mxu0 0.0
  %445 = vmatpush1.msra.mxu0 0.0
  %446 = vmatprep.subr.mxu0 0.0
  %447 = vmatpush1.msra.mxu0 0.0
  %448 = vmatprep.subr.mxu0 0.0
  %449 = vmatpush1.msra.mxu0 0.0
  %450 = vmatprep.subr.mxu0 0.0
  %451 = vmatpush1.msra.mxu0 0.0
  %452 = vmatprep.subr.mxu0 0.0
  %453 = vmatpush1.msra.mxu0 0.0
  %454 = vmatprep.subr.mxu0 0.0
  %455 = vmatpush1.msra.mxu0 0.0
  %456 = vmatprep.subr.mxu0 0.0
  %457 = vmatpush1.msra.mxu0 0.0
  %458 = vmatprep.subr.mxu0 0.0
  %459 = vmatpush1.msra.mxu0 0.0
  %460 = vmatprep.subr.mxu0 0.0
  %461 = vmatpush1.msra.mxu0 0.0
  %462 = vmatprep.subr.mxu0 0.0
  %463 = vmatpush1.msra.mxu0 0.0
  %464 = vmatprep.subr.mxu0 0.0
  %465 = vmatpush1.msra.mxu0 0.0
  %466 = vmatprep.subr.mxu0 0.0
  %467 = vmatpush1.msra.mxu0 0.0
  %468 = vmatprep.subr.mxu0 0.0
  %469 = vmatpush1.msra.mxu0 0.0
  %470 = vmatprep.subr.mxu0 0.0
  %471 = vmatpush1.msra.mxu0 0.0
  %472 = vmatprep.mubr.f32.mxu0 0.0
  %473 = vmatmul.mubr.f32.gmra.mrb[0].mxu0 %v402
  %v474 = vpop.f32.mrb[0].mxu0
  %v475 = vadd.f32 0.0, %v474
  %v476 = vpop.f32.mrb[0].mxu0
  %477 = vdwg.mxu0
  %478 = vrot.lane.b32.xlu0 %v309, 96
  %v479 = vpop.permute.xlu0 %478
  %480 = vrot.lane.b32.xlu0 %v262, 96
  %v481 = vpop.permute.xlu0 %480
  %v482 = vsel %vm311, %v479, 0
  %v484 = vsel %vm311, %v481, 0
  %486 = vmatprep.subr.mxu0 0.0
  %487 = vmatpush1.xpose.msra.mxu0 %v484
  %488 = vmatprep.subr.mxu0 0.0
  %489 = vmatpush1.xpose.msra.mxu0 0.0
  %490 = vmatprep.subr.mxu0 0.0
  %491 = vmatpush1.xpose.msra.mxu0 0.0
  %492 = vmatprep.subr.mxu0 0.0
  %493 = vmatpush1.xpose.msra.mxu0 0.0
  %494 = vmatprep.subr.mxu0 0.0
  %495 = vmatpush1.xpose.msra.mxu0 0.0
  %496 = vmatprep.subr.mxu0 0.0
  %497 = vmatpush1.xpose.msra.mxu0 0.0
  %498 = vmatprep.subr.mxu0 0.0
  %499 = vmatpush1.xpose.msra.mxu0 0.0
  %500 = vmatprep.subr.mxu0 0.0
  %501 = vmatpush1.xpose.msra.mxu0 0.0
  %502 = vmatprep.subr.mxu0 0.0
  %503 = vmatpush1.xpose.msra.mxu0 0.0
  %504 = vmatprep.subr.mxu0 0.0
  %505 = vmatpush1.xpose.msra.mxu0 0.0
  %506 = vmatprep.subr.mxu0 0.0
  %507 = vmatpush1.xpose.msra.mxu0 0.0
  %508 = vmatprep.subr.mxu0 0.0
  %509 = vmatpush1.xpose.msra.mxu0 0.0
  %510 = vmatprep.subr.mxu0 0.0
  %511 = vmatpush1.xpose.msra.mxu0 0.0
  %512 = vmatprep.subr.mxu0 0.0
  %513 = vmatpush1.xpose.msra.mxu0 0.0
  %514 = vmatprep.subr.mxu0 0.0
  %515 = vmatpush1.xpose.msra.mxu0 0.0
  %516 = vmatprep.subr.mxu0 0.0
  %517 = vmatpush1.xpose.msra.mxu0 0.0
  %518 = vmatprep.subr.mxu0 0.0
  %519 = vmatpush1.xpose.msra.mxu0 0.0
  %520 = vmatprep.subr.mxu0 0.0
  %521 = vmatpush1.xpose.msra.mxu0 0.0
  %522 = vmatprep.subr.mxu0 0.0
  %523 = vmatpush1.xpose.msra.mxu0 0.0
  %524 = vmatprep.subr.mxu0 0.0
  %525 = vmatpush1.xpose.msra.mxu0 0.0
  %526 = vmatprep.subr.mxu0 0.0
  %527 = vmatpush1.xpose.msra.mxu0 0.0
  %528 = vmatprep.subr.mxu0 0.0
  %529 = vmatpush1.xpose.msra.mxu0 0.0
  %530 = vmatprep.subr.mxu0 0.0
  %531 = vmatpush1.xpose.msra.mxu0 0.0
  %532 = vmatprep.subr.mxu0 0.0
  %533 = vmatpush1.xpose.msra.mxu0 0.0
  %534 = vmatprep.subr.mxu0 0.0
  %535 = vmatpush1.xpose.msra.mxu0 0.0
  %536 = vmatprep.subr.mxu0 0.0
  %537 = vmatpush1.xpose.msra.mxu0 0.0
  %538 = vmatprep.subr.mxu0 0.0
  %539 = vmatpush1.xpose.msra.mxu0 0.0
  %540 = vmatprep.subr.mxu0 0.0
  %541 = vmatpush1.xpose.msra.mxu0 0.0
  %542 = vmatprep.subr.mxu0 0.0
  %543 = vmatpush1.xpose.msra.mxu0 0.0
  %544 = vmatprep.subr.mxu0 0.0
  %545 = vmatpush1.xpose.msra.mxu0 0.0
  %546 = vmatprep.subr.mxu0 0.0
  %547 = vmatpush1.xpose.msra.mxu0 0.0
  %548 = vmatprep.subr.mxu0 0.0
  %549 = vmatpush1.xpose.msra.mxu0 0.0
  %550 = vmatprep.mubr.f32.mxu0 0.0
  %551 = vmatmul.mubr.f32.gmra.mrb[0].mxu0 %v482
  %v552 = vpop.f32.mrb[0].mxu0
  %v553 = vadd.f32 0.0, %v552
  %v554 = vpop.f32.mrb[0].mxu0
  %555 = vdwg.mxu0
  %v556 = vsel %vm388, %v553, -inf
  %557 = vmax.xlane.f32.xlu0 %v556
  %v558 = vpop.xlane.xlu0 %557
  %v559 = vsub.f32 %v553, %v558
  %v560 = vmul.f32 %v559, 1.442695
  %v561 = vpow.pop %v560
  %v562 = vsel %vm388, %v561, 0.0
  %563 = vadd.xlane.f32.xlu0 %v562
  %v564 = vpop.xlane.xlu0 %563
  %v565 = vrcp.pop %v564
  %v566 = vmul.f32 %v561, %v565
  %567 = vrot.lane.b32.xlu0 %v303, 96
  %v568 = vpop.permute.xlu0 %567
  %v570 = vsel %vm400, %v566, 0
  %v572 = vsel %vm404, %v568, 0
  %574 = vmatprep.subr.mxu0 0.0
  %575 = vmatpush1.msra.mxu0 %v572
  %576 = vmatprep.subr.mxu0 0.0
  %577 = vmatpush1.msra.mxu0 0.0
  %578 = vmatprep.subr.mxu0 0.0
  %579 = vmatpush1.msra.mxu0 0.0
  %580 = vmatprep.subr.mxu0 0.0
  %581 = vmatpush1.msra.mxu0 0.0
  %582 = vmatprep.subr.mxu0 0.0
  %583 = vmatpush1.msra.mxu0 0.0
  %584 = vmatprep.subr.mxu0 0.0
  %585 = vmatpush1.msra.mxu0 0.0
  %586 = vmatprep.subr.mxu0 0.0
  %587 = vmatpush1.msra.mxu0 0.0
  %588 = vmatprep.subr.mxu0 0.0
  %589 = vmatpush1.msra.mxu0 0.0
  %590 = vmatprep.subr.mxu0 0.0
  %591 = vmatpush1.msra.mxu0 0.0
  %592 = vmatprep.subr.mxu0 0.0
  %593 = vmatpush1.msra.mxu0 0.0
  %594 = vmatprep.subr.mxu0 0.0
  %595 = vmatpush1.msra.mxu0 0.0
  %596 = vmatprep.subr.mxu0 0.0
  %597 = vmatpush1.msra.mxu0 0.0
  %598 = vmatprep.subr.mxu0 0.0
  %599 = vmatpush1.msra.mxu0 0.0
  %600 = vmatprep.subr.mxu0 0.0
  %601 = vmatpush1.msra.mxu0 0.0
  %602 = vmatprep.subr.mxu0 0.0
  %603 = vmatpush1.msra.mxu0 0.0
  %604 = vmatprep.subr.mxu0 0.0
  %605 = vmatpush1.msra.mxu0 0.0
  %606 = vmatprep.subr.mxu0 0.0
  %607 = vmatpush1.msra.mxu0 0.0
  %608 = vmatprep.subr.mxu0 0.0
  %609 = vmatpush1.msra.mxu0 0.0
  %610 = vmatprep.subr.mxu0 0.0
  %611 = vmatpush1.msra.mxu0 0.0
  %612 = vmatprep.subr.mxu0 0.0
  %613 = vmatpush1.msra.mxu0 0.0
  %614 = vmatprep.subr.mxu0 0.0
  %615 = vmatpush1.msra.mxu0 0.0
  %616 = vmatprep.subr.mxu0 0.0
  %617 = vmatpush1.msra.mxu0 0.0
  %618 = vmatprep.subr.mxu0 0.0
  %619 = vmatpush1.msra.mxu0 0.0
  %620 = vmatprep.subr.mxu0 0.0
  %621 = vmatpush1.msra.mxu0 0.0
  %622 = vmatprep.subr.mxu0 0.0
  %623 = vmatpush1.msra.mxu0 0.0
  %624 = vmatprep.subr.mxu0 0.0
  %625 = vmatpush1.msra.mxu0 0.0
  %626 = vmatprep.subr.mxu0 0.0
  %627 = vmatpush1.msra.mxu0 0.0
  %628 = vmatprep.subr.mxu0 0.0
  %629 = vmatpush1.msra.mxu0 0.0
  %630 = vmatprep.subr.mxu0 0.0
  %631 = vmatpush1.msra.mxu0 0.0
  %632 = vmatprep.subr.mxu0 0.0
  %633 = vmatpush1.msra.mxu0 0.0
  %634 = vmatprep.subr.mxu0 0.0
  %635 = vmatpush1.msra.mxu0 0.0
  %636 = vmatprep.subr.mxu0 0.0
  %637 = vmatpush1.msra.mxu0 0.0
  %638 = vmatprep.mubr.f32.mxu0 0.0
  %639 = vmatmul.mubr.f32.gmra.mrb[0].mxu0 %v570
  %v640 = vpop.f32.mrb[0].mxu0
  %v641 = vadd.f32 0.0, %v640
  %v642 = vpop.f32.mrb[0].mxu0
  %643 = vdwg.mxu0
  %644 = vrot.lane.b32.xlu0 %v309, 64
  %v645 = vpop.permute.xlu0 %644
  %646 = vrot.lane.b32.xlu0 %v262, 64
  %v647 = vpop.permute.xlu0 %646
  %v648 = vsel %vm311, %v645, 0
  %v650 = vsel %vm311, %v647, 0
  %652 = vmatprep.subr.mxu0 0.0
  %653 = vmatpush1.xpose.msra.mxu0 %v650
  %654 = vmatprep.subr.mxu0 0.0
  %655 = vmatpush1.xpose.msra.mxu0 0.0
  %656 = vmatprep.subr.mxu0 0.0
  %657 = vmatpush1.xpose.msra.mxu0 0.0
  %658 = vmatprep.subr.mxu0 0.0
  %659 = vmatpush1.xpose.msra.mxu0 0.0
  %660 = vmatprep.subr.mxu0 0.0
  %661 = vmatpush1.xpose.msra.mxu0 0.0
  %662 = vmatprep.subr.mxu0 0.0
  %663 = vmatpush1.xpose.msra.mxu0 0.0
  %664 = vmatprep.subr.mxu0 0.0
  %665 = vmatpush1.xpose.msra.mxu0 0.0
  %666 = vmatprep.subr.mxu0 0.0
  %667 = vmatpush1.xpose.msra.mxu0 0.0
  %668 = vmatprep.subr.mxu0 0.0
  %669 = vmatpush1.xpose.msra.mxu0 0.0
  %670 = vmatprep.subr.mxu0 0.0
  %671 = vmatpush1.xpose.msra.mxu0 0.0
  %672 = vmatprep.subr.mxu0 0.0
  %673 = vmatpush1.xpose.msra.mxu0 0.0
  %674 = vmatprep.subr.mxu0 0.0
  %675 = vmatpush1.xpose.msra.mxu0 0.0
  %676 = vmatprep.subr.mxu0 0.0
  %677 = vmatpush1.xpose.msra.mxu0 0.0
  %678 = vmatprep.subr.mxu0 0.0
  %679 = vmatpush1.xpose.msra.mxu0 0.0
  %680 = vmatprep.subr.mxu0 0.0
  %681 = vmatpush1.xpose.msra.mxu0 0.0
  %682 = vmatprep.subr.mxu0 0.0
  %683 = vmatpush1.xpose.msra.mxu0 0.0
  %684 = vmatprep.subr.mxu0 0.0
  %685 = vmatpush1.xpose.msra.mxu0 0.0
  %686 = vmatprep.subr.mxu0 0.0
  %687 = vmatpush1.xpose.msra.mxu0 0.0
  %688 = vmatprep.subr.mxu0 0.0
  %689 = vmatpush1.xpose.msra.mxu0 0.0
  %690 = vmatprep.subr.mxu0 0.0
  %691 = vmatpush1.xpose.msra.mxu0 0.0
  %692 = vmatprep.subr.mxu0 0.0
  %693 = vmatpush1.xpose.msra.mxu0 0.0
  %694 = vmatprep.subr.mxu0 0.0
  %695 = vmatpush1.xpose.msra.mxu0 0.0
  %696 = vmatprep.subr.mxu0 0.0
  %697 = vmatpush1.xpose.msra.mxu0 0.0
  %698 = vmatprep.subr.mxu0 0.0
  %699 = vmatpush1.xpose.msra.mxu0 0.0
  %700 = vmatprep.subr.mxu0 0.0
  %701 = vmatpush1.xpose.msra.mxu0 0.0
  %702 = vmatprep.subr.mxu0 0.0
  %703 = vmatpush1.xpose.msra.mxu0 0.0
  %704 = vmatprep.subr.mxu0 0.0
  %705 = vmatpush1.xpose.msra.mxu0 0.0
  %706 = vmatprep.subr.mxu0 0.0
  %707 = vmatpush1.xpose.msra.mxu0 0.0
  %708 = vmatprep.subr.mxu0 0.0
  %709 = vmatpush1.xpose.msra.mxu0 0.0
  %710 = vmatprep.subr.mxu0 0.0
  %711 = vmatpush1.xpose.msra.mxu0 0.0
  %712 = vmatprep.subr.mxu0 0.0
  %713 = vmatpush1.xpose.msra.mxu0 0.0
  %714 = vmatprep.subr.mxu0 0.0
  %715 = vmatpush1.xpose.msra.mxu0 0.0
  %716 = vmatprep.mubr.f32.mxu0 0.0
  %717 = vmatmul.mubr.f32.gmra.mrb[0].mxu0 %v648
  %v718 = vpop.f32.mrb[0].mxu0
  %v719 = vadd.f32 0.0, %v718
  %v720 = vpop.f32.mrb[0].mxu0
  %721 = vdwg.mxu0
  %v722 = vsel %vm388, %v719, -inf
  %723 = vmax.xlane.f32.xlu0 %v722
  %v724 = vpop.xlane.xlu0 %723
  %v725 = vsub.f32 %v719, %v724
  %v726 = vmul.f32 %v725, 1.442695
  %v727 = vpow.pop %v726
  %v728 = vsel %vm388, %v727, 0.0
  %729 = vadd.xlane.f32.xlu0 %v728
  %v730 = vpop.xlane.xlu0 %729
  %v731 = vrcp.pop %v730
  %v732 = vmul.f32 %v727, %v731
  %733 = vrot.lane.b32.xlu0 %v303, 64
  %v734 = vpop.permute.xlu0 %733
  %v736 = vsel %vm400, %v732, 0
  %v738 = vsel %vm404, %v734, 0
  %740 = vmatprep.subr.mxu0 0.0
  %741 = vmatpush1.msra.mxu0 %v738
  %742 = vmatprep.subr.mxu0 0.0
  %743 = vmatpush1.msra.mxu0 0.0
  %744 = vmatprep.subr.mxu0 0.0
  %745 = vmatpush1.msra.mxu0 0.0
  %746 = vmatprep.subr.mxu0 0.0
  %747 = vmatpush1.msra.mxu0 0.0
  %748 = vmatprep.subr.mxu0 0.0
  %749 = vmatpush1.msra.mxu0 0.0
  %750 = vmatprep.subr.mxu0 0.0
  %751 = vmatpush1.msra.mxu0 0.0
  %752 = vmatprep.subr.mxu0 0.0
  %753 = vmatpush1.msra.mxu0 0.0
  %754 = vmatprep.subr.mxu0 0.0
  %755 = vmatpush1.msra.mxu0 0.0
  %756 = vmatprep.subr.mxu0 0.0
  %757 = vmatpush1.msra.mxu0 0.0
  %758 = vmatprep.subr.mxu0 0.0
  %759 = vmatpush1.msra.mxu0 0.0
  %760 = vmatprep.subr.mxu0 0.0
  %761 = vmatpush1.msra.mxu0 0.0
  %762 = vmatprep.subr.mxu0 0.0
  %763 = vmatpush1.msra.mxu0 0.0
  %764 = vmatprep.subr.mxu0 0.0
  %765 = vmatpush1.msra.mxu0 0.0
  %766 = vmatprep.subr.mxu0 0.0
  %767 = vmatpush1.msra.mxu0 0.0
  %768 = vmatprep.subr.mxu0 0.0
  %769 = vmatpush1.msra.mxu0 0.0
  %770 = vmatprep.subr.mxu0 0.0
  %771 = vmatpush1.msra.mxu0 0.0
  %772 = vmatprep.subr.mxu0 0.0
  %773 = vmatpush1.msra.mxu0 0.0
  %774 = vmatprep.subr.mxu0 0.0
  %775 = vmatpush1.msra.mxu0 0.0
  %776 = vmatprep.subr.mxu0 0.0
  %777 = vmatpush1.msra.mxu0 0.0
  %778 = vmatprep.subr.mxu0 0.0
  %779 = vmatpush1.msra.mxu0 0.0
  %780 = vmatprep.subr.mxu0 0.0
  %781 = vmatpush1.msra.mxu0 0.0
  %782 = vmatprep.subr.mxu0 0.0
  %783 = vmatpush1.msra.mxu0 0.0
  %784 = vmatprep.subr.mxu0 0.0
  %785 = vmatpush1.msra.mxu0 0.0
  %786 = vmatprep.subr.mxu0 0.0
  %787 = vmatpush1.msra.mxu0 0.0
  %788 = vmatprep.subr.mxu0 0.0
  %789 = vmatpush1.msra.mxu0 0.0
  %790 = vmatprep.subr.mxu0 0.0
  %791 = vmatpush1.msra.mxu0 0.0
  %792 = vmatprep.subr.mxu0 0.0
  %793 = vmatpush1.msra.mxu0 0.0
  %794 = vmatprep.subr.mxu0 0.0
  %795 = vmatpush1.msra.mxu0 0.0
  %796 = vmatprep.subr.mxu0 0.0
  %797 = vmatpush1.msra.mxu0 0.0
  %798 = vmatprep.subr.mxu0 0.0
  %799 = vmatpush1.msra.mxu0 0.0
  %800 = vmatprep.subr.mxu0 0.0
  %801 = vmatpush1.msra.mxu0 0.0
  %802 = vmatprep.subr.mxu0 0.0
  %803 = vmatpush1.msra.mxu0 0.0
  %804 = vmatprep.mubr.f32.mxu0 0.0
  %805 = vmatmul.mubr.f32.gmra.mrb[0].mxu0 %v736
  %v806 = vpop.f32.mrb[0].mxu0
  %v807 = vadd.f32 0.0, %v806
  %v808 = vpop.f32.mrb[0].mxu0
  %809 = vdwg.mxu0
  %810 = vrot.lane.b32.xlu0 %v309, 32
  %v811 = vpop.permute.xlu0 %810
  %812 = vrot.lane.b32.xlu0 %v262, 32
  %v813 = vpop.permute.xlu0 %812
  %v814 = vsel %vm311, %v811, 0
  %v816 = vsel %vm311, %v813, 0
  %818 = vmatprep.subr.mxu0 0.0
  %819 = vmatpush1.xpose.msra.mxu0 %v816
  %820 = vmatprep.subr.mxu0 0.0
  %821 = vmatpush1.xpose.msra.mxu0 0.0
  %822 = vmatprep.subr.mxu0 0.0
  %823 = vmatpush1.xpose.msra.mxu0 0.0
  %824 = vmatprep.subr.mxu0 0.0
  %825 = vmatpush1.xpose.msra.mxu0 0.0
  %826 = vmatprep.subr.mxu0 0.0
  %827 = vmatpush1.xpose.msra.mxu0 0.0
  %828 = vmatprep.subr.mxu0 0.0
  %829 = vmatpush1.xpose.msra.mxu0 0.0
  %830 = vmatprep.subr.mxu0 0.0
  %831 = vmatpush1.xpose.msra.mxu0 0.0
  %832 = vmatprep.subr.mxu0 0.0
  %833 = vmatpush1.xpose.msra.mxu0 0.0
  %834 = vmatprep.subr.mxu0 0.0
  %835 = vmatpush1.xpose.msra.mxu0 0.0
  %836 = vmatprep.subr.mxu0 0.0
  %837 = vmatpush1.xpose.msra.mxu0 0.0
  %838 = vmatprep.subr.mxu0 0.0
  %839 = vmatpush1.xpose.msra.mxu0 0.0
  %840 = vmatprep.subr.mxu0 0.0
  %841 = vmatpush1.xpose.msra.mxu0 0.0
  %842 = vmatprep.subr.mxu0 0.0
  %843 = vmatpush1.xpose.msra.mxu0 0.0
  %844 = vmatprep.subr.mxu0 0.0
  %845 = vmatpush1.xpose.msra.mxu0 0.0
  %846 = vmatprep.subr.mxu0 0.0
  %847 = vmatpush1.xpose.msra.mxu0 0.0
  %848 = vmatprep.subr.mxu0 0.0
  %849 = vmatpush1.xpose.msra.mxu0 0.0
  %850 = vmatprep.subr.mxu0 0.0
  %851 = vmatpush1.xpose.msra.mxu0 0.0
  %852 = vmatprep.subr.mxu0 0.0
  %853 = vmatpush1.xpose.msra.mxu0 0.0
  %854 = vmatprep.subr.mxu0 0.0
  %855 = vmatpush1.xpose.msra.mxu0 0.0
  %856 = vmatprep.subr.mxu0 0.0
  %857 = vmatpush1.xpose.msra.mxu0 0.0
  %858 = vmatprep.subr.mxu0 0.0
  %859 = vmatpush1.xpose.msra.mxu0 0.0
  %860 = vmatprep.subr.mxu0 0.0
  %861 = vmatpush1.xpose.msra.mxu0 0.0
  %862 = vmatprep.subr.mxu0 0.0
  %863 = vmatpush1.xpose.msra.mxu0 0.0
  %864 = vmatprep.subr.mxu0 0.0
  %865 = vmatpush1.xpose.msra.mxu0 0.0
  %866 = vmatprep.subr.mxu0 0.0
  %867 = vmatpush1.xpose.msra.mxu0 0.0
  %868 = vmatprep.subr.mxu0 0.0
  %869 = vmatpush1.xpose.msra.mxu0 0.0
  %870 = vmatprep.subr.mxu0 0.0
  %871 = vmatpush1.xpose.msra.mxu0 0.0
  %872 = vmatprep.subr.mxu0 0.0
  %873 = vmatpush1.xpose.msra.mxu0 0.0
  %874 = vmatprep.subr.mxu0 0.0
  %875 = vmatpush1.xpose.msra.mxu0 0.0
  %876 = vmatprep.subr.mxu0 0.0
  %877 = vmatpush1.xpose.msra.mxu0 0.0
  %878 = vmatprep.subr.mxu0 0.0
  %879 = vmatpush1.xpose.msra.mxu0 0.0
  %880 = vmatprep.subr.mxu0 0.0
  %881 = vmatpush1.xpose.msra.mxu0 0.0
  %882 = vmatprep.mubr.f32.mxu0 0.0
  %883 = vmatmul.mubr.f32.gmra.mrb[0].mxu0 %v814
  %v884 = vpop.f32.mrb[0].mxu0
  %v885 = vadd.f32 0.0, %v884
  %v886 = vpop.f32.mrb[0].mxu0
  %887 = vdwg.mxu0
  %v888 = vsel %vm388, %v885, -inf
  %889 = vmax.xlane.f32.xlu0 %v888
  %v890 = vpop.xlane.xlu0 %889
  %v891 = vsub.f32 %v885, %v890
  %v892 = vmul.f32 %v891, 1.442695
  %v893 = vpow.pop %v892
  %v894 = vsel %vm388, %v893, 0.0
  %895 = vadd.xlane.f32.xlu0 %v894
  %v896 = vpop.xlane.xlu0 %895
  %v897 = vrcp.pop %v896
  %v898 = vmul.f32 %v893, %v897
  %899 = vrot.lane.b32.xlu0 %v303, 32
  %v900 = vpop.permute.xlu0 %899
  %v902 = vsel %vm400, %v898, 0
  %v904 = vsel %vm404, %v900, 0
  %906 = vmatprep.subr.mxu0 0.0
  %907 = vmatpush1.msra.mxu0 %v904
  %908 = vmatprep.subr.mxu0 0.0
  %909 = vmatpush1.msra.mxu0 0.0
  %910 = vmatprep.subr.mxu0 0.0
  %911 = vmatpush1.msra.mxu0 0.0
  %912 = vmatprep.subr.mxu0 0.0
  %913 = vmatpush1.msra.mxu0 0.0
  %914 = vmatprep.subr.mxu0 0.0
  %915 = vmatpush1.msra.mxu0 0.0
  %916 = vmatprep.subr.mxu0 0.0
  %917 = vmatpush1.msra.mxu0 0.0
  %918 = vmatprep.subr.mxu0 0.0
  %919 = vmatpush1.msra.mxu0 0.0
  %920 = vmatprep.subr.mxu0 0.0
  %921 = vmatpush1.msra.mxu0 0.0
  %922 = vmatprep.subr.mxu0 0.0
  %923 = vmatpush1.msra.mxu0 0.0
  %924 = vmatprep.subr.mxu0 0.0
  %925 = vmatpush1.msra.mxu0 0.0
  %926 = vmatprep.subr.mxu0 0.0
  %927 = vmatpush1.msra.mxu0 0.0
  %928 = vmatprep.subr.mxu0 0.0
  %929 = vmatpush1.msra.mxu0 0.0
  %930 = vmatprep.subr.mxu0 0.0
  %931 = vmatpush1.msra.mxu0 0.0
  %932 = vmatprep.subr.mxu0 0.0
  %933 = vmatpush1.msra.mxu0 0.0
  %934 = vmatprep.subr.mxu0 0.0
  %935 = vmatpush1.msra.mxu0 0.0
  %936 = vmatprep.subr.mxu0 0.0
  %937 = vmatpush1.msra.mxu0 0.0
  %938 = vmatprep.subr.mxu0 0.0
  %939 = vmatpush1.msra.mxu0 0.0
  %940 = vmatprep.subr.mxu0 0.0
  %941 = vmatpush1.msra.mxu0 0.0
  %942 = vmatprep.subr.mxu0 0.0
  %943 = vmatpush1.msra.mxu0 0.0
  %944 = vmatprep.subr.mxu0 0.0
  %945 = vmatpush1.msra.mxu0 0.0
  %946 = vmatprep.subr.mxu0 0.0
  %947 = vmatpush1.msra.mxu0 0.0
  %948 = vmatprep.subr.mxu0 0.0
  %949 = vmatpush1.msra.mxu0 0.0
  %950 = vmatprep.subr.mxu0 0.0
  %951 = vmatpush1.msra.mxu0 0.0
  %952 = vmatprep.subr.mxu0 0.0
  %953 = vmatpush1.msra.mxu0 0.0
  %954 = vmatprep.subr.mxu0 0.0
  %955 = vmatpush1.msra.mxu0 0.0
  %956 = vmatprep.subr.mxu0 0.0
  %957 = vmatpush1.msra.mxu0 0.0
  %958 = vmatprep.subr.mxu0 0.0
  %959 = vmatpush1.msra.mxu0 0.0
  %960 = vmatprep.subr.mxu0 0.0
  %961 = vmatpush1.msra.mxu0 0.0
  %962 = vmatprep.subr.mxu0 0.0
  %963 = vmatpush1.msra.mxu0 0.0
  %964 = vmatprep.subr.mxu0 0.0
  %965 = vmatpush1.msra.mxu0 0.0
  %966 = vmatprep.subr.mxu0 0.0
  %967 = vmatpush1.msra.mxu0 0.0
  %968 = vmatprep.subr.mxu0 0.0
  %969 = vmatpush1.msra.mxu0 0.0
  %970 = vmatprep.mubr.f32.mxu0 0.0
  %971 = vmatmul.mubr.f32.gmra.mrb[0].mxu0 %v902
  %v972 = vpop.f32.mrb[0].mxu0
  %v973 = vadd.f32 0.0, %v972
  %v974 = vpop.f32.mrb[0].mxu0
  %975 = vdwg.mxu0
  %977 = vrot.lane.b32.xlu0 %v641, 32
  %v978 = vpop.permute.xlu0 %977
  %981 = vrot.lane.b32.xlu0 %v807, 64
  %v982 = vpop.permute.xlu0 %981
  %985 = vrot.lane.b32.xlu0 %v973, 96
  %v986 = vpop.permute.xlu0 %985
  %v988 = vsel %vm311, %v475, %v978
  %vm989 = vcmask 523264
  %v990 = vsel %vm989, %v988, %v982
  %vm991 = vcmask 785408
  %v992 = vsel %vm991, %v990, %v986
  %vm994 = vcmask 1041408
  %v995 = vrot.slane %v309, 6
  %v996 = vrot.slane %v310, 6
  %v997 = vsel %vm994, %v995, %v996
  %v999 = vrot.slane %v262, 6
  %v1000 = vrot.slane %v266, 6
  %v1001 = vsel %vm994, %v999, %v1000
  %v1002 = vsel %vm311, %v997, 0
  %v1004 = vsel %vm311, %v1001, 0
  %1006 = vmatprep.subr.mxu0 0.0
  %1007 = vmatpush1.xpose.msra.mxu0 %v1004
  %1008 = vmatprep.subr.mxu0 0.0
  %1009 = vmatpush1.xpose.msra.mxu0 0.0
  %1010 = vmatprep.subr.mxu0 0.0
  %1011 = vmatpush1.xpose.msra.mxu0 0.0
  %1012 = vmatprep.subr.mxu0 0.0
  %1013 = vmatpush1.xpose.msra.mxu0 0.0
  %1014 = vmatprep.subr.mxu0 0.0
  %1015 = vmatpush1.xpose.msra.mxu0 0.0
  %1016 = vmatprep.subr.mxu0 0.0
  %1017 = vmatpush1.xpose.msra.mxu0 0.0
  %1018 = vmatprep.subr.mxu0 0.0
  %1019 = vmatpush1.xpose.msra.mxu0 0.0
  %1020 = vmatprep.subr.mxu0 0.0
  %1021 = vmatpush1.xpose.msra.mxu0 0.0
  %1022 = vmatprep.subr.mxu0 0.0
  %1023 = vmatpush1.xpose.msra.mxu0 0.0
  %1024 = vmatprep.subr.mxu0 0.0
  %1025 = vmatpush1.xpose.msra.mxu0 0.0
  %1026 = vmatprep.subr.mxu0 0.0
  %1027 = vmatpush1.xpose.msra.mxu0 0.0
  %1028 = vmatprep.subr.mxu0 0.0
  %1029 = vmatpush1.xpose.msra.mxu0 0.0
  %1030 = vmatprep.subr.mxu0 0.0
  %1031 = vmatpush1.xpose.msra.mxu0 0.0
  %1032 = vmatprep.subr.mxu0 0.0
  %1033 = vmatpush1.xpose.msra.mxu0 0.0
  %1034 = vmatprep.subr.mxu0 0.0
  %1035 = vmatpush1.xpose.msra.mxu0 0.0
  %1036 = vmatprep.subr.mxu0 0.0
  %1037 = vmatpush1.xpose.msra.mxu0 0.0
  %1038 = vmatprep.subr.mxu0 0.0
  %1039 = vmatpush1.xpose.msra.mxu0 0.0
  %1040 = vmatprep.subr.mxu0 0.0
  %1041 = vmatpush1.xpose.msra.mxu0 0.0
  %1042 = vmatprep.subr.mxu0 0.0
  %1043 = vmatpush1.xpose.msra.mxu0 0.0
  %1044 = vmatprep.subr.mxu0 0.0
  %1045 = vmatpush1.xpose.msra.mxu0 0.0
  %1046 = vmatprep.subr.mxu0 0.0
  %1047 = vmatpush1.xpose.msra.mxu0 0.0
  %1048 = vmatprep.subr.mxu0 0.0
  %1049 = vmatpush1.xpose.msra.mxu0 0.0
  %1050 = vmatprep.subr.mxu0 0.0
  %1051 = vmatpush1.xpose.msra.mxu0 0.0
  %1052 = vmatprep.subr.mxu0 0.0
  %1053 = vmatpush1.xpose.msra.mxu0 0.0
  %1054 = vmatprep.subr.mxu0 0.0
  %1055 = vmatpush1.xpose.msra.mxu0 0.0
  %1056 = vmatprep.subr.mxu0 0.0
  %1057 = vmatpush1.xpose.msra.mxu0 0.0
  %1058 = vmatprep.subr.mxu0 0.0
  %1059 = vmatpush1.xpose.msra.mxu0 0.0
  %1060 = vmatprep.subr.mxu0 0.0
  %1061 = vmatpush1.xpose.msra.mxu0 0.0
  %1062 = vmatprep.subr.mxu0 0.0
  %1063 = vmatpush1.xpose.msra.mxu0 0.0
  %1064 = vmatprep.subr.mxu0 0.0
  %1065 = vmatpush1.xpose.msra.mxu0 0.0
  %1066 = vmatprep.subr.mxu0 0.0
  %1067 = vmatpush1.xpose.msra.mxu0 0.0
  %1068 = vmatprep.subr.mxu0 0.0
  %1069 = vmatpush1.xpose.msra.mxu0 0.0
  %1070 = vmatprep.mubr.f32.mxu0 0.0
  %1071 = vmatmul.mubr.f32.gmra.mrb[0].mxu0 %v1002
  %v1072 = vpop.f32.mrb[0].mxu0
  %v1073 = vadd.f32 0.0, %v1072
  %v1074 = vpop.f32.mrb[0].mxu0
  %1075 = vdwg.mxu0
  %v1076 = vsel %vm388, %v1073, -inf
  %1077 = vmax.xlane.f32.xlu0 %v1076
  %v1078 = vpop.xlane.xlu0 %1077
  %v1079 = vsub.f32 %v1073, %v1078
  %v1080 = vmul.f32 %v1079, 1.442695
  %v1081 = vpow.pop %v1080
  %v1082 = vsel %vm388, %v1081, 0.0
  %1083 = vadd.xlane.f32.xlu0 %v1082
  %v1084 = vpop.xlane.xlu0 %1083
  %v1085 = vrcp.pop %v1084
  %v1086 = vmul.f32 %v1081, %v1085
  %v1088 = vrot.slane %v303, 6
  %v1089 = vrot.slane %v306, 6
  %v1090 = vsel %vm994, %v1088, %v1089
  %v1092 = vsel %vm400, %v1086, 0
  %v1094 = vsel %vm404, %v1090, 0
  %1096 = vmatprep.subr.mxu0 0.0
  %1097 = vmatpush1.msra.mxu0 %v1094
  %1098 = vmatprep.subr.mxu0 0.0
  %1099 = vmatpush1.msra.mxu0 0.0
  %1100 = vmatprep.subr.mxu0 0.0
  %1101 = vmatpush1.msra.mxu0 0.0
  %1102 = vmatprep.subr.mxu0 0.0
  %1103 = vmatpush1.msra.mxu0 0.0
  %1104 = vmatprep.subr.mxu0 0.0
  %1105 = vmatpush1.msra.mxu0 0.0
  %1106 = vmatprep.subr.mxu0 0.0
  %1107 = vmatpush1.msra.mxu0 0.0
  %1108 = vmatprep.subr.mxu0 0.0
  %1109 = vmatpush1.msra.mxu0 0.0
  %1110 = vmatprep.subr.mxu0 0.0
  %1111 = vmatpush1.msra.mxu0 0.0
  %1112 = vmatprep.subr.mxu0 0.0
  %1113 = vmatpush1.msra.mxu0 0.0
  %1114 = vmatprep.subr.mxu0 0.0
  %1115 = vmatpush1.msra.mxu0 0.0
  %1116 = vmatprep.subr.mxu0 0.0
  %1117 = vmatpush1.msra.mxu0 0.0
  %1118 = vmatprep.subr.mxu0 0.0
  %1119 = vmatpush1.msra.mxu0 0.0
  %1120 = vmatprep.subr.mxu0 0.0
  %1121 = vmatpush1.msra.mxu0 0.0
  %1122 = vmatprep.subr.mxu0 0.0
  %1123 = vmatpush1.msra.mxu0 0.0
  %1124 = vmatprep.subr.mxu0 0.0
  %1125 = vmatpush1.msra.mxu0 0.0
  %1126 = vmatprep.subr.mxu0 0.0
  %1127 = vmatpush1.msra.mxu0 0.0
  %1128 = vmatprep.subr.mxu0 0.0
  %1129 = vmatpush1.msra.mxu0 0.0
  %1130 = vmatprep.subr.mxu0 0.0
  %1131 = vmatpush1.msra.mxu0 0.0
  %1132 = vmatprep.subr.mxu0 0.0
  %1133 = vmatpush1.msra.mxu0 0.0
  %1134 = vmatprep.subr.mxu0 0.0
  %1135 = vmatpush1.msra.mxu0 0.0
  %1136 = vmatprep.subr.mxu0 0.0
  %1137 = vmatpush1.msra.mxu0 0.0
  %1138 = vmatprep.subr.mxu0 0.0
  %1139 = vmatpush1.msra.mxu0 0.0
  %1140 = vmatprep.subr.mxu0 0.0
  %1141 = vmatpush1.msra.mxu0 0.0
  %1142 = vmatprep.subr.mxu0 0.0
  %1143 = vmatpush1.msra.mxu0 0.0
  %1144 = vmatprep.subr.mxu0 0.0
  %1145 = vmatpush1.msra.mxu0 0.0
  %1146 = vmatprep.subr.mxu0 0.0
  %1147 = vmatpush1.msra.mxu0 0.0
  %1148 = vmatprep.subr.mxu0 0.0
  %1149 = vmatpush1.msra.mxu0 0.0
  %1150 = vmatprep.subr.mxu0 0.0
  %1151 = vmatpush1.msra.mxu0 0.0
  %1152 = vmatprep.subr.mxu0 0.0
  %1153 = vmatpush1.msra.mxu0 0.0
  %1154 = vmatprep.subr.mxu0 0.0
  %1155 = vmatpush1.msra.mxu0 0.0
  %1156 = vmatprep.subr.mxu0 0.0
  %1157 = vmatpush1.msra.mxu0 0.0
  %1158 = vmatprep.subr.mxu0 0.0
  %1159 = vmatpush1.msra.mxu0 0.0
  %1160 = vmatprep.mubr.f32.mxu0 0.0
  %1161 = vmatmul.mubr.f32.gmra.mrb[0].mxu0 %v1092
  %v1162 = vpop.f32.mrb[0].mxu0
  %v1163 = vadd.f32 0.0, %v1162
  %v1164 = vpop.f32.mrb[0].mxu0
  %1165 = vdwg.mxu0
  %1166 = vrot.lane.b32.xlu0 %v997, 96
  %v1167 = vpop.permute.xlu0 %1166
  %1168 = vrot.lane.b32.xlu0 %v1001, 96
  %v1169 = vpop.permute.xlu0 %1168
  %v1170 = vsel %vm311, %v1167, 0
  %v1172 = vsel %vm311, %v1169, 0
  %1174 = vmatprep.subr.mxu0 0.0
  %1175 = vmatpush1.xpose.msra.mxu0 %v1172
  %1176 = vmatprep.subr.mxu0 0.0
  %1177 = vmatpush1.xpose.msra.mxu0 0.0
  %1178 = vmatprep.subr.mxu0 0.0
  %1179 = vmatpush1.xpose.msra.mxu0 0.0
  %1180 = vmatprep.subr.mxu0 0.0
  %1181 = vmatpush1.xpose.msra.mxu0 0.0
  %1182 = vmatprep.subr.mxu0 0.0
  %1183 = vmatpush1.xpose.msra.mxu0 0.0
  %1184 = vmatprep.subr.mxu0 0.0
  %1185 = vmatpush1.xpose.msra.mxu0 0.0
  %1186 = vmatprep.subr.mxu0 0.0
  %1187 = vmatpush1.xpose.msra.mxu0 0.0
  %1188 = vmatprep.subr.mxu0 0.0
  %1189 = vmatpush1.xpose.msra.mxu0 0.0
  %1190 = vmatprep.subr.mxu0 0.0
  %1191 = vmatpush1.xpose.msra.mxu0 0.0
  %1192 = vmatprep.subr.mxu0 0.0
  %1193 = vmatpush1.xpose.msra.mxu0 0.0
  %1194 = vmatprep.subr.mxu0 0.0
  %1195 = vmatpush1.xpose.msra.mxu0 0.0
  %1196 = vmatprep.subr.mxu0 0.0
  %1197 = vmatpush1.xpose.msra.mxu0 0.0
  %1198 = vmatprep.subr.mxu0 0.0
  %1199 = vmatpush1.xpose.msra.mxu0 0.0
  %1200 = vmatprep.subr.mxu0 0.0
  %1201 = vmatpush1.xpose.msra.mxu0 0.0
  %1202 = vmatprep.subr.mxu0 0.0
  %1203 = vmatpush1.xpose.msra.mxu0 0.0
  %1204 = vmatprep.subr.mxu0 0.0
  %1205 = vmatpush1.xpose.msra.mxu0 0.0
  %1206 = vmatprep.subr.mxu0 0.0
  %1207 = vmatpush1.xpose.msra.mxu0 0.0
  %1208 = vmatprep.subr.mxu0 0.0
  %1209 = vmatpush1.xpose.msra.mxu0 0.0
  %1210 = vmatprep.subr.mxu0 0.0
  %1211 = vmatpush1.xpose.msra.mxu0 0.0
  %1212 = vmatprep.subr.mxu0 0.0
  %1213 = vmatpush1.xpose.msra.mxu0 0.0
  %1214 = vmatprep.subr.mxu0 0.0
  %1215 = vmatpush1.xpose.msra.mxu0 0.0
  %1216 = vmatprep.subr.mxu0 0.0
  %1217 = vmatpush1.xpose.msra.mxu0 0.0
  %1218 = vmatprep.subr.mxu0 0.0
  %1219 = vmatpush1.xpose.msra.mxu0 0.0
  %1220 = vmatprep.subr.mxu0 0.0
  %1221 = vmatpush1.xpose.msra.mxu0 0.0
  %1222 = vmatprep.subr.mxu0 0.0
  %1223 = vmatpush1.xpose.msra.mxu0 0.0
  %1224 = vmatprep.subr.mxu0 0.0
  %1225 = vmatpush1.xpose.msra.mxu0 0.0
  %1226 = vmatprep.subr.mxu0 0.0
  %1227 = vmatpush1.xpose.msra.mxu0 0.0
  %1228 = vmatprep.subr.mxu0 0.0
  %1229 = vmatpush1.xpose.msra.mxu0 0.0
  %1230 = vmatprep.subr.mxu0 0.0
  %1231 = vmatpush1.xpose.msra.mxu0 0.0
  %1232 = vmatprep.subr.mxu0 0.0
  %1233 = vmatpush1.xpose.msra.mxu0 0.0
  %1234 = vmatprep.subr.mxu0 0.0
  %1235 = vmatpush1.xpose.msra.mxu0 0.0
  %1236 = vmatprep.subr.mxu0 0.0
  %1237 = vmatpush1.xpose.msra.mxu0 0.0
  %1238 = vmatprep.mubr.f32.mxu0 0.0
  %1239 = vmatmul.mubr.f32.gmra.mrb[0].mxu0 %v1170
  %v1240 = vpop.f32.mrb[0].mxu0
  %v1241 = vadd.f32 0.0, %v1240
  %v1242 = vpop.f32.mrb[0].mxu0
  %1243 = vdwg.mxu0
  %v1244 = vsel %vm388, %v1241, -inf
  %1245 = vmax.xlane.f32.xlu0 %v1244
  %v1246 = vpop.xlane.xlu0 %1245
  %v1247 = vsub.f32 %v1241, %v1246
  %v1248 = vmul.f32 %v1247, 1.442695
  %v1249 = vpow.pop %v1248
  %v1250 = vsel %vm388, %v1249, 0.0
  %1251 = vadd.xlane.f32.xlu0 %v1250
  %v1252 = vpop.xlane.xlu0 %1251
  %v1253 = vrcp.pop %v1252
  %v1254 = vmul.f32 %v1249, %v1253
  %1255 = vrot.lane.b32.xlu0 %v1090, 96
  %v1256 = vpop.permute.xlu0 %1255
  %v1258 = vsel %vm400, %v1254, 0
  %v1260 = vsel %vm404, %v1256, 0
  %1262 = vmatprep.subr.mxu0 0.0
  %1263 = vmatpush1.msra.mxu0 %v1260
  %1264 = vmatprep.subr.mxu0 0.0
  %1265 = vmatpush1.msra.mxu0 0.0
  %1266 = vmatprep.subr.mxu0 0.0
  %1267 = vmatpush1.msra.mxu0 0.0
  %1268 = vmatprep.subr.mxu0 0.0
  %1269 = vmatpush1.msra.mxu0 0.0
  %1270 = vmatprep.subr.mxu0 0.0
  %1271 = vmatpush1.msra.mxu0 0.0
  %1272 = vmatprep.subr.mxu0 0.0
  %1273 = vmatpush1.msra.mxu0 0.0
  %1274 = vmatprep.subr.mxu0 0.0
  %1275 = vmatpush1.msra.mxu0 0.0
  %1276 = vmatprep.subr.mxu0 0.0
  %1277 = vmatpush1.msra.mxu0 0.0
  %1278 = vmatprep.subr.mxu0 0.0
  %1279 = vmatpush1.msra.mxu0 0.0
  %1280 = vmatprep.subr.mxu0 0.0
  %1281 = vmatpush1.msra.mxu0 0.0
  %1282 = vmatprep.subr.mxu0 0.0
  %1283 = vmatpush1.msra.mxu0 0.0
  %1284 = vmatprep.subr.mxu0 0.0
  %1285 = vmatpush1.msra.mxu0 0.0
  %1286 = vmatprep.subr.mxu0 0.0
  %1287 = vmatpush1.msra.mxu0 0.0
  %1288 = vmatprep.subr.mxu0 0.0
  %1289 = vmatpush1.msra.mxu0 0.0
  %1290 = vmatprep.subr.mxu0 0.0
  %1291 = vmatpush1.msra.mxu0 0.0
  %1292 = vmatprep.subr.mxu0 0.0
  %1293 = vmatpush1.msra.mxu0 0.0
  %1294 = vmatprep.subr.mxu0 0.0
  %1295 = vmatpush1.msra.mxu0 0.0
  %1296 = vmatprep.subr.mxu0 0.0
  %1297 = vmatpush1.msra.mxu0 0.0
  %1298 = vmatprep.subr.mxu0 0.0
  %1299 = vmatpush1.msra.mxu0 0.0
  %1300 = vmatprep.subr.mxu0 0.0
  %1301 = vmatpush1.msra.mxu0 0.0
  %1302 = vmatprep.subr.mxu0 0.0
  %1303 = vmatpush1.msra.mxu0 0.0
  %1304 = vmatprep.subr.mxu0 0.0
  %1305 = vmatpush1.msra.mxu0 0.0
  %1306 = vmatprep.subr.mxu0 0.0
  %1307 = vmatpush1.msra.mxu0 0.0
  %1308 = vmatprep.subr.mxu0 0.0
  %1309 = vmatpush1.msra.mxu0 0.0
  %1310 = vmatprep.subr.mxu0 0.0
  %1311 = vmatpush1.msra.mxu0 0.0
  %1312 = vmatprep.subr.mxu0 0.0
  %1313 = vmatpush1.msra.mxu0 0.0
  %1314 = vmatprep.subr.mxu0 0.0
  %1315 = vmatpush1.msra.mxu0 0.0
  %1316 = vmatprep.subr.mxu0 0.0
  %1317 = vmatpush1.msra.mxu0 0.0
  %1318 = vmatprep.subr.mxu0 0.0
  %1319 = vmatpush1.msra.mxu0 0.0
  %1320 = vmatprep.subr.mxu0 0.0
  %1321 = vmatpush1.msra.mxu0 0.0
  %1322 = vmatprep.subr.mxu0 0.0
  %1323 = vmatpush1.msra.mxu0 0.0
  %1324 = vmatprep.subr.mxu0 0.0
  %1325 = vmatpush1.msra.mxu0 0.0
  %1326 = vmatprep.mubr.f32.mxu0 0.0
  %1327 = vmatmul.mubr.f32.gmra.mrb[0].mxu0 %v1258
  %v1328 = vpop.f32.mrb[0].mxu0
  %v1329 = vadd.f32 0.0, %v1328
  %v1330 = vpop.f32.mrb[0].mxu0
  %1331 = vdwg.mxu0
  %1332 = vrot.lane.b32.xlu0 %v997, 64
  %v1333 = vpop.permute.xlu0 %1332
  %1334 = vrot.lane.b32.xlu0 %v1001, 64
  %v1335 = vpop.permute.xlu0 %1334
  %v1336 = vsel %vm311, %v1333, 0
  %v1338 = vsel %vm311, %v1335, 0
  %1340 = vmatprep.subr.mxu0 0.0
  %1341 = vmatpush1.xpose.msra.mxu0 %v1338
  %1342 = vmatprep.subr.mxu0 0.0
  %1343 = vmatpush1.xpose.msra.mxu0 0.0
  %1344 = vmatprep.subr.mxu0 0.0
  %1345 = vmatpush1.xpose.msra.mxu0 0.0
  %1346 = vmatprep.subr.mxu0 0.0
  %1347 = vmatpush1.xpose.msra.mxu0 0.0
  %1348 = vmatprep.subr.mxu0 0.0
  %1349 = vmatpush1.xpose.msra.mxu0 0.0
  %1350 = vmatprep.subr.mxu0 0.0
  %1351 = vmatpush1.xpose.msra.mxu0 0.0
  %1352 = vmatprep.subr.mxu0 0.0
  %1353 = vmatpush1.xpose.msra.mxu0 0.0
  %1354 = vmatprep.subr.mxu0 0.0
  %1355 = vmatpush1.xpose.msra.mxu0 0.0
  %1356 = vmatprep.subr.mxu0 0.0
  %1357 = vmatpush1.xpose.msra.mxu0 0.0
  %1358 = vmatprep.subr.mxu0 0.0
  %1359 = vmatpush1.xpose.msra.mxu0 0.0
  %1360 = vmatprep.subr.mxu0 0.0
  %1361 = vmatpush1.xpose.msra.mxu0 0.0
  %1362 = vmatprep.subr.mxu0 0.0
  %1363 = vmatpush1.xpose.msra.mxu0 0.0
  %1364 = vmatprep.subr.mxu0 0.0
  %1365 = vmatpush1.xpose.msra.mxu0 0.0
  %1366 = vmatprep.subr.mxu0 0.0
  %1367 = vmatpush1.xpose.msra.mxu0 0.0
  %1368 = vmatprep.subr.mxu0 0.0
  %1369 = vmatpush1.xpose.msra.mxu0 0.0
  %1370 = vmatprep.subr.mxu0 0.0
  %1371 = vmatpush1.xpose.msra.mxu0 0.0
  %1372 = vmatprep.subr.mxu0 0.0
  %1373 = vmatpush1.xpose.msra.mxu0 0.0
  %1374 = vmatprep.subr.mxu0 0.0
  %1375 = vmatpush1.xpose.msra.mxu0 0.0
  %1376 = vmatprep.subr.mxu0 0.0
  %1377 = vmatpush1.xpose.msra.mxu0 0.0
  %1378 = vmatprep.subr.mxu0 0.0
  %1379 = vmatpush1.xpose.msra.mxu0 0.0
  %1380 = vmatprep.subr.mxu0 0.0
  %1381 = vmatpush1.xpose.msra.mxu0 0.0
  %1382 = vmatprep.subr.mxu0 0.0
  %1383 = vmatpush1.xpose.msra.mxu0 0.0
  %1384 = vmatprep.subr.mxu0 0.0
  %1385 = vmatpush1.xpose.msra.mxu0 0.0
  %1386 = vmatprep.subr.mxu0 0.0
  %1387 = vmatpush1.xpose.msra.mxu0 0.0
  %1388 = vmatprep.subr.mxu0 0.0
  %1389 = vmatpush1.xpose.msra.mxu0 0.0
  %1390 = vmatprep.subr.mxu0 0.0
  %1391 = vmatpush1.xpose.msra.mxu0 0.0
  %1392 = vmatprep.subr.mxu0 0.0
  %1393 = vmatpush1.xpose.msra.mxu0 0.0
  %1394 = vmatprep.subr.mxu0 0.0
  %1395 = vmatpush1.xpose.msra.mxu0 0.0
  %1396 = vmatprep.subr.mxu0 0.0
  %1397 = vmatpush1.xpose.msra.mxu0 0.0
  %1398 = vmatprep.subr.mxu0 0.0
  %1399 = vmatpush1.xpose.msra.mxu0 0.0
  %1400 = vmatprep.subr.mxu0 0.0
  %1401 = vmatpush1.xpose.msra.mxu0 0.0
  %1402 = vmatprep.subr.mxu0 0.0
  %1403 = vmatpush1.xpose.msra.mxu0 0.0
  %1404 = vmatprep.mubr.f32.mxu0 0.0
  %1405 = vmatmul.mubr.f32.gmra.mrb[0].mxu0 %v1336
  %v1406 = vpop.f32.mrb[0].mxu0
  %v1407 = vadd.f32 0.0, %v1406
  %v1408 = vpop.f32.mrb[0].mxu0
  %1409 = vdwg.mxu0
  %v1410 = vsel %vm388, %v1407, -inf
  %1411 = vmax.xlane.f32.xlu0 %v1410
  %v1412 = vpop.xlane.xlu0 %1411
  %v1413 = vsub.f32 %v1407, %v1412
  %v1414 = vmul.f32 %v1413, 1.442695
  %v1415 = vpow.pop %v1414
  %v1416 = vsel %vm388, %v1415, 0.0
  %1417 = vadd.xlane.f32.xlu0 %v1416
  %v1418 = vpop.xlane.xlu0 %1417
  %v1419 = vrcp.pop %v1418
  %v1420 = vmul.f32 %v1415, %v1419
  %1421 = vrot.lane.b32.xlu0 %v1090, 64
  %v1422 = vpop.permute.xlu0 %1421
  %v1424 = vsel %vm400, %v1420, 0
  %v1426 = vsel %vm404, %v1422, 0
  %1428 = vmatprep.subr.mxu0 0.0
  %1429 = vmatpush1.msra.mxu0 %v1426
  %1430 = vmatprep.subr.mxu0 0.0
  %1431 = vmatpush1.msra.mxu0 0.0
  %1432 = vmatprep.subr.mxu0 0.0
  %1433 = vmatpush1.msra.mxu0 0.0
  %1434 = vmatprep.subr.mxu0 0.0
  %1435 = vmatpush1.msra.mxu0 0.0
  %1436 = vmatprep.subr.mxu0 0.0
  %1437 = vmatpush1.msra.mxu0 0.0
  %1438 = vmatprep.subr.mxu0 0.0
  %1439 = vmatpush1.msra.mxu0 0.0
  %1440 = vmatprep.subr.mxu0 0.0
  %1441 = vmatpush1.msra.mxu0 0.0
  %1442 = vmatprep.subr.mxu0 0.0
  %1443 = vmatpush1.msra.mxu0 0.0
  %1444 = vmatprep.subr.mxu0 0.0
  %1445 = vmatpush1.msra.mxu0 0.0
  %1446 = vmatprep.subr.mxu0 0.0
  %1447 = vmatpush1.msra.mxu0 0.0
  %1448 = vmatprep.subr.mxu0 0.0
  %1449 = vmatpush1.msra.mxu0 0.0
  %1450 = vmatprep.subr.mxu0 0.0
  %1451 = vmatpush1.msra.mxu0 0.0
  %1452 = vmatprep.subr.mxu0 0.0
  %1453 = vmatpush1.msra.mxu0 0.0
  %1454 = vmatprep.subr.mxu0 0.0
  %1455 = vmatpush1.msra.mxu0 0.0
  %1456 = vmatprep.subr.mxu0 0.0
  %1457 = vmatpush1.msra.mxu0 0.0
  %1458 = vmatprep.subr.mxu0 0.0
  %1459 = vmatpush1.msra.mxu0 0.0
  %1460 = vmatprep.subr.mxu0 0.0
  %1461 = vmatpush1.msra.mxu0 0.0
  %1462 = vmatprep.subr.mxu0 0.0
  %1463 = vmatpush1.msra.mxu0 0.0
  %1464 = vmatprep.subr.mxu0 0.0
  %1465 = vmatpush1.msra.mxu0 0.0
  %1466 = vmatprep.subr.mxu0 0.0
  %1467 = vmatpush1.msra.mxu0 0.0
  %1468 = vmatprep.subr.mxu0 0.0
  %1469 = vmatpush1.msra.mxu0 0.0
  %1470 = vmatprep.subr.mxu0 0.0
  %1471 = vmatpush1.msra.mxu0 0.0
  %1472 = vmatprep.subr.mxu0 0.0
  %1473 = vmatpush1.msra.mxu0 0.0
  %1474 = vmatprep.subr.mxu0 0.0
  %1475 = vmatpush1.msra.mxu0 0.0
  %1476 = vmatprep.subr.mxu0 0.0
  %1477 = vmatpush1.msra.mxu0 0.0
  %1478 = vmatprep.subr.mxu0 0.0
  %1479 = vmatpush1.msra.mxu0 0.0
  %1480 = vmatprep.subr.mxu0 0.0
  %1481 = vmatpush1.msra.mxu0 0.0
  %1482 = vmatprep.subr.mxu0 0.0
  %1483 = vmatpush1.msra.mxu0 0.0
  %1484 = vmatprep.subr.mxu0 0.0
  %1485 = vmatpush1.msra.mxu0 0.0
  %1486 = vmatprep.subr.mxu0 0.0
  %1487 = vmatpush1.msra.mxu0 0.0
  %1488 = vmatprep.subr.mxu0 0.0
  %1489 = vmatpush1.msra.mxu0 0.0
  %1490 = vmatprep.subr.mxu0 0.0
  %1491 = vmatpush1.msra.mxu0 0.0
  %1492 = vmatprep.mubr.f32.mxu0 0.0
  %1493 = vmatmul.mubr.f32.gmra.mrb[0].mxu0 %v1424
  %v1494 = vpop.f32.mrb[0].mxu0
  %v1495 = vadd.f32 0.0, %v1494
  %v1496 = vpop.f32.mrb[0].mxu0
  %1497 = vdwg.mxu0
  %1498 = vrot.lane.b32.xlu0 %v997, 32
  %v1499 = vpop.permute.xlu0 %1498
  %1500 = vrot.lane.b32.xlu0 %v1001, 32
  %v1501 = vpop.permute.xlu0 %1500
  %v1502 = vsel %vm311, %v1499, 0
  %v1504 = vsel %vm311, %v1501, 0
  %1506 = vmatprep.subr.mxu0 0.0
  %1507 = vmatpush1.xpose.msra.mxu0 %v1504
  %1508 = vmatprep.subr.mxu0 0.0
  %1509 = vmatpush1.xpose.msra.mxu0 0.0
  %1510 = vmatprep.subr.mxu0 0.0
  %1511 = vmatpush1.xpose.msra.mxu0 0.0
  %1512 = vmatprep.subr.mxu0 0.0
  %1513 = vmatpush1.xpose.msra.mxu0 0.0
  %1514 = vmatprep.subr.mxu0 0.0
  %1515 = vmatpush1.xpose.msra.mxu0 0.0
  %1516 = vmatprep.subr.mxu0 0.0
  %1517 = vmatpush1.xpose.msra.mxu0 0.0
  %1518 = vmatprep.subr.mxu0 0.0
  %1519 = vmatpush1.xpose.msra.mxu0 0.0
  %1520 = vmatprep.subr.mxu0 0.0
  %1521 = vmatpush1.xpose.msra.mxu0 0.0
  %1522 = vmatprep.subr.mxu0 0.0
  %1523 = vmatpush1.xpose.msra.mxu0 0.0
  %1524 = vmatprep.subr.mxu0 0.0
  %1525 = vmatpush1.xpose.msra.mxu0 0.0
  %1526 = vmatprep.subr.mxu0 0.0
  %1527 = vmatpush1.xpose.msra.mxu0 0.0
  %1528 = vmatprep.subr.mxu0 0.0
  %1529 = vmatpush1.xpose.msra.mxu0 0.0
  %1530 = vmatprep.subr.mxu0 0.0
  %1531 = vmatpush1.xpose.msra.mxu0 0.0
  %1532 = vmatprep.subr.mxu0 0.0
  %1533 = vmatpush1.xpose.msra.mxu0 0.0
  %1534 = vmatprep.subr.mxu0 0.0
  %1535 = vmatpush1.xpose.msra.mxu0 0.0
  %1536 = vmatprep.subr.mxu0 0.0
  %1537 = vmatpush1.xpose.msra.mxu0 0.0
  %1538 = vmatprep.subr.mxu0 0.0
  %1539 = vmatpush1.xpose.msra.mxu0 0.0
  %1540 = vmatprep.subr.mxu0 0.0
  %1541 = vmatpush1.xpose.msra.mxu0 0.0
  %1542 = vmatprep.subr.mxu0 0.0
  %1543 = vmatpush1.xpose.msra.mxu0 0.0
  %1544 = vmatprep.subr.mxu0 0.0
  %1545 = vmatpush1.xpose.msra.mxu0 0.0
  %1546 = vmatprep.subr.mxu0 0.0
  %1547 = vmatpush1.xpose.msra.mxu0 0.0
  %1548 = vmatprep.subr.mxu0 0.0
  %1549 = vmatpush1.xpose.msra.mxu0 0.0
  %1550 = vmatprep.subr.mxu0 0.0
  %1551 = vmatpush1.xpose.msra.mxu0 0.0
  %1552 = vmatprep.subr.mxu0 0.0
  %1553 = vmatpush1.xpose.msra.mxu0 0.0
  %1554 = vmatprep.subr.mxu0 0.0
  %1555 = vmatpush1.xpose.msra.mxu0 0.0
  %1556 = vmatprep.subr.mxu0 0.0
  %1557 = vmatpush1.xpose.msra.mxu0 0.0
  %1558 = vmatprep.subr.mxu0 0.0
  %1559 = vmatpush1.xpose.msra.mxu0 0.0
  %1560 = vmatprep.subr.mxu0 0.0
  %1561 = vmatpush1.xpose.msra.mxu0 0.0
  %1562 = vmatprep.subr.mxu0 0.0
  %1563 = vmatpush1.xpose.msra.mxu0 0.0
  %1564 = vmatprep.subr.mxu0 0.0
  %1565 = vmatpush1.xpose.msra.mxu0 0.0
  %1566 = vmatprep.subr.mxu0 0.0
  %1567 = vmatpush1.xpose.msra.mxu0 0.0
  %1568 = vmatprep.subr.mxu0 0.0
  %1569 = vmatpush1.xpose.msra.mxu0 0.0
  %1570 = vmatprep.mubr.f32.mxu0 0.0
  %1571 = vmatmul.mubr.f32.gmra.mrb[0].mxu0 %v1502
  %v1572 = vpop.f32.mrb[0].mxu0
  %v1573 = vadd.f32 0.0, %v1572
  %v1574 = vpop.f32.mrb[0].mxu0
  %1575 = vdwg.mxu0
  %v1576 = vsel %vm388, %v1573, -inf
  %1577 = vmax.xlane.f32.xlu0 %v1576
  %v1578 = vpop.xlane.xlu0 %1577
  %v1579 = vsub.f32 %v1573, %v1578
  %v1580 = vmul.f32 %v1579, 1.442695
  %v1581 = vpow.pop %v1580
  %v1582 = vsel %vm388, %v1581, 0.0
  %1583 = vadd.xlane.f32.xlu0 %v1582
  %v1584 = vpop.xlane.xlu0 %1583
  %v1585 = vrcp.pop %v1584
  %v1586 = vmul.f32 %v1581, %v1585
  %1587 = vrot.lane.b32.xlu0 %v1090, 32
  %v1588 = vpop.permute.xlu0 %1587
  %v1590 = vsel %vm400, %v1586, 0
  %v1592 = vsel %vm404, %v1588, 0
  %1594 = vmatprep.subr.mxu0 0.0
  %1595 = vmatpush1.msra.mxu0 %v1592
  %1596 = vmatprep.subr.mxu0 0.0
  %1597 = vmatpush1.msra.mxu0 0.0
  %1598 = vmatprep.subr.mxu0 0.0
  %1599 = vmatpush1.msra.mxu0 0.0
  %1600 = vmatprep.subr.mxu0 0.0
  %1601 = vmatpush1.msra.mxu0 0.0
  %1602 = vmatprep.subr.mxu0 0.0
  %1603 = vmatpush1.msra.mxu0 0.0
  %1604 = vmatprep.subr.mxu0 0.0
  %1605 = vmatpush1.msra.mxu0 0.0
  %1606 = vmatprep.subr.mxu0 0.0
  %1607 = vmatpush1.msra.mxu0 0.0
  %1608 = vmatprep.subr.mxu0 0.0
  %1609 = vmatpush1.msra.mxu0 0.0
  %1610 = vmatprep.subr.mxu0 0.0
  %1611 = vmatpush1.msra.mxu0 0.0
  %1612 = vmatprep.subr.mxu0 0.0
  %1613 = vmatpush1.msra.mxu0 0.0
  %1614 = vmatprep.subr.mxu0 0.0
  %1615 = vmatpush1.msra.mxu0 0.0
  %1616 = vmatprep.subr.mxu0 0.0
  %1617 = vmatpush1.msra.mxu0 0.0
  %1618 = vmatprep.subr.mxu0 0.0
  %1619 = vmatpush1.msra.mxu0 0.0
  %1620 = vmatprep.subr.mxu0 0.0
  %1621 = vmatpush1.msra.mxu0 0.0
  %1622 = vmatprep.subr.mxu0 0.0
  %1623 = vmatpush1.msra.mxu0 0.0
  %1624 = vmatprep.subr.mxu0 0.0
  %1625 = vmatpush1.msra.mxu0 0.0
  %1626 = vmatprep.subr.mxu0 0.0
  %1627 = vmatpush1.msra.mxu0 0.0
  %1628 = vmatprep.subr.mxu0 0.0
  %1629 = vmatpush1.msra.mxu0 0.0
  %1630 = vmatprep.subr.mxu0 0.0
  %1631 = vmatpush1.msra.mxu0 0.0
  %1632 = vmatprep.subr.mxu0 0.0
  %1633 = vmatpush1.msra.mxu0 0.0
  %1634 = vmatprep.subr.mxu0 0.0
  %1635 = vmatpush1.msra.mxu0 0.0
  %1636 = vmatprep.subr.mxu0 0.0
  %1637 = vmatpush1.msra.mxu0 0.0
  %1638 = vmatprep.subr.mxu0 0.0
  %1639 = vmatpush1.msra.mxu0 0.0
  %1640 = vmatprep.subr.mxu0 0.0
  %1641 = vmatpush1.msra.mxu0 0.0
  %1642 = vmatprep.subr.mxu0 0.0
  %1643 = vmatpush1.msra.mxu0 0.0
  %1644 = vmatprep.subr.mxu0 0.0
  %1645 = vmatpush1.msra.mxu0 0.0
  %1646 = vmatprep.subr.mxu0 0.0
  %1647 = vmatpush1.msra.mxu0 0.0
  %1648 = vmatprep.subr.mxu0 0.0
  %1649 = vmatpush1.msra.mxu0 0.0
  %1650 = vmatprep.subr.mxu0 0.0
  %1651 = vmatpush1.msra.mxu0 0.0
  %1652 = vmatprep.subr.mxu0 0.0
  %1653 = vmatpush1.msra.mxu0 0.0
  %1654 = vmatprep.subr.mxu0 0.0
  %1655 = vmatpush1.msra.mxu0 0.0
  %1656 = vmatprep.subr.mxu0 0.0
  %1657 = vmatpush1.msra.mxu0 0.0
  %1658 = vmatprep.mubr.f32.mxu0 0.0
  %1659 = vmatmul.mubr.f32.gmra.mrb[0].mxu0 %v1590
  %v1660 = vpop.f32.mrb[0].mxu0
  %v1661 = vadd.f32 0.0, %v1660
  %v1662 = vpop.f32.mrb[0].mxu0
  %1663 = vdwg.mxu0
  %1665 = vrot.lane.b32.xlu0 %v1329, 32
  %v1666 = vpop.permute.xlu0 %1665
  %1669 = vrot.lane.b32.xlu0 %v1495, 64
  %v1670 = vpop.permute.xlu0 %1669
  %1673 = vrot.lane.b32.xlu0 %v1661, 96
  %v1674 = vpop.permute.xlu0 %1673
  %v1676 = vsel %vm311, %v1163, %v1666
  %v1677 = vsel %vm989, %v1676, %v1670
  %v1678 = vsel %vm991, %v1677, %v1674
  %v1680 = vrot.slane %v1678, 2
  %v1682 = vsel %vm404, %v992, %v1680
  %v1683 = vpack.c.bf16 %v1680, %v1682
  %v1684 = vld [vmem:[%s3] sm:$0xf]
  %v1685 = vld [vmem:[%s3 + $0x4] sm:$0xf]
  %v1686 = vld [vmem:[%s3 + $0x8] sm:$0xf]
  %v1687 = vld [vmem:[%s3 + $0xc] sm:$0xf]
  %v1688 = vld [vmem:[%s3 + $0x10] sm:$0xf]
  %v1689 = vld [vmem:[%s3 + $0x14] sm:$0xf]
  %v1690 = vld [vmem:[%s3 + $0x18] sm:$0xf]
  %v1691 = vld [vmem:[%s3 + $0x1c] sm:$0xf]
  %v1692 = vld [vmem:[%s3 + $0x20] sm:$0xf]
  %v1693 = vld [vmem:[%s3 + $0x24] sm:$0xf]
  %v1694 = vld [vmem:[%s3 + $0x28] sm:$0xf]
  %v1695 = vld [vmem:[%s3 + $0x2c] sm:$0xf]
  %v1696 = vld [vmem:[%s3 + $0x30] sm:$0xf]
  %v1697 = vld [vmem:[%s3 + $0x34] sm:$0xf]
  %v1698 = vld [vmem:[%s3 + $0x38] sm:$0xf]
  %v1699 = vld [vmem:[%s3 + $0x3c] sm:$0xf]
  %v1700 = vld [vmem:[%s4] sm:$0x1]
  %v1702 = vlaneseq
  %v1703 = vshrl.u32 %v1702, 7
  %v1704 = vsub.s32 0, %v1703
  %v1705 = vrot.slane %v1700, %v1704
  %v1723 = vunpack.c.l.b16 %v1684
  %v1724 = vunpack.c.l.b16 %v1685
  %v1725 = vunpack.c.l.b16 %v1686
  %v1726 = vunpack.c.l.b16 %v1687
  %v1727 = vunpack.c.l.b16 %v1688
  %v1728 = vunpack.c.l.b16 %v1689
  %v1729 = vunpack.c.l.b16 %v1690
  %v1730 = vunpack.c.l.b16 %v1691
  %v1731 = vunpack.c.l.b16 %v1692
  %v1732 = vunpack.c.l.b16 %v1693
  %v1733 = vunpack.c.l.b16 %v1694
  %v1734 = vunpack.c.l.b16 %v1695
  %v1735 = vunpack.c.l.b16 %v1696
  %v1736 = vunpack.c.l.b16 %v1697
  %v1737 = vunpack.c.l.b16 %v1698
  %v1738 = vunpack.c.l.b16 %v1699
  %v1739 = vpack.c.b16 %v1724, %v1723
  %v1740 = vpack.c.b16 %v1726, %v1725
  %v1741 = vpack.c.b16 %v1728, %v1727
  %v1742 = vpack.c.b16 %v1730, %v1729
  %v1743 = vpack.c.b16 %v1732, %v1731
  %v1744 = vpack.c.b16 %v1734, %v1733
  %v1745 = vpack.c.b16 %v1736, %v1735
  %v1746 = vpack.c.b16 %v1738, %v1737
  %1755 = vmatprep.subr.bf16.mxu0 0
  %1756 = vmatpush1.bf16.msra.mxu0 %v1739
  %1757 = vmatprep.subr.bf16.mxu0 0
  %1758 = vmatpush1.bf16.msra.mxu0 %v1740
  %1759 = vmatprep.subr.bf16.mxu0 0
  %1760 = vmatpush1.bf16.msra.mxu0 %v1741
  %1761 = vmatprep.subr.bf16.mxu0 0
  %1762 = vmatpush1.bf16.msra.mxu0 %v1742
  %1763 = vmatprep.subr.bf16.mxu0 0
  %1764 = vmatpush1.bf16.msra.mxu0 %v1743
  %1765 = vmatprep.subr.bf16.mxu0 0
  %1766 = vmatpush1.bf16.msra.mxu0 %v1744
  %1767 = vmatprep.subr.bf16.mxu0 0
  %1768 = vmatpush1.bf16.msra.mxu0 %v1745
  %1769 = vmatprep.subr.bf16.mxu0 0
  %1770 = vmatpush1.bf16.msra.mxu0 %v1746
  %1771 = vmatprep.subr.bf16.mxu0 0
  %1772 = vmatpush1.bf16.msra.mxu0 0
  %1773 = vmatprep.subr.bf16.mxu0 0
  %1774 = vmatpush1.bf16.msra.mxu0 0
  %1775 = vmatprep.subr.bf16.mxu0 0
  %1776 = vmatpush1.bf16.msra.mxu0 0
  %1777 = vmatprep.subr.bf16.mxu0 0
  %1778 = vmatpush1.bf16.msra.mxu0 0
  %1779 = vmatprep.subr.bf16.mxu0 0
  %1780 = vmatpush1.bf16.msra.mxu0 0
  %1781 = vmatprep.subr.bf16.mxu0 0
  %1782 = vmatpush1.bf16.msra.mxu0 0
  %1783 = vmatprep.subr.bf16.mxu0 0
  %1784 = vmatpush1.bf16.msra.mxu0 0
  %1785 = vmatprep.subr.bf16.mxu0 0
  %1786 = vmatpush1.bf16.msra.mxu0 0
  %1787 = vmatprep.mubr.bf16.mxu0 0
  %1788 = vmatmul.mubr.bf16.gmra.mrb[0].mxu0 %v1683
  %v1789 = vpop.f32.mrb[0].mxu0
  %v1790 = vadd.f32 %v1705, %v1789
  %v1791 = vpop.f32.mrb[0].mxu0
  %v1792 = vpop.f32.mrb[0].mxu0
  %v1793 = vadd.f32 %v1705, %v1792
  %v1794 = vpop.f32.mrb[0].mxu0
  %1795 = vdwg.mxu0
  %v1796 = vadd.f32 %v45, %v1790
  %v1797 = vadd.f32 %v46, %v1793
  %v1798 = vld [vmem:[%s5] sm:$0x1]
  %v1799 = vld [vmem:[%s6] sm:$0x1]
  %1800 = vadd.xlane.f32.xlu0 %v1796
  %v1801 = vpop.xlane.xlu0 %1800
  %vm1802 = vcmask 1043456
  %v1803 = vsel %vm1802, %v1797, 0.0
  %1804 = vadd.xlane.f32.xlu0 %v1803
  %v1805 = vpop.xlane.xlu0 %1804
  %v1806 = vrcp.pop 128.0
  %v1807 = vmul.f32 %v1801, %v1806
  %v1808 = vmul.f32 %v1805, %v1806
  %v1809 = vsub.f32 %v1796, %v1807
  %v1810 = vsub.f32 %v1797, %v1808
  %v1811 = vmul.f32 %v1809, %v1809
  %v1812 = vmul.f32 %v1810, %v1810
  %1813 = vadd.xlane.f32.xlu0 %v1811
  %v1814 = vpop.xlane.xlu0 %1813
  %v1815 = vsel %vm1802, %v1812, 0.0
  %1816 = vadd.xlane.f32.xlu0 %v1815
  %v1817 = vpop.xlane.xlu0 %1816
  %v1818 = vmul.f32 %v1814, %v1806
  %v1819 = vmul.f32 %v1817, %v1806
  %v1820 = vadd.f32 %v1818, 1e-05
  %v1821 = vadd.f32 %v1819, 1e-05
  %v1822 = vrsqrt.pop %v1820
  %v1823 = vrsqrt.pop %v1821
  %v1824 = vmul.f32 %v1809, %v1822
  %v1825 = vmul.f32 %v1810, %v1823
  %v1827 = vlaneseq
  %v1828 = vshrl.u32 %v1827, 7
  %v1829 = vsub.s32 0, %v1828
  %v1830 = vrot.slane %v1798, %v1829
  %v1832 = vmul.f32 %v1824, %v1830
  %v1833 = vmul.f32 %v1825, %v1830
  %v1835 = vlaneseq
  %v1836 = vshrl.u32 %v1835, 7
  %v1837 = vsub.s32 0, %v1836
  %v1838 = vrot.slane %v1799, %v1837
  %v1840 = vadd.f32 %v1832, %v1838
  %v1841 = vadd.f32 %v1833, %v1838
  %v1842 = vpack.c.bf16 %v1841, %v1840
  %v1843 = vld [vmem:[%s7] sm:$0xff]
  %v1844 = vld [vmem:[%s7 + $0x8] sm:$0xff]
  %v1845 = vld [vmem:[%s7 + $0x10] sm:$0xff]
  %v1846 = vld [vmem:[%s7 + $0x18] sm:$0xff]
  %v1847 = vld [vmem:[%s7 + $0x20] sm:$0xff]
  %v1848 = vld [vmem:[%s7 + $0x28] sm:$0xff]
  %v1849 = vld [vmem:[%s7 + $0x30] sm:$0xff]
  %v1850 = vld [vmem:[%s7 + $0x38] sm:$0xff]
  %v1851 = vld [vmem:[%s7 + $0x40] sm:$0xff]
  %v1852 = vld [vmem:[%s7 + $0x48] sm:$0xff]
  %v1853 = vld [vmem:[%s7 + $0x50] sm:$0xff]
  %v1854 = vld [vmem:[%s7 + $0x58] sm:$0xff]
  %v1855 = vld [vmem:[%s7 + $0x60] sm:$0xff]
  %v1856 = vld [vmem:[%s7 + $0x68] sm:$0xff]
  %v1857 = vld [vmem:[%s7 + $0x70] sm:$0xff]
  %v1858 = vld [vmem:[%s7 + $0x78] sm:$0xff]
  %v1859 = vld [vmem:[%s8] sm:$0x3]
  %v1861 = vlaneseq
  %v1862 = vshrl.u32 %v1861, 7
  %v1863 = vsub.s32 0, %v1862
  %v1864 = vrot.slane %v1859, %v1863
  %v1865 = vlaneseq
  %v1866 = vshrl.u32 %v1865, 7
  %v1867 = vsub.s32 1, %v1866
  %v1868 = vrot.slane %v1859, %v1867
  %v1887 = vunpack.c.l.b16 %v1843
  %v1888 = vunpack.c.h.b16 %v1843
  %v1889 = vunpack.c.l.b16 %v1844
  %v1890 = vunpack.c.h.b16 %v1844
  %v1891 = vunpack.c.l.b16 %v1845
  %v1892 = vunpack.c.h.b16 %v1845
  %v1893 = vunpack.c.l.b16 %v1846
  %v1894 = vunpack.c.h.b16 %v1846
  %v1895 = vunpack.c.l.b16 %v1847
  %v1896 = vunpack.c.h.b16 %v1847
  %v1897 = vunpack.c.l.b16 %v1848
  %v1898 = vunpack.c.h.b16 %v1848
  %v1899 = vunpack.c.l.b16 %v1849
  %v1900 = vunpack.c.h.b16 %v1849
  %v1901 = vunpack.c.l.b16 %v1850
  %v1902 = vunpack.c.h.b16 %v1850
  %v1903 = vunpack.c.l.b16 %v1851
  %v1904 = vunpack.c.h.b16 %v1851
  %v1905 = vunpack.c.l.b16 %v1852
  %v1906 = vunpack.c.h.b16 %v1852
  %v1907 = vunpack.c.l.b16 %v1853
  %v1908 = vunpack.c.h.b16 %v1853
  %v1909 = vunpack.c.l.b16 %v1854
  %v1910 = vunpack.c.h.b16 %v1854
  %v1911 = vunpack.c.l.b16 %v1855
  %v1912 = vunpack.c.h.b16 %v1855
  %v1913 = vunpack.c.l.b16 %v1856
  %v1914 = vunpack.c.h.b16 %v1856
  %v1915 = vunpack.c.l.b16 %v1857
  %v1916 = vunpack.c.h.b16 %v1857
  %v1917 = vunpack.c.l.b16 %v1858
  %v1918 = vunpack.c.h.b16 %v1858
  %v1919 = vpack.c.b16 %v1889, %v1887
  %v1920 = vpack.c.b16 %v1890, %v1888
  %v1921 = vpack.c.b16 %v1893, %v1891
  %v1922 = vpack.c.b16 %v1894, %v1892
  %v1923 = vpack.c.b16 %v1897, %v1895
  %v1924 = vpack.c.b16 %v1898, %v1896
  %v1925 = vpack.c.b16 %v1901, %v1899
  %v1926 = vpack.c.b16 %v1902, %v1900
  %v1927 = vpack.c.b16 %v1905, %v1903
  %v1928 = vpack.c.b16 %v1906, %v1904
  %v1929 = vpack.c.b16 %v1909, %v1907
  %v1930 = vpack.c.b16 %v1910, %v1908
  %v1931 = vpack.c.b16 %v1913, %v1911
  %v1932 = vpack.c.b16 %v1914, %v1912
  %v1933 = vpack.c.b16 %v1917, %v1915
  %v1934 = vpack.c.b16 %v1918, %v1916
  %1951 = vmatprep.subr.bf16.mxu0 %v1920
  %1952 = vmatpush1.bf16.msra.mxu0 %v1919
  %1953 = vmatprep.subr.bf16.mxu0 %v1922
  %1954 = vmatpush1.bf16.msra.mxu0 %v1921
  %1955 = vmatprep.subr.bf16.mxu0 %v1924
  %1956 = vmatpush1.bf16.msra.mxu0 %v1923
  %1957 = vmatprep.subr.bf16.mxu0 %v1926
  %1958 = vmatpush1.bf16.msra.mxu0 %v1925
  %1959 = vmatprep.subr.bf16.mxu0 %v1928
  %1960 = vmatpush1.bf16.msra.mxu0 %v1927
  %1961 = vmatprep.subr.bf16.mxu0 %v1930
  %1962 = vmatpush1.bf16.msra.mxu0 %v1929
  %1963 = vmatprep.subr.bf16.mxu0 %v1932
  %1964 = vmatpush1.bf16.msra.mxu0 %v1931
  %1965 = vmatprep.subr.bf16.mxu0 %v1934
  %1966 = vmatpush1.bf16.msra.mxu0 %v1933
  %1967 = vmatprep.subr.bf16.mxu0 0
  %1968 = vmatpush1.bf16.msra.mxu0 0
  %1969 = vmatprep.subr.bf16.mxu0 0
  %1970 = vmatpush1.bf16.msra.mxu0 0
  %1971 = vmatprep.subr.bf16.mxu0 0
  %1972 = vmatpush1.bf16.msra.mxu0 0
  %1973 = vmatprep.subr.bf16.mxu0 0
  %1974 = vmatpush1.bf16.msra.mxu0 0
  %1975 = vmatprep.subr.bf16.mxu0 0
  %1976 = vmatpush1.bf16.msra.mxu0 0
  %1977 = vmatprep.subr.bf16.mxu0 0
  %1978 = vmatpush1.bf16.msra.mxu0 0
  %1979 = vmatprep.subr.bf16.mxu0 0
  %1980 = vmatpush1.bf16.msra.mxu0 0
  %1981 = vmatprep.subr.bf16.mxu0 0
  %1982 = vmatpush1.bf16.msra.mxu0 0
  %1983 = vmatprep.mubr.bf16.mxu0 0
  %1984 = vmatmul.mubr.bf16.gmra.mrb[0].mxu0 %v1842
  %v1985 = vpop.f32.mrb[0].mxu0
  %v1986 = vadd.f32 %v1864, %v1985
  %v1987 = vpop.f32.mrb[0].mxu0
  %v1988 = vadd.f32 %v1868, %v1987
  %v1989 = vpop.f32.mrb[0].mxu0
  %v1990 = vadd.f32 %v1864, %v1989
  %v1991 = vpop.f32.mrb[0].mxu0
  %v1992 = vadd.f32 %v1868, %v1991
  %1993 = vdwg.mxu0
  %v1994 = vmul.f32 %v1986, 0.5
  %v1995 = vmul.f32 %v1988, 0.5
  %v1996 = vmul.f32 %v1990, 0.5
  %v1997 = vmul.f32 %v1992, 0.5
  %v1998 = vmul.f32 %v1986, 0.044715
  %v1999 = vmul.f32 %v1988, 0.044715
  %v2000 = vmul.f32 %v1990, 0.044715
  %v2001 = vmul.f32 %v1992, 0.044715
  %v2002 = vmul.f32 %v1998, %v1986
  %v2003 = vmul.f32 %v1999, %v1988
  %v2004 = vmul.f32 %v2000, %v1990
  %v2005 = vmul.f32 %v2001, %v1992
  %v2006 = vmul.f32 %v2002, %v1986
  %v2007 = vmul.f32 %v2003, %v1988
  %v2008 = vmul.f32 %v2004, %v1990
  %v2009 = vmul.f32 %v2005, %v1992
  %v2010 = vadd.f32 %v1986, %v2006
  %v2011 = vadd.f32 %v1988, %v2007
  %v2012 = vadd.f32 %v1990, %v2008
  %v2013 = vadd.f32 %v1992, %v2009
  %v2014 = vmul.f32 %v2010, 0.7978846
  %v2015 = vmul.f32 %v2011, 0.7978846
  %v2016 = vmul.f32 %v2012, 0.7978846
  %v2017 = vmul.f32 %v2013, 0.7978846
  %v2018 = vtanh.pop %v2014
  %v2019 = vtanh.pop %v2015
  %v2020 = vtanh.pop %v2016
  %v2021 = vtanh.pop %v2017
  %v2022 = vadd.f32 %v2018, 1.0
  %v2023 = vadd.f32 %v2019, 1.0
  %v2024 = vadd.f32 %v2020, 1.0
  %v2025 = vadd.f32 %v2021, 1.0
  %v2026 = vmul.f32 %v1994, %v2022
  %v2027 = vmul.f32 %v1995, %v2023
  %v2028 = vmul.f32 %v1996, %v2024
  %v2029 = vmul.f32 %v1997, %v2025
  %v2030 = vpack.c.bf16 %v2028, %v2026
  %v2031 = vpack.c.bf16 %v2029, %v2027
  %v2032 = vld [vmem:[%s9] sm:$0xf]
  %v2033 = vld [vmem:[%s9 + $0x4] sm:$0xf]
  %v2034 = vld [vmem:[%s9 + $0x8] sm:$0xf]
  %v2035 = vld [vmem:[%s9 + $0xc] sm:$0xf]
  %v2036 = vld [vmem:[%s9 + $0x10] sm:$0xf]
  %v2037 = vld [vmem:[%s9 + $0x14] sm:$0xf]
  %v2038 = vld [vmem:[%s9 + $0x18] sm:$0xf]
  %v2039 = vld [vmem:[%s9 + $0x1c] sm:$0xf]
  %v2040 = vld [vmem:[%s9 + $0x20] sm:$0xf]
  %v2041 = vld [vmem:[%s9 + $0x24] sm:$0xf]
  %v2042 = vld [vmem:[%s9 + $0x28] sm:$0xf]
  %v2043 = vld [vmem:[%s9 + $0x2c] sm:$0xf]
  %v2044 = vld [vmem:[%s9 + $0x30] sm:$0xf]
  %v2045 = vld [vmem:[%s9 + $0x34] sm:$0xf]
  %v2046 = vld [vmem:[%s9 + $0x38] sm:$0xf]
  %v2047 = vld [vmem:[%s9 + $0x3c] sm:$0xf]
  %v2048 = vld [vmem:[%s9 + $0x40] sm:$0xf]
  %v2049 = vld [vmem:[%s9 + $0x44] sm:$0xf]
  %v2050 = vld [vmem:[%s9 + $0x48] sm:$0xf]
  %v2051 = vld [vmem:[%s9 + $0x4c] sm:$0xf]
  %v2052 = vld [vmem:[%s9 + $0x50] sm:$0xf]
  %v2053 = vld [vmem:[%s9 + $0x54] sm:$0xf]
  %v2054 = vld [vmem:[%s9 + $0x58] sm:$0xf]
  %v2055 = vld [vmem:[%s9 + $0x5c] sm:$0xf]
  %v2056 = vld [vmem:[%s9 + $0x60] sm:$0xf]
  %v2057 = vld [vmem:[%s9 + $0x64] sm:$0xf]
  %v2058 = vld [vmem:[%s9 + $0x68] sm:$0xf]
  %v2059 = vld [vmem:[%s9 + $0x6c] sm:$0xf]
  %v2060 = vld [vmem:[%s9 + $0x70] sm:$0xf]
  %v2061 = vld [vmem:[%s9 + $0x74] sm:$0xf]
  %v2062 = vld [vmem:[%s9 + $0x78] sm:$0xf]
  %v2063 = vld [vmem:[%s9 + $0x7c] sm:$0xf]
  %v2064 = vld [vmem:[%s10] sm:$0x1]
  %v2066 = vlaneseq
  %v2067 = vshrl.u32 %v2066, 7
  %v2068 = vsub.s32 0, %v2067
  %v2069 = vrot.slane %v2064, %v2068
  %v2103 = vunpack.c.l.b16 %v2032
  %v2104 = vunpack.c.l.b16 %v2033
  %v2105 = vunpack.c.l.b16 %v2034
  %v2106 = vunpack.c.l.b16 %v2035
  %v2107 = vunpack.c.l.b16 %v2036
  %v2108 = vunpack.c.l.b16 %v2037
  %v2109 = vunpack.c.l.b16 %v2038
  %v2110 = vunpack.c.l.b16 %v2039
  %v2111 = vunpack.c.l.b16 %v2040
  %v2112 = vunpack.c.l.b16 %v2041
  %v2113 = vunpack.c.l.b16 %v2042
  %v2114 = vunpack.c.l.b16 %v2043
  %v2115 = vunpack.c.l.b16 %v2044
  %v2116 = vunpack.c.l.b16 %v2045
  %v2117 = vunpack.c.l.b16 %v2046
  %v2118 = vunpack.c.l.b16 %v2047
  %v2119 = vunpack.c.l.b16 %v2048
  %v2120 = vunpack.c.l.b16 %v2049
  %v2121 = vunpack.c.l.b16 %v2050
  %v2122 = vunpack.c.l.b16 %v2051
  %v2123 = vunpack.c.l.b16 %v2052
  %v2124 = vunpack.c.l.b16 %v2053
  %v2125 = vunpack.c.l.b16 %v2054
  %v2126 = vunpack.c.l.b16 %v2055
  %v2127 = vunpack.c.l.b16 %v2056
  %v2128 = vunpack.c.l.b16 %v2057
  %v2129 = vunpack.c.l.b16 %v2058
  %v2130 = vunpack.c.l.b16 %v2059
  %v2131 = vunpack.c.l.b16 %v2060
  %v2132 = vunpack.c.l.b16 %v2061
  %v2133 = vunpack.c.l.b16 %v2062
  %v2134 = vunpack.c.l.b16 %v2063
  %v2135 = vpack.c.b16 %v2104, %v2103
  %v2136 = vpack.c.b16 %v2106, %v2105
  %v2137 = vpack.c.b16 %v2108, %v2107
  %v2138 = vpack.c.b16 %v2110, %v2109
  %v2139 = vpack.c.b16 %v2112, %v2111
  %v2140 = vpack.c.b16 %v2114, %v2113
  %v2141 = vpack.c.b16 %v2116, %v2115
  %v2142 = vpack.c.b16 %v2118, %v2117
  %v2143 = vpack.c.b16 %v2120, %v2119
  %v2144 = vpack.c.b16 %v2122, %v2121
  %v2145 = vpack.c.b16 %v2124, %v2123
  %v2146 = vpack.c.b16 %v2126, %v2125
  %v2147 = vpack.c.b16 %v2128, %v2127
  %v2148 = vpack.c.b16 %v2130, %v2129
  %v2149 = vpack.c.b16 %v2132, %v2131
  %v2150 = vpack.c.b16 %v2134, %v2133
  %2167 = vmatprep.subr.bf16.mxu0 0
  %2168 = vmatpush1.bf16.msra.mxu0 %v2135
  %2169 = vmatprep.subr.bf16.mxu0 0
  %2170 = vmatpush1.bf16.msra.mxu0 %v2136
  %2171 = vmatprep.subr.bf16.mxu0 0
  %2172 = vmatpush1.bf16.msra.mxu0 %v2137
  %2173 = vmatprep.subr.bf16.mxu0 0
  %2174 = vmatpush1.bf16.msra.mxu0 %v2138
  %2175 = vmatprep.subr.bf16.mxu0 0
  %2176 = vmatpush1.bf16.msra.mxu0 %v2139
  %2177 = vmatprep.subr.bf16.mxu0 0
  %2178 = vmatpush1.bf16.msra.mxu0 %v2140
  %2179 = vmatprep.subr.bf16.mxu0 0
  %2180 = vmatpush1.bf16.msra.mxu0 %v2141
  %2181 = vmatprep.subr.bf16.mxu0 0
  %2182 = vmatpush1.bf16.msra.mxu0 %v2142
  %2183 = vmatprep.subr.bf16.mxu0 0
  %2184 = vmatpush1.bf16.msra.mxu0 %v2143
  %2185 = vmatprep.subr.bf16.mxu0 0
  %2186 = vmatpush1.bf16.msra.mxu0 %v2144
  %2187 = vmatprep.subr.bf16.mxu0 0
  %2188 = vmatpush1.bf16.msra.mxu0 %v2145
  %2189 = vmatprep.subr.bf16.mxu0 0
  %2190 = vmatpush1.bf16.msra.mxu0 %v2146
  %2191 = vmatprep.subr.bf16.mxu0 0
  %2192 = vmatpush1.bf16.msra.mxu0 %v2147
  %2193 = vmatprep.subr.bf16.mxu0 0
  %2194 = vmatpush1.bf16.msra.mxu0 %v2148
  %2195 = vmatprep.subr.bf16.mxu0 0
  %2196 = vmatpush1.bf16.msra.mxu0 %v2149
  %2197 = vmatprep.subr.bf16.mxu0 0
  %2198 = vmatpush1.bf16.msra.mxu0 %v2150
  %2199 = vmatprep.mubr.bf16.mxu0 %v2031
  %2200 = vmatmul.mubr.bf16.gmra.mrb[0].mxu0 %v2030
  %v2201 = vpop.f32.mrb[0].mxu0
  %v2202 = vadd.f32 %v2069, %v2201
  %v2203 = vpop.f32.mrb[0].mxu0
  %v2204 = vpop.f32.mrb[0].mxu0
  %v2205 = vadd.f32 %v2069, %v2204
  %v2206 = vpop.f32.mrb[0].mxu0
  %2207 = vdwg.mxu0
  %v2208 = vadd.f32 %v1840, %v2202
  %v2209 = vadd.f32 %v1841, %v2205
  %v2210 = vld [vmem:[%s11] sm:$0x1]
  %v2211 = vld [vmem:[%s12] sm:$0x1]
  %2212 = vadd.xlane.f32.xlu0 %v2208
  %v2213 = vpop.xlane.xlu0 %2212
  %v2214 = vsel %vm1802, %v2209, 0.0
  %2215 = vadd.xlane.f32.xlu0 %v2214
  %v2216 = vpop.xlane.xlu0 %2215
  %v2217 = vmul.f32 %v2213, %v1806
  %v2218 = vmul.f32 %v2216, %v1806
  %v2219 = vsub.f32 %v2208, %v2217
  %v2220 = vsub.f32 %v2209, %v2218
  %v2221 = vmul.f32 %v2219, %v2219
  %v2222 = vmul.f32 %v2220, %v2220
  %2223 = vadd.xlane.f32.xlu0 %v2221
  %v2224 = vpop.xlane.xlu0 %2223
  %v2225 = vsel %vm1802, %v2222, 0.0
  %2226 = vadd.xlane.f32.xlu0 %v2225
  %v2227 = vpop.xlane.xlu0 %2226
  %v2228 = vmul.f32 %v2224, %v1806
  %v2229 = vmul.f32 %v2227, %v1806
  %v2230 = vadd.f32 %v2228, 1e-05
  %v2231 = vadd.f32 %v2229, 1e-05
  %v2232 = vrsqrt.pop %v2230
  %v2233 = vrsqrt.pop %v2231
  %v2234 = vmul.f32 %v2219, %v2232
  %v2235 = vmul.f32 %v2220, %v2233
  %v2237 = vlaneseq
  %v2238 = vshrl.u32 %v2237, 7
  %v2239 = vsub.s32 0, %v2238
  %v2240 = vrot.slane %v2210, %v2239
  %v2242 = vmul.f32 %v2234, %v2240
  %v2243 = vmul.f32 %v2235, %v2240
  %v2245 = vlaneseq
  %v2246 = vshrl.u32 %v2245, 7
  %v2247 = vsub.s32 0, %v2246
  %v2248 = vrot.slane %v2211, %v2247
  %v2250 = vadd.f32 %v2242, %v2248
  %v2251 = vadd.f32 %v2243, %v2248
  %2252 = vst [vmem:[%s13] sm:$0xff] %v2250
  %2253 = vst [vmem:[%s13 + $0x8] sm:$0xf] %v2251
  // Predicated region
  $region54: #{ssl_model_forward.4} parent=0 // pred_check
    _
  $region55: #{ssl_model_forward.4} parent=0 // pred_check_branch
    %2255 = sbr.rel (0) target = $region57
  $region56: #{ssl_model_forward.4} parent=0 // pred_region
    _
  $region57: #{ssl_model_forward.4} parent=0 // pred_fallthru
    _
  // Predicated region
  $region58: #{ssl_model_forward.4} parent=0 // pred_check
    _
  $region59: #{ssl_model_forward.4} parent=0 // pred_check_branch
    %2257 = sbr.rel (0) target = $region61
  $region60: #{ssl_model_forward.4} parent=0 // pred_region
    _
  $region61: #{ssl_model_forward.4} parent=0 // pred_fallthru
    _

// kernel: ssl_model_forward.3
$region0: #{ssl_model_forward.3}
  #allocation0 [shape = 'u32[]', space=smem, size = 0x4, offset = 0x4, fixed_abs, tag = 'smem constant byte address 0x4 - core index']
  #allocation1 [shape = 'u32[144,128]{1,0:T(1,128)}', space=vmem, size = 0x12000, scoped, tag = 'internal scratch']
  #allocation2 [shape = 'f32[399,64]{1,0:T(8,128)}', space=vmem, size = 0x32000, scoped, tag = 'scratch operand']
  #allocation3 [shape = 'f32[199,64]{1,0:T(8,128)}', space=vmem, size = 0x19000, scoped, tag = 'scratch operand']
  #allocation4 [shape = 'f32[22,128]{1,0:T(8,128)}', space=vmem, size = 0x3000, scoped, tag = 'scratch operand']
  %s0 = inlined_call_operand.vmem [shape: f32[2,400,8], index: 0, kind: input, shape index: {}]
  %s1 = inlined_call_operand.vmem [shape: f32[2,8,64], index: 1, kind: input, shape index: {}]
  %s2 = inlined_call_operand.vmem [shape: f32[1,64], index: 2, kind: input, shape index: {}]
  %s3 = inlined_call_operand.vmem [shape: f32[1,64], index: 3, kind: input, shape index: {}]
  %s4 = inlined_call_operand.vmem [shape: bf16[4,3,64,64], index: 4, kind: input, shape index: {}]
  %s5 = inlined_call_operand.vmem [shape: bf16[2,2,64,64], index: 5, kind: input, shape index: {}]
  %s6 = inlined_call_operand.vmem [shape: f32[1,64], index: 6, kind: input, shape index: {}]
  %s7 = inlined_call_operand.vmem [shape: f32[1,64], index: 7, kind: input, shape index: {}]
  %s8 = inlined_call_operand.vmem [shape: bf16[64,128], index: 8, kind: input, shape index: {}]
  %s9 = inlined_call_operand.vmem [shape: f32[1,128], index: 9, kind: input, shape index: {}]
  %s10 = inlined_call_operand.vmem [shape: bf16[4,512,32], index: 10, kind: input, shape index: {}]
  %s11 = inlined_call_operand.vmem [shape: f32[1,128], index: 11, kind: input, shape index: {}]
  %s12 = inlined_call_operand.vmem [shape: f32[1,128], index: 12, kind: input, shape index: {}]
  %s13 = inlined_call_operand.vmem [shape: f32[1,128], index: 13, kind: input, shape index: {}]
  %s14 = inlined_call_operand.vmem [shape: f32[2,6,128], index: 14, kind: output, shape index: {}]
  %s15 = sld [smem:[#allocation0]]
  $region89: #{ssl_model_forward.3} parent=0
    _
  %s17 = ssub.s32 1, %s15
  %s18 = scalar_select 0, %s17, %s15
  loop: start=0, step=1, limit=4
  $region2: #{ssl_model_forward.3} parent=0 // loop_pre_header
    _
  $region3: #{ssl_model_forward.3} parent=0 // loop_header
    %s20 = sphi 0, %s24
    %p21 = scmp.ge.s32.totalorder %s20, 4
    %s30 = sphi 0, %s32
    %s33 = sphi 0, %s30
    %s34 = sphi 0, %s33
    %s50 = sphi 0, %s34
    %s54 = sphi 0, %s54
    %s56 = sphi 0, %s54
    %s57 = sphi 0, %s56
    %s71 = sphi 0, %s57
    %s75 = sphi 0, %s75
    %s77 = sphi 0, %s75
    %s78 = sphi 0, %s77
    %s92 = sphi 0, %s78
    %s96 = sphi 0, %s96
    %s98 = sphi 0, %s96
    %s99 = sphi 0, %s98
    %s113 = sphi 0, %s99
    %s117 = sphi 0, %s117
    %s119 = sphi 0, %s117
    %s120 = sphi 0, %s119
    %s134 = sphi 0, %s120
    %s138 = sphi 0, %s138
    %s140 = sphi 0, %s138
    %s141 = sphi 0, %s140
    %s155 = sphi 0, %s141
    %s159 = sphi 0, %s159
    %s161 = sphi 0, %s159
    %s162 = sphi 0, %s161
    %s176 = sphi 0, %s162
    %s180 = sphi 0, %s180
    %s182 = sphi 0, %s180
    %s183 = sphi 0, %s182
    %s197 = sphi 0, %s183
    %s201 = sphi 0, %s201
    %s203 = sphi 0, %s201
    %s204 = sphi 0, %s203
    %s218 = sphi 0, %s204
    %s222 = sphi 0, %s222
    %s224 = sphi 0, %s222
    %s225 = sphi 0, %s224
    %s239 = sphi 0, %s225
    %s243 = sphi 0, %s243
    %s245 = sphi 0, %s243
    %s246 = sphi 0, %s245
    %s260 = sphi 0, %s246
    %s264 = sphi 0, %s264
    %s266 = sphi 0, %s264
    %s267 = sphi 0, %s266
    %s281 = sphi 0, %s267
    %s285 = sphi 0, %s285
    %s287 = sphi 0, %s285
    %s288 = sphi 0, %s287
    %s302 = sphi 0, %s288
    %s306 = sphi 0, %s306
    %s308 = sphi 0, %s306
    %s309 = sphi 0, %s308
    %s323 = sphi 0, %s309
    %s329 = sphi 0, %s331
    %s332 = sphi 0, %s329
    %s333 = sphi 0, %s332
    %s349 = sphi 0, %s333
  $region4: #{ssl_model_forward.3} parent=0 // loop_header_branch
    %23 = sbr.rel (%p21) target = $region8
  $region5: #{ssl_model_forward.3} parent=0 // loop_body
    %s25 = ssub.s32 %s20, 1
    %s26 = ssub.s32 %s20, 2
    %s27 = sadd.s32 %s20, 1
    %s28 = ssub.s32 %s20, %s27
    %p29 = scmp.eq.s32.totalorder %s28, 0
    %s31 = sadd.s32 %s30, 1
    %s32 = scalar_select %p29, %s30, %s31
    %p35 = pneg %p29
    %p36 = scmp.eq.s32.totalorder %s20, 1
    %p37 = por %p35, %p36
    %p38 = scmp.ne.s32.totalorder %s30, %s33
    %p39 = scmp.eq.s32.totalorder %s20, 0
    %p40 = por %p38, %p39
    %p41 = scmp.ne.s32.totalorder %s30, %s33
    %p42 = scmp.eq.s32.totalorder %s25, 1
    %p43 = por %p41, %p42
    %p44 = scmp.ne.s32.totalorder %s33, %s34
    %p45 = scmp.eq.s32.totalorder %s25, 0
    %p46 = por %p44, %p45
    %p47 = scmp.ne.s32.totalorder %s33, %s34
    %p48 = scmp.eq.s32.totalorder %s26, 1
    %p49 = por %p47, %p48
    %p51 = scmp.ne.s32.totalorder %s34, %s50
    %p52 = scmp.eq.s32.totalorder %s26, 0
    %p53 = por %p51, %p52
    %s55 = sadd.s32 %s54, 1
    %p58 = scmp.eq.s32.totalorder %s20, 1
    %p59 = scmp.ne.s32.totalorder %s54, %s56
    %p60 = scmp.eq.s32.totalorder %s20, 0
    %p61 = por %p59, %p60
    %p62 = scmp.ne.s32.totalorder %s54, %s56
    %p63 = scmp.eq.s32.totalorder %s25, 1
    %p64 = por %p62, %p63
    %p65 = scmp.ne.s32.totalorder %s56, %s57
    %p66 = scmp.eq.s32.totalorder %s25, 0
    %p67 = por %p65, %p66
    %p68 = scmp.ne.s32.totalorder %s56, %s57
    %p69 = scmp.eq.s32.totalorder %s26, 1
    %p70 = por %p68, %p69
    %p72 = scmp.ne.s32.totalorder %s57, %s71
    %p73 = scmp.eq.s32.totalorder %s26, 0
    %p74 = por %p72, %p73
    %s76 = sadd.s32 %s75, 1
    %p79 = scmp.eq.s32.totalorder %s20, 1
    %p80 = scmp.ne.s32.totalorder %s75, %s77
    %p81 = scmp.eq.s32.totalorder %s20, 0
    %p82 = por %p80, %p81
    %p83 = scmp.ne.s32.totalorder %s75, %s77
    %p84 = scmp.eq.s32.totalorder %s25, 1
    %p85 = por %p83, %p84
    %p86 = scmp.ne.s32.totalorder %s77, %s78
    %p87 = scmp.eq.s32.totalorder %s25, 0
    %p88 = por %p86, %p87
    %p89 = scmp.ne.s32.totalorder %s77, %s78
    %p90 = scmp.eq.s32.totalorder %s26, 1
    %p91 = por %p89, %p90
    %p93 = scmp.ne.s32.totalorder %s78, %s92
    %p94 = scmp.eq.s32.totalorder %s26, 0
    %p95 = por %p93, %p94
    %s97 = sadd.s32 %s96, 1
    %p100 = scmp.eq.s32.totalorder %s20, 1
    %p101 = scmp.ne.s32.totalorder %s96, %s98
    %p102 = scmp.eq.s32.totalorder %s20, 0
    %p103 = por %p101, %p102
    %p104 = scmp.ne.s32.totalorder %s96, %s98
    %p105 = scmp.eq.s32.totalorder %s25, 1
    %p106 = por %p104, %p105
    %p107 = scmp.ne.s32.totalorder %s98, %s99
    %p108 = scmp.eq.s32.totalorder %s25, 0
    %p109 = por %p107, %p108
    %p110 = scmp.ne.s32.totalorder %s98, %s99
    %p111 = scmp.eq.s32.totalorder %s26, 1
    %p112 = por %p110, %p111
    %p114 = scmp.ne.s32.totalorder %s99, %s113
    %p115 = scmp.eq.s32.totalorder %s26, 0
    %p116 = por %p114, %p115
    %s118 = sadd.s32 %s117, 1
    %p121 = scmp.eq.s32.totalorder %s20, 1
    %p122 = scmp.ne.s32.totalorder %s117, %s119
    %p123 = scmp.eq.s32.totalorder %s20, 0
    %p124 = por %p122, %p123
    %p125 = scmp.ne.s32.totalorder %s117, %s119
    %p126 = scmp.eq.s32.totalorder %s25, 1
    %p127 = por %p125, %p126
    %p128 = scmp.ne.s32.totalorder %s119, %s120
    %p129 = scmp.eq.s32.totalorder %s25, 0
    %p130 = por %p128, %p129
    %p131 = scmp.ne.s32.totalorder %s119, %s120
    %p132 = scmp.eq.s32.totalorder %s26, 1
    %p133 = por %p131, %p132
    %p135 = scmp.ne.s32.totalorder %s120, %s134
    %p136 = scmp.eq.s32.totalorder %s26, 0
    %p137 = por %p135, %p136
    %s139 = sadd.s32 %s138, 1
    %p142 = scmp.eq.s32.totalorder %s20, 1
    %p143 = scmp.ne.s32.totalorder %s138, %s140
    %p144 = scmp.eq.s32.totalorder %s20, 0
    %p145 = por %p143, %p144
    %p146 = scmp.ne.s32.totalorder %s138, %s140
    %p147 = scmp.eq.s32.totalorder %s25, 1
    %p148 = por %p146, %p147
    %p149 = scmp.ne.s32.totalorder %s140, %s141
    %p150 = scmp.eq.s32.totalorder %s25, 0
    %p151 = por %p149, %p150
    %p152 = scmp.ne.s32.totalorder %s140, %s141
    %p153 = scmp.eq.s32.totalorder %s26, 1
    %p154 = por %p152, %p153
    %p156 = scmp.ne.s32.totalorder %s141, %s155
    %p157 = scmp.eq.s32.totalorder %s26, 0
    %p158 = por %p156, %p157
    %s160 = sadd.s32 %s159, 1
    %p163 = scmp.eq.s32.totalorder %s20, 1
    %p164 = scmp.ne.s32.totalorder %s159, %s161
    %p165 = scmp.eq.s32.totalorder %s20, 0
    %p166 = por %p164, %p165
    %p167 = scmp.ne.s32.totalorder %s159, %s161
    %p168 = scmp.eq.s32.totalorder %s25, 1
    %p169 = por %p167, %p168
    %p170 = scmp.ne.s32.totalorder %s161, %s162
    %p171 = scmp.eq.s32.totalorder %s25, 0
    %p172 = por %p170, %p171
    %p173 = scmp.ne.s32.totalorder %s161, %s162
    %p174 = scmp.eq.s32.totalorder %s26, 1
    %p175 = por %p173, %p174
    %p177 = scmp.ne.s32.totalorder %s162, %s176
    %p178 = scmp.eq.s32.totalorder %s26, 0
    %p179 = por %p177, %p178
    %s181 = sadd.s32 %s180, 1
    %p184 = scmp.eq.s32.totalorder %s20, 1
    %p185 = scmp.ne.s32.totalorder %s180, %s182
    %p186 = scmp.eq.s32.totalorder %s20, 0
    %p187 = por %p185, %p186
    %p188 = scmp.ne.s32.totalorder %s180, %s182
    %p189 = scmp.eq.s32.totalorder %s25, 1
    %p190 = por %p188, %p189
    %p191 = scmp.ne.s32.totalorder %s182, %s183
    %p192 = scmp.eq.s32.totalorder %s25, 0
    %p193 = por %p191, %p192
    %p194 = scmp.ne.s32.totalorder %s182, %s183
    %p195 = scmp.eq.s32.totalorder %s26, 1
    %p196 = por %p194, %p195
    %p198 = scmp.ne.s32.totalorder %s183, %s197
    %p199 = scmp.eq.s32.totalorder %s26, 0
    %p200 = por %p198, %p199
    %s202 = sadd.s32 %s201, 1
    %p205 = scmp.eq.s32.totalorder %s20, 1
    %p206 = scmp.ne.s32.totalorder %s201, %s203
    %p207 = scmp.eq.s32.totalorder %s20, 0
    %p208 = por %p206, %p207
    %p209 = scmp.ne.s32.totalorder %s201, %s203
    %p210 = scmp.eq.s32.totalorder %s25, 1
    %p211 = por %p209, %p210
    %p212 = scmp.ne.s32.totalorder %s203, %s204
    %p213 = scmp.eq.s32.totalorder %s25, 0
    %p214 = por %p212, %p213
    %p215 = scmp.ne.s32.totalorder %s203, %s204
    %p216 = scmp.eq.s32.totalorder %s26, 1
    %p217 = por %p215, %p216
    %p219 = scmp.ne.s32.totalorder %s204, %s218
    %p220 = scmp.eq.s32.totalorder %s26, 0
    %p221 = por %p219, %p220
    %s223 = sadd.s32 %s222, 1
    %p226 = scmp.eq.s32.totalorder %s20, 1
    %p227 = scmp.ne.s32.totalorder %s222, %s224
    %p228 = scmp.eq.s32.totalorder %s20, 0
    %p229 = por %p227, %p228
    %p230 = scmp.ne.s32.totalorder %s222, %s224
    %p231 = scmp.eq.s32.totalorder %s25, 1
    %p232 = por %p230, %p231
    %p233 = scmp.ne.s32.totalorder %s224, %s225
    %p234 = scmp.eq.s32.totalorder %s25, 0
    %p235 = por %p233, %p234
    %p236 = scmp.ne.s32.totalorder %s224, %s225
    %p237 = scmp.eq.s32.totalorder %s26, 1
    %p238 = por %p236, %p237
    %p240 = scmp.ne.s32.totalorder %s225, %s239
    %p241 = scmp.eq.s32.totalorder %s26, 0
    %p242 = por %p240, %p241
    %s244 = sadd.s32 %s243, 1
    %p247 = scmp.eq.s32.totalorder %s20, 1
    %p248 = scmp.ne.s32.totalorder %s243, %s245
    %p249 = scmp.eq.s32.totalorder %s20, 0
    %p250 = por %p248, %p249
    %p251 = scmp.ne.s32.totalorder %s243, %s245
    %p252 = scmp.eq.s32.totalorder %s25, 1
    %p253 = por %p251, %p252
    %p254 = scmp.ne.s32.totalorder %s245, %s246
    %p255 = scmp.eq.s32.totalorder %s25, 0
    %p256 = por %p254, %p255
    %p257 = scmp.ne.s32.totalorder %s245, %s246
    %p258 = scmp.eq.s32.totalorder %s26, 1
    %p259 = por %p257, %p258
    %p261 = scmp.ne.s32.totalorder %s246, %s260
    %p262 = scmp.eq.s32.totalorder %s26, 0
    %p263 = por %p261, %p262
    %s265 = sadd.s32 %s264, 1
    %p268 = scmp.eq.s32.totalorder %s20, 1
    %p269 = scmp.ne.s32.totalorder %s264, %s266
    %p270 = scmp.eq.s32.totalorder %s20, 0
    %p271 = por %p269, %p270
    %p272 = scmp.ne.s32.totalorder %s264, %s266
    %p273 = scmp.eq.s32.totalorder %s25, 1
    %p274 = por %p272, %p273
    %p275 = scmp.ne.s32.totalorder %s266, %s267
    %p276 = scmp.eq.s32.totalorder %s25, 0
    %p277 = por %p275, %p276
    %p278 = scmp.ne.s32.totalorder %s266, %s267
    %p279 = scmp.eq.s32.totalorder %s26, 1
    %p280 = por %p278, %p279
    %p282 = scmp.ne.s32.totalorder %s267, %s281
    %p283 = scmp.eq.s32.totalorder %s26, 0
    %p284 = por %p282, %p283
    %s286 = sadd.s32 %s285, 1
    %p289 = scmp.eq.s32.totalorder %s20, 1
    %p290 = scmp.ne.s32.totalorder %s285, %s287
    %p291 = scmp.eq.s32.totalorder %s20, 0
    %p292 = por %p290, %p291
    %p293 = scmp.ne.s32.totalorder %s285, %s287
    %p294 = scmp.eq.s32.totalorder %s25, 1
    %p295 = por %p293, %p294
    %p296 = scmp.ne.s32.totalorder %s287, %s288
    %p297 = scmp.eq.s32.totalorder %s25, 0
    %p298 = por %p296, %p297
    %p299 = scmp.ne.s32.totalorder %s287, %s288
    %p300 = scmp.eq.s32.totalorder %s26, 1
    %p301 = por %p299, %p300
    %p303 = scmp.ne.s32.totalorder %s288, %s302
    %p304 = scmp.eq.s32.totalorder %s26, 0
    %p305 = por %p303, %p304
    %s307 = sadd.s32 %s306, 1
    %p310 = scmp.eq.s32.totalorder %s20, 1
    %p311 = scmp.ne.s32.totalorder %s306, %s308
    %p312 = scmp.eq.s32.totalorder %s20, 0
    %p313 = por %p311, %p312
    %p314 = scmp.ne.s32.totalorder %s306, %s308
    %p315 = scmp.eq.s32.totalorder %s25, 1
    %p316 = por %p314, %p315
    %p317 = scmp.ne.s32.totalorder %s308, %s309
    %p318 = scmp.eq.s32.totalorder %s25, 0
    %p319 = por %p317, %p318
    %p320 = scmp.ne.s32.totalorder %s308, %s309
    %p321 = scmp.eq.s32.totalorder %s26, 1
    %p322 = por %p320, %p321
    %p324 = scmp.ne.s32.totalorder %s309, %s323
    %p325 = scmp.eq.s32.totalorder %s26, 0
    %p326 = por %p324, %p325
    %s327 = ssub.s32 %s20, %s27
    %p328 = scmp.eq.s32.totalorder %s327, 0
    %s330 = sadd.s32 %s329, 1
    %s331 = scalar_select %p328, %s329, %s330
    %p334 = pneg %p328
    %p335 = scmp.eq.s32.totalorder %s20, 1
    %p336 = por %p334, %p335
    %p337 = scmp.ne.s32.totalorder %s329, %s332
    %p338 = scmp.eq.s32.totalorder %s20, 0
    %p339 = por %p337, %p338
    %p340 = scmp.ne.s32.totalorder %s329, %s332
    %p341 = scmp.eq.s32.totalorder %s25, 1
    %p342 = por %p340, %p341
    %p343 = scmp.ne.s32.totalorder %s332, %s333
    %p344 = scmp.eq.s32.totalorder %s25, 0
    %p345 = por %p343, %p344
    %p346 = scmp.ne.s32.totalorder %s332, %s333
    %p347 = scmp.eq.s32.totalorder %s26, 1
    %p348 = por %p346, %p347
    %p350 = scmp.ne.s32.totalorder %s333, %s349
    %p351 = scmp.eq.s32.totalorder %s26, 0
    %p352 = por %p350, %p351
    %p353 = scmp.le.s32.totalorder 1, %s20
    %p354 = scmp.lt.s32.totalorder %s20, 3
    %p355 = pnand %p353, %p354
    %p356 = pneg %p355
    // Predicated region
    $region9: #{ssl_model_forward.3} parent=5 // pred_check
      _
    $region10: #{ssl_model_forward.3} parent=5 // pred_check_branch
      %358 = sbr.rel (%p355) target = $region12
    $region11: #{ssl_model_forward.3} parent=5 // pred_region
      %s359 = ssub.s32 %s20, 1
      // Predicated region
      $region13: #{ssl_model_forward.3} parent=11 // pred_check
        %p360 = pneg %p67
      $region14: #{ssl_model_forward.3} parent=11 // pred_check_branch
        %362 = sbr.rel (%p360) target = $region16
      $region15: #{ssl_model_forward.3} parent=11 // pred_region
        _
      $region16: #{ssl_model_forward.3} parent=11 // pred_fallthru
        _
      // Predicated region
      $region17: #{ssl_model_forward.3} parent=11 // pred_check
        %p363 = pneg %p88
      $region18: #{ssl_model_forward.3} parent=11 // pred_check_branch
        %365 = sbr.rel (%p363) target = $region20
      $region19: #{ssl_model_forward.3} parent=11 // pred_region
        _
      $region20: #{ssl_model_forward.3} parent=11 // pred_fallthru
        _
      // Predicated region
      $region21: #{ssl_model_forward.3} parent=11 // pred_check
        %p366 = pneg %p109
      $region22: #{ssl_model_forward.3} parent=11 // pred_check_branch
        %368 = sbr.rel (%p366) target = $region24
      $region23: #{ssl_model_forward.3} parent=11 // pred_region
        _
      $region24: #{ssl_model_forward.3} parent=11 // pred_fallthru
        _
      // Predicated region
      $region25: #{ssl_model_forward.3} parent=11 // pred_check
        %p369 = pneg %p130
      $region26: #{ssl_model_forward.3} parent=11 // pred_check_branch
        %371 = sbr.rel (%p369) target = $region28
      $region27: #{ssl_model_forward.3} parent=11 // pred_region
        _
      $region28: #{ssl_model_forward.3} parent=11 // pred_fallthru
        _
      // Predicated region
      $region29: #{ssl_model_forward.3} parent=11 // pred_check
        %p372 = pneg %p151
      $region30: #{ssl_model_forward.3} parent=11 // pred_check_branch
        %374 = sbr.rel (%p372) target = $region32
      $region31: #{ssl_model_forward.3} parent=11 // pred_region
        _
      $region32: #{ssl_model_forward.3} parent=11 // pred_fallthru
        _
      // Predicated region
      $region33: #{ssl_model_forward.3} parent=11 // pred_check
        %p375 = pneg %p172
      $region34: #{ssl_model_forward.3} parent=11 // pred_check_branch
        %377 = sbr.rel (%p375) target = $region36
      $region35: #{ssl_model_forward.3} parent=11 // pred_region
        _
      $region36: #{ssl_model_forward.3} parent=11 // pred_fallthru
        _
      // Predicated region
      $region37: #{ssl_model_forward.3} parent=11 // pred_check
        %p378 = pneg %p193
      $region38: #{ssl_model_forward.3} parent=11 // pred_check_branch
        %380 = sbr.rel (%p378) target = $region40
      $region39: #{ssl_model_forward.3} parent=11 // pred_region
        _
      $region40: #{ssl_model_forward.3} parent=11 // pred_fallthru
        _
      // Predicated region
      $region41: #{ssl_model_forward.3} parent=11 // pred_check
        %p381 = pneg %p214
      $region42: #{ssl_model_forward.3} parent=11 // pred_check_branch
        %383 = sbr.rel (%p381) target = $region44
      $region43: #{ssl_model_forward.3} parent=11 // pred_region
        _
      $region44: #{ssl_model_forward.3} parent=11 // pred_fallthru
        _
      // Predicated region
      $region45: #{ssl_model_forward.3} parent=11 // pred_check
        %p384 = pneg %p235
      $region46: #{ssl_model_forward.3} parent=11 // pred_check_branch
        %386 = sbr.rel (%p384) target = $region48
      $region47: #{ssl_model_forward.3} parent=11 // pred_region
        _
      $region48: #{ssl_model_forward.3} parent=11 // pred_fallthru
        _
      // Predicated region
      $region49: #{ssl_model_forward.3} parent=11 // pred_check
        %p387 = pneg %p256
      $region50: #{ssl_model_forward.3} parent=11 // pred_check_branch
        %389 = sbr.rel (%p387) target = $region52
      $region51: #{ssl_model_forward.3} parent=11 // pred_region
        _
      $region52: #{ssl_model_forward.3} parent=11 // pred_fallthru
        _
      // Predicated region
      $region53: #{ssl_model_forward.3} parent=11 // pred_check
        %p390 = pneg %p277
      $region54: #{ssl_model_forward.3} parent=11 // pred_check_branch
        %392 = sbr.rel (%p390) target = $region56
      $region55: #{ssl_model_forward.3} parent=11 // pred_region
        _
      $region56: #{ssl_model_forward.3} parent=11 // pred_fallthru
        _
      // Predicated region
      $region57: #{ssl_model_forward.3} parent=11 // pred_check
        %p393 = pneg %p298
      $region58: #{ssl_model_forward.3} parent=11 // pred_check_branch
        %395 = sbr.rel (%p393) target = $region60
      $region59: #{ssl_model_forward.3} parent=11 // pred_region
        _
      $region60: #{ssl_model_forward.3} parent=11 // pred_fallthru
        _
      // Predicated region
      $region61: #{ssl_model_forward.3} parent=11 // pred_check
        %p396 = pneg %p319
      $region62: #{ssl_model_forward.3} parent=11 // pred_check_branch
        %398 = sbr.rel (%p396) target = $region64
      $region63: #{ssl_model_forward.3} parent=11 // pred_region
        _
      $region64: #{ssl_model_forward.3} parent=11 // pred_fallthru
        _
    $region12: #{ssl_model_forward.3} parent=5 // pred_fallthru
      _
    %p399 = scmp.lt.s32.totalorder %s20, 2
    // Predicated region
    $region65: #{ssl_model_forward.3} parent=5 // pred_check
      %p400 = pneg %p399
    $region66: #{ssl_model_forward.3} parent=5 // pred_check_branch
      %402 = sbr.rel (%p400) target = $region68
    $region67: #{ssl_model_forward.3} parent=5 // pred_region
      // Predicated region
      $region69: #{ssl_model_forward.3} parent=67 // pred_check
        %p403 = pneg %p40
      $region70: #{ssl_model_forward.3} parent=67 // pred_check_branch
        %405 = sbr.rel (%p403) target = $region72
      $region71: #{ssl_model_forward.3} parent=67 // pred_region
        %p406 = scmp.lt.s32.totalorder %s20, 1
        %s407 = scalar_select %p406, %s20, 1
        %s408 = smul.addr %s407, 50
        %s409 = smul.addr %s408, 8
        %s410 = scalar_lea.vmem %s0, %s409
      $region72: #{ssl_model_forward.3} parent=67 // pred_fallthru
        _
    $region68: #{ssl_model_forward.3} parent=5 // pred_fallthru
      _
    %p411 = scmp.le.s32.totalorder 1, %s20
    %p412 = scmp.lt.s32.totalorder %s20, 3
    %p413 = pnand %p411, %p412
    %p414 = pneg %p413
    // Predicated region
    $region73: #{ssl_model_forward.3} parent=5 // pred_check
      _
    $region74: #{ssl_model_forward.3} parent=5 // pred_check_branch
      %416 = sbr.rel (%p413) target = $region76
    $region75: #{ssl_model_forward.3} parent=5 // pred_region
      %s417 = ssub.s32 %s20, 1
      %p418 = scmp.lt.s32.totalorder %s25, 1
      %s419 = scalar_select %p418, %s25, 1
      %s420 = smul.addr %s419, 50
      %s421 = smul.addr %s420, 8
      %s422 = scalar_lea.vmem %s0, %s421
      %p423 = pneg %p46
      %p424 = pneg %p43
      %p425 = pneg %p67
      %p426 = pneg %p64
      %p427 = pneg %p88
      %p428 = pneg %p85
      %p429 = pneg %p109
      %p430 = pneg %p106
      %p431 = pneg %p130
      %p432 = pneg %p127
      %p433 = pneg %p151
      %p434 = pneg %p148
      %p435 = pneg %p172
      %p436 = pneg %p169
      %p437 = pneg %p193
      %p438 = pneg %p190
      %p439 = pneg %p214
      %p440 = pneg %p211
      %p441 = pneg %p235
      %p442 = pneg %p232
      %p443 = pneg %p256
      %p444 = pneg %p253
      %p445 = pneg %p277
      %p446 = pneg %p274
      %p447 = pneg %p298
      %p448 = pneg %p295
      %p449 = pneg %p319
      %p450 = pneg %p316
      %p451 = pneg %p345
      %p452 = pneg %p342
      %p453 = scmp.lt.s32.totalorder %s25, 1
      %s454 = scalar_select %p453, %s25, 1
      %s455 = smul.addr %s454, 8
      %s456 = scalar_lea.vmem %s14, %s455
      %p457 = scmp.lt.s32.totalorder %s25, 1
      %s458 = scalar_select %p457, %s25, 1
      %s459 = smul.addr %s458, 50
      %s460 = smul.addr %s459, 8
      %s461 = scalar_lea.vmem %s0, %s460
      %p462 = scmp.lt.s32.totalorder %s25, 1
      %s463 = scalar_select %p462, %s25, 1
      %s464 = smul.addr %s463, 8
      %s465 = scalar_lea.vmem %s14, %s464
      %v467 = vld [vmem:[%s461] sm:$0xff]
      %v468 = vld [vmem:[%s461 + $0x8] sm:$0xff]
      %v469 = vld [vmem:[%s461 + $0x10] sm:$0xff]
      %v470 = vld [vmem:[%s461 + $0x18] sm:$0xff]
      %v471 = vld [vmem:[%s461 + $0x20] sm:$0xff]
      %v472 = vld [vmem:[%s461 + $0x28] sm:$0xff]
      %v473 = vld [vmem:[%s461 + $0x30] sm:$0xff]
      %v474 = vld [vmem:[%s461 + $0x38] sm:$0xff]
      %v475 = vld [vmem:[%s461 + $0x40] sm:$0xff]
      %v476 = vld [vmem:[%s461 + $0x48] sm:$0xff]
      %v477 = vld [vmem:[%s461 + $0x50] sm:$0xff]
      %v478 = vld [vmem:[%s461 + $0x58] sm:$0xff]
      %v479 = vld [vmem:[%s461 + $0x60] sm:$0xff]
      %v480 = vld [vmem:[%s461 + $0x68] sm:$0xff]
      %v481 = vld [vmem:[%s461 + $0x70] sm:$0xff]
      %v482 = vld [vmem:[%s461 + $0x78] sm:$0xff]
      %v483 = vld [vmem:[%s461 + $0x80] sm:$0xff]
      %v484 = vld [vmem:[%s461 + $0x88] sm:$0xff]
      %v485 = vld [vmem:[%s461 + $0x90] sm:$0xff]
      %v486 = vld [vmem:[%s461 + $0x98] sm:$0xff]
      %v487 = vld [vmem:[%s461 + $0xa0] sm:$0xff]
      %v488 = vld [vmem:[%s461 + $0xa8] sm:$0xff]
      %v489 = vld [vmem:[%s461 + $0xb0] sm:$0xff]
      %v490 = vld [vmem:[%s461 + $0xb8] sm:$0xff]
      %v491 = vld [vmem:[%s461 + $0xc0] sm:$0xff]
      %v492 = vld [vmem:[%s461 + $0xc8] sm:$0xff]
      %v493 = vld [vmem:[%s461 + $0xd0] sm:$0xff]
      %v494 = vld [vmem:[%s461 + $0xd8] sm:$0xff]
      %v495 = vld [vmem:[%s461 + $0xe0] sm:$0xff]
      %v496 = vld [vmem:[%s461 + $0xe8] sm:$0xff]
      %v497 = vld [vmem:[%s461 + $0xf0] sm:$0xff]
      %v498 = vld [vmem:[%s461 + $0xf8] sm:$0xff]
      %v499 = vld [vmem:[%s461 + $0x100] sm:$0xff]
      %v500 = vld [vmem:[%s461 + $0x108] sm:$0xff]
      %v501 = vld [vmem:[%s461 + $0x110] sm:$0xff]
      %v502 = vld [vmem:[%s461 + $0x118] sm:$0xff]
      %v503 = vld [vmem:[%s461 + $0x120] sm:$0xff]
      %v504 = vld [vmem:[%s461 + $0x128] sm:$0xff]
      %v505 = vld [vmem:[%s461 + $0x130] sm:$0xff]
      %v506 = vld [vmem:[%s461 + $0x138] sm:$0xff]
      %v507 = vld [vmem:[%s461 + $0x140] sm:$0xff]
      %v508 = vld [vmem:[%s461 + $0x148] sm:$0xff]
      %v509 = vld [vmem:[%s461 + $0x150] sm:$0xff]
      %v510 = vld [vmem:[%s461 + $0x158] sm:$0xff]
      %v511 = vld [vmem:[%s461 + $0x160] sm:$0xff]
      %v512 = vld [vmem:[%s461 + $0x168] sm:$0xff]
      %v513 = vld [vmem:[%s461 + $0x170] sm:$0xff]
      %v514 = vld [vmem:[%s461 + $0x178] sm:$0xff]
      %v515 = vld [vmem:[%s461 + $0x180] sm:$0xff]
      %v516 = vld [vmem:[%s461 + $0x188] sm:$0xff]
      %v517 = vld [vmem:[%s1] sm:$0xff]
      %s518 = scalar_lea.vmem %s1, 8
      %v519 = vld [vmem:[%s518] sm:$0xff]
      %vm570 = vcmask 1046528
      %v571 = vrot.slane %v467, 1
      %v572 = vrot.slane %v468, 1
      %v573 = vsel %vm570, %v571, %v572
      %v574 = vrot.slane %v469, 1
      %v575 = vsel %vm570, %v572, %v574
      %v576 = vrot.slane %v470, 1
      %v577 = vsel %vm570, %v574, %v576
      %v578 = vrot.slane %v471, 1
      %v579 = vsel %vm570, %v576, %v578
      %v580 = vrot.slane %v472, 1
      %v581 = vsel %vm570, %v578, %v580
      %v582 = vrot.slane %v473, 1
      %v583 = vsel %vm570, %v580, %v582
      %v584 = vrot.slane %v474, 1
      %v585 = vsel %vm570, %v582, %v584
      %v586 = vrot.slane %v475, 1
      %v587 = vsel %vm570, %v584, %v586
      %v588 = vrot.slane %v476, 1
      %v589 = vsel %vm570, %v586, %v588
      %v590 = vrot.slane %v477, 1
      %v591 = vsel %vm570, %v588, %v590
      %v592 = vrot.slane %v478, 1
      %v593 = vsel %vm570, %v590, %v592
      %v594 = vrot.slane %v479, 1
      %v595 = vsel %vm570, %v592, %v594
      %v596 = vrot.slane %v480, 1
      %v597 = vsel %vm570, %v594, %v596
      %v598 = vrot.slane %v481, 1
      %v599 = vsel %vm570, %v596, %v598
      %v600 = vrot.slane %v482, 1
      %v601 = vsel %vm570, %v598, %v600
      %v602 = vrot.slane %v483, 1
      %v603 = vsel %vm570, %v600, %v602
      %v604 = vrot.slane %v484, 1
      %v605 = vsel %vm570, %v602, %v604
      %v606 = vrot.slane %v485, 1
      %v607 = vsel %vm570, %v604, %v606
      %v608 = vrot.slane %v486, 1
      %v609 = vsel %vm570, %v606, %v608
      %v610 = vrot.slane %v487, 1
      %v611 = vsel %vm570, %v608, %v610
      %v612 = vrot.slane %v488, 1
      %v613 = vsel %vm570, %v610, %v612
      %v614 = vrot.slane %v489, 1
      %v615 = vsel %vm570, %v612, %v614
      %v616 = vrot.slane %v490, 1
      %v617 = vsel %vm570, %v614, %v616
      %v618 = vrot.slane %v491, 1
      %v619 = vsel %vm570, %v616, %v618
      %v620 = vrot.slane %v492, 1
      %v621 = vsel %vm570, %v618, %v620
      %v622 = vrot.slane %v493, 1
      %v623 = vsel %vm570, %v620, %v622
      %v624 = vrot.slane %v494, 1
      %v625 = vsel %vm570, %v622, %v624
      %v626 = vrot.slane %v495, 1
      %v627 = vsel %vm570, %v624, %v626
      %v628 = vrot.slane %v496, 1
      %v629 = vsel %vm570, %v626, %v628
      %v630 = vrot.slane %v497, 1
      %v631 = vsel %vm570, %v628, %v630
      %v632 = vrot.slane %v498, 1
      %v633 = vsel %vm570, %v630, %v632
      %v634 = vrot.slane %v499, 1
      %v635 = vsel %vm570, %v632, %v634
      %v636 = vrot.slane %v500, 1
      %v637 = vsel %vm570, %v634, %v636
      %v638 = vrot.slane %v501, 1
      %v639 = vsel %vm570, %v636, %v638
      %v640 = vrot.slane %v502, 1
      %v641 = vsel %vm570, %v638, %v640
      %v642 = vrot.slane %v503, 1
      %v643 = vsel %vm570, %v640, %v642
      %v644 = vrot.slane %v504, 1
      %v645 = vsel %vm570, %v642, %v644
      %v646 = vrot.slane %v505, 1
      %v647 = vsel %vm570, %v644, %v646
      %v648 = vrot.slane %v506, 1
      %v649 = vsel %vm570, %v646, %v648
      %v650 = vrot.slane %v507, 1
      %v651 = vsel %vm570, %v648, %v650
      %v652 = vrot.slane %v508, 1
      %v653 = vsel %vm570, %v650, %v652
      %v654 = vrot.slane %v509, 1
      %v655 = vsel %vm570, %v652, %v654
      %v656 = vrot.slane %v510, 1
      %v657 = vsel %vm570, %v654, %v656
      %v658 = vrot.slane %v511, 1
      %v659 = vsel %vm570, %v656, %v658
      %v660 = vrot.slane %v512, 1
      %v661 = vsel %vm570, %v658, %v660
      %v662 = vrot.slane %v513, 1
      %v663 = vsel %vm570, %v660, %v662
      %v664 = vrot.slane %v514, 1
      %v665 = vsel %vm570, %v662, %v664
      %v666 = vrot.slane %v515, 1
      %v667 = vsel %vm570, %v664, %v666
      %v668 = vrot.slane %v516, 1
      %v669 = vsel %vm570, %v666, %v668
      %vm670 = vcmask 64512
      %v671 = vsel %vm670, %v573, 0
      %v673 = vsel %vm670, %v575, 0
      %v675 = vsel %vm670, %v577, 0
      %v677 = vsel %vm670, %v579, 0
      %v679 = vsel %vm670, %v581, 0
      %v681 = vsel %vm670, %v583, 0
      %v683 = vsel %vm670, %v585, 0
      %v685 = vsel %vm670, %v587, 0
      %v687 = vsel %vm670, %v589, 0
      %v689 = vsel %vm670, %v591, 0
      %v691 = vsel %vm670, %v593, 0
      %v693 = vsel %vm670, %v595, 0
      %v695 = vsel %vm670, %v597, 0
      %v697 = vsel %vm670, %v599, 0
      %v699 = vsel %vm670, %v601, 0
      %v701 = vsel %vm670, %v603, 0
      %v703 = vsel %vm670, %v605, 0
      %v705 = vsel %vm670, %v607, 0
      %v707 = vsel %vm670, %v609, 0
      %v709 = vsel %vm670, %v611, 0
      %v711 = vsel %vm670, %v613, 0
      %v713 = vsel %vm670, %v615, 0
      %v715 = vsel %vm670, %v617, 0
      %v717 = vsel %vm670, %v619, 0
      %v719 = vsel %vm670, %v621, 0
      %v721 = vsel %vm670, %v623, 0
      %v723 = vsel %vm670, %v625, 0
      %v725 = vsel %vm670, %v627, 0
      %v727 = vsel %vm670, %v629, 0
      %v729 = vsel %vm670, %v631, 0
      %v731 = vsel %vm670, %v633, 0
      %v733 = vsel %vm670, %v635, 0
      %v735 = vsel %vm670, %v637, 0
      %v737 = vsel %vm670, %v639, 0
      %v739 = vsel %vm670, %v641, 0
      %v741 = vsel %vm670, %v643, 0
      %v743 = vsel %vm670, %v645, 0
      %v745 = vsel %vm670, %v647, 0
      %v747 = vsel %vm670, %v649, 0
      %v749 = vsel %vm670, %v651, 0
      %v751 = vsel %vm670, %v653, 0
      %v753 = vsel %vm670, %v655, 0
      %v755 = vsel %vm670, %v657, 0
      %v757 = vsel %vm670, %v659, 0
      %v759 = vsel %vm670, %v661, 0
      %v761 = vsel %vm670, %v663, 0
      %v763 = vsel %vm670, %v665, 0
      %v765 = vsel %vm670, %v667, 0
      %v767 = vsel %vm670, %v669, 0
      %v769 = vsel %vm670, %v668, 0
      %771 = vmatprep.subr.mxu0 0.0
      %772 = vmatpush1.msra.mxu0 %v519
      %773 = vmatprep.subr.mxu0 0.0
      %774 = vmatpush1.msra.mxu0 0.0
      %775 = vmatprep.subr.mxu0 0.0
      %776 = vmatpush1.msra.mxu0 0.0
      %777 = vmatprep.subr.mxu0 0.0
      %778 = vmatpush1.msra.mxu0 0.0
      %779 = vmatprep.subr.mxu0 0.0
      %780 = vmatpush1.msra.mxu0 0.0
      %781 = vmatprep.subr.mxu0 0.0
      %782 = vmatpush1.msra.mxu0 0.0
      %783 = vmatprep.subr.mxu0 0.0
      %784 = vmatpush1.msra.mxu0 0.0
      %785 = vmatprep.subr.mxu0 0.0
      %786 = vmatpush1.msra.mxu0 0.0
      %787 = vmatprep.subr.mxu0 0.0
      %788 = vmatpush1.msra.mxu0 0.0
      %789 = vmatprep.subr.mxu0 0.0
      %790 = vmatpush1.msra.mxu0 0.0
      %791 = vmatprep.subr.mxu0 0.0
      %792 = vmatpush1.msra.mxu0 0.0
      %793 = vmatprep.subr.mxu0 0.0
      %794 = vmatpush1.msra.mxu0 0.0
      %795 = vmatprep.subr.mxu0 0.0
      %796 = vmatpush1.msra.mxu0 0.0
      %797 = vmatprep.subr.mxu0 0.0
      %798 = vmatpush1.msra.mxu0 0.0
      %799 = vmatprep.subr.mxu0 0.0
      %800 = vmatpush1.msra.mxu0 0.0
      %801 = vmatprep.subr.mxu0 0.0
      %802 = vmatpush1.msra.mxu0 0.0
      %803 = vmatprep.subr.mxu0 0.0
      %804 = vmatpush1.msra.mxu0 0.0
      %805 = vmatprep.subr.mxu0 0.0
      %806 = vmatpush1.msra.mxu0 0.0
      %807 = vmatprep.subr.mxu0 0.0
      %808 = vmatpush1.msra.mxu0 0.0
      %809 = vmatprep.subr.mxu0 0.0
      %810 = vmatpush1.msra.mxu0 0.0
      %811 = vmatprep.subr.mxu0 0.0
      %812 = vmatpush1.msra.mxu0 0.0
      %813 = vmatprep.subr.mxu0 0.0
      %814 = vmatpush1.msra.mxu0 0.0
      %815 = vmatprep.subr.mxu0 0.0
      %816 = vmatpush1.msra.mxu0 0.0
      %817 = vmatprep.subr.mxu0 0.0
      %818 = vmatpush1.msra.mxu0 0.0
      %819 = vmatprep.subr.mxu0 0.0
      %820 = vmatpush1.msra.mxu0 0.0
      %821 = vmatprep.subr.mxu0 0.0
      %822 = vmatpush1.msra.mxu0 0.0
      %823 = vmatprep.subr.mxu0 0.0
      %824 = vmatpush1.msra.mxu0 0.0
      %825 = vmatprep.subr.mxu0 0.0
      %826 = vmatpush1.msra.mxu0 0.0
      %827 = vmatprep.subr.mxu0 0.0
      %828 = vmatpush1.msra.mxu0 0.0
      %829 = vmatprep.subr.mxu0 0.0
      %830 = vmatpush1.msra.mxu0 0.0
      %831 = vmatprep.subr.mxu0 0.0
      %832 = vmatpush1.msra.mxu0 0.0
      %833 = vmatprep.subr.mxu0 0.0
      %834 = vmatpush1.msra.mxu0 0.0
      %835 = vmatprep.mubr.f32.mxu0 0.0
      %836 = vmatmul.mubr.f32.gmra.mrb[0].mxu0 %v671
      %v837 = vpop.f32.mrb[0].mxu0
      %v838 = vadd.f32 0.0, %v837
      %v839 = vpop.f32.mrb[0].mxu0
      %840 = vmatprep.mubr.f32.mxu0 0.0
      %841 = vmatmul.mubr.f32.gmra.mrb[0].mxu0 %v673
      %v842 = vpop.f32.mrb[0].mxu0
      %v843 = vadd.f32 0.0, %v842
      %v844 = vpop.f32.mrb[0].mxu0
      %845 = vmatprep.mubr.f32.mxu0 0.0
      %846 = vmatmul.mubr.f32.gmra.mrb[0].mxu0 %v675
      %v847 = vpop.f32.mrb[0].mxu0
      %v848 = vadd.f32 0.0, %v847
      %v849 = vpop.f32.mrb[0].mxu0
      %850 = vmatprep.mubr.f32.mxu0 0.0
      %851 = vmatmul.mubr.f32.gmra.mrb[0].mxu0 %v677
      %v852 = vpop.f32.mrb[0].mxu0
      %v853 = vadd.f32 0.0, %v852
      %v854 = vpop.f32.mrb[0].mxu0
      %855 = vmatprep.mubr.f32.mxu0 0.0
      %856 = vmatmul.mubr.f32.gmra.mrb[0].mxu0 %v679
      %v857 = vpop.f32.mrb[0].mxu0
      %v858 = vadd.f32 0.0, %v857
      %v859 = vpop.f32.mrb[0].mxu0
      %860 = vmatprep.mubr.f32.mxu0 0.0
      %861 = vmatmul.mubr.f32.gmra.mrb[0].mxu0 %v681
      %v862 = vpop.f32.mrb[0].mxu0
      %v863 = vadd.f32 0.0, %v862
      %v864 = vpop.f32.mrb[0].mxu0
      %865 = vmatprep.mubr.f32.mxu0 0.0
      %866 = vmatmul.mubr.f32.gmra.mrb[0].mxu0 %v683
      %v867 = vpop.f32.mrb[0].mxu0
      %v868 = vadd.f32 0.0, %v867
      %v869 = vpop.f32.mrb[0].mxu0
      %870 = vmatprep.mubr.f32.mxu0 0.0
      %871 = vmatmul.mubr.f32.gmra.mrb[0].mxu0 %v685
      %v872 = vpop.f32.mrb[0].mxu0
      %v873 = vadd.f32 0.0, %v872
      %v874 = vpop.f32.mrb[0].mxu0
      %875 = vmatprep.mubr.f32.mxu0 0.0
      %876 = vmatmul.mubr.f32.gmra.mrb[0].mxu0 %v687
      %v877 = vpop.f32.mrb[0].mxu0
      %v878 = vadd.f32 0.0, %v877
      %v879 = vpop.f32.mrb[0].mxu0
      %880 = vmatprep.mubr.f32.mxu0 0.0
      %881 = vmatmul.mubr.f32.gmra.mrb[0].mxu0 %v689
      %v882 = vpop.f32.mrb[0].mxu0
      %v883 = vadd.f32 0.0, %v882
      %v884 = vpop.f32.mrb[0].mxu0
      %885 = vmatprep.mubr.f32.mxu0 0.0
      %886 = vmatmul.mubr.f32.gmra.mrb[0].mxu0 %v691
      %v887 = vpop.f32.mrb[0].mxu0
      %v888 = vadd.f32 0.0, %v887
      %v889 = vpop.f32.mrb[0].mxu0
      %890 = vmatprep.mubr.f32.mxu0 0.0
      %891 = vmatmul.mubr.f32.gmra.mrb[0].mxu0 %v693
      %v892 = vpop.f32.mrb[0].mxu0
      %v893 = vadd.f32 0.0, %v892
      %v894 = vpop.f32.mrb[0].mxu0
      %895 = vmatprep.mubr.f32.mxu0 0.0
      %896 = vmatmul.mubr.f32.gmra.mrb[0].mxu0 %v695
      %v897 = vpop.f32.mrb[0].mxu0
      %v898 = vadd.f32 0.0, %v897
      %v899 = vpop.f32.mrb[0].mxu0
      %900 = vmatprep.mubr.f32.mxu0 0.0
      %901 = vmatmul.mubr.f32.gmra.mrb[0].mxu0 %v697
      %v902 = vpop.f32.mrb[0].mxu0
      %v903 = vadd.f32 0.0, %v902
      %v904 = vpop.f32.mrb[0].mxu0
      %905 = vmatprep.mubr.f32.mxu0 0.0
      %906 = vmatmul.mubr.f32.gmra.mrb[0].mxu0 %v699
      %v907 = vpop.f32.mrb[0].mxu0
      %v908 = vadd.f32 0.0, %v907
      %v909 = vpop.f32.mrb[0].mxu0
      %910 = vmatprep.mubr.f32.mxu0 0.0
      %911 = vmatmul.mubr.f32.gmra.mrb[0].mxu0 %v701
      %v912 = vpop.f32.mrb[0].mxu0
      %v913 = vadd.f32 0.0, %v912
      %v914 = vpop.f32.mrb[0].mxu0
      %915 = vmatprep.mubr.f32.mxu0 0.0
      %916 = vmatmul.mubr.f32.gmra.mrb[0].mxu0 %v703
      %v917 = vpop.f32.mrb[0].mxu0
      %v918 = vadd.f32 0.0, %v917
      %v919 = vpop.f32.mrb[0].mxu0
      %920 = vmatprep.mubr.f32.mxu0 0.0
      %921 = vmatmul.mubr.f32.gmra.mrb[0].mxu0 %v705
      %v922 = vpop.f32.mrb[0].mxu0
      %v923 = vadd.f32 0.0, %v922
      %v924 = vpop.f32.mrb[0].mxu0
      %925 = vmatprep.mubr.f32.mxu0 0.0
      %926 = vmatmul.mubr.f32.gmra.mrb[0].mxu0 %v707
      %v927 = vpop.f32.mrb[0].mxu0
      %v928 = vadd.f32 0.0, %v927
      %v929 = vpop.f32.mrb[0].mxu0
      %930 = vmatprep.mubr.f32.mxu0 0.0
      %931 = vmatmul.mubr.f32.gmra.mrb[0].mxu0 %v709
      %v932 = vpop.f32.mrb[0].mxu0
      %v933 = vadd.f32 0.0, %v932
      %v934 = vpop.f32.mrb[0].mxu0
      %935 = vmatprep.mubr.f32.mxu0 0.0
      %936 = vmatmul.mubr.f32.gmra.mrb[0].mxu0 %v711
      %v937 = vpop.f32.mrb[0].mxu0
      %v938 = vadd.f32 0.0, %v937
      %v939 = vpop.f32.mrb[0].mxu0
      %940 = vmatprep.mubr.f32.mxu0 0.0
      %941 = vmatmul.mubr.f32.gmra.mrb[0].mxu0 %v713
      %v942 = vpop.f32.mrb[0].mxu0
      %v943 = vadd.f32 0.0, %v942
      %v944 = vpop.f32.mrb[0].mxu0
      %945 = vmatprep.mubr.f32.mxu0 0.0
      %946 = vmatmul.mubr.f32.gmra.mrb[0].mxu0 %v715
      %v947 = vpop.f32.mrb[0].mxu0
      %v948 = vadd.f32 0.0, %v947
      %v949 = vpop.f32.mrb[0].mxu0
      %950 = vmatprep.mubr.f32.mxu0 0.0
      %951 = vmatmul.mubr.f32.gmra.mrb[0].mxu0 %v717
      %v952 = vpop.f32.mrb[0].mxu0
      %v953 = vadd.f32 0.0, %v952
      %v954 = vpop.f32.mrb[0].mxu0
      %955 = vmatprep.mubr.f32.mxu0 0.0
      %956 = vmatmul.mubr.f32.gmra.mrb[0].mxu0 %v719
      %v957 = vpop.f32.mrb[0].mxu0
      %v958 = vadd.f32 0.0, %v957
      %v959 = vpop.f32.mrb[0].mxu0
      %960 = vmatprep.mubr.f32.mxu0 0.0
      %961 = vmatmul.mubr.f32.gmra.mrb[0].mxu0 %v721
      %v962 = vpop.f32.mrb[0].mxu0
      %v963 = vadd.f32 0.0, %v962
      %v964 = vpop.f32.mrb[0].mxu0
      %965 = vmatprep.mubr.f32.mxu0 0.0
      %966 = vmatmul.mubr.f32.gmra.mrb[0].mxu0 %v723
      %v967 = vpop.f32.mrb[0].mxu0
      %v968 = vadd.f32 0.0, %v967
      %v969 = vpop.f32.mrb[0].mxu0
      %970 = vmatprep.mubr.f32.mxu0 0.0
      %971 = vmatmul.mubr.f32.gmra.mrb[0].mxu0 %v725
      %v972 = vpop.f32.mrb[0].mxu0
      %v973 = vadd.f32 0.0, %v972
      %v974 = vpop.f32.mrb[0].mxu0
      %975 = vmatprep.mubr.f32.mxu0 0.0
      %976 = vmatmul.mubr.f32.gmra.mrb[0].mxu0 %v727
      %v977 = vpop.f32.mrb[0].mxu0
      %v978 = vadd.f32 0.0, %v977
      %v979 = vpop.f32.mrb[0].mxu0
      %980 = vmatprep.mubr.f32.mxu0 0.0
      %981 = vmatmul.mubr.f32.gmra.mrb[0].mxu0 %v729
      %v982 = vpop.f32.mrb[0].mxu0
      %v983 = vadd.f32 0.0, %v982
      %v984 = vpop.f32.mrb[0].mxu0
      %985 = vmatprep.mubr.f32.mxu0 0.0
      %986 = vmatmul.mubr.f32.gmra.mrb[0].mxu0 %v731
      %v987 = vpop.f32.mrb[0].mxu0
      %v988 = vadd.f32 0.0, %v987
      %v989 = vpop.f32.mrb[0].mxu0
      %990 = vmatprep.mubr.f32.mxu0 0.0
      %991 = vmatmul.mubr.f32.gmra.mrb[0].mxu0 %v733
      %v992 = vpop.f32.mrb[0].mxu0
      %v993 = vadd.f32 0.0, %v992
      %v994 = vpop.f32.mrb[0].mxu0
      %995 = vmatprep.mubr.f32.mxu0 0.0
      %996 = vmatmul.mubr.f32.gmra.mrb[0].mxu0 %v735
      %v997 = vpop.f32.mrb[0].mxu0
      %v998 = vadd.f32 0.0, %v997
      %v999 = vpop.f32.mrb[0].mxu0
      %1000 = vmatprep.mubr.f32.mxu0 0.0
      %1001 = vmatmul.mubr.f32.gmra.mrb[0].mxu0 %v737
      %v1002 = vpop.f32.mrb[0].mxu0
      %v1003 = vadd.f32 0.0, %v1002
      %v1004 = vpop.f32.mrb[0].mxu0
      %1005 = vmatprep.mubr.f32.mxu0 0.0
      %1006 = vmatmul.mubr.f32.gmra.mrb[0].mxu0 %v739
      %v1007 = vpop.f32.mrb[0].mxu0
      %v1008 = vadd.f32 0.0, %v1007
      %v1009 = vpop.f32.mrb[0].mxu0
      %1010 = vmatprep.mubr.f32.mxu0 0.0
      %1011 = vmatmul.mubr.f32.gmra.mrb[0].mxu0 %v741
      %v1012 = vpop.f32.mrb[0].mxu0
      %v1013 = vadd.f32 0.0, %v1012
      %v1014 = vpop.f32.mrb[0].mxu0
      %1015 = vmatprep.mubr.f32.mxu0 0.0
      %1016 = vmatmul.mubr.f32.gmra.mrb[0].mxu0 %v743
      %v1017 = vpop.f32.mrb[0].mxu0
      %v1018 = vadd.f32 0.0, %v1017
      %v1019 = vpop.f32.mrb[0].mxu0
      %1020 = vmatprep.mubr.f32.mxu0 0.0
      %1021 = vmatmul.mubr.f32.gmra.mrb[0].mxu0 %v745
      %v1022 = vpop.f32.mrb[0].mxu0
      %v1023 = vadd.f32 0.0, %v1022
      %v1024 = vpop.f32.mrb[0].mxu0
      %1025 = vmatprep.mubr.f32.mxu0 0.0
      %1026 = vmatmul.mubr.f32.gmra.mrb[0].mxu0 %v747
      %v1027 = vpop.f32.mrb[0].mxu0
      %v1028 = vadd.f32 0.0, %v1027
      %v1029 = vpop.f32.mrb[0].mxu0
      %1030 = vmatprep.mubr.f32.mxu0 0.0
      %1031 = vmatmul.mubr.f32.gmra.mrb[0].mxu0 %v749
      %v1032 = vpop.f32.mrb[0].mxu0
      %v1033 = vadd.f32 0.0, %v1032
      %v1034 = vpop.f32.mrb[0].mxu0
      %1035 = vmatprep.mubr.f32.mxu0 0.0
      %1036 = vmatmul.mubr.f32.gmra.mrb[0].mxu0 %v751
      %v1037 = vpop.f32.mrb[0].mxu0
      %v1038 = vadd.f32 0.0, %v1037
      %v1039 = vpop.f32.mrb[0].mxu0
      %1040 = vmatprep.mubr.f32.mxu0 0.0
      %1041 = vmatmul.mubr.f32.gmra.mrb[0].mxu0 %v753
      %v1042 = vpop.f32.mrb[0].mxu0
      %v1043 = vadd.f32 0.0, %v1042
      %v1044 = vpop.f32.mrb[0].mxu0
      %1045 = vmatprep.mubr.f32.mxu0 0.0
      %1046 = vmatmul.mubr.f32.gmra.mrb[0].mxu0 %v755
      %v1047 = vpop.f32.mrb[0].mxu0
      %v1048 = vadd.f32 0.0, %v1047
      %v1049 = vpop.f32.mrb[0].mxu0
      %1050 = vmatprep.mubr.f32.mxu0 0.0
      %1051 = vmatmul.mubr.f32.gmra.mrb[0].mxu0 %v757
      %v1052 = vpop.f32.mrb[0].mxu0
      %v1053 = vadd.f32 0.0, %v1052
      %v1054 = vpop.f32.mrb[0].mxu0
      %1055 = vmatprep.mubr.f32.mxu0 0.0
      %1056 = vmatmul.mubr.f32.gmra.mrb[0].mxu0 %v759
      %v1057 = vpop.f32.mrb[0].mxu0
      %v1058 = vadd.f32 0.0, %v1057
      %v1059 = vpop.f32.mrb[0].mxu0
      %1060 = vmatprep.mubr.f32.mxu0 0.0
      %1061 = vmatmul.mubr.f32.gmra.mrb[0].mxu0 %v761
      %v1062 = vpop.f32.mrb[0].mxu0
      %v1063 = vadd.f32 0.0, %v1062
      %v1064 = vpop.f32.mrb[0].mxu0
      %1065 = vmatprep.mubr.f32.mxu0 0.0
      %1066 = vmatmul.mubr.f32.gmra.mrb[0].mxu0 %v763
      %v1067 = vpop.f32.mrb[0].mxu0
      %v1068 = vadd.f32 0.0, %v1067
      %v1069 = vpop.f32.mrb[0].mxu0
      %1070 = vmatprep.mubr.f32.mxu0 0.0
      %1071 = vmatmul.mubr.f32.gmra.mrb[0].mxu0 %v765
      %v1072 = vpop.f32.mrb[0].mxu0
      %v1073 = vadd.f32 0.0, %v1072
      %v1074 = vpop.f32.mrb[0].mxu0
      %1075 = vmatprep.mubr.f32.mxu0 0.0
      %1076 = vmatmul.mubr.f32.gmra.mrb[0].mxu0 %v767
      %v1077 = vpop.f32.mrb[0].mxu0
      %v1078 = vadd.f32 0.0, %v1077
      %v1079 = vpop.f32.mrb[0].mxu0
      %1080 = vmatprep.mubr.f32.mxu0 0.0
      %1081 = vmatmul.mubr.f32.gmra.mrb[0].mxu0 %v769
      %v1082 = vpop.f32.mrb[0].mxu0
      %v1083 = vadd.f32 0.0, %v1082
      %v1084 = vpop.f32.mrb[0].mxu0
      %1085 = vdwg.mxu0
      %v1086 = vsel %vm670, %v467, 0
      %v1088 = vsel %vm670, %v468, 0
      %v1090 = vsel %vm670, %v469, 0
      %v1092 = vsel %vm670, %v470, 0
      %v1094 = vsel %vm670, %v471, 0
      %v1096 = vsel %vm670, %v472, 0
      %v1098 = vsel %vm670, %v473, 0
      %v1100 = vsel %vm670, %v474, 0
      %v1102 = vsel %vm670, %v475, 0
      %v1104 = vsel %vm670, %v476, 0
      %v1106 = vsel %vm670, %v477, 0
      %v1108 = vsel %vm670, %v478, 0
      %v1110 = vsel %vm670, %v479, 0
      %v1112 = vsel %vm670, %v480, 0
      %v1114 = vsel %vm670, %v481, 0
      %v1116 = vsel %vm670, %v482, 0
      %v1118 = vsel %vm670, %v483, 0
      %v1120 = vsel %vm670, %v484, 0
      %v1122 = vsel %vm670, %v485, 0
      %v1124 = vsel %vm670, %v486, 0
      %v1126 = vsel %vm670, %v487, 0
      %v1128 = vsel %vm670, %v488, 0
      %v1130 = vsel %vm670, %v489, 0
      %v1132 = vsel %vm670, %v490, 0
      %v1134 = vsel %vm670, %v491, 0
      %v1136 = vsel %vm670, %v492, 0
      %v1138 = vsel %vm670, %v493, 0
      %v1140 = vsel %vm670, %v494, 0
      %v1142 = vsel %vm670, %v495, 0
      %v1144 = vsel %vm670, %v496, 0
      %v1146 = vsel %vm670, %v497, 0
      %v1148 = vsel %vm670, %v498, 0
      %v1150 = vsel %vm670, %v499, 0
      %v1152 = vsel %vm670, %v500, 0
      %v1154 = vsel %vm670, %v501, 0
      %v1156 = vsel %vm670, %v502, 0
      %v1158 = vsel %vm670, %v503, 0
      %v1160 = vsel %vm670, %v504, 0
      %v1162 = vsel %vm670, %v505, 0
      %v1164 = vsel %vm670, %v506, 0
      %v1166 = vsel %vm670, %v507, 0
      %v1168 = vsel %vm670, %v508, 0
      %v1170 = vsel %vm670, %v509, 0
      %v1172 = vsel %vm670, %v510, 0
      %v1174 = vsel %vm670, %v511, 0
      %v1176 = vsel %vm670, %v512, 0
      %v1178 = vsel %vm670, %v513, 0
      %v1180 = vsel %vm670, %v514, 0
      %v1182 = vsel %vm670, %v515, 0
      %v1184 = vsel %vm670, %v516, 0
      %1186 = vmatprep.subr.mxu0 0.0
      %1187 = vmatpush1.msra.mxu0 %v517
      %1188 = vmatprep.subr.mxu0 0.0
      %1189 = vmatpush1.msra.mxu0 0.0
      %1190 = vmatprep.subr.mxu0 0.0
      %1191 = vmatpush1.msra.mxu0 0.0
      %1192 = vmatprep.subr.mxu0 0.0
      %1193 = vmatpush1.msra.mxu0 0.0
      %1194 = vmatprep.subr.mxu0 0.0
      %1195 = vmatpush1.msra.mxu0 0.0
      %1196 = vmatprep.subr.mxu0 0.0
      %1197 = vmatpush1.msra.mxu0 0.0
      %1198 = vmatprep.subr.mxu0 0.0
      %1199 = vmatpush1.msra.mxu0 0.0
      %1200 = vmatprep.subr.mxu0 0.0
      %1201 = vmatpush1.msra.mxu0 0.0
      %1202 = vmatprep.subr.mxu0 0.0
      %1203 = vmatpush1.msra.mxu0 0.0
      %1204 = vmatprep.subr.mxu0 0.0
      %1205 = vmatpush1.msra.mxu0 0.0
      %1206 = vmatprep.subr.mxu0 0.0
      %1207 = vmatpush1.msra.mxu0 0.0
      %1208 = vmatprep.subr.mxu0 0.0
      %1209 = vmatpush1.msra.mxu0 0.0
      %1210 = vmatprep.subr.mxu0 0.0
      %1211 = vmatpush1.msra.mxu0 0.0
      %1212 = vmatprep.subr.mxu0 0.0
      %1213 = vmatpush1.msra.mxu0 0.0
      %1214 = vmatprep.subr.mxu0 0.0
      %1215 = vmatpush1.msra.mxu0 0.0
      %1216 = vmatprep.subr.mxu0 0.0
      %1217 = vmatpush1.msra.mxu0 0.0
      %1218 = vmatprep.subr.mxu0 0.0
      %1219 = vmatpush1.msra.mxu0 0.0
      %1220 = vmatprep.subr.mxu0 0.0
      %1221 = vmatpush1.msra.mxu0 0.0
      %1222 = vmatprep.subr.mxu0 0.0
      %1223 = vmatpush1.msra.mxu0 0.0
      %1224 = vmatprep.subr.mxu0 0.0
      %1225 = vmatpush1.msra.mxu0 0.0
      %1226 = vmatprep.subr.mxu0 0.0
      %1227 = vmatpush1.msra.mxu0 0.0
      %1228 = vmatprep.subr.mxu0 0.0
      %1229 = vmatpush1.msra.mxu0 0.0
      %1230 = vmatprep.subr.mxu0 0.0
      %1231 = vmatpush1.msra.mxu0 0.0
      %1232 = vmatprep.subr.mxu0 0.0
      %1233 = vmatpush1.msra.mxu0 0.0
      %1234 = vmatprep.subr.mxu0 0.0
      %1235 = vmatpush1.msra.mxu0 0.0
      %1236 = vmatprep.subr.mxu0 0.0
      %1237 = vmatpush1.msra.mxu0 0.0
      %1238 = vmatprep.subr.mxu0 0.0
      %1239 = vmatpush1.msra.mxu0 0.0
      %1240 = vmatprep.subr.mxu0 0.0
      %1241 = vmatpush1.msra.mxu0 0.0
      %1242 = vmatprep.subr.mxu0 0.0
      %1243 = vmatpush1.msra.mxu0 0.0
      %1244 = vmatprep.subr.mxu0 0.0
      %1245 = vmatpush1.msra.mxu0 0.0
      %1246 = vmatprep.subr.mxu0 0.0
      %1247 = vmatpush1.msra.mxu0 0.0
      %1248 = vmatprep.subr.mxu0 0.0
      %1249 = vmatpush1.msra.mxu0 0.0
      %1250 = vmatprep.mubr.f32.mxu0 0.0
      %1251 = vmatmul.mubr.f32.gmra.mrb[0].mxu0 %v1086
      %v1252 = vpop.f32.mrb[0].mxu0
      %v1253 = vadd.f32 %v838, %v1252
      %v1254 = vpop.f32.mrb[0].mxu0
      %1255 = vmatprep.mubr.f32.mxu0 0.0
      %1256 = vmatmul.mubr.f32.gmra.mrb[0].mxu0 %v1088
      %v1257 = vpop.f32.mrb[0].mxu0
      %v1258 = vadd.f32 %v843, %v1257
      %v1259 = vpop.f32.mrb[0].mxu0
      %1260 = vmatprep.mubr.f32.mxu0 0.0
      %1261 = vmatmul.mubr.f32.gmra.mrb[0].mxu0 %v1090
      %v1262 = vpop.f32.mrb[0].mxu0
      %v1263 = vadd.f32 %v848, %v1262
      %v1264 = vpop.f32.mrb[0].mxu0
      %1265 = vmatprep.mubr.f32.mxu0 0.0
      %1266 = vmatmul.mubr.f32.gmra.mrb[0].mxu0 %v1092
      %v1267 = vpop.f32.mrb[0].mxu0
      %v1268 = vadd.f32 %v853, %v1267
      %v1269 = vpop.f32.mrb[0].mxu0
      %1270 = vmatprep.mubr.f32.mxu0 0.0
      %1271 = vmatmul.mubr.f32.gmra.mrb[0].mxu0 %v1094
      %v1272 = vpop.f32.mrb[0].mxu0
      %v1273 = vadd.f32 %v858, %v1272
      %v1274 = vpop.f32.mrb[0].mxu0
      %1275 = vmatprep.mubr.f32.mxu0 0.0
      %1276 = vmatmul.mubr.f32.gmra.mrb[0].mxu0 %v1096
      %v1277 = vpop.f32.mrb[0].mxu0
      %v1278 = vadd.f32 %v863, %v1277
      %v1279 = vpop.f32.mrb[0].mxu0
      %1280 = vmatprep.mubr.f32.mxu0 0.0
      %1281 = vmatmul.mubr.f32.gmra.mrb[0].mxu0 %v1098
      %v1282 = vpop.f32.mrb[0].mxu0
      %v1283 = vadd.f32 %v868, %v1282
      %v1284 = vpop.f32.mrb[0].mxu0
      %1285 = vmatprep.mubr.f32.mxu0 0.0
      %1286 = vmatmul.mubr.f32.gmra.mrb[0].mxu0 %v1100
      %v1287 = vpop.f32.mrb[0].mxu0
      %v1288 = vadd.f32 %v873, %v1287
      %v1289 = vpop.f32.mrb[0].mxu0
      %1290 = vmatprep.mubr.f32.mxu0 0.0
      %1291 = vmatmul.mubr.f32.gmra.mrb[0].mxu0 %v1102
      %v1292 = vpop.f32.mrb[0].mxu0
      %v1293 = vadd.f32 %v878, %v1292
      %v1294 = vpop.f32.mrb[0].mxu0
      %1295 = vmatprep.mubr.f32.mxu0 0.0
      %1296 = vmatmul.mubr.f32.gmra.mrb[0].mxu0 %v1104
      %v1297 = vpop.f32.mrb[0].mxu0
      %v1298 = vadd.f32 %v883, %v1297
      %v1299 = vpop.f32.mrb[0].mxu0
      %1300 = vmatprep.mubr.f32.mxu0 0.0
      %1301 = vmatmul.mubr.f32.gmra.mrb[0].mxu0 %v1106
      %v1302 = vpop.f32.mrb[0].mxu0
      %v1303 = vadd.f32 %v888, %v1302
      %v1304 = vpop.f32.mrb[0].mxu0
      %1305 = vmatprep.mubr.f32.mxu0 0.0
      %1306 = vmatmul.mubr.f32.gmra.mrb[0].mxu0 %v1108
      %v1307 = vpop.f32.mrb[0].mxu0
      %v1308 = vadd.f32 %v893, %v1307
      %v1309 = vpop.f32.mrb[0].mxu0
      %1310 = vmatprep.mubr.f32.mxu0 0.0
      %1311 = vmatmul.mubr.f32.gmra.mrb[0].mxu0 %v1110
      %v1312 = vpop.f32.mrb[0].mxu0
      %v1313 = vadd.f32 %v898, %v1312
      %v1314 = vpop.f32.mrb[0].mxu0
      %1315 = vmatprep.mubr.f32.mxu0 0.0
      %1316 = vmatmul.mubr.f32.gmra.mrb[0].mxu0 %v1112
      %v1317 = vpop.f32.mrb[0].mxu0
      %v1318 = vadd.f32 %v903, %v1317
      %v1319 = vpop.f32.mrb[0].mxu0
      %1320 = vmatprep.mubr.f32.mxu0 0.0
      %1321 = vmatmul.mubr.f32.gmra.mrb[0].mxu0 %v1114
      %v1322 = vpop.f32.mrb[0].mxu0
      %v1323 = vadd.f32 %v908, %v1322
      %v1324 = vpop.f32.mrb[0].mxu0
      %1325 = vmatprep.mubr.f32.mxu0 0.0
      %1326 = vmatmul.mubr.f32.gmra.mrb[0].mxu0 %v1116
      %v1327 = vpop.f32.mrb[0].mxu0
      %v1328 = vadd.f32 %v913, %v1327
      %v1329 = vpop.f32.mrb[0].mxu0
      %1330 = vmatprep.mubr.f32.mxu0 0.0
      %1331 = vmatmul.mubr.f32.gmra.mrb[0].mxu0 %v1118
      %v1332 = vpop.f32.mrb[0].mxu0
      %v1333 = vadd.f32 %v918, %v1332
      %v1334 = vpop.f32.mrb[0].mxu0
      %1335 = vmatprep.mubr.f32.mxu0 0.0
      %1336 = vmatmul.mubr.f32.gmra.mrb[0].mxu0 %v1120
      %v1337 = vpop.f32.mrb[0].mxu0
      %v1338 = vadd.f32 %v923, %v1337
      %v1339 = vpop.f32.mrb[0].mxu0
      %1340 = vmatprep.mubr.f32.mxu0 0.0
      %1341 = vmatmul.mubr.f32.gmra.mrb[0].mxu0 %v1122
      %v1342 = vpop.f32.mrb[0].mxu0
      %v1343 = vadd.f32 %v928, %v1342
      %v1344 = vpop.f32.mrb[0].mxu0
      %1345 = vmatprep.mubr.f32.mxu0 0.0
      %1346 = vmatmul.mubr.f32.gmra.mrb[0].mxu0 %v1124
      %v1347 = vpop.f32.mrb[0].mxu0
      %v1348 = vadd.f32 %v933, %v1347
      %v1349 = vpop.f32.mrb[0].mxu0
      %1350 = vmatprep.mubr.f32.mxu0 0.0
      %1351 = vmatmul.mubr.f32.gmra.mrb[0].mxu0 %v1126
      %v1352 = vpop.f32.mrb[0].mxu0
      %v1353 = vadd.f32 %v938, %v1352
      %v1354 = vpop.f32.mrb[0].mxu0
      %1355 = vmatprep.mubr.f32.mxu0 0.0
      %1356 = vmatmul.mubr.f32.gmra.mrb[0].mxu0 %v1128
      %v1357 = vpop.f32.mrb[0].mxu0
      %v1358 = vadd.f32 %v943, %v1357
      %v1359 = vpop.f32.mrb[0].mxu0
      %1360 = vmatprep.mubr.f32.mxu0 0.0
      %1361 = vmatmul.mubr.f32.gmra.mrb[0].mxu0 %v1130
      %v1362 = vpop.f32.mrb[0].mxu0
      %v1363 = vadd.f32 %v948, %v1362
      %v1364 = vpop.f32.mrb[0].mxu0
      %1365 = vmatprep.mubr.f32.mxu0 0.0
      %1366 = vmatmul.mubr.f32.gmra.mrb[0].mxu0 %v1132
      %v1367 = vpop.f32.mrb[0].mxu0
      %v1368 = vadd.f32 %v953, %v1367
      %v1369 = vpop.f32.mrb[0].mxu0
      %1370 = vmatprep.mubr.f32.mxu0 0.0
      %1371 = vmatmul.mubr.f32.gmra.mrb[0].mxu0 %v1134
      %v1372 = vpop.f32.mrb[0].mxu0
      %v1373 = vadd.f32 %v958, %v1372
      %v1374 = vpop.f32.mrb[0].mxu0
      %1375 = vmatprep.mubr.f32.mxu0 0.0
      %1376 = vmatmul.mubr.f32.gmra.mrb[0].mxu0 %v1136
      %v1377 = vpop.f32.mrb[0].mxu0
      %v1378 = vadd.f32 %v963, %v1377
      %v1379 = vpop.f32.mrb[0].mxu0
      %1380 = vmatprep.mubr.f32.mxu0 0.0
      %1381 = vmatmul.mubr.f32.gmra.mrb[0].mxu0 %v1138
      %v1382 = vpop.f32.mrb[0].mxu0
      %v1383 = vadd.f32 %v968, %v1382
      %v1384 = vpop.f32.mrb[0].mxu0
      %1385 = vmatprep.mubr.f32.mxu0 0.0
      %1386 = vmatmul.mubr.f32.gmra.mrb[0].mxu0 %v1140
      %v1387 = vpop.f32.mrb[0].mxu0
      %v1388 = vadd.f32 %v973, %v1387
      %v1389 = vpop.f32.mrb[0].mxu0
      %1390 = vmatprep.mubr.f32.mxu0 0.0
      %1391 = vmatmul.mubr.f32.gmra.mrb[0].mxu0 %v1142
      %v1392 = vpop.f32.mrb[0].mxu0
      %v1393 = vadd.f32 %v978, %v1392
      %v1394 = vpop.f32.mrb[0].mxu0
      %1395 = vmatprep.mubr.f32.mxu0 0.0
      %1396 = vmatmul.mubr.f32.gmra.mrb[0].mxu0 %v1144
      %v1397 = vpop.f32.mrb[0].mxu0
      %v1398 = vadd.f32 %v983, %v1397
      %v1399 = vpop.f32.mrb[0].mxu0
      %1400 = vmatprep.mubr.f32.mxu0 0.0
      %1401 = vmatmul.mubr.f32.gmra.mrb[0].mxu0 %v1146
      %v1402 = vpop.f32.mrb[0].mxu0
      %v1403 = vadd.f32 %v988, %v1402
      %v1404 = vpop.f32.mrb[0].mxu0
      %1405 = vmatprep.mubr.f32.mxu0 0.0
      %1406 = vmatmul.mubr.f32.gmra.mrb[0].mxu0 %v1148
      %v1407 = vpop.f32.mrb[0].mxu0
      %v1408 = vadd.f32 %v993, %v1407
      %v1409 = vpop.f32.mrb[0].mxu0
      %1410 = vmatprep.mubr.f32.mxu0 0.0
      %1411 = vmatmul.mubr.f32.gmra.mrb[0].mxu0 %v1150
      %v1412 = vpop.f32.mrb[0].mxu0
      %v1413 = vadd.f32 %v998, %v1412
      %v1414 = vpop.f32.mrb[0].mxu0
      %1415 = vmatprep.mubr.f32.mxu0 0.0
      %1416 = vmatmul.mubr.f32.gmra.mrb[0].mxu0 %v1152
      %v1417 = vpop.f32.mrb[0].mxu0
      %v1418 = vadd.f32 %v1003, %v1417
      %v1419 = vpop.f32.mrb[0].mxu0
      %1420 = vmatprep.mubr.f32.mxu0 0.0
      %1421 = vmatmul.mubr.f32.gmra.mrb[0].mxu0 %v1154
      %v1422 = vpop.f32.mrb[0].mxu0
      %v1423 = vadd.f32 %v1008, %v1422
      %v1424 = vpop.f32.mrb[0].mxu0
      %1425 = vmatprep.mubr.f32.mxu0 0.0
      %1426 = vmatmul.mubr.f32.gmra.mrb[0].mxu0 %v1156
      %v1427 = vpop.f32.mrb[0].mxu0
      %v1428 = vadd.f32 %v1013, %v1427
      %v1429 = vpop.f32.mrb[0].mxu0
      %1430 = vmatprep.mubr.f32.mxu0 0.0
      %1431 = vmatmul.mubr.f32.gmra.mrb[0].mxu0 %v1158
      %v1432 = vpop.f32.mrb[0].mxu0
      %v1433 = vadd.f32 %v1018, %v1432
      %v1434 = vpop.f32.mrb[0].mxu0
      %1435 = vmatprep.mubr.f32.mxu0 0.0
      %1436 = vmatmul.mubr.f32.gmra.mrb[0].mxu0 %v1160
      %v1437 = vpop.f32.mrb[0].mxu0
      %v1438 = vadd.f32 %v1023, %v1437
      %v1439 = vpop.f32.mrb[0].mxu0
      %1440 = vmatprep.mubr.f32.mxu0 0.0
      %1441 = vmatmul.mubr.f32.gmra.mrb[0].mxu0 %v1162
      %v1442 = vpop.f32.mrb[0].mxu0
      %v1443 = vadd.f32 %v1028, %v1442
      %v1444 = vpop.f32.mrb[0].mxu0
      %1445 = vmatprep.mubr.f32.mxu0 0.0
      %1446 = vmatmul.mubr.f32.gmra.mrb[0].mxu0 %v1164
      %v1447 = vpop.f32.mrb[0].mxu0
      %v1448 = vadd.f32 %v1033, %v1447
      %v1449 = vpop.f32.mrb[0].mxu0
      %1450 = vmatprep.mubr.f32.mxu0 0.0
      %1451 = vmatmul.mubr.f32.gmra.mrb[0].mxu0 %v1166
      %v1452 = vpop.f32.mrb[0].mxu0
      %v1453 = vadd.f32 %v1038, %v1452
      %v1454 = vpop.f32.mrb[0].mxu0
      %1455 = vmatprep.mubr.f32.mxu0 0.0
      %1456 = vmatmul.mubr.f32.gmra.mrb[0].mxu0 %v1168
      %v1457 = vpop.f32.mrb[0].mxu0
      %v1458 = vadd.f32 %v1043, %v1457
      %v1459 = vpop.f32.mrb[0].mxu0
      %1460 = vmatprep.mubr.f32.mxu0 0.0
      %1461 = vmatmul.mubr.f32.gmra.mrb[0].mxu0 %v1170
      %v1462 = vpop.f32.mrb[0].mxu0
      %v1463 = vadd.f32 %v1048, %v1462
      %v1464 = vpop.f32.mrb[0].mxu0
      %1465 = vmatprep.mubr.f32.mxu0 0.0
      %1466 = vmatmul.mubr.f32.gmra.mrb[0].mxu0 %v1172
      %v1467 = vpop.f32.mrb[0].mxu0
      %v1468 = vadd.f32 %v1053, %v1467
      %v1469 = vpop.f32.mrb[0].mxu0
      %1470 = vmatprep.mubr.f32.mxu0 0.0
      %1471 = vmatmul.mubr.f32.gmra.mrb[0].mxu0 %v1174
      %v1472 = vpop.f32.mrb[0].mxu0
      %v1473 = vadd.f32 %v1058, %v1472
      %v1474 = vpop.f32.mrb[0].mxu0
      %1475 = vmatprep.mubr.f32.mxu0 0.0
      %1476 = vmatmul.mubr.f32.gmra.mrb[0].mxu0 %v1176
      %v1477 = vpop.f32.mrb[0].mxu0
      %v1478 = vadd.f32 %v1063, %v1477
      %v1479 = vpop.f32.mrb[0].mxu0
      %1480 = vmatprep.mubr.f32.mxu0 0.0
      %1481 = vmatmul.mubr.f32.gmra.mrb[0].mxu0 %v1178
      %v1482 = vpop.f32.mrb[0].mxu0
      %v1483 = vadd.f32 %v1068, %v1482
      %v1484 = vpop.f32.mrb[0].mxu0
      %1485 = vmatprep.mubr.f32.mxu0 0.0
      %1486 = vmatmul.mubr.f32.gmra.mrb[0].mxu0 %v1180
      %v1487 = vpop.f32.mrb[0].mxu0
      %v1488 = vadd.f32 %v1073, %v1487
      %v1489 = vpop.f32.mrb[0].mxu0
      %1490 = vmatprep.mubr.f32.mxu0 0.0
      %1491 = vmatmul.mubr.f32.gmra.mrb[0].mxu0 %v1182
      %v1492 = vpop.f32.mrb[0].mxu0
      %v1493 = vadd.f32 %v1078, %v1492
      %v1494 = vpop.f32.mrb[0].mxu0
      %1495 = vmatprep.mubr.f32.mxu0 0.0
      %1496 = vmatmul.mubr.f32.gmra.mrb[0].mxu0 %v1184
      %v1497 = vpop.f32.mrb[0].mxu0
      %v1498 = vadd.f32 %v1083, %v1497
      %v1499 = vpop.f32.mrb[0].mxu0
      %1500 = vdwg.mxu0
      %vm1501 = vcmask 523264
      %v1502 = vsel %vm1501, %v1253, 0.0
      %v1503 = vsel %vm1501, %v1258, 0.0
      %v1504 = vadd.f32 %v1502, %v1503
      %v1505 = vsel %vm1501, %v1263, 0.0
      %v1506 = vadd.f32 %v1504, %v1505
      %v1507 = vsel %vm1501, %v1268, 0.0
      %v1508 = vadd.f32 %v1506, %v1507
      %v1509 = vsel %vm1501, %v1273, 0.0
      %v1510 = vadd.f32 %v1508, %v1509
      %v1511 = vsel %vm1501, %v1278, 0.0
      %v1512 = vadd.f32 %v1510, %v1511
      %v1513 = vsel %vm1501, %v1283, 0.0
      %v1514 = vadd.f32 %v1512, %v1513
      %v1515 = vsel %vm1501, %v1288, 0.0
      %v1516 = vadd.f32 %v1514, %v1515
      %v1517 = vsel %vm1501, %v1293, 0.0
      %v1518 = vadd.f32 %v1516, %v1517
      %v1519 = vsel %vm1501, %v1298, 0.0
      %v1520 = vadd.f32 %v1518, %v1519
      %v1521 = vsel %vm1501, %v1303, 0.0
      %v1522 = vadd.f32 %v1520, %v1521
      %v1523 = vsel %vm1501, %v1308, 0.0
      %v1524 = vadd.f32 %v1522, %v1523
      %v1525 = vsel %vm1501, %v1313, 0.0
      %v1526 = vadd.f32 %v1524, %v1525
      %v1527 = vsel %vm1501, %v1318, 0.0
      %v1528 = vadd.f32 %v1526, %v1527
      %v1529 = vsel %vm1501, %v1323, 0.0
      %v1530 = vadd.f32 %v1528, %v1529
      %v1531 = vsel %vm1501, %v1328, 0.0
      %v1532 = vadd.f32 %v1530, %v1531
      %v1533 = vsel %vm1501, %v1333, 0.0
      %v1534 = vadd.f32 %v1532, %v1533
      %v1535 = vsel %vm1501, %v1338, 0.0
      %v1536 = vadd.f32 %v1534, %v1535
      %v1537 = vsel %vm1501, %v1343, 0.0
      %v1538 = vadd.f32 %v1536, %v1537
      %v1539 = vsel %vm1501, %v1348, 0.0
      %v1540 = vadd.f32 %v1538, %v1539
      %v1541 = vsel %vm1501, %v1353, 0.0
      %v1542 = vadd.f32 %v1540, %v1541
      %v1543 = vsel %vm1501, %v1358, 0.0
      %v1544 = vadd.f32 %v1542, %v1543
      %v1545 = vsel %vm1501, %v1363, 0.0
      %v1546 = vadd.f32 %v1544, %v1545
      %v1547 = vsel %vm1501, %v1368, 0.0
      %v1548 = vadd.f32 %v1546, %v1547
      %v1549 = vsel %vm1501, %v1373, 0.0
      %v1550 = vadd.f32 %v1548, %v1549
      %v1551 = vsel %vm1501, %v1378, 0.0
      %v1552 = vadd.f32 %v1550, %v1551
      %v1553 = vsel %vm1501, %v1383, 0.0
      %v1554 = vadd.f32 %v1552, %v1553
      %v1555 = vsel %vm1501, %v1388, 0.0
      %v1556 = vadd.f32 %v1554, %v1555
      %v1557 = vsel %vm1501, %v1393, 0.0
      %v1558 = vadd.f32 %v1556, %v1557
      %v1559 = vsel %vm1501, %v1398, 0.0
      %v1560 = vadd.f32 %v1558, %v1559
      %v1561 = vsel %vm1501, %v1403, 0.0
      %v1562 = vadd.f32 %v1560, %v1561
      %v1563 = vsel %vm1501, %v1408, 0.0
      %v1564 = vadd.f32 %v1562, %v1563
      %v1565 = vsel %vm1501, %v1413, 0.0
      %v1566 = vadd.f32 %v1564, %v1565
      %v1567 = vsel %vm1501, %v1418, 0.0
      %v1568 = vadd.f32 %v1566, %v1567
      %v1569 = vsel %vm1501, %v1423, 0.0
      %v1570 = vadd.f32 %v1568, %v1569
      %v1571 = vsel %vm1501, %v1428, 0.0
      %v1572 = vadd.f32 %v1570, %v1571
      %v1573 = vsel %vm1501, %v1433, 0.0
      %v1574 = vadd.f32 %v1572, %v1573
      %v1575 = vsel %vm1501, %v1438, 0.0
      %v1576 = vadd.f32 %v1574, %v1575
      %v1577 = vsel %vm1501, %v1443, 0.0
      %v1578 = vadd.f32 %v1576, %v1577
      %v1579 = vsel %vm1501, %v1448, 0.0
      %v1580 = vadd.f32 %v1578, %v1579
      %v1581 = vsel %vm1501, %v1453, 0.0
      %v1582 = vadd.f32 %v1580, %v1581
      %v1583 = vsel %vm1501, %v1458, 0.0
      %v1584 = vadd.f32 %v1582, %v1583
      %v1585 = vsel %vm1501, %v1463, 0.0
      %v1586 = vadd.f32 %v1584, %v1585
      %v1587 = vsel %vm1501, %v1468, 0.0
      %v1588 = vadd.f32 %v1586, %v1587
      %v1589 = vsel %vm1501, %v1473, 0.0
      %v1590 = vadd.f32 %v1588, %v1589
      %v1591 = vsel %vm1501, %v1478, 0.0
      %v1592 = vadd.f32 %v1590, %v1591
      %v1593 = vsel %vm1501, %v1483, 0.0
      %v1594 = vadd.f32 %v1592, %v1593
      %v1595 = vsel %vm1501, %v1488, 0.0
      %v1596 = vadd.f32 %v1594, %v1595
      %v1597 = vsel %vm1501, %v1493, 0.0
      %v1598 = vadd.f32 %v1596, %v1597
      %vm1599 = vcmask 522240
      %v1600 = vsel %vm1599, %v1498, 0.0
      %v1601 = vadd.f32 %v1598, %v1600
      %v1602 = vrot.slane %v1601, 4
      %v1603 = vadd.f32 %v1601, %v1602
      %v1604 = vrot.slane %v1603, 2
      %v1605 = vadd.f32 %v1603, %v1604
      %v1606 = vrot.slane %v1605, 1
      %v1607 = vadd.f32 %v1605, %v1606
      %v1608 = vrcp.pop 399.0
      %v1609 = vmul.f32 %v1607, %v1608
      %v1610 = vsub.f32 %v1253, %v1609
      %v1611 = vsub.f32 %v1258, %v1609
      %v1612 = vsub.f32 %v1263, %v1609
      %v1613 = vsub.f32 %v1268, %v1609
      %v1614 = vsub.f32 %v1273, %v1609
      %v1615 = vsub.f32 %v1278, %v1609
      %v1616 = vsub.f32 %v1283, %v1609
      %v1617 = vsub.f32 %v1288, %v1609
      %v1618 = vsub.f32 %v1293, %v1609
      %v1619 = vsub.f32 %v1298, %v1609
      %v1620 = vsub.f32 %v1303, %v1609
      %v1621 = vsub.f32 %v1308, %v1609
      %v1622 = vsub.f32 %v1313, %v1609
      %v1623 = vsub.f32 %v1318, %v1609
      %v1624 = vsub.f32 %v1323, %v1609
      %v1625 = vsub.f32 %v1328, %v1609
      %v1626 = vsub.f32 %v1333, %v1609
      %v1627 = vsub.f32 %v1338, %v1609
      %v1628 = vsub.f32 %v1343, %v1609
      %v1629 = vsub.f32 %v1348, %v1609
      %v1630 = vsub.f32 %v1353, %v1609
      %v1631 = vsub.f32 %v1358, %v1609
      %v1632 = vsub.f32 %v1363, %v1609
      %v1633 = vsub.f32 %v1368, %v1609
      %v1634 = vsub.f32 %v1373, %v1609
      %v1635 = vsub.f32 %v1378, %v1609
      %v1636 = vsub.f32 %v1383, %v1609
      %v1637 = vsub.f32 %v1388, %v1609
      %v1638 = vsub.f32 %v1393, %v1609
      %v1639 = vsub.f32 %v1398, %v1609
      %v1640 = vsub.f32 %v1403, %v1609
      %v1641 = vsub.f32 %v1408, %v1609
      %v1642 = vsub.f32 %v1413, %v1609
      %v1643 = vsub.f32 %v1418, %v1609
      %v1644 = vsub.f32 %v1423, %v1609
      %v1645 = vsub.f32 %v1428, %v1609
      %v1646 = vsub.f32 %v1433, %v1609
      %v1647 = vsub.f32 %v1438, %v1609
      %v1648 = vsub.f32 %v1443, %v1609
      %v1649 = vsub.f32 %v1448, %v1609
      %v1650 = vsub.f32 %v1453, %v1609
      %v1651 = vsub.f32 %v1458, %v1609
      %v1652 = vsub.f32 %v1463, %v1609
      %v1653 = vsub.f32 %v1468, %v1609
      %v1654 = vsub.f32 %v1473, %v1609
      %v1655 = vsub.f32 %v1478, %v1609
      %v1656 = vsub.f32 %v1483, %v1609
      %v1657 = vsub.f32 %v1488, %v1609
      %v1658 = vsub.f32 %v1493, %v1609
      %v1659 = vsub.f32 %v1498, %v1609
      %v1660 = vmul.f32 %v1610, %v1610
      %v1661 = vmul.f32 %v1611, %v1611
      %v1662 = vmul.f32 %v1612, %v1612
      %v1663 = vmul.f32 %v1613, %v1613
      %v1664 = vmul.f32 %v1614, %v1614
      %v1665 = vmul.f32 %v1615, %v1615
      %v1666 = vmul.f32 %v1616, %v1616
      %v1667 = vmul.f32 %v1617, %v1617
      %v1668 = vmul.f32 %v1618, %v1618
      %v1669 = vmul.f32 %v1619, %v1619
      %v1670 = vmul.f32 %v1620, %v1620
      %v1671 = vmul.f32 %v1621, %v1621
      %v1672 = vmul.f32 %v1622, %v1622
      %v1673 = vmul.f32 %v1623, %v1623
      %v1674 = vmul.f32 %v1624, %v1624
      %v1675 = vmul.f32 %v1625, %v1625
      %v1676 = vmul.f32 %v1626, %v1626
      %v1677 = vmul.f32 %v1627, %v1627
      %v1678 = vmul.f32 %v1628, %v1628
      %v1679 = vmul.f32 %v1629, %v1629
      %v1680 = vmul.f32 %v1630, %v1630
      %v1681 = vmul.f32 %v1631, %v1631
      %v1682 = vmul.f32 %v1632, %v1632
      %v1683 = vmul.f32 %v1633, %v1633
      %v1684 = vmul.f32 %v1634, %v1634
      %v1685 = vmul.f32 %v1635, %v1635
      %v1686 = vmul.f32 %v1636, %v1636
      %v1687 = vmul.f32 %v1637, %v1637
      %v1688 = vmul.f32 %v1638, %v1638
      %v1689 = vmul.f32 %v1639, %v1639
      %v1690 = vmul.f32 %v1640, %v1640
      %v1691 = vmul.f32 %v1641, %v1641
      %v1692 = vmul.f32 %v1642, %v1642
      %v1693 = vmul.f32 %v1643, %v1643
      %v1694 = vmul.f32 %v1644, %v1644
      %v1695 = vmul.f32 %v1645, %v1645
      %v1696 = vmul.f32 %v1646, %v1646
      %v1697 = vmul.f32 %v1647, %v1647
      %v1698 = vmul.f32 %v1648, %v1648
      %v1699 = vmul.f32 %v1649, %v1649
      %v1700 = vmul.f32 %v1650, %v1650
      %v1701 = vmul.f32 %v1651, %v1651
      %v1702 = vmul.f32 %v1652, %v1652
      %v1703 = vmul.f32 %v1653, %v1653
      %v1704 = vmul.f32 %v1654, %v1654
      %v1705 = vmul.f32 %v1655, %v1655
      %v1706 = vmul.f32 %v1656, %v1656
      %v1707 = vmul.f32 %v1657, %v1657
      %v1708 = vmul.f32 %v1658, %v1658
      %v1709 = vmul.f32 %v1659, %v1659
      %v1710 = vsel %vm1501, %v1660, 0.0
      %v1711 = vsel %vm1501, %v1661, 0.0
      %v1712 = vadd.f32 %v1710, %v1711
      %v1713 = vsel %vm1501, %v1662, 0.0
      %v1714 = vadd.f32 %v1712, %v1713
      %v1715 = vsel %vm1501, %v1663, 0.0
      %v1716 = vadd.f32 %v1714, %v1715
      %v1717 = vsel %vm1501, %v1664, 0.0
      %v1718 = vadd.f32 %v1716, %v1717
      %v1719 = vsel %vm1501, %v1665, 0.0
      %v1720 = vadd.f32 %v1718, %v1719
      %v1721 = vsel %vm1501, %v1666, 0.0
      %v1722 = vadd.f32 %v1720, %v1721
      %v1723 = vsel %vm1501, %v1667, 0.0
      %v1724 = vadd.f32 %v1722, %v1723
      %v1725 = vsel %vm1501, %v1668, 0.0
      %v1726 = vadd.f32 %v1724, %v1725
      %v1727 = vsel %vm1501, %v1669, 0.0
      %v1728 = vadd.f32 %v1726, %v1727
      %v1729 = vsel %vm1501, %v1670, 0.0
      %v1730 = vadd.f32 %v1728, %v1729
      %v1731 = vsel %vm1501, %v1671, 0.0
      %v1732 = vadd.f32 %v1730, %v1731
      %v1733 = vsel %vm1501, %v1672, 0.0
      %v1734 = vadd.f32 %v1732, %v1733
      %v1735 = vsel %vm1501, %v1673, 0.0
      %v1736 = vadd.f32 %v1734, %v1735
      %v1737 = vsel %vm1501, %v1674, 0.0
      %v1738 = vadd.f32 %v1736, %v1737
      %v1739 = vsel %vm1501, %v1675, 0.0
      %v1740 = vadd.f32 %v1738, %v1739
      %v1741 = vsel %vm1501, %v1676, 0.0
      %v1742 = vadd.f32 %v1740, %v1741
      %v1743 = vsel %vm1501, %v1677, 0.0
      %v1744 = vadd.f32 %v1742, %v1743
      %v1745 = vsel %vm1501, %v1678, 0.0
      %v1746 = vadd.f32 %v1744, %v1745
      %v1747 = vsel %vm1501, %v1679, 0.0
      %v1748 = vadd.f32 %v1746, %v1747
      %v1749 = vsel %vm1501, %v1680, 0.0
      %v1750 = vadd.f32 %v1748, %v1749
      %v1751 = vsel %vm1501, %v1681, 0.0
      %v1752 = vadd.f32 %v1750, %v1751
      %v1753 = vsel %vm1501, %v1682, 0.0
      %v1754 = vadd.f32 %v1752, %v1753
      %v1755 = vsel %vm1501, %v1683, 0.0
      %v1756 = vadd.f32 %v1754, %v1755
      %v1757 = vsel %vm1501, %v1684, 0.0
      %v1758 = vadd.f32 %v1756, %v1757
      %v1759 = vsel %vm1501, %v1685, 0.0
      %v1760 = vadd.f32 %v1758, %v1759
      %v1761 = vsel %vm1501, %v1686, 0.0
      %v1762 = vadd.f32 %v1760, %v1761
      %v1763 = vsel %vm1501, %v1687, 0.0
      %v1764 = vadd.f32 %v1762, %v1763
      %v1765 = vsel %vm1501, %v1688, 0.0
      %v1766 = vadd.f32 %v1764, %v1765
      %v1767 = vsel %vm1501, %v1689, 0.0
      %v1768 = vadd.f32 %v1766, %v1767
      %v1769 = vsel %vm1501, %v1690, 0.0
      %v1770 = vadd.f32 %v1768, %v1769
      %v1771 = vsel %vm1501, %v1691, 0.0
      %v1772 = vadd.f32 %v1770, %v1771
      %v1773 = vsel %vm1501, %v1692, 0.0
      %v1774 = vadd.f32 %v1772, %v1773
      %v1775 = vsel %vm1501, %v1693, 0.0
      %v1776 = vadd.f32 %v1774, %v1775
      %v1777 = vsel %vm1501, %v1694, 0.0
      %v1778 = vadd.f32 %v1776, %v1777
      %v1779 = vsel %vm1501, %v1695, 0.0
      %v1780 = vadd.f32 %v1778, %v1779
      %v1781 = vsel %vm1501, %v1696, 0.0
      %v1782 = vadd.f32 %v1780, %v1781
      %v1783 = vsel %vm1501, %v1697, 0.0
      %v1784 = vadd.f32 %v1782, %v1783
      %v1785 = vsel %vm1501, %v1698, 0.0
      %v1786 = vadd.f32 %v1784, %v1785
      %v1787 = vsel %vm1501, %v1699, 0.0
      %v1788 = vadd.f32 %v1786, %v1787
      %v1789 = vsel %vm1501, %v1700, 0.0
      %v1790 = vadd.f32 %v1788, %v1789
      %v1791 = vsel %vm1501, %v1701, 0.0
      %v1792 = vadd.f32 %v1790, %v1791
      %v1793 = vsel %vm1501, %v1702, 0.0
      %v1794 = vadd.f32 %v1792, %v1793
      %v1795 = vsel %vm1501, %v1703, 0.0
      %v1796 = vadd.f32 %v1794, %v1795
      %v1797 = vsel %vm1501, %v1704, 0.0
      %v1798 = vadd.f32 %v1796, %v1797
      %v1799 = vsel %vm1501, %v1705, 0.0
      %v1800 = vadd.f32 %v1798, %v1799
      %v1801 = vsel %vm1501, %v1706, 0.0
      %v1802 = vadd.f32 %v1800, %v1801
      %v1803 = vsel %vm1501, %v1707, 0.0
      %v1804 = vadd.f32 %v1802, %v1803
      %v1805 = vsel %vm1501, %v1708, 0.0
      %v1806 = vadd.f32 %v1804, %v1805
      %v1807 = vsel %vm1599, %v1709, 0.0
      %v1808 = vadd.f32 %v1806, %v1807
      %v1809 = vrot.slane %v1808, 4
      %v1810 = vadd.f32 %v1808, %v1809
      %v1811 = vrot.slane %v1810, 2
      %v1812 = vadd.f32 %v1810, %v1811
      %v1813 = vrot.slane %v1812, 1
      %v1814 = vadd.f32 %v1812, %v1813
      %v1815 = vmul.f32 %v1814, %v1608
      %v1816 = vadd.f32 %v1815, 1e-05
      %v1817 = vrsqrt.pop %v1816
      %v1818 = vmul.f32 %v1610, %v1817
      %v1819 = vmul.f32 %v1611, %v1817
      %v1820 = vmul.f32 %v1612, %v1817
      %v1821 = vmul.f32 %v1613, %v1817
      %v1822 = vmul.f32 %v1614, %v1817
      %v1823 = vmul.f32 %v1615, %v1817
      %v1824 = vmul.f32 %v1616, %v1817
      %v1825 = vmul.f32 %v1617, %v1817
      %v1826 = vmul.f32 %v1618, %v1817
      %v1827 = vmul.f32 %v1619, %v1817
      %v1828 = vmul.f32 %v1620, %v1817
      %v1829 = vmul.f32 %v1621, %v1817
      %v1830 = vmul.f32 %v1622, %v1817
      %v1831 = vmul.f32 %v1623, %v1817
      %v1832 = vmul.f32 %v1624, %v1817
      %v1833 = vmul.f32 %v1625, %v1817
      %v1834 = vmul.f32 %v1626, %v1817
      %v1835 = vmul.f32 %v1627, %v1817
      %v1836 = vmul.f32 %v1628, %v1817
      %v1837 = vmul.f32 %v1629, %v1817
      %v1838 = vmul.f32 %v1630, %v1817
      %v1839 = vmul.f32 %v1631, %v1817
      %v1840 = vmul.f32 %v1632, %v1817
      %v1841 = vmul.f32 %v1633, %v1817
      %v1842 = vmul.f32 %v1634, %v1817
      %v1843 = vmul.f32 %v1635, %v1817
      %v1844 = vmul.f32 %v1636, %v1817
      %v1845 = vmul.f32 %v1637, %v1817
      %v1846 = vmul.f32 %v1638, %v1817
      %v1847 = vmul.f32 %v1639, %v1817
      %v1848 = vmul.f32 %v1640, %v1817
      %v1849 = vmul.f32 %v1641, %v1817
      %v1850 = vmul.f32 %v1642, %v1817
      %v1851 = vmul.f32 %v1643, %v1817
      %v1852 = vmul.f32 %v1644, %v1817
      %v1853 = vmul.f32 %v1645, %v1817
      %v1854 = vmul.f32 %v1646, %v1817
      %v1855 = vmul.f32 %v1647, %v1817
      %v1856 = vmul.f32 %v1648, %v1817
      %v1857 = vmul.f32 %v1649, %v1817
      %v1858 = vmul.f32 %v1650, %v1817
      %v1859 = vmul.f32 %v1651, %v1817
      %v1860 = vmul.f32 %v1652, %v1817
      %v1861 = vmul.f32 %v1653, %v1817
      %v1862 = vmul.f32 %v1654, %v1817
      %v1863 = vmul.f32 %v1655, %v1817
      %v1864 = vmul.f32 %v1656, %v1817
      %v1865 = vmul.f32 %v1657, %v1817
      %v1866 = vmul.f32 %v1658, %v1817
      %v1867 = vmul.f32 %v1659, %v1817
      %v1868 = vld [vmem:[%s2] sm:$0x1]
      %v1870 = vlaneseq
      %v1871 = vshrl.u32 %v1870, 7
      %v1872 = vsub.s32 0, %v1871
      %v1873 = vrot.slane %v1868, %v1872
      %v1875 = vmul.f32 %v1818, %v1873
      %v1876 = vmul.f32 %v1819, %v1873
      %v1877 = vmul.f32 %v1820, %v1873
      %v1878 = vmul.f32 %v1821, %v1873
      %v1879 = vmul.f32 %v1822, %v1873
      %v1880 = vmul.f32 %v1823, %v1873
      %v1881 = vmul.f32 %v1824, %v1873
      %v1882 = vmul.f32 %v1825, %v1873
      %v1883 = vmul.f32 %v1826, %v1873
      %v1884 = vmul.f32 %v1827, %v1873
      %v1885 = vmul.f32 %v1828, %v1873
      %v1886 = vmul.f32 %v1829, %v1873
      %v1887 = vmul.f32 %v1830, %v1873
      %v1888 = vmul.f32 %v1831, %v1873
      %v1889 = vmul.f32 %v1832, %v1873
      %v1890 = vmul.f32 %v1833, %v1873
      %v1891 = vmul.f32 %v1834, %v1873
      %v1892 = vmul.f32 %v1835, %v1873
      %v1893 = vmul.f32 %v1836, %v1873
      %v1894 = vmul.f32 %v1837, %v1873
      %v1895 = vmul.f32 %v1838, %v1873
      %v1896 = vmul.f32 %v1839, %v1873
      %v1897 = vmul.f32 %v1840, %v1873
      %v1898 = vmul.f32 %v1841, %v1873
      %v1899 = vmul.f32 %v1842, %v1873
      %v1900 = vmul.f32 %v1843, %v1873
      %v1901 = vmul.f32 %v1844, %v1873
      %v1902 = vmul.f32 %v1845, %v1873
      %v1903 = vmul.f32 %v1846, %v1873
      %v1904 = vmul.f32 %v1847, %v1873
      %v1905 = vmul.f32 %v1848, %v1873
      %v1906 = vmul.f32 %v1849, %v1873
      %v1907 = vmul.f32 %v1850, %v1873
      %v1908 = vmul.f32 %v1851, %v1873
      %v1909 = vmul.f32 %v1852, %v1873
      %v1910 = vmul.f32 %v1853, %v1873
      %v1911 = vmul.f32 %v1854, %v1873
      %v1912 = vmul.f32 %v1855, %v1873
      %v1913 = vmul.f32 %v1856, %v1873
      %v1914 = vmul.f32 %v1857, %v1873
      %v1915 = vmul.f32 %v1858, %v1873
      %v1916 = vmul.f32 %v1859, %v1873
      %v1917 = vmul.f32 %v1860, %v1873
      %v1918 = vmul.f32 %v1861, %v1873
      %v1919 = vmul.f32 %v1862, %v1873
      %v1920 = vmul.f32 %v1863, %v1873
      %v1921 = vmul.f32 %v1864, %v1873
      %v1922 = vmul.f32 %v1865, %v1873
      %v1923 = vmul.f32 %v1866, %v1873
      %v1924 = vmul.f32 %v1867, %v1873
      %v1925 = vld [vmem:[%s3] sm:$0x1]
      %v1927 = vlaneseq
      %v1928 = vshrl.u32 %v1927, 7
      %v1929 = vsub.s32 0, %v1928
      %v1930 = vrot.slane %v1925, %v1929
      %v1932 = vadd.f32 %v1875, %v1930
      %v1933 = vadd.f32 %v1876, %v1930
      %v1934 = vadd.f32 %v1877, %v1930
      %v1935 = vadd.f32 %v1878, %v1930
      %v1936 = vadd.f32 %v1879, %v1930
      %v1937 = vadd.f32 %v1880, %v1930
      %v1938 = vadd.f32 %v1881, %v1930
      %v1939 = vadd.f32 %v1882, %v1930
      %v1940 = vadd.f32 %v1883, %v1930
      %v1941 = vadd.f32 %v1884, %v1930
      %v1942 = vadd.f32 %v1885, %v1930
      %v1943 = vadd.f32 %v1886, %v1930
      %v1944 = vadd.f32 %v1887, %v1930
      %v1945 = vadd.f32 %v1888, %v1930
      %v1946 = vadd.f32 %v1889, %v1930
      %v1947 = vadd.f32 %v1890, %v1930
      %v1948 = vadd.f32 %v1891, %v1930
      %v1949 = vadd.f32 %v1892, %v1930
      %v1950 = vadd.f32 %v1893, %v1930
      %v1951 = vadd.f32 %v1894, %v1930
      %v1952 = vadd.f32 %v1895, %v1930
      %v1953 = vadd.f32 %v1896, %v1930
      %v1954 = vadd.f32 %v1897, %v1930
      %v1955 = vadd.f32 %v1898, %v1930
      %v1956 = vadd.f32 %v1899, %v1930
      %v1957 = vadd.f32 %v1900, %v1930
      %v1958 = vadd.f32 %v1901, %v1930
      %v1959 = vadd.f32 %v1902, %v1930
      %v1960 = vadd.f32 %v1903, %v1930
      %v1961 = vadd.f32 %v1904, %v1930
      %v1962 = vadd.f32 %v1905, %v1930
      %v1963 = vadd.f32 %v1906, %v1930
      %v1964 = vadd.f32 %v1907, %v1930
      %v1965 = vadd.f32 %v1908, %v1930
      %v1966 = vadd.f32 %v1909, %v1930
      %v1967 = vadd.f32 %v1910, %v1930
      %v1968 = vadd.f32 %v1911, %v1930
      %v1969 = vadd.f32 %v1912, %v1930
      %v1970 = vadd.f32 %v1913, %v1930
      %v1971 = vadd.f32 %v1914, %v1930
      %v1972 = vadd.f32 %v1915, %v1930
      %v1973 = vadd.f32 %v1916, %v1930
      %v1974 = vadd.f32 %v1917, %v1930
      %v1975 = vadd.f32 %v1918, %v1930
      %v1976 = vadd.f32 %v1919, %v1930
      %v1977 = vadd.f32 %v1920, %v1930
      %v1978 = vadd.f32 %v1921, %v1930
      %v1979 = vadd.f32 %v1922, %v1930
      %v1980 = vadd.f32 %v1923, %v1930
      %v1981 = vadd.f32 %v1924, %v1930
      %v1982 = vmul.f32 %v1932, 0.5
      %v1983 = vmul.f32 %v1933, 0.5
      %v1984 = vmul.f32 %v1934, 0.5
      %v1985 = vmul.f32 %v1935, 0.5
      %v1986 = vmul.f32 %v1936, 0.5
      %v1987 = vmul.f32 %v1937, 0.5
      %v1988 = vmul.f32 %v1938, 0.5
      %v1989 = vmul.f32 %v1939, 0.5
      %v1990 = vmul.f32 %v1940, 0.5
      %v1991 = vmul.f32 %v1941, 0.5
      %v1992 = vmul.f32 %v1942, 0.5
      %v1993 = vmul.f32 %v1943, 0.5
      %v1994 = vmul.f32 %v1944, 0.5
      %v1995 = vmul.f32 %v1945, 0.5
      %v1996 = vmul.f32 %v1946, 0.5
      %v1997 = vmul.f32 %v1947, 0.5
      %v1998 = vmul.f32 %v1948, 0.5
      %v1999 = vmul.f32 %v1949, 0.5
      %v2000 = vmul.f32 %v1950, 0.5
      %v2001 = vmul.f32 %v1951, 0.5
      %v2002 = vmul.f32 %v1952, 0.5
      %v2003 = vmul.f32 %v1953, 0.5
      %v2004 = vmul.f32 %v1954, 0.5
      %v2005 = vmul.f32 %v1955, 0.5
      %v2006 = vmul.f32 %v1956, 0.5
      %v2007 = vmul.f32 %v1957, 0.5
      %v2008 = vmul.f32 %v1958, 0.5
      %v2009 = vmul.f32 %v1959, 0.5
      %v2010 = vmul.f32 %v1960, 0.5
      %v2011 = vmul.f32 %v1961, 0.5
      %v2012 = vmul.f32 %v1962, 0.5
      %v2013 = vmul.f32 %v1963, 0.5
      %v2014 = vmul.f32 %v1964, 0.5
      %v2015 = vmul.f32 %v1965, 0.5
      %v2016 = vmul.f32 %v1966, 0.5
      %v2017 = vmul.f32 %v1967, 0.5
      %v2018 = vmul.f32 %v1968, 0.5
      %v2019 = vmul.f32 %v1969, 0.5
      %v2020 = vmul.f32 %v1970, 0.5
      %v2021 = vmul.f32 %v1971, 0.5
      %v2022 = vmul.f32 %v1972, 0.5
      %v2023 = vmul.f32 %v1973, 0.5
      %v2024 = vmul.f32 %v1974, 0.5
      %v2025 = vmul.f32 %v1975, 0.5
      %v2026 = vmul.f32 %v1976, 0.5
      %v2027 = vmul.f32 %v1977, 0.5
      %v2028 = vmul.f32 %v1978, 0.5
      %v2029 = vmul.f32 %v1979, 0.5
      %v2030 = vmul.f32 %v1980, 0.5
      %v2031 = vmul.f32 %v1981, 0.5
      %v2032 = vmul.f32 %v1932, 0.044715
      %v2033 = vmul.f32 %v1933, 0.044715
      %v2034 = vmul.f32 %v1934, 0.044715
      %v2035 = vmul.f32 %v1935, 0.044715
      %v2036 = vmul.f32 %v1936, 0.044715
      %v2037 = vmul.f32 %v1937, 0.044715
      %v2038 = vmul.f32 %v1938, 0.044715
      %v2039 = vmul.f32 %v1939, 0.044715
      %v2040 = vmul.f32 %v1940, 0.044715
      %v2041 = vmul.f32 %v1941, 0.044715
      %v2042 = vmul.f32 %v1942, 0.044715
      %v2043 = vmul.f32 %v1943, 0.044715
      %v2044 = vmul.f32 %v1944, 0.044715
      %v2045 = vmul.f32 %v1945, 0.044715
      %v2046 = vmul.f32 %v1946, 0.044715
      %v2047 = vmul.f32 %v1947, 0.044715
      %v2048 = vmul.f32 %v1948, 0.044715
      %v2049 = vmul.f32 %v1949, 0.044715
      %v2050 = vmul.f32 %v1950, 0.044715
      %v2051 = vmul.f32 %v1951, 0.044715
      %v2052 = vmul.f32 %v1952, 0.044715
      %v2053 = vmul.f32 %v1953, 0.044715
      %v2054 = vmul.f32 %v1954, 0.044715
      %v2055 = vmul.f32 %v1955, 0.044715
      %v2056 = vmul.f32 %v1956, 0.044715
      %v2057 = vmul.f32 %v1957, 0.044715
      %v2058 = vmul.f32 %v1958, 0.044715
      %v2059 = vmul.f32 %v1959, 0.044715
      %v2060 = vmul.f32 %v1960, 0.044715
      %v2061 = vmul.f32 %v1961, 0.044715
      %v2062 = vmul.f32 %v1962, 0.044715
      %v2063 = vmul.f32 %v1963, 0.044715
      %v2064 = vmul.f32 %v1964, 0.044715
      %v2065 = vmul.f32 %v1965, 0.044715
      %v2066 = vmul.f32 %v1966, 0.044715
      %v2067 = vmul.f32 %v1967, 0.044715
      %v2068 = vmul.f32 %v1968, 0.044715
      %v2069 = vmul.f32 %v1969, 0.044715
      %v2070 = vmul.f32 %v1970, 0.044715
      %v2071 = vmul.f32 %v1971, 0.044715
      %v2072 = vmul.f32 %v1972, 0.044715
      %v2073 = vmul.f32 %v1973, 0.044715
      %v2074 = vmul.f32 %v1974, 0.044715
      %v2075 = vmul.f32 %v1975, 0.044715
      %v2076 = vmul.f32 %v1976, 0.044715
      %v2077 = vmul.f32 %v1977, 0.044715
      %v2078 = vmul.f32 %v1978, 0.044715
      %v2079 = vmul.f32 %v1979, 0.044715
      %v2080 = vmul.f32 %v1980, 0.044715
      %v2081 = vmul.f32 %v1981, 0.044715
      %v2082 = vmul.f32 %v2032, %v1932
      %v2083 = vmul.f32 %v2033, %v1933
      %v2084 = vmul.f32 %v2034, %v1934
      %v2085 = vmul.f32 %v2035, %v1935
      %v2086 = vmul.f32 %v2036, %v1936
      %v2087 = vmul.f32 %v2037, %v1937
      %v2088 = vmul.f32 %v2038, %v1938
      %v2089 = vmul.f32 %v2039, %v1939
      %v2090 = vmul.f32 %v2040, %v1940
      %v2091 = vmul.f32 %v2041, %v1941
      %v2092 = vmul.f32 %v2042, %v1942
      %v2093 = vmul.f32 %v2043, %v1943
      %v2094 = vmul.f32 %v2044, %v1944
      %v2095 = vmul.f32 %v2045, %v1945
      %v2096 = vmul.f32 %v2046, %v1946
      %v2097 = vmul.f32 %v2047, %v1947
      %v2098 = vmul.f32 %v2048, %v1948
      %v2099 = vmul.f32 %v2049, %v1949
      %v2100 = vmul.f32 %v2050, %v1950
      %v2101 = vmul.f32 %v2051, %v1951
      %v2102 = vmul.f32 %v2052, %v1952
      %v2103 = vmul.f32 %v2053, %v1953
      %v2104 = vmul.f32 %v2054, %v1954
      %v2105 = vmul.f32 %v2055, %v1955
      %v2106 = vmul.f32 %v2056, %v1956
      %v2107 = vmul.f32 %v2057, %v1957
      %v2108 = vmul.f32 %v2058, %v1958
      %v2109 = vmul.f32 %v2059, %v1959
      %v2110 = vmul.f32 %v2060, %v1960
      %v2111 = vmul.f32 %v2061, %v1961
      %v2112 = vmul.f32 %v2062, %v1962
      %v2113 = vmul.f32 %v2063, %v1963
      %v2114 = vmul.f32 %v2064, %v1964
      %v2115 = vmul.f32 %v2065, %v1965
      %v2116 = vmul.f32 %v2066, %v1966
      %v2117 = vmul.f32 %v2067, %v1967
      %v2118 = vmul.f32 %v2068, %v1968
      %v2119 = vmul.f32 %v2069, %v1969
      %v2120 = vmul.f32 %v2070, %v1970
      %v2121 = vmul.f32 %v2071, %v1971
      %v2122 = vmul.f32 %v2072, %v1972
      %v2123 = vmul.f32 %v2073, %v1973
      %v2124 = vmul.f32 %v2074, %v1974
      %v2125 = vmul.f32 %v2075, %v1975
      %v2126 = vmul.f32 %v2076, %v1976
      %v2127 = vmul.f32 %v2077, %v1977
      %v2128 = vmul.f32 %v2078, %v1978
      %v2129 = vmul.f32 %v2079, %v1979
      %v2130 = vmul.f32 %v2080, %v1980
      %v2131 = vmul.f32 %v2081, %v1981
      %v2132 = vmul.f32 %v2082, %v1932
      %v2133 = vmul.f32 %v2083, %v1933
      %v2134 = vmul.f32 %v2084, %v1934
      %v2135 = vmul.f32 %v2085, %v1935
      %v2136 = vmul.f32 %v2086, %v1936
      %v2137 = vmul.f32 %v2087, %v1937
      %v2138 = vmul.f32 %v2088, %v1938
      %v2139 = vmul.f32 %v2089, %v1939
      %v2140 = vmul.f32 %v2090, %v1940
      %v2141 = vmul.f32 %v2091, %v1941
      %v2142 = vmul.f32 %v2092, %v1942
      %v2143 = vmul.f32 %v2093, %v1943
      %v2144 = vmul.f32 %v2094, %v1944
      %v2145 = vmul.f32 %v2095, %v1945
      %v2146 = vmul.f32 %v2096, %v1946
      %v2147 = vmul.f32 %v2097, %v1947
      %v2148 = vmul.f32 %v2098, %v1948
      %v2149 = vmul.f32 %v2099, %v1949
      %v2150 = vmul.f32 %v2100, %v1950
      %v2151 = vmul.f32 %v2101, %v1951
      %v2152 = vmul.f32 %v2102, %v1952
      %v2153 = vmul.f32 %v2103, %v1953
      %v2154 = vmul.f32 %v2104, %v1954
      %v2155 = vmul.f32 %v2105, %v1955
      %v2156 = vmul.f32 %v2106, %v1956
      %v2157 = vmul.f32 %v2107, %v1957
      %v2158 = vmul.f32 %v2108, %v1958
      %v2159 = vmul.f32 %v2109, %v1959
      %v2160 = vmul.f32 %v2110, %v1960
      %v2161 = vmul.f32 %v2111, %v1961
      %v2162 = vmul.f32 %v2112, %v1962
      %v2163 = vmul.f32 %v2113, %v1963
      %v2164 = vmul.f32 %v2114, %v1964
      %v2165 = vmul.f32 %v2115, %v1965
      %v2166 = vmul.f32 %v2116, %v1966
      %v2167 = vmul.f32 %v2117, %v1967
      %v2168 = vmul.f32 %v2118, %v1968
      %v2169 = vmul.f32 %v2119, %v1969
      %v2170 = vmul.f32 %v2120, %v1970
      %v2171 = vmul.f32 %v2121, %v1971
      %v2172 = vmul.f32 %v2122, %v1972
      %v2173 = vmul.f32 %v2123, %v1973
      %v2174 = vmul.f32 %v2124, %v1974
      %v2175 = vmul.f32 %v2125, %v1975
      %v2176 = vmul.f32 %v2126, %v1976
      %v2177 = vmul.f32 %v2127, %v1977
      %v2178 = vmul.f32 %v2128, %v1978
      %v2179 = vmul.f32 %v2129, %v1979
      %v2180 = vmul.f32 %v2130, %v1980
      %v2181 = vmul.f32 %v2131, %v1981
      %v2182 = vadd.f32 %v1932, %v2132
      %v2183 = vadd.f32 %v1933, %v2133
      %v2184 = vadd.f32 %v1934, %v2134
      %v2185 = vadd.f32 %v1935, %v2135
      %v2186 = vadd.f32 %v1936, %v2136
      %v2187 = vadd.f32 %v1937, %v2137
      %v2188 = vadd.f32 %v1938, %v2138
      %v2189 = vadd.f32 %v1939, %v2139
      %v2190 = vadd.f32 %v1940, %v2140
      %v2191 = vadd.f32 %v1941, %v2141
      %v2192 = vadd.f32 %v1942, %v2142
      %v2193 = vadd.f32 %v1943, %v2143
      %v2194 = vadd.f32 %v1944, %v2144
      %v2195 = vadd.f32 %v1945, %v2145
      %v2196 = vadd.f32 %v1946, %v2146
      %v2197 = vadd.f32 %v1947, %v2147
      %v2198 = vadd.f32 %v1948, %v2148
      %v2199 = vadd.f32 %v1949, %v2149
      %v2200 = vadd.f32 %v1950, %v2150
      %v2201 = vadd.f32 %v1951, %v2151
      %v2202 = vadd.f32 %v1952, %v2152
      %v2203 = vadd.f32 %v1953, %v2153
      %v2204 = vadd.f32 %v1954, %v2154
      %v2205 = vadd.f32 %v1955, %v2155
      %v2206 = vadd.f32 %v1956, %v2156
      %v2207 = vadd.f32 %v1957, %v2157
      %v2208 = vadd.f32 %v1958, %v2158
      %v2209 = vadd.f32 %v1959, %v2159
      %v2210 = vadd.f32 %v1960, %v2160
      %v2211 = vadd.f32 %v1961, %v2161
      %v2212 = vadd.f32 %v1962, %v2162
      %v2213 = vadd.f32 %v1963, %v2163
      %v2214 = vadd.f32 %v1964, %v2164
      %v2215 = vadd.f32 %v1965, %v2165
      %v2216 = vadd.f32 %v1966, %v2166
      %v2217 = vadd.f32 %v1967, %v2167
      %v2218 = vadd.f32 %v1968, %v2168
      %v2219 = vadd.f32 %v1969, %v2169
      %v2220 = vadd.f32 %v1970, %v2170
      %v2221 = vadd.f32 %v1971, %v2171
      %v2222 = vadd.f32 %v1972, %v2172
      %v2223 = vadd.f32 %v1973, %v2173
      %v2224 = vadd.f32 %v1974, %v2174
      %v2225 = vadd.f32 %v1975, %v2175
      %v2226 = vadd.f32 %v1976, %v2176
      %v2227 = vadd.f32 %v1977, %v2177
      %v2228 = vadd.f32 %v1978, %v2178
      %v2229 = vadd.f32 %v1979, %v2179
      %v2230 = vadd.f32 %v1980, %v2180
      %v2231 = vadd.f32 %v1981, %v2181
      %v2232 = vmul.f32 %v2182, 0.7978846
      %v2233 = vmul.f32 %v2183, 0.7978846
      %v2234 = vmul.f32 %v2184, 0.7978846
      %v2235 = vmul.f32 %v2185, 0.7978846
      %v2236 = vmul.f32 %v2186, 0.7978846
      %v2237 = vmul.f32 %v2187, 0.7978846
      %v2238 = vmul.f32 %v2188, 0.7978846
      %v2239 = vmul.f32 %v2189, 0.7978846
      %v2240 = vmul.f32 %v2190, 0.7978846
      %v2241 = vmul.f32 %v2191, 0.7978846
      %v2242 = vmul.f32 %v2192, 0.7978846
      %v2243 = vmul.f32 %v2193, 0.7978846
      %v2244 = vmul.f32 %v2194, 0.7978846
      %v2245 = vmul.f32 %v2195, 0.7978846
      %v2246 = vmul.f32 %v2196, 0.7978846
      %v2247 = vmul.f32 %v2197, 0.7978846
      %v2248 = vmul.f32 %v2198, 0.7978846
      %v2249 = vmul.f32 %v2199, 0.7978846
      %v2250 = vmul.f32 %v2200, 0.7978846
      %v2251 = vmul.f32 %v2201, 0.7978846
      %v2252 = vmul.f32 %v2202, 0.7978846
      %v2253 = vmul.f32 %v2203, 0.7978846
      %v2254 = vmul.f32 %v2204, 0.7978846
      %v2255 = vmul.f32 %v2205, 0.7978846
      %v2256 = vmul.f32 %v2206, 0.7978846
      %v2257 = vmul.f32 %v2207, 0.7978846
      %v2258 = vmul.f32 %v2208, 0.7978846
      %v2259 = vmul.f32 %v2209, 0.7978846
      %v2260 = vmul.f32 %v2210, 0.7978846
      %v2261 = vmul.f32 %v2211, 0.7978846
      %v2262 = vmul.f32 %v2212, 0.7978846
      %v2263 = vmul.f32 %v2213, 0.7978846
      %v2264 = vmul.f32 %v2214, 0.7978846
      %v2265 = vmul.f32 %v2215, 0.7978846
      %v2266 = vmul.f32 %v2216, 0.7978846
      %v2267 = vmul.f32 %v2217, 0.7978846
      %v2268 = vmul.f32 %v2218, 0.7978846
      %v2269 = vmul.f32 %v2219, 0.7978846
      %v2270 = vmul.f32 %v2220, 0.7978846
      %v2271 = vmul.f32 %v2221, 0.7978846
      %v2272 = vmul.f32 %v2222, 0.7978846
      %v2273 = vmul.f32 %v2223, 0.7978846
      %v2274 = vmul.f32 %v2224, 0.7978846
      %v2275 = vmul.f32 %v2225, 0.7978846
      %v2276 = vmul.f32 %v2226, 0.7978846
      %v2277 = vmul.f32 %v2227, 0.7978846
      %v2278 = vmul.f32 %v2228, 0.7978846
      %v2279 = vmul.f32 %v2229, 0.7978846
      %v2280 = vmul.f32 %v2230, 0.7978846
      %v2281 = vmul.f32 %v2231, 0.7978846
      %v2282 = vtanh.pop %v2232
      %v2283 = vtanh.pop %v2233
      %v2284 = vtanh.pop %v2234
      %v2285 = vtanh.pop %v2235
      %v2286 = vtanh.pop %v2236
      %v2287 = vtanh.pop %v2237
      %v2288 = vtanh.pop %v2238
      %v2289 = vtanh.pop %v2239
      %v2290 = vtanh.pop %v2240
      %v2291 = vtanh.pop %v2241
      %v2292 = vtanh.pop %v2242
      %v2293 = vtanh.pop %v2243
      %v2294 = vtanh.pop %v2244
      %v2295 = vtanh.pop %v2245
      %v2296 = vtanh.pop %v2246
      %v2297 = vtanh.pop %v2247
      %v2298 = vtanh.pop %v2248
      %v2299 = vtanh.pop %v2249
      %v2300 = vtanh.pop %v2250
      %v2301 = vtanh.pop %v2251
      %v2302 = vtanh.pop %v2252
      %v2303 = vtanh.pop %v2253
      %v2304 = vtanh.pop %v2254
      %v2305 = vtanh.pop %v2255
      %v2306 = vtanh.pop %v2256
      %v2307 = vtanh.pop %v2257
      %v2308 = vtanh.pop %v2258
      %v2309 = vtanh.pop %v2259
      %v2310 = vtanh.pop %v2260
      %v2311 = vtanh.pop %v2261
      %v2312 = vtanh.pop %v2262
      %v2313 = vtanh.pop %v2263
      %v2314 = vtanh.pop %v2264
      %v2315 = vtanh.pop %v2265
      %v2316 = vtanh.pop %v2266
      %v2317 = vtanh.pop %v2267
      %v2318 = vtanh.pop %v2268
      %v2319 = vtanh.pop %v2269
      %v2320 = vtanh.pop %v2270
      %v2321 = vtanh.pop %v2271
      %v2322 = vtanh.pop %v2272
      %v2323 = vtanh.pop %v2273
      %v2324 = vtanh.pop %v2274
      %v2325 = vtanh.pop %v2275
      %v2326 = vtanh.pop %v2276
      %v2327 = vtanh.pop %v2277
      %v2328 = vtanh.pop %v2278
      %v2329 = vtanh.pop %v2279
      %v2330 = vtanh.pop %v2280
      %v2331 = vtanh.pop %v2281
      %v2332 = vadd.f32 %v2282, 1.0
      %v2333 = vadd.f32 %v2283, 1.0
      %v2334 = vadd.f32 %v2284, 1.0
      %v2335 = vadd.f32 %v2285, 1.0
      %v2336 = vadd.f32 %v2286, 1.0
      %v2337 = vadd.f32 %v2287, 1.0
      %v2338 = vadd.f32 %v2288, 1.0
      %v2339 = vadd.f32 %v2289, 1.0
      %v2340 = vadd.f32 %v2290, 1.0
      %v2341 = vadd.f32 %v2291, 1.0
      %v2342 = vadd.f32 %v2292, 1.0
      %v2343 = vadd.f32 %v2293, 1.0
      %v2344 = vadd.f32 %v2294, 1.0
      %v2345 = vadd.f32 %v2295, 1.0
      %v2346 = vadd.f32 %v2296, 1.0
      %v2347 = vadd.f32 %v2297, 1.0
      %v2348 = vadd.f32 %v2298, 1.0
      %v2349 = vadd.f32 %v2299, 1.0
      %v2350 = vadd.f32 %v2300, 1.0
      %v2351 = vadd.f32 %v2301, 1.0
      %v2352 = vadd.f32 %v2302, 1.0
      %v2353 = vadd.f32 %v2303, 1.0
      %v2354 = vadd.f32 %v2304, 1.0
      %v2355 = vadd.f32 %v2305, 1.0
      %v2356 = vadd.f32 %v2306, 1.0
      %v2357 = vadd.f32 %v2307, 1.0
      %v2358 = vadd.f32 %v2308, 1.0
      %v2359 = vadd.f32 %v2309, 1.0
      %v2360 = vadd.f32 %v2310, 1.0
      %v2361 = vadd.f32 %v2311, 1.0
      %v2362 = vadd.f32 %v2312, 1.0
      %v2363 = vadd.f32 %v2313, 1.0
      %v2364 = vadd.f32 %v2314, 1.0
      %v2365 = vadd.f32 %v2315, 1.0
      %v2366 = vadd.f32 %v2316, 1.0
      %v2367 = vadd.f32 %v2317, 1.0
      %v2368 = vadd.f32 %v2318, 1.0
      %v2369 = vadd.f32 %v2319, 1.0
      %v2370 = vadd.f32 %v2320, 1.0
      %v2371 = vadd.f32 %v2321, 1.0
      %v2372 = vadd.f32 %v2322, 1.0
      %v2373 = vadd.f32 %v2323, 1.0
      %v2374 = vadd.f32 %v2324, 1.0
      %v2375 = vadd.f32 %v2325, 1.0
      %v2376 = vadd.f32 %v2326, 1.0
      %v2377 = vadd.f32 %v2327, 1.0
      %v2378 = vadd.f32 %v2328, 1.0
      %v2379 = vadd.f32 %v2329, 1.0
      %v2380 = vadd.f32 %v2330, 1.0
      %v2381 = vadd.f32 %v2331, 1.0
      %v2382 = vmul.f32 %v1982, %v2332
      %v2383 = vmul.f32 %v1983, %v2333
      %v2384 = vmul.f32 %v1984, %v2334
      %v2385 = vmul.f32 %v1985, %v2335
      %v2386 = vmul.f32 %v1986, %v2336
      %v2387 = vmul.f32 %v1987, %v2337
      %v2388 = vmul.f32 %v1988, %v2338
      %v2389 = vmul.f32 %v1989, %v2339
      %v2390 = vmul.f32 %v1990, %v2340
      %v2391 = vmul.f32 %v1991, %v2341
      %v2392 = vmul.f32 %v1992, %v2342
      %v2393 = vmul.f32 %v1993, %v2343
      %v2394 = vmul.f32 %v1994, %v2344
      %v2395 = vmul.f32 %v1995, %v2345
      %v2396 = vmul.f32 %v1996, %v2346
      %v2397 = vmul.f32 %v1997, %v2347
      %v2398 = vmul.f32 %v1998, %v2348
      %v2399 = vmul.f32 %v1999, %v2349
      %v2400 = vmul.f32 %v2000, %v2350
      %v2401 = vmul.f32 %v2001, %v2351
      %v2402 = vmul.f32 %v2002, %v2352
      %v2403 = vmul.f32 %v2003, %v2353
      %v2404 = vmul.f32 %v2004, %v2354
      %v2405 = vmul.f32 %v2005, %v2355
      %v2406 = vmul.f32 %v2006, %v2356
      %v2407 = vmul.f32 %v2007, %v2357
      %v2408 = vmul.f32 %v2008, %v2358
      %v2409 = vmul.f32 %v2009, %v2359
      %v2410 = vmul.f32 %v2010, %v2360
      %v2411 = vmul.f32 %v2011, %v2361
      %v2412 = vmul.f32 %v2012, %v2362
      %v2413 = vmul.f32 %v2013, %v2363
      %v2414 = vmul.f32 %v2014, %v2364
      %v2415 = vmul.f32 %v2015, %v2365
      %v2416 = vmul.f32 %v2016, %v2366
      %v2417 = vmul.f32 %v2017, %v2367
      %v2418 = vmul.f32 %v2018, %v2368
      %v2419 = vmul.f32 %v2019, %v2369
      %v2420 = vmul.f32 %v2020, %v2370
      %v2421 = vmul.f32 %v2021, %v2371
      %v2422 = vmul.f32 %v2022, %v2372
      %v2423 = vmul.f32 %v2023, %v2373
      %v2424 = vmul.f32 %v2024, %v2374
      %v2425 = vmul.f32 %v2025, %v2375
      %v2426 = vmul.f32 %v2026, %v2376
      %v2427 = vmul.f32 %v2027, %v2377
      %v2428 = vmul.f32 %v2028, %v2378
      %v2429 = vmul.f32 %v2029, %v2379
      %v2430 = vmul.f32 %v2030, %v2380
      %v2431 = vmul.f32 %v2031, %v2381
      %2432 = vst.msk [vmem:[#allocation2] sm:$0xff] %vm1501, %v2382
      %2433 = vst.msk [vmem:[#allocation2 + $0x8] sm:$0xff] %vm1501, %v2383
      %2434 = vst.msk [vmem:[#allocation2 + $0x10] sm:$0xff] %vm1501, %v2384
      %2435 = vst.msk [vmem:[#allocation2 + $0x18] sm:$0xff] %vm1501, %v2385
      %2436 = vst.msk [vmem:[#allocation2 + $0x20] sm:$0xff] %vm1501, %v2386
      %2437 = vst.msk [vmem:[#allocation2 + $0x28] sm:$0xff] %vm1501, %v2387
      %2438 = vst.msk [vmem:[#allocation2 + $0x30] sm:$0xff] %vm1501, %v2388
      %2439 = vst.msk [vmem:[#allocation2 + $0x38] sm:$0xff] %vm1501, %v2389
      %2440 = vst.msk [vmem:[#allocation2 + $0x40] sm:$0xff] %vm1501, %v2390
      %2441 = vst.msk [vmem:[#allocation2 + $0x48] sm:$0xff] %vm1501, %v2391
      %2442 = vst.msk [vmem:[#allocation2 + $0x50] sm:$0xff] %vm1501, %v2392
      %2443 = vst.msk [vmem:[#allocation2 + $0x58] sm:$0xff] %vm1501, %v2393
      %2444 = vst.msk [vmem:[#allocation2 + $0x60] sm:$0xff] %vm1501, %v2394
      %2445 = vst.msk [vmem:[#allocation2 + $0x68] sm:$0xff] %vm1501, %v2395
      %2446 = vst.msk [vmem:[#allocation2 + $0x70] sm:$0xff] %vm1501, %v2396
      %2447 = vst.msk [vmem:[#allocation2 + $0x78] sm:$0xff] %vm1501, %v2397
      %2448 = vst.msk [vmem:[#allocation2 + $0x80] sm:$0xff] %vm1501, %v2398
      %2449 = vst.msk [vmem:[#allocation2 + $0x88] sm:$0xff] %vm1501, %v2399
      %2450 = vst.msk [vmem:[#allocation2 + $0x90] sm:$0xff] %vm1501, %v2400
      %2451 = vst.msk [vmem:[#allocation2 + $0x98] sm:$0xff] %vm1501, %v2401
      %2452 = vst.msk [vmem:[#allocation2 + $0xa0] sm:$0xff] %vm1501, %v2402
      %2453 = vst.msk [vmem:[#allocation2 + $0xa8] sm:$0xff] %vm1501, %v2403
      %2454 = vst.msk [vmem:[#allocation2 + $0xb0] sm:$0xff] %vm1501, %v2404
      %2455 = vst.msk [vmem:[#allocation2 + $0xb8] sm:$0xff] %vm1501, %v2405
      %2456 = vst.msk [vmem:[#allocation2 + $0xc0] sm:$0xff] %vm1501, %v2406
      %2457 = vst.msk [vmem:[#allocation2 + $0xc8] sm:$0xff] %vm1501, %v2407
      %2458 = vst.msk [vmem:[#allocation2 + $0xd0] sm:$0xff] %vm1501, %v2408
      %2459 = vst.msk [vmem:[#allocation2 + $0xd8] sm:$0xff] %vm1501, %v2409
      %2460 = vst.msk [vmem:[#allocation2 + $0xe0] sm:$0xff] %vm1501, %v2410
      %2461 = vst.msk [vmem:[#allocation2 + $0xe8] sm:$0xff] %vm1501, %v2411
      %2462 = vst.msk [vmem:[#allocation2 + $0xf0] sm:$0xff] %vm1501, %v2412
      %2463 = vst.msk [vmem:[#allocation2 + $0xf8] sm:$0xff] %vm1501, %v2413
      %2464 = vst.msk [vmem:[#allocation2 + $0x100] sm:$0xff] %vm1501, %v2414
      %2465 = vst.msk [vmem:[#allocation2 + $0x108] sm:$0xff] %vm1501, %v2415
      %2466 = vst.msk [vmem:[#allocation2 + $0x110] sm:$0xff] %vm1501, %v2416
      %2467 = vst.msk [vmem:[#allocation2 + $0x118] sm:$0xff] %vm1501, %v2417
      %2468 = vst.msk [vmem:[#allocation2 + $0x120] sm:$0xff] %vm1501, %v2418
      %2469 = vst.msk [vmem:[#allocation2 + $0x128] sm:$0xff] %vm1501, %v2419
      %2470 = vst.msk [vmem:[#allocation2 + $0x130] sm:$0xff] %vm1501, %v2420
      %2471 = vst.msk [vmem:[#allocation2 + $0x138] sm:$0xff] %vm1501, %v2421
      %2472 = vst.msk [vmem:[#allocation2 + $0x140] sm:$0xff] %vm1501, %v2422
      %2473 = vst.msk [vmem:[#allocation2 + $0x148] sm:$0xff] %vm1501, %v2423
      %2474 = vst.msk [vmem:[#allocation2 + $0x150] sm:$0xff] %vm1501, %v2424
      %2475 = vst.msk [vmem:[#allocation2 + $0x158] sm:$0xff] %vm1501, %v2425
      %2476 = vst.msk [vmem:[#allocation2 + $0x160] sm:$0xff] %vm1501, %v2426
      %2477 = vst.msk [vmem:[#allocation2 + $0x168] sm:$0xff] %vm1501, %v2427
      %2478 = vst.msk [vmem:[#allocation2 + $0x170] sm:$0xff] %vm1501, %v2428
      %2479 = vst.msk [vmem:[#allocation2 + $0x178] sm:$0xff] %vm1501, %v2429
      %2480 = vst.msk [vmem:[#allocation2 + $0x180] sm:$0xff] %vm1501, %v2430
      %2481 = vst.msk [vmem:[#allocation2 + $0x188] sm:$0x7f] %vm1599, %v2431
      %v2482 = vld [vmem:[#allocation2] ss:$2 sm:$0xff]
      %s2483 = scalar_lea.vmem [#allocation2], 16
      %v2484 = vld [vmem:[%s2483] ss:$2 sm:$0xff]
      %s2485 = scalar_lea.vmem [#allocation2], 32
      %v2486 = vld [vmem:[%s2485] ss:$2 sm:$0xff]
      %s2487 = scalar_lea.vmem [#allocation2], 48
      %v2488 = vld [vmem:[%s2487] ss:$2 sm:$0xff]
      %s2489 = scalar_lea.vmem [#allocation2], 64
      %v2490 = vld [vmem:[%s2489] ss:$2 sm:$0xff]
      %s2491 = scalar_lea.vmem [#allocation2], 80
      %v2492 = vld [vmem:[%s2491] ss:$2 sm:$0xff]
      %s2493 = scalar_lea.vmem [#allocation2], 96
      %v2494 = vld [vmem:[%s2493] ss:$2 sm:$0xff]
      %s2495 = scalar_lea.vmem [#allocation2], 112
      %v2496 = vld [vmem:[%s2495] ss:$2 sm:$0xff]
      %s2497 = scalar_lea.vmem [#allocation2], 128
      %v2498 = vld [vmem:[%s2497] ss:$2 sm:$0xff]
      %s2499 = scalar_lea.vmem [#allocation2], 144
      %v2500 = vld [vmem:[%s2499] ss:$2 sm:$0xff]
      %s2501 = scalar_lea.vmem [#allocation2], 160
      %v2502 = vld [vmem:[%s2501] ss:$2 sm:$0xff]
      %s2503 = scalar_lea.vmem [#allocation2], 176
      %v2504 = vld [vmem:[%s2503] ss:$2 sm:$0xff]
      %s2505 = scalar_lea.vmem [#allocation2], 192
      %v2506 = vld [vmem:[%s2505] ss:$2 sm:$0xff]
      %s2507 = scalar_lea.vmem [#allocation2], 208
      %v2508 = vld [vmem:[%s2507] ss:$2 sm:$0xff]
      %s2509 = scalar_lea.vmem [#allocation2], 224
      %v2510 = vld [vmem:[%s2509] ss:$2 sm:$0xff]
      %s2511 = scalar_lea.vmem [#allocation2], 240
      %v2512 = vld [vmem:[%s2511] ss:$2 sm:$0xff]
      %s2513 = scalar_lea.vmem [#allocation2], 256
      %v2514 = vld [vmem:[%s2513] ss:$2 sm:$0xff]
      %s2515 = scalar_lea.vmem [#allocation2], 272
      %v2516 = vld [vmem:[%s2515] ss:$2 sm:$0xff]
      %s2517 = scalar_lea.vmem [#allocation2], 288
      %v2518 = vld [vmem:[%s2517] ss:$2 sm:$0xff]
      %s2519 = scalar_lea.vmem [#allocation2], 304
      %v2520 = vld [vmem:[%s2519] ss:$2 sm:$0xff]
      %s2521 = scalar_lea.vmem [#allocation2], 320
      %v2522 = vld [vmem:[%s2521] ss:$2 sm:$0xff]
      %s2523 = scalar_lea.vmem [#allocation2], 336
      %v2524 = vld [vmem:[%s2523] ss:$2 sm:$0xff]
      %s2525 = scalar_lea.vmem [#allocation2], 352
      %v2526 = vld [vmem:[%s2525] ss:$2 sm:$0xff]
      %s2527 = scalar_lea.vmem [#allocation2], 368
      %v2528 = vld [vmem:[%s2527] ss:$2 sm:$0xff]
      %s2529 = scalar_lea.vmem [#allocation2], 384
      %v2530 = vld [vmem:[%s2529] ss:$2 sm:$0x7f]
      %v2531 = vpack.c.bf16 %v2484, %v2482
      %v2532 = vpack.c.bf16 %v2488, %v2486
      %v2533 = vpack.c.bf16 %v2492, %v2490
      %v2534 = vpack.c.bf16 %v2496, %v2494
      %v2535 = vpack.c.bf16 %v2500, %v2498
      %v2536 = vpack.c.bf16 %v2504, %v2502
      %v2537 = vpack.c.bf16 %v2508, %v2506
      %v2538 = vpack.c.bf16 %v2512, %v2510
      %v2539 = vpack.c.bf16 %v2516, %v2514
      %v2540 = vpack.c.bf16 %v2520, %v2518
      %v2541 = vpack.c.bf16 %v2524, %v2522
      %v2542 = vpack.c.bf16 %v2528, %v2526
      %v2543 = vpack.c.bf16 %v2530, %v2530
      %v2544 = vld [vmem:[%s4] sm:$0xf]
      %v2545 = vld [vmem:[%s4 + $0x4] sm:$0xf]
      %v2546 = vld [vmem:[%s4 + $0x8] sm:$0xf]
      %v2547 = vld [vmem:[%s4 + $0xc] sm:$0xf]
      %v2548 = vld [vmem:[%s4 + $0x10] sm:$0xf]
      %v2549 = vld [vmem:[%s4 + $0x14] sm:$0xf]
      %v2550 = vld [vmem:[%s4 + $0x18] sm:$0xf]
      %v2551 = vld [vmem:[%s4 + $0x1c] sm:$0xf]
      %s2552 = scalar_lea.vmem [#allocation2], 1
      %v2553 = vld [vmem:[%s2552] ss:$2 sm:$0xff]
      %s2554 = scalar_lea.vmem [#allocation2], 17
      %v2555 = vld [vmem:[%s2554] ss:$2 sm:$0xff]
      %s2556 = scalar_lea.vmem [#allocation2], 33
      %v2557 = vld [vmem:[%s2556] ss:$2 sm:$0xff]
      %s2558 = scalar_lea.vmem [#allocation2], 49
      %v2559 = vld [vmem:[%s2558] ss:$2 sm:$0xff]
      %s2560 = scalar_lea.vmem [#allocation2], 65
      %v2561 = vld [vmem:[%s2560] ss:$2 sm:$0xff]
      %s2562 = scalar_lea.vmem [#allocation2], 81
      %v2563 = vld [vmem:[%s2562] ss:$2 sm:$0xff]
      %s2564 = scalar_lea.vmem [#allocation2], 97
      %v2565 = vld [vmem:[%s2564] ss:$2 sm:$0xff]
      %s2566 = scalar_lea.vmem [#allocation2], 113
      %v2567 = vld [vmem:[%s2566] ss:$2 sm:$0xff]
      %s2568 = scalar_lea.vmem [#allocation2], 129
      %v2569 = vld [vmem:[%s2568] ss:$2 sm:$0xff]
      %s2570 = scalar_lea.vmem [#allocation2], 145
      %v2571 = vld [vmem:[%s2570] ss:$2 sm:$0xff]
      %s2572 = scalar_lea.vmem [#allocation2], 161
      %v2573 = vld [vmem:[%s2572] ss:$2 sm:$0xff]
      %s2574 = scalar_lea.vmem [#allocation2], 177
      %v2575 = vld [vmem:[%s2574] ss:$2 sm:$0xff]
      %s2576 = scalar_lea.vmem [#allocation2], 193
      %v2577 = vld [vmem:[%s2576] ss:$2 sm:$0xff]
      %s2578 = scalar_lea.vmem [#allocation2], 209
      %v2579 = vld [vmem:[%s2578] ss:$2 sm:$0xff]
      %s2580 = scalar_lea.vmem [#allocation2], 225
      %v2581 = vld [vmem:[%s2580] ss:$2 sm:$0xff]
      %s2582 = scalar_lea.vmem [#allocation2], 241
      %v2583 = vld [vmem:[%s2582] ss:$2 sm:$0xff]
      %s2584 = scalar_lea.vmem [#allocation2], 257
      %v2585 = vld [vmem:[%s2584] ss:$2 sm:$0xff]
      %s2586 = scalar_lea.vmem [#allocation2], 273
      %v2587 = vld [vmem:[%s2586] ss:$2 sm:$0xff]
      %s2588 = scalar_lea.vmem [#allocation2], 289
      %v2589 = vld [vmem:[%s2588] ss:$2 sm:$0xff]
      %s2590 = scalar_lea.vmem [#allocation2], 305
      %v2591 = vld [vmem:[%s2590] ss:$2 sm:$0xff]
      %s2592 = scalar_lea.vmem [#allocation2], 321
      %v2593 = vld [vmem:[%s2592] ss:$2 sm:$0xff]
      %s2594 = scalar_lea.vmem [#allocation2], 337
      %v2595 = vld [vmem:[%s2594] ss:$2 sm:$0xff]
      %s2596 = scalar_lea.vmem [#allocation2], 353
      %v2597 = vld [vmem:[%s2596] ss:$2 sm:$0xff]
      %s2598 = scalar_lea.vmem [#allocation2], 369
      %v2599 = vld [vmem:[%s2598] ss:$2 sm:$0xff]
      %s2600 = scalar_lea.vmem [#allocation2], 385
      %v2601 = vld [vmem:[%s2600] ss:$2 sm:$0x7f]
      %v2602 = vpack.c.bf16 %v2555, %v2553
      %v2603 = vpack.c.bf16 %v2559, %v2557
      %v2604 = vpack.c.bf16 %v2563, %v2561
      %v2605 = vpack.c.bf16 %v2567, %v2565
      %v2606 = vpack.c.bf16 %v2571, %v2569
      %v2607 = vpack.c.bf16 %v2575, %v2573
      %v2608 = vpack.c.bf16 %v2579, %v2577
      %v2609 = vpack.c.bf16 %v2583, %v2581
      %v2610 = vpack.c.bf16 %v2587, %v2585
      %v2611 = vpack.c.bf16 %v2591, %v2589
      %v2612 = vpack.c.bf16 %v2595, %v2593
      %v2613 = vpack.c.bf16 %v2599, %v2597
      %v2614 = vpack.c.bf16 %v2601, %v2601
      %s2615 = scalar_lea.vmem %s4, 32
      %v2616 = vld [vmem:[%s2615] sm:$0xf]
      %v2617 = vld [vmem:[%s2615 + $0x4] sm:$0xf]
      %v2618 = vld [vmem:[%s2615 + $0x8] sm:$0xf]
      %v2619 = vld [vmem:[%s2615 + $0xc] sm:$0xf]
      %v2620 = vld [vmem:[%s2615 + $0x10] sm:$0xf]
      %v2621 = vld [vmem:[%s2615 + $0x14] sm:$0xf]
      %v2622 = vld [vmem:[%s2615 + $0x18] sm:$0xf]
      %v2623 = vld [vmem:[%s2615 + $0x1c] sm:$0xf]
      %v2632 = vunpack.c.l.b16 %v2616
      %v2633 = vunpack.c.l.b16 %v2617
      %v2634 = vunpack.c.l.b16 %v2618
      %v2635 = vunpack.c.l.b16 %v2619
      %v2636 = vunpack.c.l.b16 %v2620
      %v2637 = vunpack.c.l.b16 %v2621
      %v2638 = vunpack.c.l.b16 %v2622
      %v2639 = vunpack.c.l.b16 %v2623
      %v2640 = vpack.c.b16 %v2633, %v2632
      %v2641 = vpack.c.b16 %v2635, %v2634
      %v2642 = vpack.c.b16 %v2637, %v2636
      %v2643 = vpack.c.b16 %v2639, %v2638
      %v2649 = vsel %vm1501, %v2602, 0
      %v2652 = vsel %vm1501, %v2603, 0
      %v2655 = vsel %vm1501, %v2604, 0
      %v2658 = vsel %vm1501, %v2605, 0
      %v2661 = vsel %vm1501, %v2606, 0
      %v2664 = vsel %vm1501, %v2607, 0
      %v2667 = vsel %vm1501, %v2608, 0
      %v2670 = vsel %vm1501, %v2609, 0
      %v2673 = vsel %vm1501, %v2610, 0
      %v2676 = vsel %vm1501, %v2611, 0
      %v2679 = vsel %vm1501, %v2612, 0
      %v2682 = vsel %vm1501, %v2613, 0
      %v2685 = vsel %vm1501, %v2614, 0
      %2687 = vmatprep.subr.bf16.mxu0 0
      %2688 = vmatpush1.bf16.msra.mxu0 %v2640
      %2689 = vmatprep.subr.bf16.mxu0 0
      %2690 = vmatpush1.bf16.msra.mxu0 %v2641
      %2691 = vmatprep.subr.bf16.mxu0 0
      %2692 = vmatpush1.bf16.msra.mxu0 %v2642
      %2693 = vmatprep.subr.bf16.mxu0 0
      %2694 = vmatpush1.bf16.msra.mxu0 %v2643
      %2695 = vmatprep.subr.bf16.mxu0 0
      %2696 = vmatpush1.bf16.msra.mxu0 0
      %2697 = vmatprep.subr.bf16.mxu0 0
      %2698 = vmatpush1.bf16.msra.mxu0 0
      %2699 = vmatprep.subr.bf16.mxu0 0
      %2700 = vmatpush1.bf16.msra.mxu0 0
      %2701 = vmatprep.subr.bf16.mxu0 0
      %2702 = vmatpush1.bf16.msra.mxu0 0
      %2703 = vmatprep.subr.bf16.mxu0 0
      %2704 = vmatpush1.bf16.msra.mxu0 0
      %2705 = vmatprep.subr.bf16.mxu0 0
      %2706 = vmatpush1.bf16.msra.mxu0 0
      %2707 = vmatprep.subr.bf16.mxu0 0
      %2708 = vmatpush1.bf16.msra.mxu0 0
      %2709 = vmatprep.subr.bf16.mxu0 0
      %2710 = vmatpush1.bf16.msra.mxu0 0
      %2711 = vmatprep.subr.bf16.mxu0 0
      %2712 = vmatpush1.bf16.msra.mxu0 0
      %2713 = vmatprep.subr.bf16.mxu0 0
      %2714 = vmatpush1.bf16.msra.mxu0 0
      %2715 = vmatprep.subr.bf16.mxu0 0
      %2716 = vmatpush1.bf16.msra.mxu0 0
      %2717 = vmatprep.subr.bf16.mxu0 0
      %2718 = vmatpush1.bf16.msra.mxu0 0
      %2719 = vmatprep.mubr.bf16.mxu0 0
      %2720 = vmatmul.mubr.bf16.gmra.mrb[0].mxu0 %v2649
      %v2721 = vpop.f32.mrb[0].mxu0
      %v2722 = vadd.f32 0.0, %v2721
      %v2723 = vpop.f32.mrb[0].mxu0
      %v2724 = vpop.f32.mrb[0].mxu0
      %v2725 = vadd.f32 0.0, %v2724
      %v2726 = vpop.f32.mrb[0].mxu0
      %2727 = vmatprep.mubr.bf16.mxu0 0
      %2728 = vmatmul.mubr.bf16.gmra.mrb[0].mxu0 %v2652
      %v2729 = vpop.f32.mrb[0].mxu0
      %v2730 = vadd.f32 0.0, %v2729
      %v2731 = vpop.f32.mrb[0].mxu0
      %v2732 = vpop.f32.mrb[0].mxu0
      %v2733 = vadd.f32 0.0, %v2732
      %v2734 = vpop.f32.mrb[0].mxu0
      %2735 = vmatprep.mubr.bf16.mxu0 0
      %2736 = vmatmul.mubr.bf16.gmra.mrb[0].mxu0 %v2655
      %v2737 = vpop.f32.mrb[0].mxu0
      %v2738 = vadd.f32 0.0, %v2737
      %v2739 = vpop.f32.mrb[0].mxu0
      %v2740 = vpop.f32.mrb[0].mxu0
      %v2741 = vadd.f32 0.0, %v2740
      %v2742 = vpop.f32.mrb[0].mxu0
      %2743 = vmatprep.mubr.bf16.mxu0 0
      %2744 = vmatmul.mubr.bf16.gmra.mrb[0].mxu0 %v2658
      %v2745 = vpop.f32.mrb[0].mxu0
      %v2746 = vadd.f32 0.0, %v2745
      %v2747 = vpop.f32.mrb[0].mxu0
      %v2748 = vpop.f32.mrb[0].mxu0
      %v2749 = vadd.f32 0.0, %v2748
      %v2750 = vpop.f32.mrb[0].mxu0
      %2751 = vmatprep.mubr.bf16.mxu0 0
      %2752 = vmatmul.mubr.bf16.gmra.mrb[0].mxu0 %v2661
      %v2753 = vpop.f32.mrb[0].mxu0
      %v2754 = vadd.f32 0.0, %v2753
      %v2755 = vpop.f32.mrb[0].mxu0
      %v2756 = vpop.f32.mrb[0].mxu0
      %v2757 = vadd.f32 0.0, %v2756
      %v2758 = vpop.f32.mrb[0].mxu0
      %2759 = vmatprep.mubr.bf16.mxu0 0
      %2760 = vmatmul.mubr.bf16.gmra.mrb[0].mxu0 %v2664
      %v2761 = vpop.f32.mrb[0].mxu0
      %v2762 = vadd.f32 0.0, %v2761
      %v2763 = vpop.f32.mrb[0].mxu0
      %v2764 = vpop.f32.mrb[0].mxu0
      %v2765 = vadd.f32 0.0, %v2764
      %v2766 = vpop.f32.mrb[0].mxu0
      %2767 = vmatprep.mubr.bf16.mxu0 0
      %2768 = vmatmul.mubr.bf16.gmra.mrb[0].mxu0 %v2667
      %v2769 = vpop.f32.mrb[0].mxu0
      %v2770 = vadd.f32 0.0, %v2769
      %v2771 = vpop.f32.mrb[0].mxu0
      %v2772 = vpop.f32.mrb[0].mxu0
      %v2773 = vadd.f32 0.0, %v2772
      %v2774 = vpop.f32.mrb[0].mxu0
      %2775 = vmatprep.mubr.bf16.mxu0 0
      %2776 = vmatmul.mubr.bf16.gmra.mrb[0].mxu0 %v2670
      %v2777 = vpop.f32.mrb[0].mxu0
      %v2778 = vadd.f32 0.0, %v2777
      %v2779 = vpop.f32.mrb[0].mxu0
      %v2780 = vpop.f32.mrb[0].mxu0
      %v2781 = vadd.f32 0.0, %v2780
      %v2782 = vpop.f32.mrb[0].mxu0
      %2783 = vmatprep.mubr.bf16.mxu0 0
      %2784 = vmatmul.mubr.bf16.gmra.mrb[0].mxu0 %v2673
      %v2785 = vpop.f32.mrb[0].mxu0
      %v2786 = vadd.f32 0.0, %v2785
      %v2787 = vpop.f32.mrb[0].mxu0
      %v2788 = vpop.f32.mrb[0].mxu0
      %v2789 = vadd.f32 0.0, %v2788
      %v2790 = vpop.f32.mrb[0].mxu0
      %2791 = vmatprep.mubr.bf16.mxu0 0
      %2792 = vmatmul.mubr.bf16.gmra.mrb[0].mxu0 %v2676
      %v2793 = vpop.f32.mrb[0].mxu0
      %v2794 = vadd.f32 0.0, %v2793
      %v2795 = vpop.f32.mrb[0].mxu0
      %v2796 = vpop.f32.mrb[0].mxu0
      %v2797 = vadd.f32 0.0, %v2796
      %v2798 = vpop.f32.mrb[0].mxu0
      %2799 = vmatprep.mubr.bf16.mxu0 0
      %2800 = vmatmul.mubr.bf16.gmra.mrb[0].mxu0 %v2679
      %v2801 = vpop.f32.mrb[0].mxu0
      %v2802 = vadd.f32 0.0, %v2801
      %v2803 = vpop.f32.mrb[0].mxu0
      %v2804 = vpop.f32.mrb[0].mxu0
      %v2805 = vadd.f32 0.0, %v2804
      %v2806 = vpop.f32.mrb[0].mxu0
      %2807 = vmatprep.mubr.bf16.mxu0 0
      %2808 = vmatmul.mubr.bf16.gmra.mrb[0].mxu0 %v2682
      %v2809 = vpop.f32.mrb[0].mxu0
      %v2810 = vadd.f32 0.0, %v2809
      %v2811 = vpop.f32.mrb[0].mxu0
      %v2812 = vpop.f32.mrb[0].mxu0
      %v2813 = vadd.f32 0.0, %v2812
      %v2814 = vpop.f32.mrb[0].mxu0
      %2815 = vmatprep.mubr.bf16.mxu0 0
      %2816 = vmatmul.mubr.bf16.gmra.mrb[0].mxu0 %v2685
      %v2817 = vpop.f32.mrb[0].mxu0
      %v2818 = vadd.f32 0.0, %v2817
      %v2819 = vpop.f32.mrb[0].mxu0
      %v2820 = vpop.f32.mrb[0].mxu0
      %v2821 = vpop.f32.mrb[0].mxu0
      %2822 = vdwg.mxu0
      %v2831 = vunpack.c.l.b16 %v2544
      %v2832 = vunpack.c.l.b16 %v2545
      %v2833 = vunpack.c.l.b16 %v2546
      %v2834 = vunpack.c.l.b16 %v2547
      %v2835 = vunpack.c.l.b16 %v2548
      %v2836 = vunpack.c.l.b16 %v2549
      %v2837 = vunpack.c.l.b16 %v2550
      %v2838 = vunpack.c.l.b16 %v2551
      %v2839 = vpack.c.b16 %v2832, %v2831
      %v2840 = vpack.c.b16 %v2834, %v2833
      %v2841 = vpack.c.b16 %v2836, %v2835
      %v2842 = vpack.c.b16 %v2838, %v2837
      %v2848 = vsel %vm1501, %v2531, 0
      %v2851 = vsel %vm1501, %v2532, 0
      %v2854 = vsel %vm1501, %v2533, 0
      %v2857 = vsel %vm1501, %v2534, 0
      %v2860 = vsel %vm1501, %v2535, 0
      %v2863 = vsel %vm1501, %v2536, 0
      %v2866 = vsel %vm1501, %v2537, 0
      %v2869 = vsel %vm1501, %v2538, 0
      %v2872 = vsel %vm1501, %v2539, 0
      %v2875 = vsel %vm1501, %v2540, 0
      %v2878 = vsel %vm1501, %v2541, 0
      %v2881 = vsel %vm1501, %v2542, 0
      %v2884 = vsel %vm1501, %v2543, 0
      %2886 = vmatprep.subr.bf16.mxu0 0
      %2887 = vmatpush1.bf16.msra.mxu0 %v2839
      %2888 = vmatprep.subr.bf16.mxu0 0
      %2889 = vmatpush1.bf16.msra.mxu0 %v2840
      %2890 = vmatprep.subr.bf16.mxu0 0
      %2891 = vmatpush1.bf16.msra.mxu0 %v2841
      %2892 = vmatprep.subr.bf16.mxu0 0
      %2893 = vmatpush1.bf16.msra.mxu0 %v2842
      %2894 = vmatprep.subr.bf16.mxu0 0
      %2895 = vmatpush1.bf16.msra.mxu0 0
      %2896 = vmatprep.subr.bf16.mxu0 0
      %2897 = vmatpush1.bf16.msra.mxu0 0
      %2898 = vmatprep.subr.bf16.mxu0 0
      %2899 = vmatpush1.bf16.msra.mxu0 0
      %2900 = vmatprep.subr.bf16.mxu0 0
      %2901 = vmatpush1.bf16.msra.mxu0 0
      %2902 = vmatprep.subr.bf16.mxu0 0
      %2903 = vmatpush1.bf16.msra.mxu0 0
      %2904 = vmatprep.subr.bf16.mxu0 0
      %2905 = vmatpush1.bf16.msra.mxu0 0
      %2906 = vmatprep.subr.bf16.mxu0 0
      %2907 = vmatpush1.bf16.msra.mxu0 0
      %2908 = vmatprep.subr.bf16.mxu0 0
      %2909 = vmatpush1.bf16.msra.mxu0 0
      %2910 = vmatprep.subr.bf16.mxu0 0
      %2911 = vmatpush1.bf16.msra.mxu0 0
      %2912 = vmatprep.subr.bf16.mxu0 0
      %2913 = vmatpush1.bf16.msra.mxu0 0
      %2914 = vmatprep.subr.bf16.mxu0 0
      %2915 = vmatpush1.bf16.msra.mxu0 0
      %2916 = vmatprep.subr.bf16.mxu0 0
      %2917 = vmatpush1.bf16.msra.mxu0 0
      %2918 = vmatprep.mubr.bf16.mxu0 0
      %2919 = vmatmul.mubr.bf16.gmra.mrb[0].mxu0 %v2848
      %v2920 = vpop.f32.mrb[0].mxu0
      %v2921 = vadd.f32 %v2722, %v2920
      %v2922 = vpop.f32.mrb[0].mxu0
      %v2923 = vpop.f32.mrb[0].mxu0
      %v2924 = vadd.f32 %v2725, %v2923
      %v2925 = vpop.f32.mrb[0].mxu0
      %2926 = vmatprep.mubr.bf16.mxu0 0
      %2927 = vmatmul.mubr.bf16.gmra.mrb[0].mxu0 %v2851
      %v2928 = vpop.f32.mrb[0].mxu0
      %v2929 = vadd.f32 %v2730, %v2928
      %v2930 = vpop.f32.mrb[0].mxu0
      %v2931 = vpop.f32.mrb[0].mxu0
      %v2932 = vadd.f32 %v2733, %v2931
      %v2933 = vpop.f32.mrb[0].mxu0
      %2934 = vmatprep.mubr.bf16.mxu0 0
      %2935 = vmatmul.mubr.bf16.gmra.mrb[0].mxu0 %v2854
      %v2936 = vpop.f32.mrb[0].mxu0
      %v2937 = vadd.f32 %v2738, %v2936
      %v2938 = vpop.f32.mrb[0].mxu0
      %v2939 = vpop.f32.mrb[0].mxu0
      %v2940 = vadd.f32 %v2741, %v2939
      %v2941 = vpop.f32.mrb[0].mxu0
      %2942 = vmatprep.mubr.bf16.mxu0 0
      %2943 = vmatmul.mubr.bf16.gmra.mrb[0].mxu0 %v2857
      %v2944 = vpop.f32.mrb[0].mxu0
      %v2945 = vadd.f32 %v2746, %v2944
      %v2946 = vpop.f32.mrb[0].mxu0
      %v2947 = vpop.f32.mrb[0].mxu0
      %v2948 = vadd.f32 %v2749, %v2947
      %v2949 = vpop.f32.mrb[0].mxu0
      %2950 = vmatprep.mubr.bf16.mxu0 0
      %2951 = vmatmul.mubr.bf16.gmra.mrb[0].mxu0 %v2860
      %v2952 = vpop.f32.mrb[0].mxu0
      %v2953 = vadd.f32 %v2754, %v2952
      %v2954 = vpop.f32.mrb[0].mxu0
      %v2955 = vpop.f32.mrb[0].mxu0
      %v2956 = vadd.f32 %v2757, %v2955
      %v2957 = vpop.f32.mrb[0].mxu0
      %2958 = vmatprep.mubr.bf16.mxu0 0
      %2959 = vmatmul.mubr.bf16.gmra.mrb[0].mxu0 %v2863
      %v2960 = vpop.f32.mrb[0].mxu0
      %v2961 = vadd.f32 %v2762, %v2960
      %v2962 = vpop.f32.mrb[0].mxu0
      %v2963 = vpop.f32.mrb[0].mxu0
      %v2964 = vadd.f32 %v2765, %v2963
      %v2965 = vpop.f32.mrb[0].mxu0
      %2966 = vmatprep.mubr.bf16.mxu0 0
      %2967 = vmatmul.mubr.bf16.gmra.mrb[0].mxu0 %v2866
      %v2968 = vpop.f32.mrb[0].mxu0
      %v2969 = vadd.f32 %v2770, %v2968
      %v2970 = vpop.f32.mrb[0].mxu0
      %v2971 = vpop.f32.mrb[0].mxu0
      %v2972 = vadd.f32 %v2773, %v2971
      %v2973 = vpop.f32.mrb[0].mxu0
      %2974 = vmatprep.mubr.bf16.mxu0 0
      %2975 = vmatmul.mubr.bf16.gmra.mrb[0].mxu0 %v2869
      %v2976 = vpop.f32.mrb[0].mxu0
      %v2977 = vadd.f32 %v2778, %v2976
      %v2978 = vpop.f32.mrb[0].mxu0
      %v2979 = vpop.f32.mrb[0].mxu0
      %v2980 = vadd.f32 %v2781, %v2979
      %v2981 = vpop.f32.mrb[0].mxu0
      %2982 = vmatprep.mubr.bf16.mxu0 0
      %2983 = vmatmul.mubr.bf16.gmra.mrb[0].mxu0 %v2872
      %v2984 = vpop.f32.mrb[0].mxu0
      %v2985 = vadd.f32 %v2786, %v2984
      %v2986 = vpop.f32.mrb[0].mxu0
      %v2987 = vpop.f32.mrb[0].mxu0
      %v2988 = vadd.f32 %v2789, %v2987
      %v2989 = vpop.f32.mrb[0].mxu0
      %2990 = vmatprep.mubr.bf16.mxu0 0
      %2991 = vmatmul.mubr.bf16.gmra.mrb[0].mxu0 %v2875
      %v2992 = vpop.f32.mrb[0].mxu0
      %v2993 = vadd.f32 %v2794, %v2992
      %v2994 = vpop.f32.mrb[0].mxu0
      %v2995 = vpop.f32.mrb[0].mxu0
      %v2996 = vadd.f32 %v2797, %v2995
      %v2997 = vpop.f32.mrb[0].mxu0
      %2998 = vmatprep.mubr.bf16.mxu0 0
      %2999 = vmatmul.mubr.bf16.gmra.mrb[0].mxu0 %v2878
      %v3000 = vpop.f32.mrb[0].mxu0
      %v3001 = vadd.f32 %v2802, %v3000
      %v3002 = vpop.f32.mrb[0].mxu0
      %v3003 = vpop.f32.mrb[0].mxu0
      %v3004 = vadd.f32 %v2805, %v3003
      %v3005 = vpop.f32.mrb[0].mxu0
      %3006 = vmatprep.mubr.bf16.mxu0 0
      %3007 = vmatmul.mubr.bf16.gmra.mrb[0].mxu0 %v2881
      %v3008 = vpop.f32.mrb[0].mxu0
      %v3009 = vadd.f32 %v2810, %v3008
      %v3010 = vpop.f32.mrb[0].mxu0
      %v3011 = vpop.f32.mrb[0].mxu0
      %v3012 = vadd.f32 %v2813, %v3011
      %v3013 = vpop.f32.mrb[0].mxu0
      %3014 = vmatprep.mubr.bf16.mxu0 0
      %3015 = vmatmul.mubr.bf16.gmra.mrb[0].mxu0 %v2884
      %v3016 = vpop.f32.mrb[0].mxu0
      %v3017 = vadd.f32 %v2818, %v3016
      %v3018 = vpop.f32.mrb[0].mxu0
      %v3019 = vpop.f32.mrb[0].mxu0
      %v3020 = vpop.f32.mrb[0].mxu0
      %3021 = vdwg.mxu0
      %s3022 = scalar_lea.vmem [#allocation2], 2
      %v3023 = vld [vmem:[%s3022] ss:$2 sm:$0xff]
      %s3024 = scalar_lea.vmem [#allocation2], 18
      %v3025 = vld [vmem:[%s3024] ss:$2 sm:$0xff]
      %s3026 = scalar_lea.vmem [#allocation2], 34
      %v3027 = vld [vmem:[%s3026] ss:$2 sm:$0xff]
      %s3028 = scalar_lea.vmem [#allocation2], 50
      %v3029 = vld [vmem:[%s3028] ss:$2 sm:$0xff]
      %s3030 = scalar_lea.vmem [#allocation2], 66
      %v3031 = vld [vmem:[%s3030] ss:$2 sm:$0xff]
      %s3032 = scalar_lea.vmem [#allocation2], 82
      %v3033 = vld [vmem:[%s3032] ss:$2 sm:$0xff]
      %s3034 = scalar_lea.vmem [#allocation2], 98
      %v3035 = vld [vmem:[%s3034] ss:$2 sm:$0xff]
      %s3036 = scalar_lea.vmem [#allocation2], 114
      %v3037 = vld [vmem:[%s3036] ss:$2 sm:$0xff]
      %s3038 = scalar_lea.vmem [#allocation2], 130
      %v3039 = vld [vmem:[%s3038] ss:$2 sm:$0xff]
      %s3040 = scalar_lea.vmem [#allocation2], 146
      %v3041 = vld [vmem:[%s3040] ss:$2 sm:$0xff]
      %s3042 = scalar_lea.vmem [#allocation2], 162
      %v3043 = vld [vmem:[%s3042] ss:$2 sm:$0xff]
      %s3044 = scalar_lea.vmem [#allocation2], 178
      %v3045 = vld [vmem:[%s3044] ss:$2 sm:$0xff]
      %s3046 = scalar_lea.vmem [#allocation2], 194
      %v3047 = vld [vmem:[%s3046] ss:$2 sm:$0xff]
      %s3048 = scalar_lea.vmem [#allocation2], 210
      %v3049 = vld [vmem:[%s3048] ss:$2 sm:$0xff]
      %s3050 = scalar_lea.vmem [#allocation2], 226
      %v3051 = vld [vmem:[%s3050] ss:$2 sm:$0xff]
      %s3052 = scalar_lea.vmem [#allocation2], 242
      %v3053 = vld [vmem:[%s3052] ss:$2 sm:$0xff]
      %s3054 = scalar_lea.vmem [#allocation2], 258
      %v3055 = vld [vmem:[%s3054] ss:$2 sm:$0xff]
      %s3056 = scalar_lea.vmem [#allocation2], 274
      %v3057 = vld [vmem:[%s3056] ss:$2 sm:$0xff]
      %s3058 = scalar_lea.vmem [#allocation2], 290
      %v3059 = vld [vmem:[%s3058] ss:$2 sm:$0xff]
      %s3060 = scalar_lea.vmem [#allocation2], 306
      %v3061 = vld [vmem:[%s3060] ss:$2 sm:$0xff]
      %s3062 = scalar_lea.vmem [#allocation2], 322
      %v3063 = vld [vmem:[%s3062] ss:$2 sm:$0xff]
      %s3064 = scalar_lea.vmem [#allocation2], 338
      %v3065 = vld [vmem:[%s3064] ss:$2 sm:$0xff]
      %s3066 = scalar_lea.vmem [#allocation2], 354
      %v3067 = vld [vmem:[%s3066] ss:$2 sm:$0xff]
      %s3068 = scalar_lea.vmem [#allocation2], 370
      %v3069 = vld [vmem:[%s3068] ss:$2 sm:$0xff]
      %s3070 = scalar_lea.vmem [#allocation2], 386
      %v3071 = vld [vmem:[%s3070] ss:$2 sm:$0x7f]
      %v3072 = vpack.c.bf16 %v3025, %v3023
      %v3073 = vpack.c.bf16 %v3029, %v3027
      %v3074 = vpack.c.bf16 %v3033, %v3031
      %v3075 = vpack.c.bf16 %v3037, %v3035
      %v3076 = vpack.c.bf16 %v3041, %v3039
      %v3077 = vpack.c.bf16 %v3045, %v3043
      %v3078 = vpack.c.bf16 %v3049, %v3047
      %v3079 = vpack.c.bf16 %v3053, %v3051
      %v3080 = vpack.c.bf16 %v3057, %v3055
      %v3081 = vpack.c.bf16 %v3061, %v3059
      %v3082 = vpack.c.bf16 %v3065, %v3063
      %v3083 = vpack.c.bf16 %v3069, %v3067
      %v3084 = vpack.c.bf16 %v3071, %v3071
      %s3085 = scalar_lea.vmem %s4, 64
      %v3086 = vld [vmem:[%s3085] sm:$0xf]
      %v3087 = vld [vmem:[%s3085 + $0x4] sm:$0xf]
      %v3088 = vld [vmem:[%s3085 + $0x8] sm:$0xf]
      %v3089 = vld [vmem:[%s3085 + $0xc] sm:$0xf]
      %v3090 = vld [vmem:[%s3085 + $0x10] sm:$0xf]
      %v3091 = vld [vmem:[%s3085 + $0x14] sm:$0xf]
      %v3092 = vld [vmem:[%s3085 + $0x18] sm:$0xf]
      %v3093 = vld [vmem:[%s3085 + $0x1c] sm:$0xf]
      %v3102 = vunpack.c.l.b16 %v3086
      %v3103 = vunpack.c.l.b16 %v3087
      %v3104 = vunpack.c.l.b16 %v3088
      %v3105 = vunpack.c.l.b16 %v3089
      %v3106 = vunpack.c.l.b16 %v3090
      %v3107 = vunpack.c.l.b16 %v3091
      %v3108 = vunpack.c.l.b16 %v3092
      %v3109 = vunpack.c.l.b16 %v3093
      %v3110 = vpack.c.b16 %v3103, %v3102
      %v3111 = vpack.c.b16 %v3105, %v3104
      %v3112 = vpack.c.b16 %v3107, %v3106
      %v3113 = vpack.c.b16 %v3109, %v3108
      %v3119 = vsel %vm1501, %v3072, 0
      %v3122 = vsel %vm1501, %v3073, 0
      %v3125 = vsel %vm1501, %v3074, 0
      %v3128 = vsel %vm1501, %v3075, 0
      %v3131 = vsel %vm1501, %v3076, 0
      %v3134 = vsel %vm1501, %v3077, 0
      %v3137 = vsel %vm1501, %v3078, 0
      %v3140 = vsel %vm1501, %v3079, 0
      %v3143 = vsel %vm1501, %v3080, 0
      %v3146 = vsel %vm1501, %v3081, 0
      %v3149 = vsel %vm1501, %v3082, 0
      %v3152 = vsel %vm1501, %v3083, 0
      %v3155 = vsel %vm1501, %v3084, 0
      %3157 = vmatprep.subr.bf16.mxu0 0
      %3158 = vmatpush1.bf16.msra.mxu0 %v3110
      %3159 = vmatprep.subr.bf16.mxu0 0
      %3160 = vmatpush1.bf16.msra.mxu0 %v3111
      %3161 = vmatprep.subr.bf16.mxu0 0
      %3162 = vmatpush1.bf16.msra.mxu0 %v3112
      %3163 = vmatprep.subr.bf16.mxu0 0
      %3164 = vmatpush1.bf16.msra.mxu0 %v3113
      %3165 = vmatprep.subr.bf16.mxu0 0
      %3166 = vmatpush1.bf16.msra.mxu0 0
      %3167 = vmatprep.subr.bf16.mxu0 0
      %3168 = vmatpush1.bf16.msra.mxu0 0
      %3169 = vmatprep.subr.bf16.mxu0 0
      %3170 = vmatpush1.bf16.msra.mxu0 0
      %3171 = vmatprep.subr.bf16.mxu0 0
      %3172 = vmatpush1.bf16.msra.mxu0 0
      %3173 = vmatprep.subr.bf16.mxu0 0
      %3174 = vmatpush1.bf16.msra.mxu0 0
      %3175 = vmatprep.subr.bf16.mxu0 0
      %3176 = vmatpush1.bf16.msra.mxu0 0
      %3177 = vmatprep.subr.bf16.mxu0 0
      %3178 = vmatpush1.bf16.msra.mxu0 0
      %3179 = vmatprep.subr.bf16.mxu0 0
      %3180 = vmatpush1.bf16.msra.mxu0 0
      %3181 = vmatprep.subr.bf16.mxu0 0
      %3182 = vmatpush1.bf16.msra.mxu0 0
      %3183 = vmatprep.subr.bf16.mxu0 0
      %3184 = vmatpush1.bf16.msra.mxu0 0
      %3185 = vmatprep.subr.bf16.mxu0 0
      %3186 = vmatpush1.bf16.msra.mxu0 0
      %3187 = vmatprep.subr.bf16.mxu0 0
      %3188 = vmatpush1.bf16.msra.mxu0 0
      %3189 = vmatprep.mubr.bf16.mxu0 0
      %3190 = vmatmul.mubr.bf16.gmra.mrb[0].mxu0 %v3119
      %v3191 = vpop.f32.mrb[0].mxu0
      %v3192 = vadd.f32 0.0, %v3191
      %v3193 = vpop.f32.mrb[0].mxu0
      %v3194 = vpop.f32.mrb[0].mxu0
      %v3195 = vadd.f32 0.0, %v3194
      %v3196 = vpop.f32.mrb[0].mxu0
      %3197 = vmatprep.mubr.bf16.mxu0 0
      %3198 = vmatmul.mubr.bf16.gmra.mrb[0].mxu0 %v3122
      %v3199 = vpop.f32.mrb[0].mxu0
      %v3200 = vadd.f32 0.0, %v3199
      %v3201 = vpop.f32.mrb[0].mxu0
      %v3202 = vpop.f32.mrb[0].mxu0
      %v3203 = vadd.f32 0.0, %v3202
      %v3204 = vpop.f32.mrb[0].mxu0
      %3205 = vmatprep.mubr.bf16.mxu0 0
      %3206 = vmatmul.mubr.bf16.gmra.mrb[0].mxu0 %v3125
      %v3207 = vpop.f32.mrb[0].mxu0
      %v3208 = vadd.f32 0.0, %v3207
      %v3209 = vpop.f32.mrb[0].mxu0
      %v3210 = vpop.f32.mrb[0].mxu0
      %v3211 = vadd.f32 0.0, %v3210
      %v3212 = vpop.f32.mrb[0].mxu0
      %3213 = vmatprep.mubr.bf16.mxu0 0
      %3214 = vmatmul.mubr.bf16.gmra.mrb[0].mxu0 %v3128
      %v3215 = vpop.f32.mrb[0].mxu0
      %v3216 = vadd.f32 0.0, %v3215
      %v3217 = vpop.f32.mrb[0].mxu0
      %v3218 = vpop.f32.mrb[0].mxu0
      %v3219 = vadd.f32 0.0, %v3218
      %v3220 = vpop.f32.mrb[0].mxu0
      %3221 = vmatprep.mubr.bf16.mxu0 0
      %3222 = vmatmul.mubr.bf16.gmra.mrb[0].mxu0 %v3131
      %v3223 = vpop.f32.mrb[0].mxu0
      %v3224 = vadd.f32 0.0, %v3223
      %v3225 = vpop.f32.mrb[0].mxu0
      %v3226 = vpop.f32.mrb[0].mxu0
      %v3227 = vadd.f32 0.0, %v3226
      %v3228 = vpop.f32.mrb[0].mxu0
      %3229 = vmatprep.mubr.bf16.mxu0 0
      %3230 = vmatmul.mubr.bf16.gmra.mrb[0].mxu0 %v3134
      %v3231 = vpop.f32.mrb[0].mxu0
      %v3232 = vadd.f32 0.0, %v3231
      %v3233 = vpop.f32.mrb[0].mxu0
      %v3234 = vpop.f32.mrb[0].mxu0
      %v3235 = vadd.f32 0.0, %v3234
      %v3236 = vpop.f32.mrb[0].mxu0
      %3237 = vmatprep.mubr.bf16.mxu0 0
      %3238 = vmatmul.mubr.bf16.gmra.mrb[0].mxu0 %v3137
      %v3239 = vpop.f32.mrb[0].mxu0
      %v3240 = vadd.f32 0.0, %v3239
      %v3241 = vpop.f32.mrb[0].mxu0
      %v3242 = vpop.f32.mrb[0].mxu0
      %v3243 = vadd.f32 0.0, %v3242
      %v3244 = vpop.f32.mrb[0].mxu0
      %3245 = vmatprep.mubr.bf16.mxu0 0
      %3246 = vmatmul.mubr.bf16.gmra.mrb[0].mxu0 %v3140
      %v3247 = vpop.f32.mrb[0].mxu0
      %v3248 = vadd.f32 0.0, %v3247
      %v3249 = vpop.f32.mrb[0].mxu0
      %v3250 = vpop.f32.mrb[0].mxu0
      %v3251 = vadd.f32 0.0, %v3250
      %v3252 = vpop.f32.mrb[0].mxu0
      %3253 = vmatprep.mubr.bf16.mxu0 0
      %3254 = vmatmul.mubr.bf16.gmra.mrb[0].mxu0 %v3143
      %v3255 = vpop.f32.mrb[0].mxu0
      %v3256 = vadd.f32 0.0, %v3255
      %v3257 = vpop.f32.mrb[0].mxu0
      %v3258 = vpop.f32.mrb[0].mxu0
      %v3259 = vadd.f32 0.0, %v3258
      %v3260 = vpop.f32.mrb[0].mxu0
      %3261 = vmatprep.mubr.bf16.mxu0 0
      %3262 = vmatmul.mubr.bf16.gmra.mrb[0].mxu0 %v3146
      %v3263 = vpop.f32.mrb[0].mxu0
      %v3264 = vadd.f32 0.0, %v3263
      %v3265 = vpop.f32.mrb[0].mxu0
      %v3266 = vpop.f32.mrb[0].mxu0
      %v3267 = vadd.f32 0.0, %v3266
      %v3268 = vpop.f32.mrb[0].mxu0
      %3269 = vmatprep.mubr.bf16.mxu0 0
      %3270 = vmatmul.mubr.bf16.gmra.mrb[0].mxu0 %v3149
      %v3271 = vpop.f32.mrb[0].mxu0
      %v3272 = vadd.f32 0.0, %v3271
      %v3273 = vpop.f32.mrb[0].mxu0
      %v3274 = vpop.f32.mrb[0].mxu0
      %v3275 = vadd.f32 0.0, %v3274
      %v3276 = vpop.f32.mrb[0].mxu0
      %3277 = vmatprep.mubr.bf16.mxu0 0
      %3278 = vmatmul.mubr.bf16.gmra.mrb[0].mxu0 %v3152
      %v3279 = vpop.f32.mrb[0].mxu0
      %v3280 = vadd.f32 0.0, %v3279
      %v3281 = vpop.f32.mrb[0].mxu0
      %v3282 = vpop.f32.mrb[0].mxu0
      %v3283 = vadd.f32 0.0, %v3282
      %v3284 = vpop.f32.mrb[0].mxu0
      %3285 = vmatprep.mubr.bf16.mxu0 0
      %3286 = vmatmul.mubr.bf16.gmra.mrb[0].mxu0 %v3155
      %v3287 = vpop.f32.mrb[0].mxu0
      %v3288 = vadd.f32 0.0, %v3287
      %v3289 = vpop.f32.mrb[0].mxu0
      %v3290 = vpop.f32.mrb[0].mxu0
      %v3291 = vpop.f32.mrb[0].mxu0
      %3292 = vdwg.mxu0
      %v3293 = vadd.f32 %v2921, %v3192
      %v3294 = vadd.f32 %v2924, %v3195
      %v3295 = vadd.f32 %v2929, %v3200
      %v3296 = vadd.f32 %v2932, %v3203
      %v3297 = vadd.f32 %v2937, %v3208
      %v3298 = vadd.f32 %v2940, %v3211
      %v3299 = vadd.f32 %v2945, %v3216
      %v3300 = vadd.f32 %v2948, %v3219
      %v3301 = vadd.f32 %v2953, %v3224
      %v3302 = vadd.f32 %v2956, %v3227
      %v3303 = vadd.f32 %v2961, %v3232
      %v3304 = vadd.f32 %v2964, %v3235
      %v3305 = vadd.f32 %v2969, %v3240
      %v3306 = vadd.f32 %v2972, %v3243
      %v3307 = vadd.f32 %v2977, %v3248
      %v3308 = vadd.f32 %v2980, %v3251
      %v3309 = vadd.f32 %v2985, %v3256
      %v3310 = vadd.f32 %v2988, %v3259
      %v3311 = vadd.f32 %v2993, %v3264
      %v3312 = vadd.f32 %v2996, %v3267
      %v3313 = vadd.f32 %v3001, %v3272
      %v3314 = vadd.f32 %v3004, %v3275
      %v3315 = vadd.f32 %v3009, %v3280
      %v3316 = vadd.f32 %v3012, %v3283
      %v3317 = vadd.f32 %v3017, %v3288
      %v3318 = vmul.f32 %v3293, 0.5
      %v3319 = vmul.f32 %v3294, 0.5
      %v3320 = vmul.f32 %v3295, 0.5
      %v3321 = vmul.f32 %v3296, 0.5
      %v3322 = vmul.f32 %v3297, 0.5
      %v3323 = vmul.f32 %v3298, 0.5
      %v3324 = vmul.f32 %v3299, 0.5
      %v3325 = vmul.f32 %v3300, 0.5
      %v3326 = vmul.f32 %v3301, 0.5
      %v3327 = vmul.f32 %v3302, 0.5
      %v3328 = vmul.f32 %v3303, 0.5
      %v3329 = vmul.f32 %v3304, 0.5
      %v3330 = vmul.f32 %v3305, 0.5
      %v3331 = vmul.f32 %v3306, 0.5
      %v3332 = vmul.f32 %v3307, 0.5
      %v3333 = vmul.f32 %v3308, 0.5
      %v3334 = vmul.f32 %v3309, 0.5
      %v3335 = vmul.f32 %v3310, 0.5
      %v3336 = vmul.f32 %v3311, 0.5
      %v3337 = vmul.f32 %v3312, 0.5
      %v3338 = vmul.f32 %v3313, 0.5
      %v3339 = vmul.f32 %v3314, 0.5
      %v3340 = vmul.f32 %v3315, 0.5
      %v3341 = vmul.f32 %v3316, 0.5
      %v3342 = vmul.f32 %v3317, 0.5
      %v3343 = vmul.f32 %v3293, 0.044715
      %v3344 = vmul.f32 %v3294, 0.044715
      %v3345 = vmul.f32 %v3295, 0.044715
      %v3346 = vmul.f32 %v3296, 0.044715
      %v3347 = vmul.f32 %v3297, 0.044715
      %v3348 = vmul.f32 %v3298, 0.044715
      %v3349 = vmul.f32 %v3299, 0.044715
      %v3350 = vmul.f32 %v3300, 0.044715
      %v3351 = vmul.f32 %v3301, 0.044715
      %v3352 = vmul.f32 %v3302, 0.044715
      %v3353 = vmul.f32 %v3303, 0.044715
      %v3354 = vmul.f32 %v3304, 0.044715
      %v3355 = vmul.f32 %v3305, 0.044715
      %v3356 = vmul.f32 %v3306, 0.044715
      %v3357 = vmul.f32 %v3307, 0.044715
      %v3358 = vmul.f32 %v3308, 0.044715
      %v3359 = vmul.f32 %v3309, 0.044715
      %v3360 = vmul.f32 %v3310, 0.044715
      %v3361 = vmul.f32 %v3311, 0.044715
      %v3362 = vmul.f32 %v3312, 0.044715
      %v3363 = vmul.f32 %v3313, 0.044715
      %v3364 = vmul.f32 %v3314, 0.044715
      %v3365 = vmul.f32 %v3315, 0.044715
      %v3366 = vmul.f32 %v3316, 0.044715
      %v3367 = vmul.f32 %v3317, 0.044715
      %v3368 = vmul.f32 %v3343, %v3293
      %v3369 = vmul.f32 %v3344, %v3294
      %v3370 = vmul.f32 %v3345, %v3295
      %v3371 = vmul.f32 %v3346, %v3296
      %v3372 = vmul.f32 %v3347, %v3297
      %v3373 = vmul.f32 %v3348, %v3298
      %v3374 = vmul.f32 %v3349, %v3299
      %v3375 = vmul.f32 %v3350, %v3300
      %v3376 = vmul.f32 %v3351, %v3301
      %v3377 = vmul.f32 %v3352, %v3302
      %v3378 = vmul.f32 %v3353, %v3303
      %v3379 = vmul.f32 %v3354, %v3304
      %v3380 = vmul.f32 %v3355, %v3305
      %v3381 = vmul.f32 %v3356, %v3306
      %v3382 = vmul.f32 %v3357, %v3307
      %v3383 = vmul.f32 %v3358, %v3308
      %v3384 = vmul.f32 %v3359, %v3309
      %v3385 = vmul.f32 %v3360, %v3310
      %v3386 = vmul.f32 %v3361, %v3311
      %v3387 = vmul.f32 %v3362, %v3312
      %v3388 = vmul.f32 %v3363, %v3313
      %v3389 = vmul.f32 %v3364, %v3314
      %v3390 = vmul.f32 %v3365, %v3315
      %v3391 = vmul.f32 %v3366, %v3316
      %v3392 = vmul.f32 %v3367, %v3317
      %v3393 = vmul.f32 %v3368, %v3293
      %v3394 = vmul.f32 %v3369, %v3294
      %v3395 = vmul.f32 %v3370, %v3295
      %v3396 = vmul.f32 %v3371, %v3296
      %v3397 = vmul.f32 %v3372, %v3297
      %v3398 = vmul.f32 %v3373, %v3298
      %v3399 = vmul.f32 %v3374, %v3299
      %v3400 = vmul.f32 %v3375, %v3300
      %v3401 = vmul.f32 %v3376, %v3301
      %v3402 = vmul.f32 %v3377, %v3302
      %v3403 = vmul.f32 %v3378, %v3303
      %v3404 = vmul.f32 %v3379, %v3304
      %v3405 = vmul.f32 %v3380, %v3305
      %v3406 = vmul.f32 %v3381, %v3306
      %v3407 = vmul.f32 %v3382, %v3307
      %v3408 = vmul.f32 %v3383, %v3308
      %v3409 = vmul.f32 %v3384, %v3309
      %v3410 = vmul.f32 %v3385, %v3310
      %v3411 = vmul.f32 %v3386, %v3311
      %v3412 = vmul.f32 %v3387, %v3312
      %v3413 = vmul.f32 %v3388, %v3313
      %v3414 = vmul.f32 %v3389, %v3314
      %v3415 = vmul.f32 %v3390, %v3315
      %v3416 = vmul.f32 %v3391, %v3316
      %v3417 = vmul.f32 %v3392, %v3317
      %v3418 = vadd.f32 %v3293, %v3393
      %v3419 = vadd.f32 %v3294, %v3394
      %v3420 = vadd.f32 %v3295, %v3395
      %v3421 = vadd.f32 %v3296, %v3396
      %v3422 = vadd.f32 %v3297, %v3397
      %v3423 = vadd.f32 %v3298, %v3398
      %v3424 = vadd.f32 %v3299, %v3399
      %v3425 = vadd.f32 %v3300, %v3400
      %v3426 = vadd.f32 %v3301, %v3401
      %v3427 = vadd.f32 %v3302, %v3402
      %v3428 = vadd.f32 %v3303, %v3403
      %v3429 = vadd.f32 %v3304, %v3404
      %v3430 = vadd.f32 %v3305, %v3405
      %v3431 = vadd.f32 %v3306, %v3406
      %v3432 = vadd.f32 %v3307, %v3407
      %v3433 = vadd.f32 %v3308, %v3408
      %v3434 = vadd.f32 %v3309, %v3409
      %v3435 = vadd.f32 %v3310, %v3410
      %v3436 = vadd.f32 %v3311, %v3411
      %v3437 = vadd.f32 %v3312, %v3412
      %v3438 = vadd.f32 %v3313, %v3413
      %v3439 = vadd.f32 %v3314, %v3414
      %v3440 = vadd.f32 %v3315, %v3415
      %v3441 = vadd.f32 %v3316, %v3416
      %v3442 = vadd.f32 %v3317, %v3417
      %v3443 = vmul.f32 %v3418, 0.7978846
      %v3444 = vmul.f32 %v3419, 0.7978846
      %v3445 = vmul.f32 %v3420, 0.7978846
      %v3446 = vmul.f32 %v3421, 0.7978846
      %v3447 = vmul.f32 %v3422, 0.7978846
      %v3448 = vmul.f32 %v3423, 0.7978846
      %v3449 = vmul.f32 %v3424, 0.7978846
      %v3450 = vmul.f32 %v3425, 0.7978846
      %v3451 = vmul.f32 %v3426, 0.7978846
      %v3452 = vmul.f32 %v3427, 0.7978846
      %v3453 = vmul.f32 %v3428, 0.7978846
      %v3454 = vmul.f32 %v3429, 0.7978846
      %v3455 = vmul.f32 %v3430, 0.7978846
      %v3456 = vmul.f32 %v3431, 0.7978846
      %v3457 = vmul.f32 %v3432, 0.7978846
      %v3458 = vmul.f32 %v3433, 0.7978846
      %v3459 = vmul.f32 %v3434, 0.7978846
      %v3460 = vmul.f32 %v3435, 0.7978846
      %v3461 = vmul.f32 %v3436, 0.7978846
      %v3462 = vmul.f32 %v3437, 0.7978846
      %v3463 = vmul.f32 %v3438, 0.7978846
      %v3464 = vmul.f32 %v3439, 0.7978846
      %v3465 = vmul.f32 %v3440, 0.7978846
      %v3466 = vmul.f32 %v3441, 0.7978846
      %v3467 = vmul.f32 %v3442, 0.7978846
      %v3468 = vtanh.pop %v3443
      %v3469 = vtanh.pop %v3444
      %v3470 = vtanh.pop %v3445
      %v3471 = vtanh.pop %v3446
      %v3472 = vtanh.pop %v3447
      %v3473 = vtanh.pop %v3448
      %v3474 = vtanh.pop %v3449
      %v3475 = vtanh.pop %v3450
      %v3476 = vtanh.pop %v3451
      %v3477 = vtanh.pop %v3452
      %v3478 = vtanh.pop %v3453
      %v3479 = vtanh.pop %v3454
      %v3480 = vtanh.pop %v3455
      %v3481 = vtanh.pop %v3456
      %v3482 = vtanh.pop %v3457
      %v3483 = vtanh.pop %v3458
      %v3484 = vtanh.pop %v3459
      %v3485 = vtanh.pop %v3460
      %v3486 = vtanh.pop %v3461
      %v3487 = vtanh.pop %v3462
      %v3488 = vtanh.pop %v3463
      %v3489 = vtanh.pop %v3464
      %v3490 = vtanh.pop %v3465
      %v3491 = vtanh.pop %v3466
      %v3492 = vtanh.pop %v3467
      %v3493 = vadd.f32 %v3468, 1.0
      %v3494 = vadd.f32 %v3469, 1.0
      %v3495 = vadd.f32 %v3470, 1.0
      %v3496 = vadd.f32 %v3471, 1.0
      %v3497 = vadd.f32 %v3472, 1.0
      %v3498 = vadd.f32 %v3473, 1.0
      %v3499 = vadd.f32 %v3474, 1.0
      %v3500 = vadd.f32 %v3475, 1.0
      %v3501 = vadd.f32 %v3476, 1.0
      %v3502 = vadd.f32 %v3477, 1.0
      %v3503 = vadd.f32 %v3478, 1.0
      %v3504 = vadd.f32 %v3479, 1.0
      %v3505 = vadd.f32 %v3480, 1.0
      %v3506 = vadd.f32 %v3481, 1.0
      %v3507 = vadd.f32 %v3482, 1.0
      %v3508 = vadd.f32 %v3483, 1.0
      %v3509 = vadd.f32 %v3484, 1.0
      %v3510 = vadd.f32 %v3485, 1.0
      %v3511 = vadd.f32 %v3486, 1.0
      %v3512 = vadd.f32 %v3487, 1.0
      %v3513 = vadd.f32 %v3488, 1.0
      %v3514 = vadd.f32 %v3489, 1.0
      %v3515 = vadd.f32 %v3490, 1.0
      %v3516 = vadd.f32 %v3491, 1.0
      %v3517 = vadd.f32 %v3492, 1.0
      %v3518 = vmul.f32 %v3318, %v3493
      %v3519 = vmul.f32 %v3319, %v3494
      %v3520 = vmul.f32 %v3320, %v3495
      %v3521 = vmul.f32 %v3321, %v3496
      %v3522 = vmul.f32 %v3322, %v3497
      %v3523 = vmul.f32 %v3323, %v3498
      %v3524 = vmul.f32 %v3324, %v3499
      %v3525 = vmul.f32 %v3325, %v3500
      %v3526 = vmul.f32 %v3326, %v3501
      %v3527 = vmul.f32 %v3327, %v3502
      %v3528 = vmul.f32 %v3328, %v3503
      %v3529 = vmul.f32 %v3329, %v3504
      %v3530 = vmul.f32 %v3330, %v3505
      %v3531 = vmul.f32 %v3331, %v3506
      %v3532 = vmul.f32 %v3332, %v3507
      %v3533 = vmul.f32 %v3333, %v3508
      %v3534 = vmul.f32 %v3334, %v3509
      %v3535 = vmul.f32 %v3335, %v3510
      %v3536 = vmul.f32 %v3336, %v3511
      %v3537 = vmul.f32 %v3337, %v3512
      %v3538 = vmul.f32 %v3338, %v3513
      %v3539 = vmul.f32 %v3339, %v3514
      %v3540 = vmul.f32 %v3340, %v3515
      %v3541 = vmul.f32 %v3341, %v3516
      %v3542 = vmul.f32 %v3342, %v3517
      %3543 = vst.msk [vmem:[#allocation3] sm:$0xff] %vm1501, %v3518
      %3544 = vst.msk [vmem:[#allocation3 + $0x8] sm:$0xff] %vm1501, %v3519
      %3545 = vst.msk [vmem:[#allocation3 + $0x10] sm:$0xff] %vm1501, %v3520
      %3546 = vst.msk [vmem:[#allocation3 + $0x18] sm:$0xff] %vm1501, %v3521
      %3547 = vst.msk [vmem:[#allocation3 + $0x20] sm:$0xff] %vm1501, %v3522
      %3548 = vst.msk [vmem:[#allocation3 + $0x28] sm:$0xff] %vm1501, %v3523
      %3549 = vst.msk [vmem:[#allocation3 + $0x30] sm:$0xff] %vm1501, %v3524
      %3550 = vst.msk [vmem:[#allocation3 + $0x38] sm:$0xff] %vm1501, %v3525
      %3551 = vst.msk [vmem:[#allocation3 + $0x40] sm:$0xff] %vm1501, %v3526
      %3552 = vst.msk [vmem:[#allocation3 + $0x48] sm:$0xff] %vm1501, %v3527
      %3553 = vst.msk [vmem:[#allocation3 + $0x50] sm:$0xff] %vm1501, %v3528
      %3554 = vst.msk [vmem:[#allocation3 + $0x58] sm:$0xff] %vm1501, %v3529
      %3555 = vst.msk [vmem:[#allocation3 + $0x60] sm:$0xff] %vm1501, %v3530
      %3556 = vst.msk [vmem:[#allocation3 + $0x68] sm:$0xff] %vm1501, %v3531
      %3557 = vst.msk [vmem:[#allocation3 + $0x70] sm:$0xff] %vm1501, %v3532
      %3558 = vst.msk [vmem:[#allocation3 + $0x78] sm:$0xff] %vm1501, %v3533
      %3559 = vst.msk [vmem:[#allocation3 + $0x80] sm:$0xff] %vm1501, %v3534
      %3560 = vst.msk [vmem:[#allocation3 + $0x88] sm:$0xff] %vm1501, %v3535
      %3561 = vst.msk [vmem:[#allocation3 + $0x90] sm:$0xff] %vm1501, %v3536
      %3562 = vst.msk [vmem:[#allocation3 + $0x98] sm:$0xff] %vm1501, %v3537
      %3563 = vst.msk [vmem:[#allocation3 + $0xa0] sm:$0xff] %vm1501, %v3538
      %3564 = vst.msk [vmem:[#allocation3 + $0xa8] sm:$0xff] %vm1501, %v3539
      %3565 = vst.msk [vmem:[#allocation3 + $0xb0] sm:$0xff] %vm1501, %v3540
      %3566 = vst.msk [vmem:[#allocation3 + $0xb8] sm:$0xff] %vm1501, %v3541
      %3567 = vst.msk [vmem:[#allocation3 + $0xc0] sm:$0x7f] %vm1599, %v3542
      %v3568 = vld [vmem:[#allocation3] ss:$2 sm:$0xff]
      %s3569 = scalar_lea.vmem [#allocation3], 16
      %v3570 = vld [vmem:[%s3569] ss:$2 sm:$0xff]
      %s3571 = scalar_lea.vmem [#allocation3], 32
      %v3572 = vld [vmem:[%s3571] ss:$2 sm:$0xff]
      %s3573 = scalar_lea.vmem [#allocation3], 48
      %v3574 = vld [vmem:[%s3573] ss:$2 sm:$0xff]
      %s3575 = scalar_lea.vmem [#allocation3], 64
      %v3576 = vld [vmem:[%s3575] ss:$2 sm:$0xff]
      %s3577 = scalar_lea.vmem [#allocation3], 80
      %v3578 = vld [vmem:[%s3577] ss:$2 sm:$0xff]
      %s3579 = scalar_lea.vmem [#allocation3], 96
      %v3580 = vld [vmem:[%s3579] ss:$2 sm:$0xff]
      %s3581 = scalar_lea.vmem [#allocation3], 112
      %v3582 = vld [vmem:[%s3581] ss:$2 sm:$0xff]
      %s3583 = scalar_lea.vmem [#allocation3], 128
      %v3584 = vld [vmem:[%s3583] ss:$2 sm:$0xff]
      %s3585 = scalar_lea.vmem [#allocation3], 144
      %v3586 = vld [vmem:[%s3585] ss:$2 sm:$0xff]
      %s3587 = scalar_lea.vmem [#allocation3], 160
      %v3588 = vld [vmem:[%s3587] ss:$2 sm:$0xff]
      %s3589 = scalar_lea.vmem [#allocation3], 176
      %v3590 = vld [vmem:[%s3589] ss:$2 sm:$0xff]
      %s3591 = scalar_lea.vmem [#allocation3], 192
      %v3592 = vld [vmem:[%s3591] ss:$2 sm:$0x7]
      %v3593 = vpack.c.bf16 %v3570, %v3568
      %v3594 = vpack.c.bf16 %v3574, %v3572
      %v3595 = vpack.c.bf16 %v3578, %v3576
      %v3596 = vpack.c.bf16 %v3582, %v3580
      %v3597 = vpack.c.bf16 %v3586, %v3584
      %v3598 = vpack.c.bf16 %v3590, %v3588
      %v3599 = vpack.c.bf16 %v3592, %v3592
      %s3600 = scalar_lea.vmem %s4, 96
      %v3601 = vld [vmem:[%s3600] sm:$0xf]
      %v3602 = vld [vmem:[%s3600 + $0x4] sm:$0xf]
      %v3603 = vld [vmem:[%s3600 + $0x8] sm:$0xf]
      %v3604 = vld [vmem:[%s3600 + $0xc] sm:$0xf]
      %v3605 = vld [vmem:[%s3600 + $0x10] sm:$0xf]
      %v3606 = vld [vmem:[%s3600 + $0x14] sm:$0xf]
      %v3607 = vld [vmem:[%s3600 + $0x18] sm:$0xf]
      %v3608 = vld [vmem:[%s3600 + $0x1c] sm:$0xf]
      %s3609 = scalar_lea.vmem [#allocation3], 1
      %v3610 = vld [vmem:[%s3609] ss:$2 sm:$0xff]
      %s3611 = scalar_lea.vmem [#allocation3], 17
      %v3612 = vld [vmem:[%s3611] ss:$2 sm:$0xff]
      %s3613 = scalar_lea.vmem [#allocation3], 33
      %v3614 = vld [vmem:[%s3613] ss:$2 sm:$0xff]
      %s3615 = scalar_lea.vmem [#allocation3], 49
      %v3616 = vld [vmem:[%s3615] ss:$2 sm:$0xff]
      %s3617 = scalar_lea.vmem [#allocation3], 65
      %v3618 = vld [vmem:[%s3617] ss:$2 sm:$0xff]
      %s3619 = scalar_lea.vmem [#allocation3], 81
      %v3620 = vld [vmem:[%s3619] ss:$2 sm:$0xff]
      %s3621 = scalar_lea.vmem [#allocation3], 97
      %v3622 = vld [vmem:[%s3621] ss:$2 sm:$0xff]
      %s3623 = scalar_lea.vmem [#allocation3], 113
      %v3624 = vld [vmem:[%s3623] ss:$2 sm:$0xff]
      %s3625 = scalar_lea.vmem [#allocation3], 129
      %v3626 = vld [vmem:[%s3625] ss:$2 sm:$0xff]
      %s3627 = scalar_lea.vmem [#allocation3], 145
      %v3628 = vld [vmem:[%s3627] ss:$2 sm:$0xff]
      %s3629 = scalar_lea.vmem [#allocation3], 161
      %v3630 = vld [vmem:[%s3629] ss:$2 sm:$0xff]
      %s3631 = scalar_lea.vmem [#allocation3], 177
      %v3632 = vld [vmem:[%s3631] ss:$2 sm:$0xff]
      %s3633 = scalar_lea.vmem [#allocation3], 193
      %v3634 = vld [vmem:[%s3633] ss:$2 sm:$0x7]
      %v3635 = vpack.c.bf16 %v3612, %v3610
      %v3636 = vpack.c.bf16 %v3616, %v3614
      %v3637 = vpack.c.bf16 %v3620, %v3618
      %v3638 = vpack.c.bf16 %v3624, %v3622
      %v3639 = vpack.c.bf16 %v3628, %v3626
      %v3640 = vpack.c.bf16 %v3632, %v3630
      %v3641 = vpack.c.bf16 %v3634, %v3634
      %s3642 = scalar_lea.vmem %s4, 128
      %v3643 = vld [vmem:[%s3642] sm:$0xf]
      %v3644 = vld [vmem:[%s3642 + $0x4] sm:$0xf]
      %v3645 = vld [vmem:[%s3642 + $0x8] sm:$0xf]
      %v3646 = vld [vmem:[%s3642 + $0xc] sm:$0xf]
      %v3647 = vld [vmem:[%s3642 + $0x10] sm:$0xf]
      %v3648 = vld [vmem:[%s3642 + $0x14] sm:$0xf]
      %v3649 = vld [vmem:[%s3642 + $0x18] sm:$0xf]
      %v3650 = vld [vmem:[%s3642 + $0x1c] sm:$0xf]
      %v3659 = vunpack.c.l.b16 %v3643
      %v3660 = vunpack.c.l.b16 %v3644
      %v3661 = vunpack.c.l.b16 %v3645
      %v3662 = vunpack.c.l.b16 %v3646
      %v3663 = vunpack.c.l.b16 %v3647
      %v3664 = vunpack.c.l.b16 %v3648
      %v3665 = vunpack.c.l.b16 %v3649
      %v3666 = vunpack.c.l.b16 %v3650
      %v3667 = vpack.c.b16 %v3660, %v3659
      %v3668 = vpack.c.b16 %v3662, %v3661
      %v3669 = vpack.c.b16 %v3664, %v3663
      %v3670 = vpack.c.b16 %v3666, %v3665
      %v3676 = vsel %vm1501, %v3635, 0
      %v3679 = vsel %vm1501, %v3636, 0
      %v3682 = vsel %vm1501, %v3637, 0
      %v3685 = vsel %vm1501, %v3638, 0
      %v3688 = vsel %vm1501, %v3639, 0
      %v3691 = vsel %vm1501, %v3640, 0
      %v3694 = vsel %vm1501, %v3641, 0
      %3696 = vmatprep.subr.bf16.mxu0 0
      %3697 = vmatpush1.bf16.msra.mxu0 %v3667
      %3698 = vmatprep.subr.bf16.mxu0 0
      %3699 = vmatpush1.bf16.msra.mxu0 %v3668
      %3700 = vmatprep.subr.bf16.mxu0 0
      %3701 = vmatpush1.bf16.msra.mxu0 %v3669
      %3702 = vmatprep.subr.bf16.mxu0 0
      %3703 = vmatpush1.bf16.msra.mxu0 %v3670
      %3704 = vmatprep.subr.bf16.mxu0 0
      %3705 = vmatpush1.bf16.msra.mxu0 0
      %3706 = vmatprep.subr.bf16.mxu0 0
      %3707 = vmatpush1.bf16.msra.mxu0 0
      %3708 = vmatprep.subr.bf16.mxu0 0
      %3709 = vmatpush1.bf16.msra.mxu0 0
      %3710 = vmatprep.subr.bf16.mxu0 0
      %3711 = vmatpush1.bf16.msra.mxu0 0
      %3712 = vmatprep.subr.bf16.mxu0 0
      %3713 = vmatpush1.bf16.msra.mxu0 0
      %3714 = vmatprep.subr.bf16.mxu0 0
      %3715 = vmatpush1.bf16.msra.mxu0 0
      %3716 = vmatprep.subr.bf16.mxu0 0
      %3717 = vmatpush1.bf16.msra.mxu0 0
      %3718 = vmatprep.subr.bf16.mxu0 0
      %3719 = vmatpush1.bf16.msra.mxu0 0
      %3720 = vmatprep.subr.bf16.mxu0 0
      %3721 = vmatpush1.bf16.msra.mxu0 0
      %3722 = vmatprep.subr.bf16.mxu0 0
      %3723 = vmatpush1.bf16.msra.mxu0 0
      %3724 = vmatprep.subr.bf16.mxu0 0
      %3725 = vmatpush1.bf16.msra.mxu0 0
      %3726 = vmatprep.subr.bf16.mxu0 0
      %3727 = vmatpush1.bf16.msra.mxu0 0
      %3728 = vmatprep.mubr.bf16.mxu0 0
      %3729 = vmatmul.mubr.bf16.gmra.mrb[0].mxu0 %v3676
      %v3730 = vpop.f32.mrb[0].mxu0
      %v3731 = vadd.f32 0.0, %v3730
      %v3732 = vpop.f32.mrb[0].mxu0
      %v3733 = vpop.f32.mrb[0].mxu0
      %v3734 = vadd.f32 0.0, %v3733
      %v3735 = vpop.f32.mrb[0].mxu0
      %3736 = vmatprep.mubr.bf16.mxu0 0
      %3737 = vmatmul.mubr.bf16.gmra.mrb[0].mxu0 %v3679
      %v3738 = vpop.f32.mrb[0].mxu0
      %v3739 = vadd.f32 0.0, %v3738
      %v3740 = vpop.f32.mrb[0].mxu0
      %v3741 = vpop.f32.mrb[0].mxu0
      %v3742 = vadd.f32 0.0, %v3741
      %v3743 = vpop.f32.mrb[0].mxu0
      %3744 = vmatprep.mubr.bf16.mxu0 0
      %3745 = vmatmul.mubr.bf16.gmra.mrb[0].mxu0 %v3682
      %v3746 = vpop.f32.mrb[0].mxu0
      %v3747 = vadd.f32 0.0, %v3746
      %v3748 = vpop.f32.mrb[0].mxu0
      %v3749 = vpop.f32.mrb[0].mxu0
      %v3750 = vadd.f32 0.0, %v3749
      %v3751 = vpop.f32.mrb[0].mxu0
      %3752 = vmatprep.mubr.bf16.mxu0 0
      %3753 = vmatmul.mubr.bf16.gmra.mrb[0].mxu0 %v3685
      %v3754 = vpop.f32.mrb[0].mxu0
      %v3755 = vadd.f32 0.0, %v3754
      %v3756 = vpop.f32.mrb[0].mxu0
      %v3757 = vpop.f32.mrb[0].mxu0
      %v3758 = vadd.f32 0.0, %v3757
      %v3759 = vpop.f32.mrb[0].mxu0
      %3760 = vmatprep.mubr.bf16.mxu0 0
      %3761 = vmatmul.mubr.bf16.gmra.mrb[0].mxu0 %v3688
      %v3762 = vpop.f32.mrb[0].mxu0
      %v3763 = vadd.f32 0.0, %v3762
      %v3764 = vpop.f32.mrb[0].mxu0
      %v3765 = vpop.f32.mrb[0].mxu0
      %v3766 = vadd.f32 0.0, %v3765
      %v3767 = vpop.f32.mrb[0].mxu0
      %3768 = vmatprep.mubr.bf16.mxu0 0
      %3769 = vmatmul.mubr.bf16.gmra.mrb[0].mxu0 %v3691
      %v3770 = vpop.f32.mrb[0].mxu0
      %v3771 = vadd.f32 0.0, %v3770
      %v3772 = vpop.f32.mrb[0].mxu0
      %v3773 = vpop.f32.mrb[0].mxu0
      %v3774 = vadd.f32 0.0, %v3773
      %v3775 = vpop.f32.mrb[0].mxu0
      %3776 = vmatprep.mubr.bf16.mxu0 0
      %3777 = vmatmul.mubr.bf16.gmra.mrb[0].mxu0 %v3694
      %v3778 = vpop.f32.mrb[0].mxu0
      %v3779 = vadd.f32 0.0, %v3778
      %v3780 = vpop.f32.mrb[0].mxu0
      %v3781 = vpop.f32.mrb[0].mxu0
      %v3782 = vpop.f32.mrb[0].mxu0
      %3783 = vdwg.mxu0
      %v3792 = vunpack.c.l.b16 %v3601
      %v3793 = vunpack.c.l.b16 %v3602
      %v3794 = vunpack.c.l.b16 %v3603
      %v3795 = vunpack.c.l.b16 %v3604
      %v3796 = vunpack.c.l.b16 %v3605
      %v3797 = vunpack.c.l.b16 %v3606
      %v3798 = vunpack.c.l.b16 %v3607
      %v3799 = vunpack.c.l.b16 %v3608
      %v3800 = vpack.c.b16 %v3793, %v3792
      %v3801 = vpack.c.b16 %v3795, %v3794
      %v3802 = vpack.c.b16 %v3797, %v3796
      %v3803 = vpack.c.b16 %v3799, %v3798
      %v3809 = vsel %vm1501, %v3593, 0
      %v3812 = vsel %vm1501, %v3594, 0
      %v3815 = vsel %vm1501, %v3595, 0
      %v3818 = vsel %vm1501, %v3596, 0
      %v3821 = vsel %vm1501, %v3597, 0
      %v3824 = vsel %vm1501, %v3598, 0
      %v3827 = vsel %vm1501, %v3599, 0
      %3829 = vmatprep.subr.bf16.mxu0 0
      %3830 = vmatpush1.bf16.msra.mxu0 %v3800
      %3831 = vmatprep.subr.bf16.mxu0 0
      %3832 = vmatpush1.bf16.msra.mxu0 %v3801
      %3833 = vmatprep.subr.bf16.mxu0 0
      %3834 = vmatpush1.bf16.msra.mxu0 %v3802
      %3835 = vmatprep.subr.bf16.mxu0 0
      %3836 = vmatpush1.bf16.msra.mxu0 %v3803
      %3837 = vmatprep.subr.bf16.mxu0 0
      %3838 = vmatpush1.bf16.msra.mxu0 0
      %3839 = vmatprep.subr.bf16.mxu0 0
      %3840 = vmatpush1.bf16.msra.mxu0 0
      %3841 = vmatprep.subr.bf16.mxu0 0
      %3842 = vmatpush1.bf16.msra.mxu0 0
      %3843 = vmatprep.subr.bf16.mxu0 0
      %3844 = vmatpush1.bf16.msra.mxu0 0
      %3845 = vmatprep.subr.bf16.mxu0 0
      %3846 = vmatpush1.bf16.msra.mxu0 0
      %3847 = vmatprep.subr.bf16.mxu0 0
      %3848 = vmatpush1.bf16.msra.mxu0 0
      %3849 = vmatprep.subr.bf16.mxu0 0
      %3850 = vmatpush1.bf16.msra.mxu0 0
      %3851 = vmatprep.subr.bf16.mxu0 0
      %3852 = vmatpush1.bf16.msra.mxu0 0
      %3853 = vmatprep.subr.bf16.mxu0 0
      %3854 = vmatpush1.bf16.msra.mxu0 0
      %3855 = vmatprep.subr.bf16.mxu0 0
      %3856 = vmatpush1.bf16.msra.mxu0 0
      %3857 = vmatprep.subr.bf16.mxu0 0
      %3858 = vmatpush1.bf16.msra.mxu0 0
      %3859 = vmatprep.subr.bf16.mxu0 0
      %3860 = vmatpush1.bf16.msra.mxu0 0
      %3861 = vmatprep.mubr.bf16.mxu0 0
      %3862 = vmatmul.mubr.bf16.gmra.mrb[0].mxu0 %v3809
      %v3863 = vpop.f32.mrb[0].mxu0
      %v3864 = vadd.f32 %v3731, %v3863
      %v3865 = vpop.f32.mrb[0].mxu0
      %v3866 = vpop.f32.mrb[0].mxu0
      %v3867 = vadd.f32 %v3734, %v3866
      %v3868 = vpop.f32.mrb[0].mxu0
      %3869 = vmatprep.mubr.bf16.mxu0 0
      %3870 = vmatmul.mubr.bf16.gmra.mrb[0].mxu0 %v3812
      %v3871 = vpop.f32.mrb[0].mxu0
      %v3872 = vadd.f32 %v3739, %v3871
      %v3873 = vpop.f32.mrb[0].mxu0
      %v3874 = vpop.f32.mrb[0].mxu0
      %v3875 = vadd.f32 %v3742, %v3874
      %v3876 = vpop.f32.mrb[0].mxu0
      %3877 = vmatprep.mubr.bf16.mxu0 0
      %3878 = vmatmul.mubr.bf16.gmra.mrb[0].mxu0 %v3815
      %v3879 = vpop.f32.mrb[0].mxu0
      %v3880 = vadd.f32 %v3747, %v3879
      %v3881 = vpop.f32.mrb[0].mxu0
      %v3882 = vpop.f32.mrb[0].mxu0
      %v3883 = vadd.f32 %v3750, %v3882
      %v3884 = vpop.f32.mrb[0].mxu0
      %3885 = vmatprep.mubr.bf16.mxu0 0
      %3886 = vmatmul.mubr.bf16.gmra.mrb[0].mxu0 %v3818
      %v3887 = vpop.f32.mrb[0].mxu0
      %v3888 = vadd.f32 %v3755, %v3887
      %v3889 = vpop.f32.mrb[0].mxu0
      %v3890 = vpop.f32.mrb[0].mxu0
      %v3891 = vadd.f32 %v3758, %v3890
      %v3892 = vpop.f32.mrb[0].mxu0
      %3893 = vmatprep.mubr.bf16.mxu0 0
      %3894 = vmatmul.mubr.bf16.gmra.mrb[0].mxu0 %v3821
      %v3895 = vpop.f32.mrb[0].mxu0
      %v3896 = vadd.f32 %v3763, %v3895
      %v3897 = vpop.f32.mrb[0].mxu0
      %v3898 = vpop.f32.mrb[0].mxu0
      %v3899 = vadd.f32 %v3766, %v3898
      %v3900 = vpop.f32.mrb[0].mxu0
      %3901 = vmatprep.mubr.bf16.mxu0 0
      %3902 = vmatmul.mubr.bf16.gmra.mrb[0].mxu0 %v3824
      %v3903 = vpop.f32.mrb[0].mxu0
      %v3904 = vadd.f32 %v3771, %v3903
      %v3905 = vpop.f32.mrb[0].mxu0
      %v3906 = vpop.f32.mrb[0].mxu0
      %v3907 = vadd.f32 %v3774, %v3906
      %v3908 = vpop.f32.mrb[0].mxu0
      %3909 = vmatprep.mubr.bf16.mxu0 0
      %3910 = vmatmul.mubr.bf16.gmra.mrb[0].mxu0 %v3827
      %v3911 = vpop.f32.mrb[0].mxu0
      %v3912 = vadd.f32 %v3779, %v3911
      %v3913 = vpop.f32.mrb[0].mxu0
      %v3914 = vpop.f32.mrb[0].mxu0
      %v3915 = vpop.f32.mrb[0].mxu0
      %3916 = vdwg.mxu0
      %s3917 = scalar_lea.vmem [#allocation3], 2
      %v3918 = vld [vmem:[%s3917] ss:$2 sm:$0xff]
      %s3919 = scalar_lea.vmem [#allocation3], 18
      %v3920 = vld [vmem:[%s3919] ss:$2 sm:$0xff]
      %s3921 = scalar_lea.vmem [#allocation3], 34
      %v3922 = vld [vmem:[%s3921] ss:$2 sm:$0xff]
      %s3923 = scalar_lea.vmem [#allocation3], 50
      %v3924 = vld [vmem:[%s3923] ss:$2 sm:$0xff]
      %s3925 = scalar_lea.vmem [#allocation3], 66
      %v3926 = vld [vmem:[%s3925] ss:$2 sm:$0xff]
      %s3927 = scalar_lea.vmem [#allocation3], 82
      %v3928 = vld [vmem:[%s3927] ss:$2 sm:$0xff]
      %s3929 = scalar_lea.vmem [#allocation3], 98
      %v3930 = vld [vmem:[%s3929] ss:$2 sm:$0xff]
      %s3931 = scalar_lea.vmem [#allocation3], 114
      %v3932 = vld [vmem:[%s3931] ss:$2 sm:$0xff]
      %s3933 = scalar_lea.vmem [#allocation3], 130
      %v3934 = vld [vmem:[%s3933] ss:$2 sm:$0xff]
      %s3935 = scalar_lea.vmem [#allocation3], 146
      %v3936 = vld [vmem:[%s3935] ss:$2 sm:$0xff]
      %s3937 = scalar_lea.vmem [#allocation3], 162
      %v3938 = vld [vmem:[%s3937] ss:$2 sm:$0xff]
      %s3939 = scalar_lea.vmem [#allocation3], 178
      %v3940 = vld [vmem:[%s3939] ss:$2 sm:$0xff]
      %s3941 = scalar_lea.vmem [#allocation3], 194
      %v3942 = vld [vmem:[%s3941] ss:$2 sm:$0x7]
      %v3943 = vpack.c.bf16 %v3920, %v3918
      %v3944 = vpack.c.bf16 %v3924, %v3922
      %v3945 = vpack.c.bf16 %v3928, %v3926
      %v3946 = vpack.c.bf16 %v3932, %v3930
      %v3947 = vpack.c.bf16 %v3936, %v3934
      %v3948 = vpack.c.bf16 %v3940, %v3938
      %v3949 = vpack.c.bf16 %v3942, %v3942
      %s3950 = scalar_lea.vmem %s4, 160
      %v3951 = vld [vmem:[%s3950] sm:$0xf]
      %v3952 = vld [vmem:[%s3950 + $0x4] sm:$0xf]
      %v3953 = vld [vmem:[%s3950 + $0x8] sm:$0xf]
      %v3954 = vld [vmem:[%s3950 + $0xc] sm:$0xf]
      %v3955 = vld [vmem:[%s3950 + $0x10] sm:$0xf]
      %v3956 = vld [vmem:[%s3950 + $0x14] sm:$0xf]
      %v3957 = vld [vmem:[%s3950 + $0x18] sm:$0xf]
      %v3958 = vld [vmem:[%s3950 + $0x1c] sm:$0xf]
      %v3967 = vunpack.c.l.b16 %v3951
      %v3968 = vunpack.c.l.b16 %v3952
      %v3969 = vunpack.c.l.b16 %v3953
      %v3970 = vunpack.c.l.b16 %v3954
      %v3971 = vunpack.c.l.b16 %v3955
      %v3972 = vunpack.c.l.b16 %v3956
      %v3973 = vunpack.c.l.b16 %v3957
      %v3974 = vunpack.c.l.b16 %v3958
      %v3975 = vpack.c.b16 %v3968, %v3967
      %v3976 = vpack.c.b16 %v3970, %v3969
      %v3977 = vpack.c.b16 %v3972, %v3971
      %v3978 = vpack.c.b16 %v3974, %v3973
      %v3984 = vsel %vm1501, %v3943, 0
      %v3987 = vsel %vm1501, %v3944, 0
      %v3990 = vsel %vm1501, %v3945, 0
      %v3993 = vsel %vm1501, %v3946, 0
      %v3996 = vsel %vm1501, %v3947, 0
      %v3999 = vsel %vm1501, %v3948, 0
      %v4002 = vsel %vm1501, %v3949, 0
      %4004 = vmatprep.subr.bf16.mxu0 0
      %4005 = vmatpush1.bf16.msra.mxu0 %v3975
      %4006 = vmatprep.subr.bf16.mxu0 0
      %4007 = vmatpush1.bf16.msra.mxu0 %v3976
      %4008 = vmatprep.subr.bf16.mxu0 0
      %4009 = vmatpush1.bf16.msra.mxu0 %v3977
      %4010 = vmatprep.subr.bf16.mxu0 0
      %4011 = vmatpush1.bf16.msra.mxu0 %v3978
      %4012 = vmatprep.subr.bf16.mxu0 0
      %4013 = vmatpush1.bf16.msra.mxu0 0
      %4014 = vmatprep.subr.bf16.mxu0 0
      %4015 = vmatpush1.bf16.msra.mxu0 0
      %4016 = vmatprep.subr.bf16.mxu0 0
      %4017 = vmatpush1.bf16.msra.mxu0 0
      %4018 = vmatprep.subr.bf16.mxu0 0
      %4019 = vmatpush1.bf16.msra.mxu0 0
      %4020 = vmatprep.subr.bf16.mxu0 0
      %4021 = vmatpush1.bf16.msra.mxu0 0
      %4022 = vmatprep.subr.bf16.mxu0 0
      %4023 = vmatpush1.bf16.msra.mxu0 0
      %4024 = vmatprep.subr.bf16.mxu0 0
      %4025 = vmatpush1.bf16.msra.mxu0 0
      %4026 = vmatprep.subr.bf16.mxu0 0
      %4027 = vmatpush1.bf16.msra.mxu0 0
      %4028 = vmatprep.subr.bf16.mxu0 0
      %4029 = vmatpush1.bf16.msra.mxu0 0
      %4030 = vmatprep.subr.bf16.mxu0 0
      %4031 = vmatpush1.bf16.msra.mxu0 0
      %4032 = vmatprep.subr.bf16.mxu0 0
      %4033 = vmatpush1.bf16.msra.mxu0 0
      %4034 = vmatprep.subr.bf16.mxu0 0
      %4035 = vmatpush1.bf16.msra.mxu0 0
      %4036 = vmatprep.mubr.bf16.mxu0 0
      %4037 = vmatmul.mubr.bf16.gmra.mrb[0].mxu0 %v3984
      %v4038 = vpop.f32.mrb[0].mxu0
      %v4039 = vadd.f32 0.0, %v4038
      %v4040 = vpop.f32.mrb[0].mxu0
      %v4041 = vpop.f32.mrb[0].mxu0
      %v4042 = vadd.f32 0.0, %v4041
      %v4043 = vpop.f32.mrb[0].mxu0
      %4044 = vmatprep.mubr.bf16.mxu0 0
      %4045 = vmatmul.mubr.bf16.gmra.mrb[0].mxu0 %v3987
      %v4046 = vpop.f32.mrb[0].mxu0
      %v4047 = vadd.f32 0.0, %v4046
      %v4048 = vpop.f32.mrb[0].mxu0
      %v4049 = vpop.f32.mrb[0].mxu0
      %v4050 = vadd.f32 0.0, %v4049
      %v4051 = vpop.f32.mrb[0].mxu0
      %4052 = vmatprep.mubr.bf16.mxu0 0
      %4053 = vmatmul.mubr.bf16.gmra.mrb[0].mxu0 %v3990
      %v4054 = vpop.f32.mrb[0].mxu0
      %v4055 = vadd.f32 0.0, %v4054
      %v4056 = vpop.f32.mrb[0].mxu0
      %v4057 = vpop.f32.mrb[0].mxu0
      %v4058 = vadd.f32 0.0, %v4057
      %v4059 = vpop.f32.mrb[0].mxu0
      %4060 = vmatprep.mubr.bf16.mxu0 0
      %4061 = vmatmul.mubr.bf16.gmra.mrb[0].mxu0 %v3993
      %v4062 = vpop.f32.mrb[0].mxu0
      %v4063 = vadd.f32 0.0, %v4062
      %v4064 = vpop.f32.mrb[0].mxu0
      %v4065 = vpop.f32.mrb[0].mxu0
      %v4066 = vadd.f32 0.0, %v4065
      %v4067 = vpop.f32.mrb[0].mxu0
      %4068 = vmatprep.mubr.bf16.mxu0 0
      %4069 = vmatmul.mubr.bf16.gmra.mrb[0].mxu0 %v3996
      %v4070 = vpop.f32.mrb[0].mxu0
      %v4071 = vadd.f32 0.0, %v4070
      %v4072 = vpop.f32.mrb[0].mxu0
      %v4073 = vpop.f32.mrb[0].mxu0
      %v4074 = vadd.f32 0.0, %v4073
      %v4075 = vpop.f32.mrb[0].mxu0
      %4076 = vmatprep.mubr.bf16.mxu0 0
      %4077 = vmatmul.mubr.bf16.gmra.mrb[0].mxu0 %v3999
      %v4078 = vpop.f32.mrb[0].mxu0
      %v4079 = vadd.f32 0.0, %v4078
      %v4080 = vpop.f32.mrb[0].mxu0
      %v4081 = vpop.f32.mrb[0].mxu0
      %v4082 = vadd.f32 0.0, %v4081
      %v4083 = vpop.f32.mrb[0].mxu0
      %4084 = vmatprep.mubr.bf16.mxu0 0
      %4085 = vmatmul.mubr.bf16.gmra.mrb[0].mxu0 %v4002
      %v4086 = vpop.f32.mrb[0].mxu0
      %v4087 = vadd.f32 0.0, %v4086
      %v4088 = vpop.f32.mrb[0].mxu0
      %v4089 = vpop.f32.mrb[0].mxu0
      %v4090 = vpop.f32.mrb[0].mxu0
      %4091 = vdwg.mxu0
      %v4092 = vadd.f32 %v3864, %v4039
      %v4093 = vadd.f32 %v3867, %v4042
      %v4094 = vadd.f32 %v3872, %v4047
      %v4095 = vadd.f32 %v3875, %v4050
      %v4096 = vadd.f32 %v3880, %v4055
      %v4097 = vadd.f32 %v3883, %v4058
      %v4098 = vadd.f32 %v3888, %v4063
      %v4099 = vadd.f32 %v3891, %v4066
      %v4100 = vadd.f32 %v3896, %v4071
      %v4101 = vadd.f32 %v3899, %v4074
      %v4102 = vadd.f32 %v3904, %v4079
      %v4103 = vadd.f32 %v3907, %v4082
      %v4104 = vadd.f32 %v3912, %v4087
      %v4105 = vmul.f32 %v4092, 0.5
      %v4106 = vmul.f32 %v4093, 0.5
      %v4107 = vmul.f32 %v4094, 0.5
      %v4108 = vmul.f32 %v4095, 0.5
      %v4109 = vmul.f32 %v4096, 0.5
      %v4110 = vmul.f32 %v4097, 0.5
      %v4111 = vmul.f32 %v4098, 0.5
      %v4112 = vmul.f32 %v4099, 0.5
      %v4113 = vmul.f32 %v4100, 0.5
      %v4114 = vmul.f32 %v4101, 0.5
      %v4115 = vmul.f32 %v4102, 0.5
      %v4116 = vmul.f32 %v4103, 0.5
      %v4117 = vmul.f32 %v4104, 0.5
      %v4118 = vmul.f32 %v4092, 0.044715
      %v4119 = vmul.f32 %v4093, 0.044715
      %v4120 = vmul.f32 %v4094, 0.044715
      %v4121 = vmul.f32 %v4095, 0.044715
      %v4122 = vmul.f32 %v4096, 0.044715
      %v4123 = vmul.f32 %v4097, 0.044715
      %v4124 = vmul.f32 %v4098, 0.044715
      %v4125 = vmul.f32 %v4099, 0.044715
      %v4126 = vmul.f32 %v4100, 0.044715
      %v4127 = vmul.f32 %v4101, 0.044715
      %v4128 = vmul.f32 %v4102, 0.044715
      %v4129 = vmul.f32 %v4103, 0.044715
      %v4130 = vmul.f32 %v4104, 0.044715
      %v4131 = vmul.f32 %v4118, %v4092
      %v4132 = vmul.f32 %v4119, %v4093
      %v4133 = vmul.f32 %v4120, %v4094
      %v4134 = vmul.f32 %v4121, %v4095
      %v4135 = vmul.f32 %v4122, %v4096
      %v4136 = vmul.f32 %v4123, %v4097
      %v4137 = vmul.f32 %v4124, %v4098
      %v4138 = vmul.f32 %v4125, %v4099
      %v4139 = vmul.f32 %v4126, %v4100
      %v4140 = vmul.f32 %v4127, %v4101
      %v4141 = vmul.f32 %v4128, %v4102
      %v4142 = vmul.f32 %v4129, %v4103
      %v4143 = vmul.f32 %v4130, %v4104
      %v4144 = vmul.f32 %v4131, %v4092
      %v4145 = vmul.f32 %v4132, %v4093
      %v4146 = vmul.f32 %v4133, %v4094
      %v4147 = vmul.f32 %v4134, %v4095
      %v4148 = vmul.f32 %v4135, %v4096
      %v4149 = vmul.f32 %v4136, %v4097
      %v4150 = vmul.f32 %v4137, %v4098
      %v4151 = vmul.f32 %v4138, %v4099
      %v4152 = vmul.f32 %v4139, %v4100
      %v4153 = vmul.f32 %v4140, %v4101
      %v4154 = vmul.f32 %v4141, %v4102
      %v4155 = vmul.f32 %v4142, %v4103
      %v4156 = vmul.f32 %v4143, %v4104
      %v4157 = vadd.f32 %v4092, %v4144
      %v4158 = vadd.f32 %v4093, %v4145
      %v4159 = vadd.f32 %v4094, %v4146
      %v4160 = vadd.f32 %v4095, %v4147
      %v4161 = vadd.f32 %v4096, %v4148
      %v4162 = vadd.f32 %v4097, %v4149
      %v4163 = vadd.f32 %v4098, %v4150
      %v4164 = vadd.f32 %v4099, %v4151
      %v4165 = vadd.f32 %v4100, %v4152
      %v4166 = vadd.f32 %v4101, %v4153
      %v4167 = vadd.f32 %v4102, %v4154
      %v4168 = vadd.f32 %v4103, %v4155
      %v4169 = vadd.f32 %v4104, %v4156
      %v4170 = vmul.f32 %v4157, 0.7978846
      %v4171 = vmul.f32 %v4158, 0.7978846
      %v4172 = vmul.f32 %v4159, 0.7978846
      %v4173 = vmul.f32 %v4160, 0.7978846
      %v4174 = vmul.f32 %v4161, 0.7978846
      %v4175 = vmul.f32 %v4162, 0.7978846
      %v4176 = vmul.f32 %v4163, 0.7978846
      %v4177 = vmul.f32 %v4164, 0.7978846
      %v4178 = vmul.f32 %v4165, 0.7978846
      %v4179 = vmul.f32 %v4166, 0.7978846
      %v4180 = vmul.f32 %v4167, 0.7978846
      %v4181 = vmul.f32 %v4168, 0.7978846
      %v4182 = vmul.f32 %v4169, 0.7978846
      %v4183 = vtanh.pop %v4170
      %v4184 = vtanh.pop %v4171
      %v4185 = vtanh.pop %v4172
      %v4186 = vtanh.pop %v4173
      %v4187 = vtanh.pop %v4174
      %v4188 = vtanh.pop %v4175
      %v4189 = vtanh.pop %v4176
      %v4190 = vtanh.pop %v4177
      %v4191 = vtanh.pop %v4178
      %v4192 = vtanh.pop %v4179
      %v4193 = vtanh.pop %v4180
      %v4194 = vtanh.pop %v4181
      %v4195 = vtanh.pop %v4182
      %v4196 = vadd.f32 %v4183, 1.0
      %v4197 = vadd.f32 %v4184, 1.0
      %v4198 = vadd.f32 %v4185, 1.0
      %v4199 = vadd.f32 %v4186, 1.0
      %v4200 = vadd.f32 %v4187, 1.0
      %v4201 = vadd.f32 %v4188, 1.0
      %v4202 = vadd.f32 %v4189, 1.0
      %v4203 = vadd.f32 %v4190, 1.0
      %v4204 = vadd.f32 %v4191, 1.0
      %v4205 = vadd.f32 %v4192, 1.0
      %v4206 = vadd.f32 %v4193, 1.0
      %v4207 = vadd.f32 %v4194, 1.0
      %v4208 = vadd.f32 %v4195, 1.0
      %v4209 = vmul.f32 %v4105, %v4196
      %v4210 = vmul.f32 %v4106, %v4197
      %v4211 = vmul.f32 %v4107, %v4198
      %v4212 = vmul.f32 %v4108, %v4199
      %v4213 = vmul.f32 %v4109, %v4200
      %v4214 = vmul.f32 %v4110, %v4201
      %v4215 = vmul.f32 %v4111, %v4202
      %v4216 = vmul.f32 %v4112, %v4203
      %v4217 = vmul.f32 %v4113, %v4204
      %v4218 = vmul.f32 %v4114, %v4205
      %v4219 = vmul.f32 %v4115, %v4206
      %v4220 = vmul.f32 %v4116, %v4207
      %v4221 = vmul.f32 %v4117, %v4208
      %4222 = vst.msk [vmem:[#allocation2] sm:$0xff] %vm1501, %v4209
      %4223 = vst.msk [vmem:[#allocation2 + $0x8] sm:$0xff] %vm1501, %v4210
      %4224 = vst.msk [vmem:[#allocation2 + $0x10] sm:$0xff] %vm1501, %v4211
      %4225 = vst.msk [vmem:[#allocation2 + $0x18] sm:$0xff] %vm1501, %v4212
      %4226 = vst.msk [vmem:[#allocation2 + $0x20] sm:$0xff] %vm1501, %v4213
      %4227 = vst.msk [vmem:[#allocation2 + $0x28] sm:$0xff] %vm1501, %v4214
      %4228 = vst.msk [vmem:[#allocation2 + $0x30] sm:$0xff] %vm1501, %v4215
      %4229 = vst.msk [vmem:[#allocation2 + $0x38] sm:$0xff] %vm1501, %v4216
      %4230 = vst.msk [vmem:[#allocation2 + $0x40] sm:$0xff] %vm1501, %v4217
      %4231 = vst.msk [vmem:[#allocation2 + $0x48] sm:$0xff] %vm1501, %v4218
      %4232 = vst.msk [vmem:[#allocation2 + $0x50] sm:$0xff] %vm1501, %v4219
      %4233 = vst.msk [vmem:[#allocation2 + $0x58] sm:$0xff] %vm1501, %v4220
      %vm4234 = vcmask 518144
      %4235 = vst.msk [vmem:[#allocation2 + $0x60] sm:$0x7] %vm4234, %v4221
      %v4236 = vld [vmem:[#allocation2] ss:$2 sm:$0xff]
      %v4237 = vld [vmem:[%s2483] ss:$2 sm:$0xff]
      %v4238 = vld [vmem:[%s2485] ss:$2 sm:$0xff]
      %v4239 = vld [vmem:[%s2487] ss:$2 sm:$0xff]
      %v4240 = vld [vmem:[%s2489] ss:$2 sm:$0xff]
      %v4241 = vld [vmem:[%s2491] ss:$2 sm:$0xff]
      %v4242 = vld [vmem:[%s2493] ss:$2 sm:$0x1]
      %v4243 = vpack.c.bf16 %v4237, %v4236
      %v4244 = vpack.c.bf16 %v4239, %v4238
      %v4245 = vpack.c.bf16 %v4241, %v4240
      %v4246 = vpack.c.bf16 %v4242, %v4242
      %s4247 = scalar_lea.vmem %s4, 192
      %v4248 = vld [vmem:[%s4247] sm:$0xf]
      %v4249 = vld [vmem:[%s4247 + $0x4] sm:$0xf]
      %v4250 = vld [vmem:[%s4247 + $0x8] sm:$0xf]
      %v4251 = vld [vmem:[%s4247 + $0xc] sm:$0xf]
      %v4252 = vld [vmem:[%s4247 + $0x10] sm:$0xf]
      %v4253 = vld [vmem:[%s4247 + $0x14] sm:$0xf]
      %v4254 = vld [vmem:[%s4247 + $0x18] sm:$0xf]
      %v4255 = vld [vmem:[%s4247 + $0x1c] sm:$0xf]
      %v4256 = vld [vmem:[%s2552] ss:$2 sm:$0xff]
      %v4257 = vld [vmem:[%s2554] ss:$2 sm:$0xff]
      %v4258 = vld [vmem:[%s2556] ss:$2 sm:$0xff]
      %v4259 = vld [vmem:[%s2558] ss:$2 sm:$0xff]
      %v4260 = vld [vmem:[%s2560] ss:$2 sm:$0xff]
      %v4261 = vld [vmem:[%s2562] ss:$2 sm:$0xff]
      %v4262 = vld [vmem:[%s2564] ss:$2 sm:$0x1]
      %v4263 = vpack.c.bf16 %v4257, %v4256
      %v4264 = vpack.c.bf16 %v4259, %v4258
      %v4265 = vpack.c.bf16 %v4261, %v4260
      %v4266 = vpack.c.bf16 %v4262, %v4262
      %s4267 = scalar_lea.vmem %s4, 224
      %v4268 = vld [vmem:[%s4267] sm:$0xf]
      %v4269 = vld [vmem:[%s4267 + $0x4] sm:$0xf]
      %v4270 = vld [vmem:[%s4267 + $0x8] sm:$0xf]
      %v4271 = vld [vmem:[%s4267 + $0xc] sm:$0xf]
      %v4272 = vld [vmem:[%s4267 + $0x10] sm:$0xf]
      %v4273 = vld [vmem:[%s4267 + $0x14] sm:$0xf]
      %v4274 = vld [vmem:[%s4267 + $0x18] sm:$0xf]
      %v4275 = vld [vmem:[%s4267 + $0x1c] sm:$0xf]
      %v4284 = vunpack.c.l.b16 %v4268
      %v4285 = vunpack.c.l.b16 %v4269
      %v4286 = vunpack.c.l.b16 %v4270
      %v4287 = vunpack.c.l.b16 %v4271
      %v4288 = vunpack.c.l.b16 %v4272
      %v4289 = vunpack.c.l.b16 %v4273
      %v4290 = vunpack.c.l.b16 %v4274
      %v4291 = vunpack.c.l.b16 %v4275
      %v4292 = vpack.c.b16 %v4285, %v4284
      %v4293 = vpack.c.b16 %v4287, %v4286
      %v4294 = vpack.c.b16 %v4289, %v4288
      %v4295 = vpack.c.b16 %v4291, %v4290
      %v4301 = vsel %vm1501, %v4263, 0
      %v4304 = vsel %vm1501, %v4264, 0
      %v4307 = vsel %vm1501, %v4265, 0
      %v4310 = vsel %vm1501, %v4266, 0
      %4312 = vmatprep.subr.bf16.mxu0 0
      %4313 = vmatpush1.bf16.msra.mxu0 %v4292
      %4314 = vmatprep.subr.bf16.mxu0 0
      %4315 = vmatpush1.bf16.msra.mxu0 %v4293
      %4316 = vmatprep.subr.bf16.mxu0 0
      %4317 = vmatpush1.bf16.msra.mxu0 %v4294
      %4318 = vmatprep.subr.bf16.mxu0 0
      %4319 = vmatpush1.bf16.msra.mxu0 %v4295
      %4320 = vmatprep.subr.bf16.mxu0 0
      %4321 = vmatpush1.bf16.msra.mxu0 0
      %4322 = vmatprep.subr.bf16.mxu0 0
      %4323 = vmatpush1.bf16.msra.mxu0 0
      %4324 = vmatprep.subr.bf16.mxu0 0
      %4325 = vmatpush1.bf16.msra.mxu0 0
      %4326 = vmatprep.subr.bf16.mxu0 0
      %4327 = vmatpush1.bf16.msra.mxu0 0
      %4328 = vmatprep.subr.bf16.mxu0 0
      %4329 = vmatpush1.bf16.msra.mxu0 0
      %4330 = vmatprep.subr.bf16.mxu0 0
      %4331 = vmatpush1.bf16.msra.mxu0 0
      %4332 = vmatprep.subr.bf16.mxu0 0
      %4333 = vmatpush1.bf16.msra.mxu0 0
      %4334 = vmatprep.subr.bf16.mxu0 0
      %4335 = vmatpush1.bf16.msra.mxu0 0
      %4336 = vmatprep.subr.bf16.mxu0 0
      %4337 = vmatpush1.bf16.msra.mxu0 0
      %4338 = vmatprep.subr.bf16.mxu0 0
      %4339 = vmatpush1.bf16.msra.mxu0 0
      %4340 = vmatprep.subr.bf16.mxu0 0
      %4341 = vmatpush1.bf16.msra.mxu0 0
      %4342 = vmatprep.subr.bf16.mxu0 0
      %4343 = vmatpush1.bf16.msra.mxu0 0
      %4344 = vmatprep.mubr.bf16.mxu0 0
      %4345 = vmatmul.mubr.bf16.gmra.mrb[0].mxu0 %v4301
      %v4346 = vpop.f32.mrb[0].mxu0
      %v4347 = vadd.f32 0.0, %v4346
      %v4348 = vpop.f32.mrb[0].mxu0
      %v4349 = vpop.f32.mrb[0].mxu0
      %v4350 = vadd.f32 0.0, %v4349
      %v4351 = vpop.f32.mrb[0].mxu0
      %4352 = vmatprep.mubr.bf16.mxu0 0
      %4353 = vmatmul.mubr.bf16.gmra.mrb[0].mxu0 %v4304
      %v4354 = vpop.f32.mrb[0].mxu0
      %v4355 = vadd.f32 0.0, %v4354
      %v4356 = vpop.f32.mrb[0].mxu0
      %v4357 = vpop.f32.mrb[0].mxu0
      %v4358 = vadd.f32 0.0, %v4357
      %v4359 = vpop.f32.mrb[0].mxu0
      %4360 = vmatprep.mubr.bf16.mxu0 0
      %4361 = vmatmul.mubr.bf16.gmra.mrb[0].mxu0 %v4307
      %v4362 = vpop.f32.mrb[0].mxu0
      %v4363 = vadd.f32 0.0, %v4362
      %v4364 = vpop.f32.mrb[0].mxu0
      %v4365 = vpop.f32.mrb[0].mxu0
      %v4366 = vadd.f32 0.0, %v4365
      %v4367 = vpop.f32.mrb[0].mxu0
      %4368 = vmatprep.mubr.bf16.mxu0 0
      %4369 = vmatmul.mubr.bf16.gmra.mrb[0].mxu0 %v4310
      %v4370 = vpop.f32.mrb[0].mxu0
      %v4371 = vadd.f32 0.0, %v4370
      %v4372 = vpop.f32.mrb[0].mxu0
      %v4373 = vpop.f32.mrb[0].mxu0
      %v4374 = vpop.f32.mrb[0].mxu0
      %4375 = vdwg.mxu0
      %v4384 = vunpack.c.l.b16 %v4248
      %v4385 = vunpack.c.l.b16 %v4249
      %v4386 = vunpack.c.l.b16 %v4250
      %v4387 = vunpack.c.l.b16 %v4251
      %v4388 = vunpack.c.l.b16 %v4252
      %v4389 = vunpack.c.l.b16 %v4253
      %v4390 = vunpack.c.l.b16 %v4254
      %v4391 = vunpack.c.l.b16 %v4255
      %v4392 = vpack.c.b16 %v4385, %v4384
      %v4393 = vpack.c.b16 %v4387, %v4386
      %v4394 = vpack.c.b16 %v4389, %v4388
      %v4395 = vpack.c.b16 %v4391, %v4390
      %v4401 = vsel %vm1501, %v4243, 0
      %v4404 = vsel %vm1501, %v4244, 0
      %v4407 = vsel %vm1501, %v4245, 0
      %v4410 = vsel %vm1501, %v4246, 0
      %4412 = vmatprep.subr.bf16.mxu0 0
      %4413 = vmatpush1.bf16.msra.mxu0 %v4392
      %4414 = vmatprep.subr.bf16.mxu0 0
      %4415 = vmatpush1.bf16.msra.mxu0 %v4393
      %4416 = vmatprep.subr.bf16.mxu0 0
      %4417 = vmatpush1.bf16.msra.mxu0 %v4394
      %4418 = vmatprep.subr.bf16.mxu0 0
      %4419 = vmatpush1.bf16.msra.mxu0 %v4395
      %4420 = vmatprep.subr.bf16.mxu0 0
      %4421 = vmatpush1.bf16.msra.mxu0 0
      %4422 = vmatprep.subr.bf16.mxu0 0
      %4423 = vmatpush1.bf16.msra.mxu0 0
      %4424 = vmatprep.subr.bf16.mxu0 0
      %4425 = vmatpush1.bf16.msra.mxu0 0
      %4426 = vmatprep.subr.bf16.mxu0 0
      %4427 = vmatpush1.bf16.msra.mxu0 0
      %4428 = vmatprep.subr.bf16.mxu0 0
      %4429 = vmatpush1.bf16.msra.mxu0 0
      %4430 = vmatprep.subr.bf16.mxu0 0
      %4431 = vmatpush1.bf16.msra.mxu0 0
      %4432 = vmatprep.subr.bf16.mxu0 0
      %4433 = vmatpush1.bf16.msra.mxu0 0
      %4434 = vmatprep.subr.bf16.mxu0 0
      %4435 = vmatpush1.bf16.msra.mxu0 0
      %4436 = vmatprep.subr.bf16.mxu0 0
      %4437 = vmatpush1.bf16.msra.mxu0 0
      %4438 = vmatprep.subr.bf16.mxu0 0
      %4439 = vmatpush1.bf16.msra.mxu0 0
      %4440 = vmatprep.subr.bf16.mxu0 0
      %4441 = vmatpush1.bf16.msra.mxu0 0
      %4442 = vmatprep.subr.bf16.mxu0 0
      %4443 = vmatpush1.bf16.msra.mxu0 0
      %4444 = vmatprep.mubr.bf16.mxu0 0
      %4445 = vmatmul.mubr.bf16.gmra.mrb[0].mxu0 %v4401
      %v4446 = vpop.f32.mrb[0].mxu0
      %v4447 = vadd.f32 %v4347, %v4446
      %v4448 = vpop.f32.mrb[0].mxu0
      %v4449 = vpop.f32.mrb[0].mxu0
      %v4450 = vadd.f32 %v4350, %v4449
      %v4451 = vpop.f32.mrb[0].mxu0
      %4452 = vmatprep.mubr.bf16.mxu0 0
      %4453 = vmatmul.mubr.bf16.gmra.mrb[0].mxu0 %v4404
      %v4454 = vpop.f32.mrb[0].mxu0
      %v4455 = vadd.f32 %v4355, %v4454
      %v4456 = vpop.f32.mrb[0].mxu0
      %v4457 = vpop.f32.mrb[0].mxu0
      %v4458 = vadd.f32 %v4358, %v4457
      %v4459 = vpop.f32.mrb[0].mxu0
      %4460 = vmatprep.mubr.bf16.mxu0 0
      %4461 = vmatmul.mubr.bf16.gmra.mrb[0].mxu0 %v4407
      %v4462 = vpop.f32.mrb[0].mxu0
      %v4463 = vadd.f32 %v4363, %v4462
      %v4464 = vpop.f32.mrb[0].mxu0
      %v4465 = vpop.f32.mrb[0].mxu0
      %v4466 = vadd.f32 %v4366, %v4465
      %v4467 = vpop.f32.mrb[0].mxu0
      %4468 = vmatprep.mubr.bf16.mxu0 0
      %4469 = vmatmul.mubr.bf16.gmra.mrb[0].mxu0 %v4410
      %v4470 = vpop.f32.mrb[0].mxu0
      %v4471 = vadd.f32 %v4371, %v4470
      %v4472 = vpop.f32.mrb[0].mxu0
      %v4473 = vpop.f32.mrb[0].mxu0
      %v4474 = vpop.f32.mrb[0].mxu0
      %4475 = vdwg.mxu0
      %v4476 = vld [vmem:[%s3022] ss:$2 sm:$0xff]
      %v4477 = vld [vmem:[%s3024] ss:$2 sm:$0xff]
      %v4478 = vld [vmem:[%s3026] ss:$2 sm:$0xff]
      %v4479 = vld [vmem:[%s3028] ss:$2 sm:$0xff]
      %v4480 = vld [vmem:[%s3030] ss:$2 sm:$0xff]
      %v4481 = vld [vmem:[%s3032] ss:$2 sm:$0xff]
      %v4482 = vld [vmem:[%s3034] ss:$2 sm:$0x1]
      %v4483 = vpack.c.bf16 %v4477, %v4476
      %v4484 = vpack.c.bf16 %v4479, %v4478
      %v4485 = vpack.c.bf16 %v4481, %v4480
      %v4486 = vpack.c.bf16 %v4482, %v4482
      %s4487 = scalar_lea.vmem %s4, 256
      %v4488 = vld [vmem:[%s4487] sm:$0xf]
      %v4489 = vld [vmem:[%s4487 + $0x4] sm:$0xf]
      %v4490 = vld [vmem:[%s4487 + $0x8] sm:$0xf]
      %v4491 = vld [vmem:[%s4487 + $0xc] sm:$0xf]
      %v4492 = vld [vmem:[%s4487 + $0x10] sm:$0xf]
      %v4493 = vld [vmem:[%s4487 + $0x14] sm:$0xf]
      %v4494 = vld [vmem:[%s4487 + $0x18] sm:$0xf]
      %v4495 = vld [vmem:[%s4487 + $0x1c] sm:$0xf]
      %v4504 = vunpack.c.l.b16 %v4488
      %v4505 = vunpack.c.l.b16 %v4489
      %v4506 = vunpack.c.l.b16 %v4490
      %v4507 = vunpack.c.l.b16 %v4491
      %v4508 = vunpack.c.l.b16 %v4492
      %v4509 = vunpack.c.l.b16 %v4493
      %v4510 = vunpack.c.l.b16 %v4494
      %v4511 = vunpack.c.l.b16 %v4495
      %v4512 = vpack.c.b16 %v4505, %v4504
      %v4513 = vpack.c.b16 %v4507, %v4506
      %v4514 = vpack.c.b16 %v4509, %v4508
      %v4515 = vpack.c.b16 %v4511, %v4510
      %v4521 = vsel %vm1501, %v4483, 0
      %v4524 = vsel %vm1501, %v4484, 0
      %v4527 = vsel %vm1501, %v4485, 0
      %v4530 = vsel %vm1501, %v4486, 0
      %4532 = vmatprep.subr.bf16.mxu0 0
      %4533 = vmatpush1.bf16.msra.mxu0 %v4512
      %4534 = vmatprep.subr.bf16.mxu0 0
      %4535 = vmatpush1.bf16.msra.mxu0 %v4513
      %4536 = vmatprep.subr.bf16.mxu0 0
      %4537 = vmatpush1.bf16.msra.mxu0 %v4514
      %4538 = vmatprep.subr.bf16.mxu0 0
      %4539 = vmatpush1.bf16.msra.mxu0 %v4515
      %4540 = vmatprep.subr.bf16.mxu0 0
      %4541 = vmatpush1.bf16.msra.mxu0 0
      %4542 = vmatprep.subr.bf16.mxu0 0
      %4543 = vmatpush1.bf16.msra.mxu0 0
      %4544 = vmatprep.subr.bf16.mxu0 0
      %4545 = vmatpush1.bf16.msra.mxu0 0
      %4546 = vmatprep.subr.bf16.mxu0 0
      %4547 = vmatpush1.bf16.msra.mxu0 0
      %4548 = vmatprep.subr.bf16.mxu0 0
      %4549 = vmatpush1.bf16.msra.mxu0 0
      %4550 = vmatprep.subr.bf16.mxu0 0
      %4551 = vmatpush1.bf16.msra.mxu0 0
      %4552 = vmatprep.subr.bf16.mxu0 0
      %4553 = vmatpush1.bf16.msra.mxu0 0
      %4554 = vmatprep.subr.bf16.mxu0 0
      %4555 = vmatpush1.bf16.msra.mxu0 0
      %4556 = vmatprep.subr.bf16.mxu0 0
      %4557 = vmatpush1.bf16.msra.mxu0 0
      %4558 = vmatprep.subr.bf16.mxu0 0
      %4559 = vmatpush1.bf16.msra.mxu0 0
      %4560 = vmatprep.subr.bf16.mxu0 0
      %4561 = vmatpush1.bf16.msra.mxu0 0
      %4562 = vmatprep.subr.bf16.mxu0 0
      %4563 = vmatpush1.bf16.msra.mxu0 0
      %4564 = vmatprep.mubr.bf16.mxu0 0
      %4565 = vmatmul.mubr.bf16.gmra.mrb[0].mxu0 %v4521
      %v4566 = vpop.f32.mrb[0].mxu0
      %v4567 = vadd.f32 0.0, %v4566
      %v4568 = vpop.f32.mrb[0].mxu0
      %v4569 = vpop.f32.mrb[0].mxu0
      %v4570 = vadd.f32 0.0, %v4569
      %v4571 = vpop.f32.mrb[0].mxu0
      %4572 = vmatprep.mubr.bf16.mxu0 0
      %4573 = vmatmul.mubr.bf16.gmra.mrb[0].mxu0 %v4524
      %v4574 = vpop.f32.mrb[0].mxu0
      %v4575 = vadd.f32 0.0, %v4574
      %v4576 = vpop.f32.mrb[0].mxu0
      %v4577 = vpop.f32.mrb[0].mxu0
      %v4578 = vadd.f32 0.0, %v4577
      %v4579 = vpop.f32.mrb[0].mxu0
      %4580 = vmatprep.mubr.bf16.mxu0 0
      %4581 = vmatmul.mubr.bf16.gmra.mrb[0].mxu0 %v4527
      %v4582 = vpop.f32.mrb[0].mxu0
      %v4583 = vadd.f32 0.0, %v4582
      %v4584 = vpop.f32.mrb[0].mxu0
      %v4585 = vpop.f32.mrb[0].mxu0
      %v4586 = vadd.f32 0.0, %v4585
      %v4587 = vpop.f32.mrb[0].mxu0
      %4588 = vmatprep.mubr.bf16.mxu0 0
      %4589 = vmatmul.mubr.bf16.gmra.mrb[0].mxu0 %v4530
      %v4590 = vpop.f32.mrb[0].mxu0
      %v4591 = vadd.f32 0.0, %v4590
      %v4592 = vpop.f32.mrb[0].mxu0
      %v4593 = vpop.f32.mrb[0].mxu0
      %v4594 = vpop.f32.mrb[0].mxu0
      %4595 = vdwg.mxu0
      %v4596 = vadd.f32 %v4447, %v4567
      %v4597 = vadd.f32 %v4450, %v4570
      %v4598 = vadd.f32 %v4455, %v4575
      %v4599 = vadd.f32 %v4458, %v4578
      %v4600 = vadd.f32 %v4463, %v4583
      %v4601 = vadd.f32 %v4466, %v4586
      %v4602 = vadd.f32 %v4471, %v4591
      %v4603 = vmul.f32 %v4596, 0.5
      %v4604 = vmul.f32 %v4597, 0.5
      %v4605 = vmul.f32 %v4598, 0.5
      %v4606 = vmul.f32 %v4599, 0.5
      %v4607 = vmul.f32 %v4600, 0.5
      %v4608 = vmul.f32 %v4601, 0.5
      %v4609 = vmul.f32 %v4602, 0.5
      %v4610 = vmul.f32 %v4596, 0.044715
      %v4611 = vmul.f32 %v4597, 0.044715
      %v4612 = vmul.f32 %v4598, 0.044715
      %v4613 = vmul.f32 %v4599, 0.044715
      %v4614 = vmul.f32 %v4600, 0.044715
      %v4615 = vmul.f32 %v4601, 0.044715
      %v4616 = vmul.f32 %v4602, 0.044715
      %v4617 = vmul.f32 %v4610, %v4596
      %v4618 = vmul.f32 %v4611, %v4597
      %v4619 = vmul.f32 %v4612, %v4598
      %v4620 = vmul.f32 %v4613, %v4599
      %v4621 = vmul.f32 %v4614, %v4600
      %v4622 = vmul.f32 %v4615, %v4601
      %v4623 = vmul.f32 %v4616, %v4602
      %v4624 = vmul.f32 %v4617, %v4596
      %v4625 = vmul.f32 %v4618, %v4597
      %v4626 = vmul.f32 %v4619, %v4598
      %v4627 = vmul.f32 %v4620, %v4599
      %v4628 = vmul.f32 %v4621, %v4600
      %v4629 = vmul.f32 %v4622, %v4601
      %v4630 = vmul.f32 %v4623, %v4602
      %v4631 = vadd.f32 %v4596, %v4624
      %v4632 = vadd.f32 %v4597, %v4625
      %v4633 = vadd.f32 %v4598, %v4626
      %v4634 = vadd.f32 %v4599, %v4627
      %v4635 = vadd.f32 %v4600, %v4628
      %v4636 = vadd.f32 %v4601, %v4629
      %v4637 = vadd.f32 %v4602, %v4630
      %v4638 = vmul.f32 %v4631, 0.7978846
      %v4639 = vmul.f32 %v4632, 0.7978846
      %v4640 = vmul.f32 %v4633, 0.7978846
      %v4641 = vmul.f32 %v4634, 0.7978846
      %v4642 = vmul.f32 %v4635, 0.7978846
      %v4643 = vmul.f32 %v4636, 0.7978846
      %v4644 = vmul.f32 %v4637, 0.7978846
      %v4645 = vtanh.pop %v4638
      %v4646 = vtanh.pop %v4639
      %v4647 = vtanh.pop %v4640
      %v4648 = vtanh.pop %v4641
      %v4649 = vtanh.pop %v4642
      %v4650 = vtanh.pop %v4643
      %v4651 = vtanh.pop %v4644
      %v4652 = vadd.f32 %v4645, 1.0
      %v4653 = vadd.f32 %v4646, 1.0
      %v4654 = vadd.f32 %v4647, 1.0
      %v4655 = vadd.f32 %v4648, 1.0
      %v4656 = vadd.f32 %v4649, 1.0
      %v4657 = vadd.f32 %v4650, 1.0
      %v4658 = vadd.f32 %v4651, 1.0
      %v4659 = vmul.f32 %v4603, %v4652
      %v4660 = vmul.f32 %v4604, %v4653
      %v4661 = vmul.f32 %v4605, %v4654
      %v4662 = vmul.f32 %v4606, %v4655
      %v4663 = vmul.f32 %v4607, %v4656
      %v4664 = vmul.f32 %v4608, %v4657
      %v4665 = vmul.f32 %v4609, %v4658
      %4666 = vst.msk [vmem:[#allocation3] sm:$0xff] %vm1501, %v4659
      %4667 = vst.msk [vmem:[#allocation3 + $0x8] sm:$0xff] %vm1501, %v4660
      %4668 = vst.msk [vmem:[#allocation3 + $0x10] sm:$0xff] %vm1501, %v4661
      %4669 = vst.msk [vmem:[#allocation3 + $0x18] sm:$0xff] %vm1501, %v4662
      %4670 = vst.msk [vmem:[#allocation3 + $0x20] sm:$0xff] %vm1501, %v4663
      %4671 = vst.msk [vmem:[#allocation3 + $0x28] sm:$0xff] %vm1501, %v4664
      %vm4672 = vcmask 516096
      %4673 = vst.msk [vmem:[#allocation3 + $0x30] sm:$0x1] %vm4672, %v4665
      %v4674 = vld [vmem:[#allocation3] ss:$2 sm:$0xff]
      %v4675 = vld [vmem:[%s3569] ss:$2 sm:$0xff]
      %v4676 = vld [vmem:[%s3571] ss:$2 sm:$0xff]
      %v4677 = vpack.c.bf16 %v4675, %v4674
      %v4678 = vpack.c.bf16 %v4676, %v4676
      %s4679 = scalar_lea.vmem %s4, 288
      %v4680 = vld [vmem:[%s4679] sm:$0xf]
      %v4681 = vld [vmem:[%s4679 + $0x4] sm:$0xf]
      %v4682 = vld [vmem:[%s4679 + $0x8] sm:$0xf]
      %v4683 = vld [vmem:[%s4679 + $0xc] sm:$0xf]
      %v4684 = vld [vmem:[%s4679 + $0x10] sm:$0xf]
      %v4685 = vld [vmem:[%s4679 + $0x14] sm:$0xf]
      %v4686 = vld [vmem:[%s4679 + $0x18] sm:$0xf]
      %v4687 = vld [vmem:[%s4679 + $0x1c] sm:$0xf]
      %v4688 = vld [vmem:[%s3609] ss:$2 sm:$0xff]
      %v4689 = vld [vmem:[%s3611] ss:$2 sm:$0xff]
      %v4690 = vld [vmem:[%s3613] ss:$2 sm:$0xff]
      %v4691 = vpack.c.bf16 %v4689, %v4688
      %v4692 = vpack.c.bf16 %v4690, %v4690
      %s4693 = scalar_lea.vmem %s4, 320
      %v4694 = vld [vmem:[%s4693] sm:$0xf]
      %v4695 = vld [vmem:[%s4693 + $0x4] sm:$0xf]
      %v4696 = vld [vmem:[%s4693 + $0x8] sm:$0xf]
      %v4697 = vld [vmem:[%s4693 + $0xc] sm:$0xf]
      %v4698 = vld [vmem:[%s4693 + $0x10] sm:$0xf]
      %v4699 = vld [vmem:[%s4693 + $0x14] sm:$0xf]
      %v4700 = vld [vmem:[%s4693 + $0x18] sm:$0xf]
      %v4701 = vld [vmem:[%s4693 + $0x1c] sm:$0xf]
      %v4710 = vunpack.c.l.b16 %v4694
      %v4711 = vunpack.c.l.b16 %v4695
      %v4712 = vunpack.c.l.b16 %v4696
      %v4713 = vunpack.c.l.b16 %v4697
      %v4714 = vunpack.c.l.b16 %v4698
      %v4715 = vunpack.c.l.b16 %v4699
      %v4716 = vunpack.c.l.b16 %v4700
      %v4717 = vunpack.c.l.b16 %v4701
      %v4718 = vpack.c.b16 %v4711, %v4710
      %v4719 = vpack.c.b16 %v4713, %v4712
      %v4720 = vpack.c.b16 %v4715, %v4714
      %v4721 = vpack.c.b16 %v4717, %v4716
      %v4727 = vsel %vm1501, %v4691, 0
      %v4730 = vsel %vm1501, %v4692, 0
      %4732 = vmatprep.subr.bf16.mxu0 0
      %4733 = vmatpush1.bf16.msra.mxu0 %v4718
      %4734 = vmatprep.subr.bf16.mxu0 0
      %4735 = vmatpush1.bf16.msra.mxu0 %v4719
      %4736 = vmatprep.subr.bf16.mxu0 0
      %4737 = vmatpush1.bf16.msra.mxu0 %v4720
      %4738 = vmatprep.subr.bf16.mxu0 0
      %4739 = vmatpush1.bf16.msra.mxu0 %v4721
      %4740 = vmatprep.subr.bf16.mxu0 0
      %4741 = vmatpush1.bf16.msra.mxu0 0
      %4742 = vmatprep.subr.bf16.mxu0 0
      %4743 = vmatpush1.bf16.msra.mxu0 0
      %4744 = vmatprep.subr.bf16.mxu0 0
      %4745 = vmatpush1.bf16.msra.mxu0 0
      %4746 = vmatprep.subr.bf16.mxu0 0
      %4747 = vmatpush1.bf16.msra.mxu0 0
      %4748 = vmatprep.subr.bf16.mxu0 0
      %4749 = vmatpush1.bf16.msra.mxu0 0
      %4750 = vmatprep.subr.bf16.mxu0 0
      %4751 = vmatpush1.bf16.msra.mxu0 0
      %4752 = vmatprep.subr.bf16.mxu0 0
      %4753 = vmatpush1.bf16.msra.mxu0 0
      %4754 = vmatprep.subr.bf16.mxu0 0
      %4755 = vmatpush1.bf16.msra.mxu0 0
      %4756 = vmatprep.subr.bf16.mxu0 0
      %4757 = vmatpush1.bf16.msra.mxu0 0
      %4758 = vmatprep.subr.bf16.mxu0 0
      %4759 = vmatpush1.bf16.msra.mxu0 0
      %4760 = vmatprep.subr.bf16.mxu0 0
      %4761 = vmatpush1.bf16.msra.mxu0 0
      %4762 = vmatprep.subr.bf16.mxu0 0
      %4763 = vmatpush1.bf16.msra.mxu0 0
      %4764 = vmatprep.mubr.bf16.mxu0 0
      %4765 = vmatmul.mubr.bf16.gmra.mrb[0].mxu0 %v4727
      %v4766 = vpop.f32.mrb[0].mxu0
      %v4767 = vadd.f32 0.0, %v4766
      %v4768 = vpop.f32.mrb[0].mxu0
      %v4769 = vpop.f32.mrb[0].mxu0
      %v4770 = vadd.f32 0.0, %v4769
      %v4771 = vpop.f32.mrb[0].mxu0
      %4772 = vmatprep.mubr.bf16.mxu0 0
      %4773 = vmatmul.mubr.bf16.gmra.mrb[0].mxu0 %v4730
      %v4774 = vpop.f32.mrb[0].mxu0
      %v4775 = vadd.f32 0.0, %v4774
      %v4776 = vpop.f32.mrb[0].mxu0
      %v4777 = vpop.f32.mrb[0].mxu0
      %v4778 = vpop.f32.mrb[0].mxu0
      %4779 = vdwg.mxu0
      %v4788 = vunpack.c.l.b16 %v4680
      %v4789 = vunpack.c.l.b16 %v4681
      %v4790 = vunpack.c.l.b16 %v4682
      %v4791 = vunpack.c.l.b16 %v4683
      %v4792 = vunpack.c.l.b16 %v4684
      %v4793 = vunpack.c.l.b16 %v4685
      %v4794 = vunpack.c.l.b16 %v4686
      %v4795 = vunpack.c.l.b16 %v4687
      %v4796 = vpack.c.b16 %v4789, %v4788
      %v4797 = vpack.c.b16 %v4791, %v4790
      %v4798 = vpack.c.b16 %v4793, %v4792
      %v4799 = vpack.c.b16 %v4795, %v4794
      %v4805 = vsel %vm1501, %v4677, 0
      %v4808 = vsel %vm1501, %v4678, 0
      %4810 = vmatprep.subr.bf16.mxu0 0
      %4811 = vmatpush1.bf16.msra.mxu0 %v4796
      %4812 = vmatprep.subr.bf16.mxu0 0
      %4813 = vmatpush1.bf16.msra.mxu0 %v4797
      %4814 = vmatprep.subr.bf16.mxu0 0
      %4815 = vmatpush1.bf16.msra.mxu0 %v4798
      %4816 = vmatprep.subr.bf16.mxu0 0
      %4817 = vmatpush1.bf16.msra.mxu0 %v4799
      %4818 = vmatprep.subr.bf16.mxu0 0
      %4819 = vmatpush1.bf16.msra.mxu0 0
      %4820 = vmatprep.subr.bf16.mxu0 0
      %4821 = vmatpush1.bf16.msra.mxu0 0
      %4822 = vmatprep.subr.bf16.mxu0 0
      %4823 = vmatpush1.bf16.msra.mxu0 0
      %4824 = vmatprep.subr.bf16.mxu0 0
      %4825 = vmatpush1.bf16.msra.mxu0 0
      %4826 = vmatprep.subr.bf16.mxu0 0
      %4827 = vmatpush1.bf16.msra.mxu0 0
      %4828 = vmatprep.subr.bf16.mxu0 0
      %4829 = vmatpush1.bf16.msra.mxu0 0
      %4830 = vmatprep.subr.bf16.mxu0 0
      %4831 = vmatpush1.bf16.msra.mxu0 0
      %4832 = vmatprep.subr.bf16.mxu0 0
      %4833 = vmatpush1.bf16.msra.mxu0 0
      %4834 = vmatprep.subr.bf16.mxu0 0
      %4835 = vmatpush1.bf16.msra.mxu0 0
      %4836 = vmatprep.subr.bf16.mxu0 0
      %4837 = vmatpush1.bf16.msra.mxu0 0
      %4838 = vmatprep.subr.bf16.mxu0 0
      %4839 = vmatpush1.bf16.msra.mxu0 0
      %4840 = vmatprep.subr.bf16.mxu0 0
      %4841 = vmatpush1.bf16.msra.mxu0 0
      %4842 = vmatprep.mubr.bf16.mxu0 0
      %4843 = vmatmul.mubr.bf16.gmra.mrb[0].mxu0 %v4805
      %v4844 = vpop.f32.mrb[0].mxu0
      %v4845 = vadd.f32 %v4767, %v4844
      %v4846 = vpop.f32.mrb[0].mxu0
      %v4847 = vpop.f32.mrb[0].mxu0
      %v4848 = vadd.f32 %v4770, %v4847
      %v4849 = vpop.f32.mrb[0].mxu0
      %4850 = vmatprep.mubr.bf16.mxu0 0
      %4851 = vmatmul.mubr.bf16.gmra.mrb[0].mxu0 %v4808
      %v4852 = vpop.f32.mrb[0].mxu0
      %v4853 = vadd.f32 %v4775, %v4852
      %v4854 = vpop.f32.mrb[0].mxu0
      %v4855 = vpop.f32.mrb[0].mxu0
      %v4856 = vpop.f32.mrb[0].mxu0
      %4857 = vdwg.mxu0
      %v4858 = vld [vmem:[%s3917] ss:$2 sm:$0xff]
      %v4859 = vld [vmem:[%s3919] ss:$2 sm:$0xff]
      %v4860 = vld [vmem:[%s3921] ss:$2 sm:$0xff]
      %v4861 = vpack.c.bf16 %v4859, %v4858
      %v4862 = vpack.c.bf16 %v4860, %v4860
      %s4863 = scalar_lea.vmem %s4, 352
      %v4864 = vld [vmem:[%s4863] sm:$0xf]
      %v4865 = vld [vmem:[%s4863 + $0x4] sm:$0xf]
      %v4866 = vld [vmem:[%s4863 + $0x8] sm:$0xf]
      %v4867 = vld [vmem:[%s4863 + $0xc] sm:$0xf]
      %v4868 = vld [vmem:[%s4863 + $0x10] sm:$0xf]
      %v4869 = vld [vmem:[%s4863 + $0x14] sm:$0xf]
      %v4870 = vld [vmem:[%s4863 + $0x18] sm:$0xf]
      %v4871 = vld [vmem:[%s4863 + $0x1c] sm:$0xf]
      %v4880 = vunpack.c.l.b16 %v4864
      %v4881 = vunpack.c.l.b16 %v4865
      %v4882 = vunpack.c.l.b16 %v4866
      %v4883 = vunpack.c.l.b16 %v4867
      %v4884 = vunpack.c.l.b16 %v4868
      %v4885 = vunpack.c.l.b16 %v4869
      %v4886 = vunpack.c.l.b16 %v4870
      %v4887 = vunpack.c.l.b16 %v4871
      %v4888 = vpack.c.b16 %v4881, %v4880
      %v4889 = vpack.c.b16 %v4883, %v4882
      %v4890 = vpack.c.b16 %v4885, %v4884
      %v4891 = vpack.c.b16 %v4887, %v4886
      %v4897 = vsel %vm1501, %v4861, 0
      %v4900 = vsel %vm1501, %v4862, 0
      %4902 = vmatprep.subr.bf16.mxu0 0
      %4903 = vmatpush1.bf16.msra.mxu0 %v4888
      %4904 = vmatprep.subr.bf16.mxu0 0
      %4905 = vmatpush1.bf16.msra.mxu0 %v4889
      %4906 = vmatprep.subr.bf16.mxu0 0
      %4907 = vmatpush1.bf16.msra.mxu0 %v4890
      %4908 = vmatprep.subr.bf16.mxu0 0
      %4909 = vmatpush1.bf16.msra.mxu0 %v4891
      %4910 = vmatprep.subr.bf16.mxu0 0
      %4911 = vmatpush1.bf16.msra.mxu0 0
      %4912 = vmatprep.subr.bf16.mxu0 0
      %4913 = vmatpush1.bf16.msra.mxu0 0
      %4914 = vmatprep.subr.bf16.mxu0 0
      %4915 = vmatpush1.bf16.msra.mxu0 0
      %4916 = vmatprep.subr.bf16.mxu0 0
      %4917 = vmatpush1.bf16.msra.mxu0 0
      %4918 = vmatprep.subr.bf16.mxu0 0
      %4919 = vmatpush1.bf16.msra.mxu0 0
      %4920 = vmatprep.subr.bf16.mxu0 0
      %4921 = vmatpush1.bf16.msra.mxu0 0
      %4922 = vmatprep.subr.bf16.mxu0 0
      %4923 = vmatpush1.bf16.msra.mxu0 0
      %4924 = vmatprep.subr.bf16.mxu0 0
      %4925 = vmatpush1.bf16.msra.mxu0 0
      %4926 = vmatprep.subr.bf16.mxu0 0
      %4927 = vmatpush1.bf16.msra.mxu0 0
      %4928 = vmatprep.subr.bf16.mxu0 0
      %4929 = vmatpush1.bf16.msra.mxu0 0
      %4930 = vmatprep.subr.bf16.mxu0 0
      %4931 = vmatpush1.bf16.msra.mxu0 0
      %4932 = vmatprep.subr.bf16.mxu0 0
      %4933 = vmatpush1.bf16.msra.mxu0 0
      %4934 = vmatprep.mubr.bf16.mxu0 0
      %4935 = vmatmul.mubr.bf16.gmra.mrb[0].mxu0 %v4897
      %v4936 = vpop.f32.mrb[0].mxu0
      %v4937 = vadd.f32 0.0, %v4936
      %v4938 = vpop.f32.mrb[0].mxu0
      %v4939 = vpop.f32.mrb[0].mxu0
      %v4940 = vadd.f32 0.0, %v4939
      %v4941 = vpop.f32.mrb[0].mxu0
      %4942 = vmatprep.mubr.bf16.mxu0 0
      %4943 = vmatmul.mubr.bf16.gmra.mrb[0].mxu0 %v4900
      %v4944 = vpop.f32.mrb[0].mxu0
      %v4945 = vadd.f32 0.0, %v4944
      %v4946 = vpop.f32.mrb[0].mxu0
      %v4947 = vpop.f32.mrb[0].mxu0
      %v4948 = vpop.f32.mrb[0].mxu0
      %4949 = vdwg.mxu0
      %v4950 = vadd.f32 %v4845, %v4937
      %v4951 = vadd.f32 %v4848, %v4940
      %v4952 = vadd.f32 %v4853, %v4945
      %v4953 = vmul.f32 %v4950, 0.5
      %v4954 = vmul.f32 %v4951, 0.5
      %v4955 = vmul.f32 %v4952, 0.5
      %v4956 = vmul.f32 %v4950, 0.044715
      %v4957 = vmul.f32 %v4951, 0.044715
      %v4958 = vmul.f32 %v4952, 0.044715
      %v4959 = vmul.f32 %v4956, %v4950
      %v4960 = vmul.f32 %v4957, %v4951
      %v4961 = vmul.f32 %v4958, %v4952
      %v4962 = vmul.f32 %v4959, %v4950
      %v4963 = vmul.f32 %v4960, %v4951
      %v4964 = vmul.f32 %v4961, %v4952
      %v4965 = vadd.f32 %v4950, %v4962
      %v4966 = vadd.f32 %v4951, %v4963
      %v4967 = vadd.f32 %v4952, %v4964
      %v4968 = vmul.f32 %v4965, 0.7978846
      %v4969 = vmul.f32 %v4966, 0.7978846
      %v4970 = vmul.f32 %v4967, 0.7978846
      %v4971 = vtanh.pop %v4968
      %v4972 = vtanh.pop %v4969
      %v4973 = vtanh.pop %v4970
      %v4974 = vadd.f32 %v4971, 1.0
      %v4975 = vadd.f32 %v4972, 1.0
      %v4976 = vadd.f32 %v4973, 1.0
      %v4977 = vmul.f32 %v4953, %v4974
      %v4978 = vmul.f32 %v4954, %v4975
      %v4979 = vmul.f32 %v4955, %v4976
      %4980 = vst.msk [vmem:[#allocation2] sm:$0xff] %vm1501, %v4977
      %4981 = vst.msk [vmem:[#allocation2 + $0x8] sm:$0xff] %vm1501, %v4978
      %4982 = vst.msk [vmem:[#allocation2 + $0x10] sm:$0xff] %vm1501, %v4979
      %v4983 = vld [vmem:[#allocation2] ss:$2 sm:$0xff]
      %v4984 = vld [vmem:[%s2483] ss:$2 sm:$0xf]
      %v4985 = vpack.c.bf16 %v4984, %v4983
      %v4986 = vld [vmem:[%s5] sm:$0xf]
      %v4987 = vld [vmem:[%s5 + $0x4] sm:$0xf]
      %v4988 = vld [vmem:[%s5 + $0x8] sm:$0xf]
      %v4989 = vld [vmem:[%s5 + $0xc] sm:$0xf]
      %v4990 = vld [vmem:[%s5 + $0x10] sm:$0xf]
      %v4991 = vld [vmem:[%s5 + $0x14] sm:$0xf]
      %v4992 = vld [vmem:[%s5 + $0x18] sm:$0xf]
      %v4993 = vld [vmem:[%s5 + $0x1c] sm:$0xf]
      %v4994 = vld [vmem:[%s2552] ss:$2 sm:$0xff]
      %v4995 = vld [vmem:[%s2554] ss:$2 sm:$0xf]
      %v4996 = vpack.c.bf16 %v4995, %v4994
      %s4997 = scalar_lea.vmem %s5, 32
      %v4998 = vld [vmem:[%s4997] sm:$0xf]
      %v4999 = vld [vmem:[%s4997 + $0x4] sm:$0xf]
      %v5000 = vld [vmem:[%s4997 + $0x8] sm:$0xf]
      %v5001 = vld [vmem:[%s4997 + $0xc] sm:$0xf]
      %v5002 = vld [vmem:[%s4997 + $0x10] sm:$0xf]
      %v5003 = vld [vmem:[%s4997 + $0x14] sm:$0xf]
      %v5004 = vld [vmem:[%s4997 + $0x18] sm:$0xf]
      %v5005 = vld [vmem:[%s4997 + $0x1c] sm:$0xf]
      %v5014 = vunpack.c.l.b16 %v4998
      %v5015 = vunpack.c.l.b16 %v4999
      %v5016 = vunpack.c.l.b16 %v5000
      %v5017 = vunpack.c.l.b16 %v5001
      %v5018 = vunpack.c.l.b16 %v5002
      %v5019 = vunpack.c.l.b16 %v5003
      %v5020 = vunpack.c.l.b16 %v5004
      %v5021 = vunpack.c.l.b16 %v5005
      %v5022 = vpack.c.b16 %v5015, %v5014
      %v5023 = vpack.c.b16 %v5017, %v5016
      %v5024 = vpack.c.b16 %v5019, %v5018
      %v5025 = vpack.c.b16 %v5021, %v5020
      %v5031 = vsel %vm1501, %v4996, 0
      %5033 = vmatprep.subr.bf16.mxu0 0
      %5034 = vmatpush1.bf16.msra.mxu0 %v5022
      %5035 = vmatprep.subr.bf16.mxu0 0
      %5036 = vmatpush1.bf16.msra.mxu0 %v5023
      %5037 = vmatprep.subr.bf16.mxu0 0
      %5038 = vmatpush1.bf16.msra.mxu0 %v5024
      %5039 = vmatprep.subr.bf16.mxu0 0
      %5040 = vmatpush1.bf16.msra.mxu0 %v5025
      %5041 = vmatprep.subr.bf16.mxu0 0
      %5042 = vmatpush1.bf16.msra.mxu0 0
      %5043 = vmatprep.subr.bf16.mxu0 0
      %5044 = vmatpush1.bf16.msra.mxu0 0
      %5045 = vmatprep.subr.bf16.mxu0 0
      %5046 = vmatpush1.bf16.msra.mxu0 0
      %5047 = vmatprep.subr.bf16.mxu0 0
      %5048 = vmatpush1.bf16.msra.mxu0 0
      %5049 = vmatprep.subr.bf16.mxu0 0
      %5050 = vmatpush1.bf16.msra.mxu0 0
      %5051 = vmatprep.subr.bf16.mxu0 0
      %5052 = vmatpush1.bf16.msra.mxu0 0
      %5053 = vmatprep.subr.bf16.mxu0 0
      %5054 = vmatpush1.bf16.msra.mxu0 0
      %5055 = vmatprep.subr.bf16.mxu0 0
      %5056 = vmatpush1.bf16.msra.mxu0 0
      %5057 = vmatprep.subr.bf16.mxu0 0
      %5058 = vmatpush1.bf16.msra.mxu0 0
      %5059 = vmatprep.subr.bf16.mxu0 0
      %5060 = vmatpush1.bf16.msra.mxu0 0
      %5061 = vmatprep.subr.bf16.mxu0 0
      %5062 = vmatpush1.bf16.msra.mxu0 0
      %5063 = vmatprep.subr.bf16.mxu0 0
      %5064 = vmatpush1.bf16.msra.mxu0 0
      %5065 = vmatprep.mubr.bf16.mxu0 0
      %5066 = vmatmul.mubr.bf16.gmra.mrb[0].mxu0 %v5031
      %v5067 = vpop.f32.mrb[0].mxu0
      %v5068 = vadd.f32 0.0, %v5067
      %v5069 = vpop.f32.mrb[0].mxu0
      %v5070 = vpop.f32.mrb[0].mxu0
      %v5071 = vadd.f32 0.0, %v5070
      %v5072 = vpop.f32.mrb[0].mxu0
      %5073 = vdwg.mxu0
      %v5082 = vunpack.c.l.b16 %v4986
      %v5083 = vunpack.c.l.b16 %v4987
      %v5084 = vunpack.c.l.b16 %v4988
      %v5085 = vunpack.c.l.b16 %v4989
      %v5086 = vunpack.c.l.b16 %v4990
      %v5087 = vunpack.c.l.b16 %v4991
      %v5088 = vunpack.c.l.b16 %v4992
      %v5089 = vunpack.c.l.b16 %v4993
      %v5090 = vpack.c.b16 %v5083, %v5082
      %v5091 = vpack.c.b16 %v5085, %v5084
      %v5092 = vpack.c.b16 %v5087, %v5086
      %v5093 = vpack.c.b16 %v5089, %v5088
      %v5099 = vsel %vm1501, %v4985, 0
      %5101 = vmatprep.subr.bf16.mxu0 0
      %5102 = vmatpush1.bf16.msra.mxu0 %v5090
      %5103 = vmatprep.subr.bf16.mxu0 0
      %5104 = vmatpush1.bf16.msra.mxu0 %v5091
      %5105 = vmatprep.subr.bf16.mxu0 0
      %5106 = vmatpush1.bf16.msra.mxu0 %v5092
      %5107 = vmatprep.subr.bf16.mxu0 0
      %5108 = vmatpush1.bf16.msra.mxu0 %v5093
      %5109 = vmatprep.subr.bf16.mxu0 0
      %5110 = vmatpush1.bf16.msra.mxu0 0
      %5111 = vmatprep.subr.bf16.mxu0 0
      %5112 = vmatpush1.bf16.msra.mxu0 0
      %5113 = vmatprep.subr.bf16.mxu0 0
      %5114 = vmatpush1.bf16.msra.mxu0 0
      %5115 = vmatprep.subr.bf16.mxu0 0
      %5116 = vmatpush1.bf16.msra.mxu0 0
      %5117 = vmatprep.subr.bf16.mxu0 0
      %5118 = vmatpush1.bf16.msra.mxu0 0
      %5119 = vmatprep.subr.bf16.mxu0 0
      %5120 = vmatpush1.bf16.msra.mxu0 0
      %5121 = vmatprep.subr.bf16.mxu0 0
      %5122 = vmatpush1.bf16.msra.mxu0 0
      %5123 = vmatprep.subr.bf16.mxu0 0
      %5124 = vmatpush1.bf16.msra.mxu0 0
      %5125 = vmatprep.subr.bf16.mxu0 0
      %5126 = vmatpush1.bf16.msra.mxu0 0
      %5127 = vmatprep.subr.bf16.mxu0 0
      %5128 = vmatpush1.bf16.msra.mxu0 0
      %5129 = vmatprep.subr.bf16.mxu0 0
      %5130 = vmatpush1.bf16.msra.mxu0 0
      %5131 = vmatprep.subr.bf16.mxu0 0
      %5132 = vmatpush1.bf16.msra.mxu0 0
      %5133 = vmatprep.mubr.bf16.mxu0 0
      %5134 = vmatmul.mubr.bf16.gmra.mrb[0].mxu0 %v5099
      %v5135 = vpop.f32.mrb[0].mxu0
      %v5136 = vadd.f32 %v5068, %v5135
      %v5137 = vpop.f32.mrb[0].mxu0
      %v5138 = vpop.f32.mrb[0].mxu0
      %v5139 = vadd.f32 %v5071, %v5138
      %v5140 = vpop.f32.mrb[0].mxu0
      %5141 = vdwg.mxu0
      %v5142 = vmul.f32 %v5136, 0.5
      %v5143 = vmul.f32 %v5139, 0.5
      %v5144 = vmul.f32 %v5136, 0.044715
      %v5145 = vmul.f32 %v5139, 0.044715
      %v5146 = vmul.f32 %v5144, %v5136
      %v5147 = vmul.f32 %v5145, %v5139
      %v5148 = vmul.f32 %v5146, %v5136
      %v5149 = vmul.f32 %v5147, %v5139
      %v5150 = vadd.f32 %v5136, %v5148
      %v5151 = vadd.f32 %v5139, %v5149
      %v5152 = vmul.f32 %v5150, 0.7978846
      %v5153 = vmul.f32 %v5151, 0.7978846
      %v5154 = vtanh.pop %v5152
      %v5155 = vtanh.pop %v5153
      %v5156 = vadd.f32 %v5154, 1.0
      %v5157 = vadd.f32 %v5155, 1.0
      %v5158 = vmul.f32 %v5142, %v5156
      %v5159 = vmul.f32 %v5143, %v5157
      %5160 = vst.msk [vmem:[#allocation3] sm:$0xff] %vm1501, %v5158
      %vm5161 = vcmask 519168
      %5162 = vst.msk [vmem:[#allocation3 + $0x8] sm:$0xf] %vm5161, %v5159
      %v5163 = vld [vmem:[#allocation3] ss:$2 sm:$0x3f]
      %v5164 = vpack.c.bf16 %v5163, %v5163
      %s5165 = scalar_lea.vmem %s5, 64
      %v5166 = vld [vmem:[%s5165] sm:$0xf]
      %v5167 = vld [vmem:[%s5165 + $0x4] sm:$0xf]
      %v5168 = vld [vmem:[%s5165 + $0x8] sm:$0xf]
      %v5169 = vld [vmem:[%s5165 + $0xc] sm:$0xf]
      %v5170 = vld [vmem:[%s5165 + $0x10] sm:$0xf]
      %v5171 = vld [vmem:[%s5165 + $0x14] sm:$0xf]
      %v5172 = vld [vmem:[%s5165 + $0x18] sm:$0xf]
      %v5173 = vld [vmem:[%s5165 + $0x1c] sm:$0xf]
      %v5174 = vld [vmem:[%s3609] ss:$2 sm:$0x3f]
      %v5175 = vpack.c.bf16 %v5174, %v5174
      %s5176 = scalar_lea.vmem %s5, 96
      %v5177 = vld [vmem:[%s5176] sm:$0xf]
      %v5178 = vld [vmem:[%s5176 + $0x4] sm:$0xf]
      %v5179 = vld [vmem:[%s5176 + $0x8] sm:$0xf]
      %v5180 = vld [vmem:[%s5176 + $0xc] sm:$0xf]
      %v5181 = vld [vmem:[%s5176 + $0x10] sm:$0xf]
      %v5182 = vld [vmem:[%s5176 + $0x14] sm:$0xf]
      %v5183 = vld [vmem:[%s5176 + $0x18] sm:$0xf]
      %v5184 = vld [vmem:[%s5176 + $0x1c] sm:$0xf]
      %v5193 = vunpack.c.l.b16 %v5177
      %v5194 = vunpack.c.l.b16 %v5178
      %v5195 = vunpack.c.l.b16 %v5179
      %v5196 = vunpack.c.l.b16 %v5180
      %v5197 = vunpack.c.l.b16 %v5181
      %v5198 = vunpack.c.l.b16 %v5182
      %v5199 = vunpack.c.l.b16 %v5183
      %v5200 = vunpack.c.l.b16 %v5184
      %v5201 = vpack.c.b16 %v5194, %v5193
      %v5202 = vpack.c.b16 %v5196, %v5195
      %v5203 = vpack.c.b16 %v5198, %v5197
      %v5204 = vpack.c.b16 %v5200, %v5199
      %v5210 = vsel %vm1501, %v5175, 0
      %5212 = vmatprep.subr.bf16.mxu0 0
      %5213 = vmatpush1.bf16.msra.mxu0 %v5201
      %5214 = vmatprep.subr.bf16.mxu0 0
      %5215 = vmatpush1.bf16.msra.mxu0 %v5202
      %5216 = vmatprep.subr.bf16.mxu0 0
      %5217 = vmatpush1.bf16.msra.mxu0 %v5203
      %5218 = vmatprep.subr.bf16.mxu0 0
      %5219 = vmatpush1.bf16.msra.mxu0 %v5204
      %5220 = vmatprep.subr.bf16.mxu0 0
      %5221 = vmatpush1.bf16.msra.mxu0 0
      %5222 = vmatprep.subr.bf16.mxu0 0
      %5223 = vmatpush1.bf16.msra.mxu0 0
      %5224 = vmatprep.subr.bf16.mxu0 0
      %5225 = vmatpush1.bf16.msra.mxu0 0
      %5226 = vmatprep.subr.bf16.mxu0 0
      %5227 = vmatpush1.bf16.msra.mxu0 0
      %5228 = vmatprep.subr.bf16.mxu0 0
      %5229 = vmatpush1.bf16.msra.mxu0 0
      %5230 = vmatprep.subr.bf16.mxu0 0
      %5231 = vmatpush1.bf16.msra.mxu0 0
      %5232 = vmatprep.subr.bf16.mxu0 0
      %5233 = vmatpush1.bf16.msra.mxu0 0
      %5234 = vmatprep.subr.bf16.mxu0 0
      %5235 = vmatpush1.bf16.msra.mxu0 0
      %5236 = vmatprep.subr.bf16.mxu0 0
      %5237 = vmatpush1.bf16.msra.mxu0 0
      %5238 = vmatprep.subr.bf16.mxu0 0
      %5239 = vmatpush1.bf16.msra.mxu0 0
      %5240 = vmatprep.subr.bf16.mxu0 0
      %5241 = vmatpush1.bf16.msra.mxu0 0
      %5242 = vmatprep.subr.bf16.mxu0 0
      %5243 = vmatpush1.bf16.msra.mxu0 0
      %5244 = vmatprep.mubr.bf16.mxu0 0
      %5245 = vmatmul.mubr.bf16.gmra.mrb[0].mxu0 %v5210
      %v5246 = vpop.f32.mrb[0].mxu0
      %v5247 = vadd.f32 0.0, %v5246
      %v5248 = vpop.f32.mrb[0].mxu0
      %v5249 = vpop.f32.mrb[0].mxu0
      %v5250 = vpop.f32.mrb[0].mxu0
      %5251 = vdwg.mxu0
      %v5260 = vunpack.c.l.b16 %v5166
      %v5261 = vunpack.c.l.b16 %v5167
      %v5262 = vunpack.c.l.b16 %v5168
      %v5263 = vunpack.c.l.b16 %v5169
      %v5264 = vunpack.c.l.b16 %v5170
      %v5265 = vunpack.c.l.b16 %v5171
      %v5266 = vunpack.c.l.b16 %v5172
      %v5267 = vunpack.c.l.b16 %v5173
      %v5268 = vpack.c.b16 %v5261, %v5260
      %v5269 = vpack.c.b16 %v5263, %v5262
      %v5270 = vpack.c.b16 %v5265, %v5264
      %v5271 = vpack.c.b16 %v5267, %v5266
      %v5277 = vsel %vm1501, %v5164, 0
      %5279 = vmatprep.subr.bf16.mxu0 0
      %5280 = vmatpush1.bf16.msra.mxu0 %v5268
      %5281 = vmatprep.subr.bf16.mxu0 0
      %5282 = vmatpush1.bf16.msra.mxu0 %v5269
      %5283 = vmatprep.subr.bf16.mxu0 0
      %5284 = vmatpush1.bf16.msra.mxu0 %v5270
      %5285 = vmatprep.subr.bf16.mxu0 0
      %5286 = vmatpush1.bf16.msra.mxu0 %v5271
      %5287 = vmatprep.subr.bf16.mxu0 0
      %5288 = vmatpush1.bf16.msra.mxu0 0
      %5289 = vmatprep.subr.bf16.mxu0 0
      %5290 = vmatpush1.bf16.msra.mxu0 0
      %5291 = vmatprep.subr.bf16.mxu0 0
      %5292 = vmatpush1.bf16.msra.mxu0 0
      %5293 = vmatprep.subr.bf16.mxu0 0
      %5294 = vmatpush1.bf16.msra.mxu0 0
      %5295 = vmatprep.subr.bf16.mxu0 0
      %5296 = vmatpush1.bf16.msra.mxu0 0
      %5297 = vmatprep.subr.bf16.mxu0 0
      %5298 = vmatpush1.bf16.msra.mxu0 0
      %5299 = vmatprep.subr.bf16.mxu0 0
      %5300 = vmatpush1.bf16.msra.mxu0 0
      %5301 = vmatprep.subr.bf16.mxu0 0
      %5302 = vmatpush1.bf16.msra.mxu0 0
      %5303 = vmatprep.subr.bf16.mxu0 0
      %5304 = vmatpush1.bf16.msra.mxu0 0
      %5305 = vmatprep.subr.bf16.mxu0 0
      %5306 = vmatpush1.bf16.msra.mxu0 0
      %5307 = vmatprep.subr.bf16.mxu0 0
      %5308 = vmatpush1.bf16.msra.mxu0 0
      %5309 = vmatprep.subr.bf16.mxu0 0
      %5310 = vmatpush1.bf16.msra.mxu0 0
      %5311 = vmatprep.mubr.bf16.mxu0 0
      %5312 = vmatmul.mubr.bf16.gmra.mrb[0].mxu0 %v5277
      %v5313 = vpop.f32.mrb[0].mxu0
      %v5314 = vadd.f32 %v5247, %v5313
      %v5315 = vpop.f32.mrb[0].mxu0
      %v5316 = vpop.f32.mrb[0].mxu0
      %v5317 = vpop.f32.mrb[0].mxu0
      %5318 = vdwg.mxu0
      %v5319 = vmul.f32 %v5314, 0.5
      %v5320 = vmul.f32 %v5314, 0.044715
      %v5321 = vmul.f32 %v5320, %v5314
      %v5322 = vmul.f32 %v5321, %v5314
      %v5323 = vadd.f32 %v5314, %v5322
      %v5324 = vmul.f32 %v5323, 0.7978846
      %v5325 = vtanh.pop %v5324
      %v5326 = vadd.f32 %v5325, 1.0
      %v5327 = vmul.f32 %v5319, %v5326
      %v5328 = vld [vmem:[%s6] sm:$0x1]
      %v5329 = vld [vmem:[%s7] sm:$0x1]
      %vm5330 = vcmask 521216
      %v5331 = vsel %vm5330, %v5327, 0.0
      %5332 = vadd.xlane.f32.xlu0 %v5331
      %v5333 = vpop.xlane.xlu0 %5332
      %v5334 = vrcp.pop 64.0
      %v5335 = vmul.f32 %v5333, %v5334
      %v5336 = vsub.f32 %v5327, %v5335
      %v5337 = vmul.f32 %v5336, %v5336
      %v5338 = vsel %vm5330, %v5337, 0.0
      %5339 = vadd.xlane.f32.xlu0 %v5338
      %v5340 = vpop.xlane.xlu0 %5339
      %v5341 = vmul.f32 %v5340, %v5334
      %v5342 = vadd.f32 %v5341, 1e-05
      %v5343 = vrsqrt.pop %v5342
      %v5344 = vmul.f32 %v5336, %v5343
      %v5346 = vlaneseq
      %v5347 = vshrl.u32 %v5346, 7
      %v5348 = vsub.s32 0, %v5347
      %v5349 = vrot.slane %v5328, %v5348
      %v5351 = vmul.f32 %v5344, %v5349
      %v5353 = vlaneseq
      %v5354 = vshrl.u32 %v5353, 7
      %v5355 = vsub.s32 0, %v5354
      %v5356 = vrot.slane %v5329, %v5355
      %v5358 = vadd.f32 %v5351, %v5356
      %v5359 = vpack.c.bf16 %v5358, %v5358
      %v5360 = vld [vmem:[%s8] sm:$0xf]
      %v5361 = vld [vmem:[%s8 + $0x4] sm:$0xf]
      %v5362 = vld [vmem:[%s8 + $0x8] sm:$0xf]
      %v5363 = vld [vmem:[%s8 + $0xc] sm:$0xf]
      %v5364 = vld [vmem:[%s8 + $0x10] sm:$0xf]
      %v5365 = vld [vmem:[%s8 + $0x14] sm:$0xf]
      %v5366 = vld [vmem:[%s8 + $0x18] sm:$0xf]
      %v5367 = vld [vmem:[%s8 + $0x1c] sm:$0xf]
      %v5368 = vld [vmem:[%s9] sm:$0x1]
      %v5370 = vlaneseq
      %v5371 = vshrl.u32 %v5370, 7
      %v5372 = vsub.s32 0, %v5371
      %v5373 = vrot.slane %v5368, %v5372
      %v5383 = vunpack.c.l.b16 %v5360
      %v5384 = vunpack.c.l.b16 %v5361
      %v5385 = vunpack.c.l.b16 %v5362
      %v5386 = vunpack.c.l.b16 %v5363
      %v5387 = vunpack.c.l.b16 %v5364
      %v5388 = vunpack.c.l.b16 %v5365
      %v5389 = vunpack.c.l.b16 %v5366
      %v5390 = vunpack.c.l.b16 %v5367
      %v5391 = vpack.c.b16 %v5384, %v5383
      %v5392 = vpack.c.b16 %v5386, %v5385
      %v5393 = vpack.c.b16 %v5388, %v5387
      %v5394 = vpack.c.b16 %v5390, %v5389
      %v5400 = vsel %vm1501, %v5359, 0
      %5402 = vmatprep.subr.bf16.mxu0 0
      %5403 = vmatpush1.bf16.msra.mxu0 %v5391
      %5404 = vmatprep.subr.bf16.mxu0 0
      %5405 = vmatpush1.bf16.msra.mxu0 %v5392
      %5406 = vmatprep.subr.bf16.mxu0 0
      %5407 = vmatpush1.bf16.msra.mxu0 %v5393
      %5408 = vmatprep.subr.bf16.mxu0 0
      %5409 = vmatpush1.bf16.msra.mxu0 %v5394
      %5410 = vmatprep.subr.bf16.mxu0 0
      %5411 = vmatpush1.bf16.msra.mxu0 0
      %5412 = vmatprep.subr.bf16.mxu0 0
      %5413 = vmatpush1.bf16.msra.mxu0 0
      %5414 = vmatprep.subr.bf16.mxu0 0
      %5415 = vmatpush1.bf16.msra.mxu0 0
      %5416 = vmatprep.subr.bf16.mxu0 0
      %5417 = vmatpush1.bf16.msra.mxu0 0
      %5418 = vmatprep.subr.bf16.mxu0 0
      %5419 = vmatpush1.bf16.msra.mxu0 0
      %5420 = vmatprep.subr.bf16.mxu0 0
      %5421 = vmatpush1.bf16.msra.mxu0 0
      %5422 = vmatprep.subr.bf16.mxu0 0
      %5423 = vmatpush1.bf16.msra.mxu0 0
      %5424 = vmatprep.subr.bf16.mxu0 0
      %5425 = vmatpush1.bf16.msra.mxu0 0
      %5426 = vmatprep.subr.bf16.mxu0 0
      %5427 = vmatpush1.bf16.msra.mxu0 0
      %5428 = vmatprep.subr.bf16.mxu0 0
      %5429 = vmatpush1.bf16.msra.mxu0 0
      %5430 = vmatprep.subr.bf16.mxu0 0
      %5431 = vmatpush1.bf16.msra.mxu0 0
      %5432 = vmatprep.subr.bf16.mxu0 0
      %5433 = vmatpush1.bf16.msra.mxu0 0
      %5434 = vmatprep.mubr.bf16.mxu0 0
      %5435 = vmatmul.mubr.bf16.gmra.mrb[0].mxu0 %v5400
      %v5436 = vpop.f32.mrb[0].mxu0
      %v5437 = vadd.f32 %v5373, %v5436
      %v5438 = vpop.f32.mrb[0].mxu0
      %v5439 = vpop.f32.mrb[0].mxu0
      %v5440 = vpop.f32.mrb[0].mxu0
      %5441 = vdwg.mxu0
      %5442 = vst [vmem:[#allocation4] sm:$0xff] 0.0
      %5443 = vst [vmem:[#allocation4 + $0x8] sm:$0xff] 0.0
      %5444 = vst [vmem:[#allocation4 + $0x10] sm:$0x3f] 0.0
      %5445 = vst [vmem:[#allocation4 + $0x8] sm:$0x3f] %v5437
      %v5446 = vld [vmem:[#allocation4] sm:$0x7f]
      %v5447 = vld [vmem:[#allocation4 + $0x1] sm:$0x7f]
      %v5448 = vld [vmem:[#allocation4 + $0x2] sm:$0x7f]
      %v5449 = vld [vmem:[#allocation4 + $0x3] sm:$0x7f]
      %v5450 = vld [vmem:[#allocation4 + $0x4] sm:$0x7f]
      %v5451 = vld [vmem:[#allocation4 + $0x5] sm:$0x7f]
      %v5452 = vld [vmem:[#allocation4 + $0x6] sm:$0x7f]
      %v5453 = vld [vmem:[#allocation4 + $0x7] sm:$0x7f]
      %v5454 = vld [vmem:[#allocation4 + $0x8] sm:$0x7f]
      %v5455 = vld [vmem:[#allocation4 + $0x9] sm:$0x7f]
      %v5456 = vld [vmem:[#allocation4 + $0xa] sm:$0x7f]
      %v5457 = vld [vmem:[#allocation4 + $0xb] sm:$0x7f]
      %v5458 = vld [vmem:[#allocation4 + $0xc] sm:$0x7f]
      %v5459 = vld [vmem:[#allocation4 + $0xd] sm:$0x7f]
      %v5460 = vld [vmem:[#allocation4 + $0xe] sm:$0x7f]
      %v5461 = vld [vmem:[#allocation4 + $0xf] sm:$0x7f]
      %5463 = vrot.lane.b32.xlu0 %v5447, 32
      %v5464 = vpop.permute.xlu0 %5463
      %5467 = vrot.lane.b32.xlu0 %v5448, 64
      %v5468 = vpop.permute.xlu0 %5467
      %5471 = vrot.lane.b32.xlu0 %v5449, 96
      %v5472 = vpop.permute.xlu0 %5471
      %5475 = vrot.lane.b32.xlu0 %v5451, 32
      %v5476 = vpop.permute.xlu0 %5475
      %5479 = vrot.lane.b32.xlu0 %v5452, 64
      %v5480 = vpop.permute.xlu0 %5479
      %5483 = vrot.lane.b32.xlu0 %v5453, 96
      %v5484 = vpop.permute.xlu0 %5483
      %5487 = vrot.lane.b32.xlu0 %v5455, 32
      %v5488 = vpop.permute.xlu0 %5487
      %5491 = vrot.lane.b32.xlu0 %v5456, 64
      %v5492 = vpop.permute.xlu0 %5491
      %5495 = vrot.lane.b32.xlu0 %v5457, 96
      %v5496 = vpop.permute.xlu0 %5495
      %5499 = vrot.lane.b32.xlu0 %v5459, 32
      %v5500 = vpop.permute.xlu0 %5499
      %5503 = vrot.lane.b32.xlu0 %v5460, 64
      %v5504 = vpop.permute.xlu0 %5503
      %5507 = vrot.lane.b32.xlu0 %v5461, 96
      %v5508 = vpop.permute.xlu0 %5507
      %vm5510 = vcmask 261120
      %v5511 = vsel %vm5510, %v5446, %v5464
      %v5512 = vsel %vm1501, %v5511, %v5468
      %vm5513 = vcmask 785408
      %v5514 = vsel %vm5513, %v5512, %v5472
      %v5515 = vsel %vm5510, %v5450, %v5476
      %v5516 = vsel %vm1501, %v5515, %v5480
      %v5517 = vsel %vm5513, %v5516, %v5484
      %v5518 = vsel %vm5510, %v5454, %v5488
      %v5519 = vsel %vm1501, %v5518, %v5492
      %v5520 = vsel %vm5513, %v5519, %v5496
      %v5521 = vsel %vm5510, %v5458, %v5500
      %v5522 = vsel %vm1501, %v5521, %v5504
      %v5523 = vsel %vm5513, %v5522, %v5508
      %v5524 = vpack.c.bf16 %v5514, %v5514
      %v5525 = vpack.c.bf16 %v5517, %v5517
      %v5526 = vpack.c.bf16 %v5520, %v5520
      %v5527 = vpack.c.bf16 %v5523, %v5523
      %v5528 = vld [vmem:[%s10] sm:$0xf]
      %v5529 = vld [vmem:[%s10 + $0x4] sm:$0xf]
      %v5530 = vld [vmem:[%s10 + $0x8] sm:$0xf]
      %v5531 = vld [vmem:[%s10 + $0xc] sm:$0xf]
      %v5532 = vld [vmem:[%s10 + $0x10] sm:$0xf]
      %v5533 = vld [vmem:[%s10 + $0x14] sm:$0xf]
      %v5534 = vld [vmem:[%s10 + $0x18] sm:$0xf]
      %v5535 = vld [vmem:[%s10 + $0x1c] sm:$0xf]
      %v5536 = vld [vmem:[%s10 + $0x20] sm:$0xf]
      %v5537 = vld [vmem:[%s10 + $0x24] sm:$0xf]
      %v5538 = vld [vmem:[%s10 + $0x28] sm:$0xf]
      %v5539 = vld [vmem:[%s10 + $0x2c] sm:$0xf]
      %v5540 = vld [vmem:[%s10 + $0x30] sm:$0xf]
      %v5541 = vld [vmem:[%s10 + $0x34] sm:$0xf]
      %v5542 = vld [vmem:[%s10 + $0x38] sm:$0xf]
      %v5543 = vld [vmem:[%s10 + $0x3c] sm:$0xf]
      %v5544 = vld [vmem:[%s10 + $0x40] sm:$0xf]
      %v5545 = vld [vmem:[%s10 + $0x44] sm:$0xf]
      %v5546 = vld [vmem:[%s10 + $0x48] sm:$0xf]
      %v5547 = vld [vmem:[%s10 + $0x4c] sm:$0xf]
      %v5548 = vld [vmem:[%s10 + $0x50] sm:$0xf]
      %v5549 = vld [vmem:[%s10 + $0x54] sm:$0xf]
      %v5550 = vld [vmem:[%s10 + $0x58] sm:$0xf]
      %v5551 = vld [vmem:[%s10 + $0x5c] sm:$0xf]
      %v5552 = vld [vmem:[%s10 + $0x60] sm:$0xf]
      %v5553 = vld [vmem:[%s10 + $0x64] sm:$0xf]
      %v5554 = vld [vmem:[%s10 + $0x68] sm:$0xf]
      %v5555 = vld [vmem:[%s10 + $0x6c] sm:$0xf]
      %v5556 = vld [vmem:[%s10 + $0x70] sm:$0xf]
      %v5557 = vld [vmem:[%s10 + $0x74] sm:$0xf]
      %v5558 = vld [vmem:[%s10 + $0x78] sm:$0xf]
      %v5559 = vld [vmem:[%s10 + $0x7c] sm:$0xf]
      %v5560 = vld [vmem:[%s10 + $0x80] sm:$0xf]
      %v5561 = vld [vmem:[%s10 + $0x84] sm:$0xf]
      %v5562 = vld [vmem:[%s10 + $0x88] sm:$0xf]
      %v5563 = vld [vmem:[%s10 + $0x8c] sm:$0xf]
      %v5564 = vld [vmem:[%s10 + $0x90] sm:$0xf]
      %v5565 = vld [vmem:[%s10 + $0x94] sm:$0xf]
      %v5566 = vld [vmem:[%s10 + $0x98] sm:$0xf]
      %v5567 = vld [vmem:[%s10 + $0x9c] sm:$0xf]
      %v5568 = vld [vmem:[%s10 + $0xa0] sm:$0xf]
      %v5569 = vld [vmem:[%s10 + $0xa4] sm:$0xf]
      %v5570 = vld [vmem:[%s10 + $0xa8] sm:$0xf]
      %v5571 = vld [vmem:[%s10 + $0xac] sm:$0xf]
      %v5572 = vld [vmem:[%s10 + $0xb0] sm:$0xf]
      %v5573 = vld [vmem:[%s10 + $0xb4] sm:$0xf]
      %v5574 = vld [vmem:[%s10 + $0xb8] sm:$0xf]
      %v5575 = vld [vmem:[%s10 + $0xbc] sm:$0xf]
      %v5576 = vld [vmem:[%s10 + $0xc0] sm:$0xf]
      %v5577 = vld [vmem:[%s10 + $0xc4] sm:$0xf]
      %v5578 = vld [vmem:[%s10 + $0xc8] sm:$0xf]
      %v5579 = vld [vmem:[%s10 + $0xcc] sm:$0xf]
      %v5580 = vld [vmem:[%s10 + $0xd0] sm:$0xf]
      %v5581 = vld [vmem:[%s10 + $0xd4] sm:$0xf]
      %v5582 = vld [vmem:[%s10 + $0xd8] sm:$0xf]
      %v5583 = vld [vmem:[%s10 + $0xdc] sm:$0xf]
      %v5584 = vld [vmem:[%s10 + $0xe0] sm:$0xf]
      %v5585 = vld [vmem:[%s10 + $0xe4] sm:$0xf]
      %v5586 = vld [vmem:[%s10 + $0xe8] sm:$0xf]
      %v5587 = vld [vmem:[%s10 + $0xec] sm:$0xf]
      %v5588 = vld [vmem:[%s10 + $0xf0] sm:$0xf]
      %v5589 = vld [vmem:[%s10 + $0xf4] sm:$0xf]
      %v5590 = vld [vmem:[%s10 + $0xf8] sm:$0xf]
      %v5591 = vld [vmem:[%s10 + $0xfc] sm:$0xf]
      %v5656 = vunpack.c.l.b16 %v5528
      %v5657 = vunpack.c.l.b16 %v5529
      %v5658 = vunpack.c.l.b16 %v5530
      %v5659 = vunpack.c.l.b16 %v5531
      %v5660 = vunpack.c.l.b16 %v5532
      %v5661 = vunpack.c.l.b16 %v5533
      %v5662 = vunpack.c.l.b16 %v5534
      %v5663 = vunpack.c.l.b16 %v5535
      %v5664 = vunpack.c.l.b16 %v5536
      %v5665 = vunpack.c.l.b16 %v5537
      %v5666 = vunpack.c.l.b16 %v5538
      %v5667 = vunpack.c.l.b16 %v5539
      %v5668 = vunpack.c.l.b16 %v5540
      %v5669 = vunpack.c.l.b16 %v5541
      %v5670 = vunpack.c.l.b16 %v5542
      %v5671 = vunpack.c.l.b16 %v5543
      %v5672 = vunpack.c.l.b16 %v5544
      %v5673 = vunpack.c.l.b16 %v5545
      %v5674 = vunpack.c.l.b16 %v5546
      %v5675 = vunpack.c.l.b16 %v5547
      %v5676 = vunpack.c.l.b16 %v5548
      %v5677 = vunpack.c.l.b16 %v5549
      %v5678 = vunpack.c.l.b16 %v5550
      %v5679 = vunpack.c.l.b16 %v5551
      %v5680 = vunpack.c.l.b16 %v5552
      %v5681 = vunpack.c.l.b16 %v5553
      %v5682 = vunpack.c.l.b16 %v5554
      %v5683 = vunpack.c.l.b16 %v5555
      %v5684 = vunpack.c.l.b16 %v5556
      %v5685 = vunpack.c.l.b16 %v5557
      %v5686 = vunpack.c.l.b16 %v5558
      %v5687 = vunpack.c.l.b16 %v5559
      %v5688 = vunpack.c.l.b16 %v5560
      %v5689 = vunpack.c.l.b16 %v5561
      %v5690 = vunpack.c.l.b16 %v5562
      %v5691 = vunpack.c.l.b16 %v5563
      %v5692 = vunpack.c.l.b16 %v5564
      %v5693 = vunpack.c.l.b16 %v5565
      %v5694 = vunpack.c.l.b16 %v5566
      %v5695 = vunpack.c.l.b16 %v5567
      %v5696 = vunpack.c.l.b16 %v5568
      %v5697 = vunpack.c.l.b16 %v5569
      %v5698 = vunpack.c.l.b16 %v5570
      %v5699 = vunpack.c.l.b16 %v5571
      %v5700 = vunpack.c.l.b16 %v5572
      %v5701 = vunpack.c.l.b16 %v5573
      %v5702 = vunpack.c.l.b16 %v5574
      %v5703 = vunpack.c.l.b16 %v5575
      %v5704 = vunpack.c.l.b16 %v5576
      %v5705 = vunpack.c.l.b16 %v5577
      %v5706 = vunpack.c.l.b16 %v5578
      %v5707 = vunpack.c.l.b16 %v5579
      %v5708 = vunpack.c.l.b16 %v5580
      %v5709 = vunpack.c.l.b16 %v5581
      %v5710 = vunpack.c.l.b16 %v5582
      %v5711 = vunpack.c.l.b16 %v5583
      %v5712 = vunpack.c.l.b16 %v5584
      %v5713 = vunpack.c.l.b16 %v5585
      %v5714 = vunpack.c.l.b16 %v5586
      %v5715 = vunpack.c.l.b16 %v5587
      %v5716 = vunpack.c.l.b16 %v5588
      %v5717 = vunpack.c.l.b16 %v5589
      %v5718 = vunpack.c.l.b16 %v5590
      %v5719 = vunpack.c.l.b16 %v5591
      %v5720 = vpack.c.b16 %v5657, %v5656
      %v5721 = vpack.c.b16 %v5659, %v5658
      %v5722 = vpack.c.b16 %v5661, %v5660
      %v5723 = vpack.c.b16 %v5663, %v5662
      %v5724 = vpack.c.b16 %v5665, %v5664
      %v5725 = vpack.c.b16 %v5667, %v5666
      %v5726 = vpack.c.b16 %v5669, %v5668
      %v5727 = vpack.c.b16 %v5671, %v5670
      %v5728 = vpack.c.b16 %v5673, %v5672
      %v5729 = vpack.c.b16 %v5675, %v5674
      %v5730 = vpack.c.b16 %v5677, %v5676
      %v5731 = vpack.c.b16 %v5679, %v5678
      %v5732 = vpack.c.b16 %v5681, %v5680
      %v5733 = vpack.c.b16 %v5683, %v5682
      %v5734 = vpack.c.b16 %v5685, %v5684
      %v5735 = vpack.c.b16 %v5687, %v5686
      %v5736 = vpack.c.b16 %v5689, %v5688
      %v5737 = vpack.c.b16 %v5691, %v5690
      %v5738 = vpack.c.b16 %v5693, %v5692
      %v5739 = vpack.c.b16 %v5695, %v5694
      %v5740 = vpack.c.b16 %v5697, %v5696
      %v5741 = vpack.c.b16 %v5699, %v5698
      %v5742 = vpack.c.b16 %v5701, %v5700
      %v5743 = vpack.c.b16 %v5703, %v5702
      %v5744 = vpack.c.b16 %v5705, %v5704
      %v5745 = vpack.c.b16 %v5707, %v5706
      %v5746 = vpack.c.b16 %v5709, %v5708
      %v5747 = vpack.c.b16 %v5711, %v5710
      %v5748 = vpack.c.b16 %v5713, %v5712
      %v5749 = vpack.c.b16 %v5715, %v5714
      %v5750 = vpack.c.b16 %v5717, %v5716
      %v5751 = vpack.c.b16 %v5719, %v5718
      %5784 = vmatprep.subr.bf16.mxu0 0
      %5785 = vmatpush1.bf16.msra.mxu0 %v5720
      %5786 = vmatprep.subr.bf16.mxu0 0
      %5787 = vmatpush1.bf16.msra.mxu0 %v5721
      %5788 = vmatprep.subr.bf16.mxu0 0
      %5789 = vmatpush1.bf16.msra.mxu0 %v5722
      %5790 = vmatprep.subr.bf16.mxu0 0
      %5791 = vmatpush1.bf16.msra.mxu0 %v5723
      %5792 = vmatprep.subr.bf16.mxu0 0
      %5793 = vmatpush1.bf16.msra.mxu0 %v5724
      %5794 = vmatprep.subr.bf16.mxu0 0
      %5795 = vmatpush1.bf16.msra.mxu0 %v5725
      %5796 = vmatprep.subr.bf16.mxu0 0
      %5797 = vmatpush1.bf16.msra.mxu0 %v5726
      %5798 = vmatprep.subr.bf16.mxu0 0
      %5799 = vmatpush1.bf16.msra.mxu0 %v5727
      %5800 = vmatprep.subr.bf16.mxu0 0
      %5801 = vmatpush1.bf16.msra.mxu0 %v5728
      %5802 = vmatprep.subr.bf16.mxu0 0
      %5803 = vmatpush1.bf16.msra.mxu0 %v5729
      %5804 = vmatprep.subr.bf16.mxu0 0
      %5805 = vmatpush1.bf16.msra.mxu0 %v5730
      %5806 = vmatprep.subr.bf16.mxu0 0
      %5807 = vmatpush1.bf16.msra.mxu0 %v5731
      %5808 = vmatprep.subr.bf16.mxu0 0
      %5809 = vmatpush1.bf16.msra.mxu0 %v5732
      %5810 = vmatprep.subr.bf16.mxu0 0
      %5811 = vmatpush1.bf16.msra.mxu0 %v5733
      %5812 = vmatprep.subr.bf16.mxu0 0
      %5813 = vmatpush1.bf16.msra.mxu0 %v5734
      %5814 = vmatprep.subr.bf16.mxu0 0
      %5815 = vmatpush1.bf16.msra.mxu0 %v5735
      %5816 = vmatprep.mubr.bf16.mxu0 %v5525
      %5817 = vmatmul.mubr.bf16.gmra.mrb[0].mxu0 %v5524
      %v5818 = vpop.f32.mrb[0].mxu0
      %v5819 = vadd.f32 0.0, %v5818
      %v5820 = vpop.f32.mrb[0].mxu0
      %v5821 = vpop.f32.mrb[0].mxu0
      %v5822 = vpop.f32.mrb[0].mxu0
      %5823 = vdwg.mxu0
      %5824 = vmatprep.subr.bf16.mxu0 0
      %5825 = vmatpush1.bf16.msra.mxu0 %v5736
      %5826 = vmatprep.subr.bf16.mxu0 0
      %5827 = vmatpush1.bf16.msra.mxu0 %v5737
      %5828 = vmatprep.subr.bf16.mxu0 0
      %5829 = vmatpush1.bf16.msra.mxu0 %v5738
      %5830 = vmatprep.subr.bf16.mxu0 0
      %5831 = vmatpush1.bf16.msra.mxu0 %v5739
      %5832 = vmatprep.subr.bf16.mxu0 0
      %5833 = vmatpush1.bf16.msra.mxu0 %v5740
      %5834 = vmatprep.subr.bf16.mxu0 0
      %5835 = vmatpush1.bf16.msra.mxu0 %v5741
      %5836 = vmatprep.subr.bf16.mxu0 0
      %5837 = vmatpush1.bf16.msra.mxu0 %v5742
      %5838 = vmatprep.subr.bf16.mxu0 0
      %5839 = vmatpush1.bf16.msra.mxu0 %v5743
      %5840 = vmatprep.subr.bf16.mxu0 0
      %5841 = vmatpush1.bf16.msra.mxu0 %v5744
      %5842 = vmatprep.subr.bf16.mxu0 0
      %5843 = vmatpush1.bf16.msra.mxu0 %v5745
      %5844 = vmatprep.subr.bf16.mxu0 0
      %5845 = vmatpush1.bf16.msra.mxu0 %v5746
      %5846 = vmatprep.subr.bf16.mxu0 0
      %5847 = vmatpush1.bf16.msra.mxu0 %v5747
      %5848 = vmatprep.subr.bf16.mxu0 0
      %5849 = vmatpush1.bf16.msra.mxu0 %v5748
      %5850 = vmatprep.subr.bf16.mxu0 0
      %5851 = vmatpush1.bf16.msra.mxu0 %v5749
      %5852 = vmatprep.subr.bf16.mxu0 0
      %5853 = vmatpush1.bf16.msra.mxu0 %v5750
      %5854 = vmatprep.subr.bf16.mxu0 0
      %5855 = vmatpush1.bf16.msra.mxu0 %v5751
      %5856 = vmatprep.mubr.bf16.mxu0 %v5527
      %5857 = vmatmul.mubr.bf16.gmra.mrb[0].mxu0 %v5526
      %v5858 = vpop.f32.mrb[0].mxu0
      %v5859 = vadd.f32 %v5819, %v5858
      %v5860 = vpop.f32.mrb[0].mxu0
      %v5861 = vpop.f32.mrb[0].mxu0
      %v5862 = vpop.f32.mrb[0].mxu0
      %5863 = vdwg.mxu0
      %5865 = vrot.lane.b32.xlu0 %v5446, 96
      %v5866 = vpop.permute.xlu0 %5865
      %5868 = vrot.lane.b32.xlu0 %v5448, 32
      %v5869 = vpop.permute.xlu0 %5868
      %5871 = vrot.lane.b32.xlu0 %v5449, 64
      %v5872 = vpop.permute.xlu0 %5871
      %5875 = vrot.lane.b32.xlu0 %v5450, 96
      %v5876 = vpop.permute.xlu0 %5875
      %5878 = vrot.lane.b32.xlu0 %v5452, 32
      %v5879 = vpop.permute.xlu0 %5878
      %5881 = vrot.lane.b32.xlu0 %v5453, 64
      %v5882 = vpop.permute.xlu0 %5881
      %5885 = vrot.lane.b32.xlu0 %v5454, 96
      %v5886 = vpop.permute.xlu0 %5885
      %5888 = vrot.lane.b32.xlu0 %v5456, 32
      %v5889 = vpop.permute.xlu0 %5888
      %5891 = vrot.lane.b32.xlu0 %v5457, 64
      %v5892 = vpop.permute.xlu0 %5891
      %5895 = vrot.lane.b32.xlu0 %v5458, 96
      %v5896 = vpop.permute.xlu0 %5895
      %5898 = vrot.lane.b32.xlu0 %v5460, 32
      %v5899 = vpop.permute.xlu0 %5898
      %5901 = vrot.lane.b32.xlu0 %v5461, 64
      %v5902 = vpop.permute.xlu0 %5901
      %v5904 = vsel %vm5510, %v5866, %v5447
      %v5905 = vsel %vm1501, %v5904, %v5869
      %v5906 = vsel %vm5513, %v5905, %v5872
      %v5907 = vsel %vm5510, %v5876, %v5451
      %v5908 = vsel %vm1501, %v5907, %v5879
      %v5909 = vsel %vm5513, %v5908, %v5882
      %v5910 = vsel %vm5510, %v5886, %v5455
      %v5911 = vsel %vm1501, %v5910, %v5889
      %v5912 = vsel %vm5513, %v5911, %v5892
      %v5913 = vsel %vm5510, %v5896, %v5459
      %v5914 = vsel %vm1501, %v5913, %v5899
      %v5915 = vsel %vm5513, %v5914, %v5902
      %v5916 = vpack.c.bf16 %v5906, %v5906
      %v5917 = vpack.c.bf16 %v5909, %v5909
      %v5918 = vpack.c.bf16 %v5912, %v5912
      %v5919 = vpack.c.bf16 %v5915, %v5915
      %s5920 = scalar_lea.vmem %s10, 256
      %v5921 = vld [vmem:[%s5920] sm:$0xf]
      %v5922 = vld [vmem:[%s5920 + $0x4] sm:$0xf]
      %v5923 = vld [vmem:[%s5920 + $0x8] sm:$0xf]
      %v5924 = vld [vmem:[%s5920 + $0xc] sm:$0xf]
      %v5925 = vld [vmem:[%s5920 + $0x10] sm:$0xf]
      %v5926 = vld [vmem:[%s5920 + $0x14] sm:$0xf]
      %v5927 = vld [vmem:[%s5920 + $0x18] sm:$0xf]
      %v5928 = vld [vmem:[%s5920 + $0x1c] sm:$0xf]
      %v5929 = vld [vmem:[%s5920 + $0x20] sm:$0xf]
      %v5930 = vld [vmem:[%s5920 + $0x24] sm:$0xf]
      %v5931 = vld [vmem:[%s5920 + $0x28] sm:$0xf]
      %v5932 = vld [vmem:[%s5920 + $0x2c] sm:$0xf]
      %v5933 = vld [vmem:[%s5920 + $0x30] sm:$0xf]
      %v5934 = vld [vmem:[%s5920 + $0x34] sm:$0xf]
      %v5935 = vld [vmem:[%s5920 + $0x38] sm:$0xf]
      %v5936 = vld [vmem:[%s5920 + $0x3c] sm:$0xf]
      %v5937 = vld [vmem:[%s5920 + $0x40] sm:$0xf]
      %v5938 = vld [vmem:[%s5920 + $0x44] sm:$0xf]
      %v5939 = vld [vmem:[%s5920 + $0x48] sm:$0xf]
      %v5940 = vld [vmem:[%s5920 + $0x4c] sm:$0xf]
      %v5941 = vld [vmem:[%s5920 + $0x50] sm:$0xf]
      %v5942 = vld [vmem:[%s5920 + $0x54] sm:$0xf]
      %v5943 = vld [vmem:[%s5920 + $0x58] sm:$0xf]
      %v5944 = vld [vmem:[%s5920 + $0x5c] sm:$0xf]
      %v5945 = vld [vmem:[%s5920 + $0x60] sm:$0xf]
      %v5946 = vld [vmem:[%s5920 + $0x64] sm:$0xf]
      %v5947 = vld [vmem:[%s5920 + $0x68] sm:$0xf]
      %v5948 = vld [vmem:[%s5920 + $0x6c] sm:$0xf]
      %v5949 = vld [vmem:[%s5920 + $0x70] sm:$0xf]
      %v5950 = vld [vmem:[%s5920 + $0x74] sm:$0xf]
      %v5951 = vld [vmem:[%s5920 + $0x78] sm:$0xf]
      %v5952 = vld [vmem:[%s5920 + $0x7c] sm:$0xf]
      %v5953 = vld [vmem:[%s5920 + $0x80] sm:$0xf]
      %v5954 = vld [vmem:[%s5920 + $0x84] sm:$0xf]
      %v5955 = vld [vmem:[%s5920 + $0x88] sm:$0xf]
      %v5956 = vld [vmem:[%s5920 + $0x8c] sm:$0xf]
      %v5957 = vld [vmem:[%s5920 + $0x90] sm:$0xf]
      %v5958 = vld [vmem:[%s5920 + $0x94] sm:$0xf]
      %v5959 = vld [vmem:[%s5920 + $0x98] sm:$0xf]
      %v5960 = vld [vmem:[%s5920 + $0x9c] sm:$0xf]
      %v5961 = vld [vmem:[%s5920 + $0xa0] sm:$0xf]
      %v5962 = vld [vmem:[%s5920 + $0xa4] sm:$0xf]
      %v5963 = vld [vmem:[%s5920 + $0xa8] sm:$0xf]
      %v5964 = vld [vmem:[%s5920 + $0xac] sm:$0xf]
      %v5965 = vld [vmem:[%s5920 + $0xb0] sm:$0xf]
      %v5966 = vld [vmem:[%s5920 + $0xb4] sm:$0xf]
      %v5967 = vld [vmem:[%s5920 + $0xb8] sm:$0xf]
      %v5968 = vld [vmem:[%s5920 + $0xbc] sm:$0xf]
      %v5969 = vld [vmem:[%s5920 + $0xc0] sm:$0xf]
      %v5970 = vld [vmem:[%s5920 + $0xc4] sm:$0xf]
      %v5971 = vld [vmem:[%s5920 + $0xc8] sm:$0xf]
      %v5972 = vld [vmem:[%s5920 + $0xcc] sm:$0xf]
      %v5973 = vld [vmem:[%s5920 + $0xd0] sm:$0xf]
      %v5974 = vld [vmem:[%s5920 + $0xd4] sm:$0xf]
      %v5975 = vld [vmem:[%s5920 + $0xd8] sm:$0xf]
      %v5976 = vld [vmem:[%s5920 + $0xdc] sm:$0xf]
      %v5977 = vld [vmem:[%s5920 + $0xe0] sm:$0xf]
      %v5978 = vld [vmem:[%s5920 + $0xe4] sm:$0xf]
      %v5979 = vld [vmem:[%s5920 + $0xe8] sm:$0xf]
      %v5980 = vld [vmem:[%s5920 + $0xec] sm:$0xf]
      %v5981 = vld [vmem:[%s5920 + $0xf0] sm:$0xf]
      %v5982 = vld [vmem:[%s5920 + $0xf4] sm:$0xf]
      %v5983 = vld [vmem:[%s5920 + $0xf8] sm:$0xf]
      %v5984 = vld [vmem:[%s5920 + $0xfc] sm:$0xf]
      %v6049 = vunpack.c.l.b16 %v5921
      %v6050 = vunpack.c.l.b16 %v5922
      %v6051 = vunpack.c.l.b16 %v5923
      %v6052 = vunpack.c.l.b16 %v5924
      %v6053 = vunpack.c.l.b16 %v5925
      %v6054 = vunpack.c.l.b16 %v5926
      %v6055 = vunpack.c.l.b16 %v5927
      %v6056 = vunpack.c.l.b16 %v5928
      %v6057 = vunpack.c.l.b16 %v5929
      %v6058 = vunpack.c.l.b16 %v5930
      %v6059 = vunpack.c.l.b16 %v5931
      %v6060 = vunpack.c.l.b16 %v5932
      %v6061 = vunpack.c.l.b16 %v5933
      %v6062 = vunpack.c.l.b16 %v5934
      %v6063 = vunpack.c.l.b16 %v5935
      %v6064 = vunpack.c.l.b16 %v5936
      %v6065 = vunpack.c.l.b16 %v5937
      %v6066 = vunpack.c.l.b16 %v5938
      %v6067 = vunpack.c.l.b16 %v5939
      %v6068 = vunpack.c.l.b16 %v5940
      %v6069 = vunpack.c.l.b16 %v5941
      %v6070 = vunpack.c.l.b16 %v5942
      %v6071 = vunpack.c.l.b16 %v5943
      %v6072 = vunpack.c.l.b16 %v5944
      %v6073 = vunpack.c.l.b16 %v5945
      %v6074 = vunpack.c.l.b16 %v5946
      %v6075 = vunpack.c.l.b16 %v5947
      %v6076 = vunpack.c.l.b16 %v5948
      %v6077 = vunpack.c.l.b16 %v5949
      %v6078 = vunpack.c.l.b16 %v5950
      %v6079 = vunpack.c.l.b16 %v5951
      %v6080 = vunpack.c.l.b16 %v5952
      %v6081 = vunpack.c.l.b16 %v5953
      %v6082 = vunpack.c.l.b16 %v5954
      %v6083 = vunpack.c.l.b16 %v5955
      %v6084 = vunpack.c.l.b16 %v5956
      %v6085 = vunpack.c.l.b16 %v5957
      %v6086 = vunpack.c.l.b16 %v5958
      %v6087 = vunpack.c.l.b16 %v5959
      %v6088 = vunpack.c.l.b16 %v5960
      %v6089 = vunpack.c.l.b16 %v5961
      %v6090 = vunpack.c.l.b16 %v5962
      %v6091 = vunpack.c.l.b16 %v5963
      %v6092 = vunpack.c.l.b16 %v5964
      %v6093 = vunpack.c.l.b16 %v5965
      %v6094 = vunpack.c.l.b16 %v5966
      %v6095 = vunpack.c.l.b16 %v5967
      %v6096 = vunpack.c.l.b16 %v5968
      %v6097 = vunpack.c.l.b16 %v5969
      %v6098 = vunpack.c.l.b16 %v5970
      %v6099 = vunpack.c.l.b16 %v5971
      %v6100 = vunpack.c.l.b16 %v5972
      %v6101 = vunpack.c.l.b16 %v5973
      %v6102 = vunpack.c.l.b16 %v5974
      %v6103 = vunpack.c.l.b16 %v5975
      %v6104 = vunpack.c.l.b16 %v5976
      %v6105 = vunpack.c.l.b16 %v5977
      %v6106 = vunpack.c.l.b16 %v5978
      %v6107 = vunpack.c.l.b16 %v5979
      %v6108 = vunpack.c.l.b16 %v5980
      %v6109 = vunpack.c.l.b16 %v5981
      %v6110 = vunpack.c.l.b16 %v5982
      %v6111 = vunpack.c.l.b16 %v5983
      %v6112 = vunpack.c.l.b16 %v5984
      %v6113 = vpack.c.b16 %v6050, %v6049
      %v6114 = vpack.c.b16 %v6052, %v6051
      %v6115 = vpack.c.b16 %v6054, %v6053
      %v6116 = vpack.c.b16 %v6056, %v6055
      %v6117 = vpack.c.b16 %v6058, %v6057
      %v6118 = vpack.c.b16 %v6060, %v6059
      %v6119 = vpack.c.b16 %v6062, %v6061
      %v6120 = vpack.c.b16 %v6064, %v6063
      %v6121 = vpack.c.b16 %v6066, %v6065
      %v6122 = vpack.c.b16 %v6068, %v6067
      %v6123 = vpack.c.b16 %v6070, %v6069
      %v6124 = vpack.c.b16 %v6072, %v6071
      %v6125 = vpack.c.b16 %v6074, %v6073
      %v6126 = vpack.c.b16 %v6076, %v6075
      %v6127 = vpack.c.b16 %v6078, %v6077
      %v6128 = vpack.c.b16 %v6080, %v6079
      %v6129 = vpack.c.b16 %v6082, %v6081
      %v6130 = vpack.c.b16 %v6084, %v6083
      %v6131 = vpack.c.b16 %v6086, %v6085
      %v6132 = vpack.c.b16 %v6088, %v6087
      %v6133 = vpack.c.b16 %v6090, %v6089
      %v6134 = vpack.c.b16 %v6092, %v6091
      %v6135 = vpack.c.b16 %v6094, %v6093
      %v6136 = vpack.c.b16 %v6096, %v6095
      %v6137 = vpack.c.b16 %v6098, %v6097
      %v6138 = vpack.c.b16 %v6100, %v6099
      %v6139 = vpack.c.b16 %v6102, %v6101
      %v6140 = vpack.c.b16 %v6104, %v6103
      %v6141 = vpack.c.b16 %v6106, %v6105
      %v6142 = vpack.c.b16 %v6108, %v6107
      %v6143 = vpack.c.b16 %v6110, %v6109
      %v6144 = vpack.c.b16 %v6112, %v6111
      %6177 = vmatprep.subr.bf16.mxu0 0
      %6178 = vmatpush1.bf16.msra.mxu0 %v6113
      %6179 = vmatprep.subr.bf16.mxu0 0
      %6180 = vmatpush1.bf16.msra.mxu0 %v6114
      %6181 = vmatprep.subr.bf16.mxu0 0
      %6182 = vmatpush1.bf16.msra.mxu0 %v6115
      %6183 = vmatprep.subr.bf16.mxu0 0
      %6184 = vmatpush1.bf16.msra.mxu0 %v6116
      %6185 = vmatprep.subr.bf16.mxu0 0
      %6186 = vmatpush1.bf16.msra.mxu0 %v6117
      %6187 = vmatprep.subr.bf16.mxu0 0
      %6188 = vmatpush1.bf16.msra.mxu0 %v6118
      %6189 = vmatprep.subr.bf16.mxu0 0
      %6190 = vmatpush1.bf16.msra.mxu0 %v6119
      %6191 = vmatprep.subr.bf16.mxu0 0
      %6192 = vmatpush1.bf16.msra.mxu0 %v6120
      %6193 = vmatprep.subr.bf16.mxu0 0
      %6194 = vmatpush1.bf16.msra.mxu0 %v6121
      %6195 = vmatprep.subr.bf16.mxu0 0
      %6196 = vmatpush1.bf16.msra.mxu0 %v6122
      %6197 = vmatprep.subr.bf16.mxu0 0
      %6198 = vmatpush1.bf16.msra.mxu0 %v6123
      %6199 = vmatprep.subr.bf16.mxu0 0
      %6200 = vmatpush1.bf16.msra.mxu0 %v6124
      %6201 = vmatprep.subr.bf16.mxu0 0
      %6202 = vmatpush1.bf16.msra.mxu0 %v6125
      %6203 = vmatprep.subr.bf16.mxu0 0
      %6204 = vmatpush1.bf16.msra.mxu0 %v6126
      %6205 = vmatprep.subr.bf16.mxu0 0
      %6206 = vmatpush1.bf16.msra.mxu0 %v6127
      %6207 = vmatprep.subr.bf16.mxu0 0
      %6208 = vmatpush1.bf16.msra.mxu0 %v6128
      %6209 = vmatprep.mubr.bf16.mxu0 %v5917
      %6210 = vmatmul.mubr.bf16.gmra.mrb[0].mxu0 %v5916
      %v6211 = vpop.f32.mrb[0].mxu0
      %v6212 = vadd.f32 0.0, %v6211
      %v6213 = vpop.f32.mrb[0].mxu0
      %v6214 = vpop.f32.mrb[0].mxu0
      %v6215 = vpop.f32.mrb[0].mxu0
      %6216 = vdwg.mxu0
      %6217 = vmatprep.subr.bf16.mxu0 0
      %6218 = vmatpush1.bf16.msra.mxu0 %v6129
      %6219 = vmatprep.subr.bf16.mxu0 0
      %6220 = vmatpush1.bf16.msra.mxu0 %v6130
      %6221 = vmatprep.subr.bf16.mxu0 0
      %6222 = vmatpush1.bf16.msra.mxu0 %v6131
      %6223 = vmatprep.subr.bf16.mxu0 0
      %6224 = vmatpush1.bf16.msra.mxu0 %v6132
      %6225 = vmatprep.subr.bf16.mxu0 0
      %6226 = vmatpush1.bf16.msra.mxu0 %v6133
      %6227 = vmatprep.subr.bf16.mxu0 0
      %6228 = vmatpush1.bf16.msra.mxu0 %v6134
      %6229 = vmatprep.subr.bf16.mxu0 0
      %6230 = vmatpush1.bf16.msra.mxu0 %v6135
      %6231 = vmatprep.subr.bf16.mxu0 0
      %6232 = vmatpush1.bf16.msra.mxu0 %v6136
      %6233 = vmatprep.subr.bf16.mxu0 0
      %6234 = vmatpush1.bf16.msra.mxu0 %v6137
      %6235 = vmatprep.subr.bf16.mxu0 0
      %6236 = vmatpush1.bf16.msra.mxu0 %v6138
      %6237 = vmatprep.subr.bf16.mxu0 0
      %6238 = vmatpush1.bf16.msra.mxu0 %v6139
      %6239 = vmatprep.subr.bf16.mxu0 0
      %6240 = vmatpush1.bf16.msra.mxu0 %v6140
      %6241 = vmatprep.subr.bf16.mxu0 0
      %6242 = vmatpush1.bf16.msra.mxu0 %v6141
      %6243 = vmatprep.subr.bf16.mxu0 0
      %6244 = vmatpush1.bf16.msra.mxu0 %v6142
      %6245 = vmatprep.subr.bf16.mxu0 0
      %6246 = vmatpush1.bf16.msra.mxu0 %v6143
      %6247 = vmatprep.subr.bf16.mxu0 0
      %6248 = vmatpush1.bf16.msra.mxu0 %v6144
      %6249 = vmatprep.mubr.bf16.mxu0 %v5919
      %6250 = vmatmul.mubr.bf16.gmra.mrb[0].mxu0 %v5918
      %v6251 = vpop.f32.mrb[0].mxu0
      %v6252 = vadd.f32 %v6212, %v6251
      %v6253 = vpop.f32.mrb[0].mxu0
      %v6254 = vpop.f32.mrb[0].mxu0
      %v6255 = vpop.f32.mrb[0].mxu0
      %6256 = vdwg.mxu0
      %6257 = vrot.lane.b32.xlu0 %v5446, 64
      %v6258 = vpop.permute.xlu0 %6257
      %6260 = vrot.lane.b32.xlu0 %v5447, 96
      %v6261 = vpop.permute.xlu0 %6260
      %6263 = vrot.lane.b32.xlu0 %v5449, 32
      %v6264 = vpop.permute.xlu0 %6263
      %6266 = vrot.lane.b32.xlu0 %v5450, 64
      %v6267 = vpop.permute.xlu0 %6266
      %6269 = vrot.lane.b32.xlu0 %v5451, 96
      %v6270 = vpop.permute.xlu0 %6269
      %6272 = vrot.lane.b32.xlu0 %v5453, 32
      %v6273 = vpop.permute.xlu0 %6272
      %6275 = vrot.lane.b32.xlu0 %v5454, 64
      %v6276 = vpop.permute.xlu0 %6275
      %6278 = vrot.lane.b32.xlu0 %v5455, 96
      %v6279 = vpop.permute.xlu0 %6278
      %6281 = vrot.lane.b32.xlu0 %v5457, 32
      %v6282 = vpop.permute.xlu0 %6281
      %6284 = vrot.lane.b32.xlu0 %v5458, 64
      %v6285 = vpop.permute.xlu0 %6284
      %6287 = vrot.lane.b32.xlu0 %v5459, 96
      %v6288 = vpop.permute.xlu0 %6287
      %6290 = vrot.lane.b32.xlu0 %v5461, 32
      %v6291 = vpop.permute.xlu0 %6290
      %v6293 = vsel %vm5510, %v6258, %v6261
      %v6294 = vsel %vm1501, %v6293, %v5448
      %v6295 = vsel %vm5513, %v6294, %v6264
      %v6296 = vsel %vm5510, %v6267, %v6270
      %v6297 = vsel %vm1501, %v6296, %v5452
      %v6298 = vsel %vm5513, %v6297, %v6273
      %v6299 = vsel %vm5510, %v6276, %v6279
      %v6300 = vsel %vm1501, %v6299, %v5456
      %v6301 = vsel %vm5513, %v6300, %v6282
      %v6302 = vsel %vm5510, %v6285, %v6288
      %v6303 = vsel %vm1501, %v6302, %v5460
      %v6304 = vsel %vm5513, %v6303, %v6291
      %v6305 = vpack.c.bf16 %v6295, %v6295
      %v6306 = vpack.c.bf16 %v6298, %v6298
      %v6307 = vpack.c.bf16 %v6301, %v6301
      %v6308 = vpack.c.bf16 %v6304, %v6304
      %s6309 = scalar_lea.vmem %s10, 512
      %v6310 = vld [vmem:[%s6309] sm:$0xf]
      %v6311 = vld [vmem:[%s6309 + $0x4] sm:$0xf]
      %v6312 = vld [vmem:[%s6309 + $0x8] sm:$0xf]
      %v6313 = vld [vmem:[%s6309 + $0xc] sm:$0xf]
      %v6314 = vld [vmem:[%s6309 + $0x10] sm:$0xf]
      %v6315 = vld [vmem:[%s6309 + $0x14] sm:$0xf]
      %v6316 = vld [vmem:[%s6309 + $0x18] sm:$0xf]
      %v6317 = vld [vmem:[%s6309 + $0x1c] sm:$0xf]
      %v6318 = vld [vmem:[%s6309 + $0x20] sm:$0xf]
      %v6319 = vld [vmem:[%s6309 + $0x24] sm:$0xf]
      %v6320 = vld [vmem:[%s6309 + $0x28] sm:$0xf]
      %v6321 = vld [vmem:[%s6309 + $0x2c] sm:$0xf]
      %v6322 = vld [vmem:[%s6309 + $0x30] sm:$0xf]
      %v6323 = vld [vmem:[%s6309 + $0x34] sm:$0xf]
      %v6324 = vld [vmem:[%s6309 + $0x38] sm:$0xf]
      %v6325 = vld [vmem:[%s6309 + $0x3c] sm:$0xf]
      %v6326 = vld [vmem:[%s6309 + $0x40] sm:$0xf]
      %v6327 = vld [vmem:[%s6309 + $0x44] sm:$0xf]
      %v6328 = vld [vmem:[%s6309 + $0x48] sm:$0xf]
      %v6329 = vld [vmem:[%s6309 + $0x4c] sm:$0xf]
      %v6330 = vld [vmem:[%s6309 + $0x50] sm:$0xf]
      %v6331 = vld [vmem:[%s6309 + $0x54] sm:$0xf]
      %v6332 = vld [vmem:[%s6309 + $0x58] sm:$0xf]
      %v6333 = vld [vmem:[%s6309 + $0x5c] sm:$0xf]
      %v6334 = vld [vmem:[%s6309 + $0x60] sm:$0xf]
      %v6335 = vld [vmem:[%s6309 + $0x64] sm:$0xf]
      %v6336 = vld [vmem:[%s6309 + $0x68] sm:$0xf]
      %v6337 = vld [vmem:[%s6309 + $0x6c] sm:$0xf]
      %v6338 = vld [vmem:[%s6309 + $0x70] sm:$0xf]
      %v6339 = vld [vmem:[%s6309 + $0x74] sm:$0xf]
      %v6340 = vld [vmem:[%s6309 + $0x78] sm:$0xf]
      %v6341 = vld [vmem:[%s6309 + $0x7c] sm:$0xf]
      %v6342 = vld [vmem:[%s6309 + $0x80] sm:$0xf]
      %v6343 = vld [vmem:[%s6309 + $0x84] sm:$0xf]
      %v6344 = vld [vmem:[%s6309 + $0x88] sm:$0xf]
      %v6345 = vld [vmem:[%s6309 + $0x8c] sm:$0xf]
      %v6346 = vld [vmem:[%s6309 + $0x90] sm:$0xf]
      %v6347 = vld [vmem:[%s6309 + $0x94] sm:$0xf]
      %v6348 = vld [vmem:[%s6309 + $0x98] sm:$0xf]
      %v6349 = vld [vmem:[%s6309 + $0x9c] sm:$0xf]
      %v6350 = vld [vmem:[%s6309 + $0xa0] sm:$0xf]
      %v6351 = vld [vmem:[%s6309 + $0xa4] sm:$0xf]
      %v6352 = vld [vmem:[%s6309 + $0xa8] sm:$0xf]
      %v6353 = vld [vmem:[%s6309 + $0xac] sm:$0xf]
      %v6354 = vld [vmem:[%s6309 + $0xb0] sm:$0xf]
      %v6355 = vld [vmem:[%s6309 + $0xb4] sm:$0xf]
      %v6356 = vld [vmem:[%s6309 + $0xb8] sm:$0xf]
      %v6357 = vld [vmem:[%s6309 + $0xbc] sm:$0xf]
      %v6358 = vld [vmem:[%s6309 + $0xc0] sm:$0xf]
      %v6359 = vld [vmem:[%s6309 + $0xc4] sm:$0xf]
      %v6360 = vld [vmem:[%s6309 + $0xc8] sm:$0xf]
      %v6361 = vld [vmem:[%s6309 + $0xcc] sm:$0xf]
      %v6362 = vld [vmem:[%s6309 + $0xd0] sm:$0xf]
      %v6363 = vld [vmem:[%s6309 + $0xd4] sm:$0xf]
      %v6364 = vld [vmem:[%s6309 + $0xd8] sm:$0xf]
      %v6365 = vld [vmem:[%s6309 + $0xdc] sm:$0xf]
      %v6366 = vld [vmem:[%s6309 + $0xe0] sm:$0xf]
      %v6367 = vld [vmem:[%s6309 + $0xe4] sm:$0xf]
      %v6368 = vld [vmem:[%s6309 + $0xe8] sm:$0xf]
      %v6369 = vld [vmem:[%s6309 + $0xec] sm:$0xf]
      %v6370 = vld [vmem:[%s6309 + $0xf0] sm:$0xf]
      %v6371 = vld [vmem:[%s6309 + $0xf4] sm:$0xf]
      %v6372 = vld [vmem:[%s6309 + $0xf8] sm:$0xf]
      %v6373 = vld [vmem:[%s6309 + $0xfc] sm:$0xf]
      %v6438 = vunpack.c.l.b16 %v6310
      %v6439 = vunpack.c.l.b16 %v6311
      %v6440 = vunpack.c.l.b16 %v6312
      %v6441 = vunpack.c.l.b16 %v6313
      %v6442 = vunpack.c.l.b16 %v6314
      %v6443 = vunpack.c.l.b16 %v6315
      %v6444 = vunpack.c.l.b16 %v6316
      %v6445 = vunpack.c.l.b16 %v6317
      %v6446 = vunpack.c.l.b16 %v6318
      %v6447 = vunpack.c.l.b16 %v6319
      %v6448 = vunpack.c.l.b16 %v6320
      %v6449 = vunpack.c.l.b16 %v6321
      %v6450 = vunpack.c.l.b16 %v6322
      %v6451 = vunpack.c.l.b16 %v6323
      %v6452 = vunpack.c.l.b16 %v6324
      %v6453 = vunpack.c.l.b16 %v6325
      %v6454 = vunpack.c.l.b16 %v6326
      %v6455 = vunpack.c.l.b16 %v6327
      %v6456 = vunpack.c.l.b16 %v6328
      %v6457 = vunpack.c.l.b16 %v6329
      %v6458 = vunpack.c.l.b16 %v6330
      %v6459 = vunpack.c.l.b16 %v6331
      %v6460 = vunpack.c.l.b16 %v6332
      %v6461 = vunpack.c.l.b16 %v6333
      %v6462 = vunpack.c.l.b16 %v6334
      %v6463 = vunpack.c.l.b16 %v6335
      %v6464 = vunpack.c.l.b16 %v6336
      %v6465 = vunpack.c.l.b16 %v6337
      %v6466 = vunpack.c.l.b16 %v6338
      %v6467 = vunpack.c.l.b16 %v6339
      %v6468 = vunpack.c.l.b16 %v6340
      %v6469 = vunpack.c.l.b16 %v6341
      %v6470 = vunpack.c.l.b16 %v6342
      %v6471 = vunpack.c.l.b16 %v6343
      %v6472 = vunpack.c.l.b16 %v6344
      %v6473 = vunpack.c.l.b16 %v6345
      %v6474 = vunpack.c.l.b16 %v6346
      %v6475 = vunpack.c.l.b16 %v6347
      %v6476 = vunpack.c.l.b16 %v6348
      %v6477 = vunpack.c.l.b16 %v6349
      %v6478 = vunpack.c.l.b16 %v6350
      %v6479 = vunpack.c.l.b16 %v6351
      %v6480 = vunpack.c.l.b16 %v6352
      %v6481 = vunpack.c.l.b16 %v6353
      %v6482 = vunpack.c.l.b16 %v6354
      %v6483 = vunpack.c.l.b16 %v6355
      %v6484 = vunpack.c.l.b16 %v6356
      %v6485 = vunpack.c.l.b16 %v6357
      %v6486 = vunpack.c.l.b16 %v6358
      %v6487 = vunpack.c.l.b16 %v6359
      %v6488 = vunpack.c.l.b16 %v6360
      %v6489 = vunpack.c.l.b16 %v6361
      %v6490 = vunpack.c.l.b16 %v6362
      %v6491 = vunpack.c.l.b16 %v6363
      %v6492 = vunpack.c.l.b16 %v6364
      %v6493 = vunpack.c.l.b16 %v6365
      %v6494 = vunpack.c.l.b16 %v6366
      %v6495 = vunpack.c.l.b16 %v6367
      %v6496 = vunpack.c.l.b16 %v6368
      %v6497 = vunpack.c.l.b16 %v6369
      %v6498 = vunpack.c.l.b16 %v6370
      %v6499 = vunpack.c.l.b16 %v6371
      %v6500 = vunpack.c.l.b16 %v6372
      %v6501 = vunpack.c.l.b16 %v6373
      %v6502 = vpack.c.b16 %v6439, %v6438
      %v6503 = vpack.c.b16 %v6441, %v6440
      %v6504 = vpack.c.b16 %v6443, %v6442
      %v6505 = vpack.c.b16 %v6445, %v6444
      %v6506 = vpack.c.b16 %v6447, %v6446
      %v6507 = vpack.c.b16 %v6449, %v6448
      %v6508 = vpack.c.b16 %v6451, %v6450
      %v6509 = vpack.c.b16 %v6453, %v6452
      %v6510 = vpack.c.b16 %v6455, %v6454
      %v6511 = vpack.c.b16 %v6457, %v6456
      %v6512 = vpack.c.b16 %v6459, %v6458
      %v6513 = vpack.c.b16 %v6461, %v6460
      %v6514 = vpack.c.b16 %v6463, %v6462
      %v6515 = vpack.c.b16 %v6465, %v6464
      %v6516 = vpack.c.b16 %v6467, %v6466
      %v6517 = vpack.c.b16 %v6469, %v6468
      %v6518 = vpack.c.b16 %v6471, %v6470
      %v6519 = vpack.c.b16 %v6473, %v6472
      %v6520 = vpack.c.b16 %v6475, %v6474
      %v6521 = vpack.c.b16 %v6477, %v6476
      %v6522 = vpack.c.b16 %v6479, %v6478
      %v6523 = vpack.c.b16 %v6481, %v6480
      %v6524 = vpack.c.b16 %v6483, %v6482
      %v6525 = vpack.c.b16 %v6485, %v6484
      %v6526 = vpack.c.b16 %v6487, %v6486
      %v6527 = vpack.c.b16 %v6489, %v6488
      %v6528 = vpack.c.b16 %v6491, %v6490
      %v6529 = vpack.c.b16 %v6493, %v6492
      %v6530 = vpack.c.b16 %v6495, %v6494
      %v6531 = vpack.c.b16 %v6497, %v6496
      %v6532 = vpack.c.b16 %v6499, %v6498
      %v6533 = vpack.c.b16 %v6501, %v6500
      %6566 = vmatprep.subr.bf16.mxu0 0
      %6567 = vmatpush1.bf16.msra.mxu0 %v6502
      %6568 = vmatprep.subr.bf16.mxu0 0
      %6569 = vmatpush1.bf16.msra.mxu0 %v6503
      %6570 = vmatprep.subr.bf16.mxu0 0
      %6571 = vmatpush1.bf16.msra.mxu0 %v6504
      %6572 = vmatprep.subr.bf16.mxu0 0
      %6573 = vmatpush1.bf16.msra.mxu0 %v6505
      %6574 = vmatprep.subr.bf16.mxu0 0
      %6575 = vmatpush1.bf16.msra.mxu0 %v6506
      %6576 = vmatprep.subr.bf16.mxu0 0
      %6577 = vmatpush1.bf16.msra.mxu0 %v6507
      %6578 = vmatprep.subr.bf16.mxu0 0
      %6579 = vmatpush1.bf16.msra.mxu0 %v6508
      %6580 = vmatprep.subr.bf16.mxu0 0
      %6581 = vmatpush1.bf16.msra.mxu0 %v6509
      %6582 = vmatprep.subr.bf16.mxu0 0
      %6583 = vmatpush1.bf16.msra.mxu0 %v6510
      %6584 = vmatprep.subr.bf16.mxu0 0
      %6585 = vmatpush1.bf16.msra.mxu0 %v6511
      %6586 = vmatprep.subr.bf16.mxu0 0
      %6587 = vmatpush1.bf16.msra.mxu0 %v6512
      %6588 = vmatprep.subr.bf16.mxu0 0
      %6589 = vmatpush1.bf16.msra.mxu0 %v6513
      %6590 = vmatprep.subr.bf16.mxu0 0
      %6591 = vmatpush1.bf16.msra.mxu0 %v6514
      %6592 = vmatprep.subr.bf16.mxu0 0
      %6593 = vmatpush1.bf16.msra.mxu0 %v6515
      %6594 = vmatprep.subr.bf16.mxu0 0
      %6595 = vmatpush1.bf16.msra.mxu0 %v6516
      %6596 = vmatprep.subr.bf16.mxu0 0
      %6597 = vmatpush1.bf16.msra.mxu0 %v6517
      %6598 = vmatprep.mubr.bf16.mxu0 %v6306
      %6599 = vmatmul.mubr.bf16.gmra.mrb[0].mxu0 %v6305
      %v6600 = vpop.f32.mrb[0].mxu0
      %v6601 = vadd.f32 0.0, %v6600
      %v6602 = vpop.f32.mrb[0].mxu0
      %v6603 = vpop.f32.mrb[0].mxu0
      %v6604 = vpop.f32.mrb[0].mxu0
      %6605 = vdwg.mxu0
      %6606 = vmatprep.subr.bf16.mxu0 0
      %6607 = vmatpush1.bf16.msra.mxu0 %v6518
      %6608 = vmatprep.subr.bf16.mxu0 0
      %6609 = vmatpush1.bf16.msra.mxu0 %v6519
      %6610 = vmatprep.subr.bf16.mxu0 0
      %6611 = vmatpush1.bf16.msra.mxu0 %v6520
      %6612 = vmatprep.subr.bf16.mxu0 0
      %6613 = vmatpush1.bf16.msra.mxu0 %v6521
      %6614 = vmatprep.subr.bf16.mxu0 0
      %6615 = vmatpush1.bf16.msra.mxu0 %v6522
      %6616 = vmatprep.subr.bf16.mxu0 0
      %6617 = vmatpush1.bf16.msra.mxu0 %v6523
      %6618 = vmatprep.subr.bf16.mxu0 0
      %6619 = vmatpush1.bf16.msra.mxu0 %v6524
      %6620 = vmatprep.subr.bf16.mxu0 0
      %6621 = vmatpush1.bf16.msra.mxu0 %v6525
      %6622 = vmatprep.subr.bf16.mxu0 0
      %6623 = vmatpush1.bf16.msra.mxu0 %v6526
      %6624 = vmatprep.subr.bf16.mxu0 0
      %6625 = vmatpush1.bf16.msra.mxu0 %v6527
      %6626 = vmatprep.subr.bf16.mxu0 0
      %6627 = vmatpush1.bf16.msra.mxu0 %v6528
      %6628 = vmatprep.subr.bf16.mxu0 0
      %6629 = vmatpush1.bf16.msra.mxu0 %v6529
      %6630 = vmatprep.subr.bf16.mxu0 0
      %6631 = vmatpush1.bf16.msra.mxu0 %v6530
      %6632 = vmatprep.subr.bf16.mxu0 0
      %6633 = vmatpush1.bf16.msra.mxu0 %v6531
      %6634 = vmatprep.subr.bf16.mxu0 0
      %6635 = vmatpush1.bf16.msra.mxu0 %v6532
      %6636 = vmatprep.subr.bf16.mxu0 0
      %6637 = vmatpush1.bf16.msra.mxu0 %v6533
      %6638 = vmatprep.mubr.bf16.mxu0 %v6308
      %6639 = vmatmul.mubr.bf16.gmra.mrb[0].mxu0 %v6307
      %v6640 = vpop.f32.mrb[0].mxu0
      %v6641 = vadd.f32 %v6601, %v6640
      %v6642 = vpop.f32.mrb[0].mxu0
      %v6643 = vpop.f32.mrb[0].mxu0
      %v6644 = vpop.f32.mrb[0].mxu0
      %6645 = vdwg.mxu0
      %6646 = vrot.lane.b32.xlu0 %v5446, 32
      %v6647 = vpop.permute.xlu0 %6646
      %6649 = vrot.lane.b32.xlu0 %v5447, 64
      %v6650 = vpop.permute.xlu0 %6649
      %6652 = vrot.lane.b32.xlu0 %v5448, 96
      %v6653 = vpop.permute.xlu0 %6652
      %6655 = vrot.lane.b32.xlu0 %v5450, 32
      %v6656 = vpop.permute.xlu0 %6655
      %6658 = vrot.lane.b32.xlu0 %v5451, 64
      %v6659 = vpop.permute.xlu0 %6658
      %6661 = vrot.lane.b32.xlu0 %v5452, 96
      %v6662 = vpop.permute.xlu0 %6661
      %6664 = vrot.lane.b32.xlu0 %v5454, 32
      %v6665 = vpop.permute.xlu0 %6664
      %6667 = vrot.lane.b32.xlu0 %v5455, 64
      %v6668 = vpop.permute.xlu0 %6667
      %6670 = vrot.lane.b32.xlu0 %v5456, 96
      %v6671 = vpop.permute.xlu0 %6670
      %6673 = vrot.lane.b32.xlu0 %v5458, 32
      %v6674 = vpop.permute.xlu0 %6673
      %6676 = vrot.lane.b32.xlu0 %v5459, 64
      %v6677 = vpop.permute.xlu0 %6676
      %6679 = vrot.lane.b32.xlu0 %v5460, 96
      %v6680 = vpop.permute.xlu0 %6679
      %v6682 = vsel %vm5510, %v6647, %v6650
      %v6683 = vsel %vm1501, %v6682, %v6653
      %v6684 = vsel %vm5513, %v6683, %v5449
      %v6685 = vsel %vm5510, %v6656, %v6659
      %v6686 = vsel %vm1501, %v6685, %v6662
      %v6687 = vsel %vm5513, %v6686, %v5453
      %v6688 = vsel %vm5510, %v6665, %v6668
      %v6689 = vsel %vm1501, %v6688, %v6671
      %v6690 = vsel %vm5513, %v6689, %v5457
      %v6691 = vsel %vm5510, %v6674, %v6677
      %v6692 = vsel %vm1501, %v6691, %v6680
      %v6693 = vsel %vm5513, %v6692, %v5461
      %v6694 = vpack.c.bf16 %v6684, %v6684
      %v6695 = vpack.c.bf16 %v6687, %v6687
      %v6696 = vpack.c.bf16 %v6690, %v6690
      %v6697 = vpack.c.bf16 %v6693, %v6693
      %s6698 = scalar_lea.vmem %s10, 768
      %v6699 = vld [vmem:[%s6698] sm:$0xf]
      %v6700 = vld [vmem:[%s6698 + $0x4] sm:$0xf]
      %v6701 = vld [vmem:[%s6698 + $0x8] sm:$0xf]
      %v6702 = vld [vmem:[%s6698 + $0xc] sm:$0xf]
      %v6703 = vld [vmem:[%s6698 + $0x10] sm:$0xf]
      %v6704 = vld [vmem:[%s6698 + $0x14] sm:$0xf]
      %v6705 = vld [vmem:[%s6698 + $0x18] sm:$0xf]
      %v6706 = vld [vmem:[%s6698 + $0x1c] sm:$0xf]
      %v6707 = vld [vmem:[%s6698 + $0x20] sm:$0xf]
      %v6708 = vld [vmem:[%s6698 + $0x24] sm:$0xf]
      %v6709 = vld [vmem:[%s6698 + $0x28] sm:$0xf]
      %v6710 = vld [vmem:[%s6698 + $0x2c] sm:$0xf]
      %v6711 = vld [vmem:[%s6698 + $0x30] sm:$0xf]
      %v6712 = vld [vmem:[%s6698 + $0x34] sm:$0xf]
      %v6713 = vld [vmem:[%s6698 + $0x38] sm:$0xf]
      %v6714 = vld [vmem:[%s6698 + $0x3c] sm:$0xf]
      %v6715 = vld [vmem:[%s6698 + $0x40] sm:$0xf]
      %v6716 = vld [vmem:[%s6698 + $0x44] sm:$0xf]
      %v6717 = vld [vmem:[%s6698 + $0x48] sm:$0xf]
      %v6718 = vld [vmem:[%s6698 + $0x4c] sm:$0xf]
      %v6719 = vld [vmem:[%s6698 + $0x50] sm:$0xf]
      %v6720 = vld [vmem:[%s6698 + $0x54] sm:$0xf]
      %v6721 = vld [vmem:[%s6698 + $0x58] sm:$0xf]
      %v6722 = vld [vmem:[%s6698 + $0x5c] sm:$0xf]
      %v6723 = vld [vmem:[%s6698 + $0x60] sm:$0xf]
      %v6724 = vld [vmem:[%s6698 + $0x64] sm:$0xf]
      %v6725 = vld [vmem:[%s6698 + $0x68] sm:$0xf]
      %v6726 = vld [vmem:[%s6698 + $0x6c] sm:$0xf]
      %v6727 = vld [vmem:[%s6698 + $0x70] sm:$0xf]
      %v6728 = vld [vmem:[%s6698 + $0x74] sm:$0xf]
      %v6729 = vld [vmem:[%s6698 + $0x78] sm:$0xf]
      %v6730 = vld [vmem:[%s6698 + $0x7c] sm:$0xf]
      %v6731 = vld [vmem:[%s6698 + $0x80] sm:$0xf]
      %v6732 = vld [vmem:[%s6698 + $0x84] sm:$0xf]
      %v6733 = vld [vmem:[%s6698 + $0x88] sm:$0xf]
      %v6734 = vld [vmem:[%s6698 + $0x8c] sm:$0xf]
      %v6735 = vld [vmem:[%s6698 + $0x90] sm:$0xf]
      %v6736 = vld [vmem:[%s6698 + $0x94] sm:$0xf]
      %v6737 = vld [vmem:[%s6698 + $0x98] sm:$0xf]
      %v6738 = vld [vmem:[%s6698 + $0x9c] sm:$0xf]
      %v6739 = vld [vmem:[%s6698 + $0xa0] sm:$0xf]
      %v6740 = vld [vmem:[%s6698 + $0xa4] sm:$0xf]
      %v6741 = vld [vmem:[%s6698 + $0xa8] sm:$0xf]
      %v6742 = vld [vmem:[%s6698 + $0xac] sm:$0xf]
      %v6743 = vld [vmem:[%s6698 + $0xb0] sm:$0xf]
      %v6744 = vld [vmem:[%s6698 + $0xb4] sm:$0xf]
      %v6745 = vld [vmem:[%s6698 + $0xb8] sm:$0xf]
      %v6746 = vld [vmem:[%s6698 + $0xbc] sm:$0xf]
      %v6747 = vld [vmem:[%s6698 + $0xc0] sm:$0xf]
      %v6748 = vld [vmem:[%s6698 + $0xc4] sm:$0xf]
      %v6749 = vld [vmem:[%s6698 + $0xc8] sm:$0xf]
      %v6750 = vld [vmem:[%s6698 + $0xcc] sm:$0xf]
      %v6751 = vld [vmem:[%s6698 + $0xd0] sm:$0xf]
      %v6752 = vld [vmem:[%s6698 + $0xd4] sm:$0xf]
      %v6753 = vld [vmem:[%s6698 + $0xd8] sm:$0xf]
      %v6754 = vld [vmem:[%s6698 + $0xdc] sm:$0xf]
      %v6755 = vld [vmem:[%s6698 + $0xe0] sm:$0xf]
      %v6756 = vld [vmem:[%s6698 + $0xe4] sm:$0xf]
      %v6757 = vld [vmem:[%s6698 + $0xe8] sm:$0xf]
      %v6758 = vld [vmem:[%s6698 + $0xec] sm:$0xf]
      %v6759 = vld [vmem:[%s6698 + $0xf0] sm:$0xf]
      %v6760 = vld [vmem:[%s6698 + $0xf4] sm:$0xf]
      %v6761 = vld [vmem:[%s6698 + $0xf8] sm:$0xf]
      %v6762 = vld [vmem:[%s6698 + $0xfc] sm:$0xf]
      %v6827 = vunpack.c.l.b16 %v6699
      %v6828 = vunpack.c.l.b16 %v6700
      %v6829 = vunpack.c.l.b16 %v6701
      %v6830 = vunpack.c.l.b16 %v6702
      %v6831 = vunpack.c.l.b16 %v6703
      %v6832 = vunpack.c.l.b16 %v6704
      %v6833 = vunpack.c.l.b16 %v6705
      %v6834 = vunpack.c.l.b16 %v6706
      %v6835 = vunpack.c.l.b16 %v6707
      %v6836 = vunpack.c.l.b16 %v6708
      %v6837 = vunpack.c.l.b16 %v6709
      %v6838 = vunpack.c.l.b16 %v6710
      %v6839 = vunpack.c.l.b16 %v6711
      %v6840 = vunpack.c.l.b16 %v6712
      %v6841 = vunpack.c.l.b16 %v6713
      %v6842 = vunpack.c.l.b16 %v6714
      %v6843 = vunpack.c.l.b16 %v6715
      %v6844 = vunpack.c.l.b16 %v6716
      %v6845 = vunpack.c.l.b16 %v6717
      %v6846 = vunpack.c.l.b16 %v6718
      %v6847 = vunpack.c.l.b16 %v6719
      %v6848 = vunpack.c.l.b16 %v6720
      %v6849 = vunpack.c.l.b16 %v6721
      %v6850 = vunpack.c.l.b16 %v6722
      %v6851 = vunpack.c.l.b16 %v6723
      %v6852 = vunpack.c.l.b16 %v6724
      %v6853 = vunpack.c.l.b16 %v6725
      %v6854 = vunpack.c.l.b16 %v6726
      %v6855 = vunpack.c.l.b16 %v6727
      %v6856 = vunpack.c.l.b16 %v6728
      %v6857 = vunpack.c.l.b16 %v6729
      %v6858 = vunpack.c.l.b16 %v6730
      %v6859 = vunpack.c.l.b16 %v6731
      %v6860 = vunpack.c.l.b16 %v6732
      %v6861 = vunpack.c.l.b16 %v6733
      %v6862 = vunpack.c.l.b16 %v6734
      %v6863 = vunpack.c.l.b16 %v6735
      %v6864 = vunpack.c.l.b16 %v6736
      %v6865 = vunpack.c.l.b16 %v6737
      %v6866 = vunpack.c.l.b16 %v6738
      %v6867 = vunpack.c.l.b16 %v6739
      %v6868 = vunpack.c.l.b16 %v6740
      %v6869 = vunpack.c.l.b16 %v6741
      %v6870 = vunpack.c.l.b16 %v6742
      %v6871 = vunpack.c.l.b16 %v6743
      %v6872 = vunpack.c.l.b16 %v6744
      %v6873 = vunpack.c.l.b16 %v6745
      %v6874 = vunpack.c.l.b16 %v6746
      %v6875 = vunpack.c.l.b16 %v6747
      %v6876 = vunpack.c.l.b16 %v6748
      %v6877 = vunpack.c.l.b16 %v6749
      %v6878 = vunpack.c.l.b16 %v6750
      %v6879 = vunpack.c.l.b16 %v6751
      %v6880 = vunpack.c.l.b16 %v6752
      %v6881 = vunpack.c.l.b16 %v6753
      %v6882 = vunpack.c.l.b16 %v6754
      %v6883 = vunpack.c.l.b16 %v6755
      %v6884 = vunpack.c.l.b16 %v6756
      %v6885 = vunpack.c.l.b16 %v6757
      %v6886 = vunpack.c.l.b16 %v6758
      %v6887 = vunpack.c.l.b16 %v6759
      %v6888 = vunpack.c.l.b16 %v6760
      %v6889 = vunpack.c.l.b16 %v6761
      %v6890 = vunpack.c.l.b16 %v6762
      %v6891 = vpack.c.b16 %v6828, %v6827
      %v6892 = vpack.c.b16 %v6830, %v6829
      %v6893 = vpack.c.b16 %v6832, %v6831
      %v6894 = vpack.c.b16 %v6834, %v6833
      %v6895 = vpack.c.b16 %v6836, %v6835
      %v6896 = vpack.c.b16 %v6838, %v6837
      %v6897 = vpack.c.b16 %v6840, %v6839
      %v6898 = vpack.c.b16 %v6842, %v6841
      %v6899 = vpack.c.b16 %v6844, %v6843
      %v6900 = vpack.c.b16 %v6846, %v6845
      %v6901 = vpack.c.b16 %v6848, %v6847
      %v6902 = vpack.c.b16 %v6850, %v6849
      %v6903 = vpack.c.b16 %v6852, %v6851
      %v6904 = vpack.c.b16 %v6854, %v6853
      %v6905 = vpack.c.b16 %v6856, %v6855
      %v6906 = vpack.c.b16 %v6858, %v6857
      %v6907 = vpack.c.b16 %v6860, %v6859
      %v6908 = vpack.c.b16 %v6862, %v6861
      %v6909 = vpack.c.b16 %v6864, %v6863
      %v6910 = vpack.c.b16 %v6866, %v6865
      %v6911 = vpack.c.b16 %v6868, %v6867
      %v6912 = vpack.c.b16 %v6870, %v6869
      %v6913 = vpack.c.b16 %v6872, %v6871
      %v6914 = vpack.c.b16 %v6874, %v6873
      %v6915 = vpack.c.b16 %v6876, %v6875
      %v6916 = vpack.c.b16 %v6878, %v6877
      %v6917 = vpack.c.b16 %v6880, %v6879
      %v6918 = vpack.c.b16 %v6882, %v6881
      %v6919 = vpack.c.b16 %v6884, %v6883
      %v6920 = vpack.c.b16 %v6886, %v6885
      %v6921 = vpack.c.b16 %v6888, %v6887
      %v6922 = vpack.c.b16 %v6890, %v6889
      %6955 = vmatprep.subr.bf16.mxu0 0
      %6956 = vmatpush1.bf16.msra.mxu0 %v6891
      %6957 = vmatprep.subr.bf16.mxu0 0
      %6958 = vmatpush1.bf16.msra.mxu0 %v6892
      %6959 = vmatprep.subr.bf16.mxu0 0
      %6960 = vmatpush1.bf16.msra.mxu0 %v6893
      %6961 = vmatprep.subr.bf16.mxu0 0
      %6962 = vmatpush1.bf16.msra.mxu0 %v6894
      %6963 = vmatprep.subr.bf16.mxu0 0
      %6964 = vmatpush1.bf16.msra.mxu0 %v6895
      %6965 = vmatprep.subr.bf16.mxu0 0
      %6966 = vmatpush1.bf16.msra.mxu0 %v6896
      %6967 = vmatprep.subr.bf16.mxu0 0
      %6968 = vmatpush1.bf16.msra.mxu0 %v6897
      %6969 = vmatprep.subr.bf16.mxu0 0
      %6970 = vmatpush1.bf16.msra.mxu0 %v6898
      %6971 = vmatprep.subr.bf16.mxu0 0
      %6972 = vmatpush1.bf16.msra.mxu0 %v6899
      %6973 = vmatprep.subr.bf16.mxu0 0
      %6974 = vmatpush1.bf16.msra.mxu0 %v6900
      %6975 = vmatprep.subr.bf16.mxu0 0
      %6976 = vmatpush1.bf16.msra.mxu0 %v6901
      %6977 = vmatprep.subr.bf16.mxu0 0
      %6978 = vmatpush1.bf16.msra.mxu0 %v6902
      %6979 = vmatprep.subr.bf16.mxu0 0
      %6980 = vmatpush1.bf16.msra.mxu0 %v6903
      %6981 = vmatprep.subr.bf16.mxu0 0
      %6982 = vmatpush1.bf16.msra.mxu0 %v6904
      %6983 = vmatprep.subr.bf16.mxu0 0
      %6984 = vmatpush1.bf16.msra.mxu0 %v6905
      %6985 = vmatprep.subr.bf16.mxu0 0
      %6986 = vmatpush1.bf16.msra.mxu0 %v6906
      %6987 = vmatprep.mubr.bf16.mxu0 %v6695
      %6988 = vmatmul.mubr.bf16.gmra.mrb[0].mxu0 %v6694
      %v6989 = vpop.f32.mrb[0].mxu0
      %v6990 = vadd.f32 0.0, %v6989
      %v6991 = vpop.f32.mrb[0].mxu0
      %v6992 = vpop.f32.mrb[0].mxu0
      %v6993 = vpop.f32.mrb[0].mxu0
      %6994 = vdwg.mxu0
      %6995 = vmatprep.subr.bf16.mxu0 0
      %6996 = vmatpush1.bf16.msra.mxu0 %v6907
      %6997 = vmatprep.subr.bf16.mxu0 0
      %6998 = vmatpush1.bf16.msra.mxu0 %v6908
      %6999 = vmatprep.subr.bf16.mxu0 0
      %7000 = vmatpush1.bf16.msra.mxu0 %v6909
      %7001 = vmatprep.subr.bf16.mxu0 0
      %7002 = vmatpush1.bf16.msra.mxu0 %v6910
      %7003 = vmatprep.subr.bf16.mxu0 0
      %7004 = vmatpush1.bf16.msra.mxu0 %v6911
      %7005 = vmatprep.subr.bf16.mxu0 0
      %7006 = vmatpush1.bf16.msra.mxu0 %v6912
      %7007 = vmatprep.subr.bf16.mxu0 0
      %7008 = vmatpush1.bf16.msra.mxu0 %v6913
      %7009 = vmatprep.subr.bf16.mxu0 0
      %7010 = vmatpush1.bf16.msra.mxu0 %v6914
      %7011 = vmatprep.subr.bf16.mxu0 0
      %7012 = vmatpush1.bf16.msra.mxu0 %v6915
      %7013 = vmatprep.subr.bf16.mxu0 0
      %7014 = vmatpush1.bf16.msra.mxu0 %v6916
      %7015 = vmatprep.subr.bf16.mxu0 0
      %7016 = vmatpush1.bf16.msra.mxu0 %v6917
      %7017 = vmatprep.subr.bf16.mxu0 0
      %7018 = vmatpush1.bf16.msra.mxu0 %v6918
      %7019 = vmatprep.subr.bf16.mxu0 0
      %7020 = vmatpush1.bf16.msra.mxu0 %v6919
      %7021 = vmatprep.subr.bf16.mxu0 0
      %7022 = vmatpush1.bf16.msra.mxu0 %v6920
      %7023 = vmatprep.subr.bf16.mxu0 0
      %7024 = vmatpush1.bf16.msra.mxu0 %v6921
      %7025 = vmatprep.subr.bf16.mxu0 0
      %7026 = vmatpush1.bf16.msra.mxu0 %v6922
      %7027 = vmatprep.mubr.bf16.mxu0 %v6697
      %7028 = vmatmul.mubr.bf16.gmra.mrb[0].mxu0 %v6696
      %v7029 = vpop.f32.mrb[0].mxu0
      %v7030 = vadd.f32 %v6990, %v7029
      %v7031 = vpop.f32.mrb[0].mxu0
      %v7032 = vpop.f32.mrb[0].mxu0
      %v7033 = vpop.f32.mrb[0].mxu0
      %7034 = vdwg.mxu0
      %7036 = vrot.lane.b32.xlu0 %v6252, 32
      %v7037 = vpop.permute.xlu0 %7036
      %7040 = vrot.lane.b32.xlu0 %v6641, 64
      %v7041 = vpop.permute.xlu0 %7040
      %7044 = vrot.lane.b32.xlu0 %v7030, 96
      %v7045 = vpop.permute.xlu0 %7044
      %v7047 = vsel %vm5510, %v5859, %v7037
      %v7048 = vsel %vm1501, %v7047, %v7041
      %v7049 = vsel %vm5513, %v7048, %v7045
      %v7050 = vld [vmem:[%s11] sm:$0x1]
      %v7052 = vlaneseq
      %v7053 = vshrl.u32 %v7052, 7
      %v7054 = vsub.s32 0, %v7053
      %v7055 = vrot.slane %v7050, %v7054
      %v7057 = vadd.f32 %v7049, %v7055
      %v7058 = vmul.f32 %v7057, 0.5
      %v7059 = vmul.f32 %v7057, 0.044715
      %v7060 = vmul.f32 %v7059, %v7057
      %v7061 = vmul.f32 %v7060, %v7057
      %v7062 = vadd.f32 %v7057, %v7061
      %v7063 = vmul.f32 %v7062, 0.7978846
      %v7064 = vtanh.pop %v7063
      %v7065 = vadd.f32 %v7064, 1.0
      %v7066 = vmul.f32 %v7058, %v7065
      %v7067 = vadd.f32 %v5437, %v7066
      %v7068 = vld [vmem:[%s12] sm:$0x1]
      %v7069 = vld [vmem:[%s13] sm:$0x1]
      %vm7070 = vcmask 1045504
      %v7071 = vsel %vm7070, %v7067, 0.0
      %7072 = vadd.xlane.f32.xlu0 %v7071
      %v7073 = vpop.xlane.xlu0 %7072
      %v7074 = vrcp.pop 128.0
      %v7075 = vmul.f32 %v7073, %v7074
      %v7076 = vsub.f32 %v7067, %v7075
      %v7077 = vmul.f32 %v7076, %v7076
      %v7078 = vsel %vm7070, %v7077, 0.0
      %7079 = vadd.xlane.f32.xlu0 %v7078
      %v7080 = vpop.xlane.xlu0 %7079
      %v7081 = vmul.f32 %v7080, %v7074
      %v7082 = vadd.f32 %v7081, 1e-05
      %v7083 = vrsqrt.pop %v7082
      %v7084 = vmul.f32 %v7076, %v7083
      %v7086 = vlaneseq
      %v7087 = vshrl.u32 %v7086, 7
      %v7088 = vsub.s32 0, %v7087
      %v7089 = vrot.slane %v7068, %v7088
      %v7091 = vmul.f32 %v7084, %v7089
      %v7093 = vlaneseq
      %v7094 = vshrl.u32 %v7093, 7
      %v7095 = vsub.s32 0, %v7094
      %v7096 = vrot.slane %v7069, %v7095
      %v7098 = vadd.f32 %v7091, %v7096
      %7099 = vst [vmem:[%s465] sm:$0x3f] %v7098
      %p7100 = scmp.lt.s32.totalorder %s25, 1
      %s7101 = scalar_select %p7100, %s25, 1
      %s7102 = smul.addr %s7101, 8
      %s7103 = scalar_lea.vmem %s14, %s7102
      // Predicated region
      $region77: #{ssl_model_forward.3} parent=75 // pred_check
        %p7104 = pneg %p342
      $region78: #{ssl_model_forward.3} parent=75 // pred_check_branch
        %7106 = sbr.rel (%p7104) target = $region80
      $region79: #{ssl_model_forward.3} parent=75 // pred_region
        _
      $region80: #{ssl_model_forward.3} parent=75 // pred_fallthru
        _
    $region76: #{ssl_model_forward.3} parent=5 // pred_fallthru
      _
    %p7107 = scmp.le.s32.totalorder 2, %s20
    // Predicated region
    $region81: #{ssl_model_forward.3} parent=5 // pred_check
      %p7108 = pneg %p7107
    $region82: #{ssl_model_forward.3} parent=5 // pred_check_branch
      %7110 = sbr.rel (%p7108) target = $region84
    $region83: #{ssl_model_forward.3} parent=5 // pred_region
      %s7111 = ssub.s32 %s20, 2
      // Predicated region
      $region85: #{ssl_model_forward.3} parent=83 // pred_check
        %p7112 = pneg %p348
      $region86: #{ssl_model_forward.3} parent=83 // pred_check_branch
        %7114 = sbr.rel (%p7112) target = $region88
      $region87: #{ssl_model_forward.3} parent=83 // pred_region
        %p7115 = scmp.lt.s32.totalorder %s26, 1
        %s7116 = scalar_select %p7115, %s26, 1
        %s7117 = smul.addr %s7116, 8
        %s7118 = scalar_lea.vmem %s14, %s7117
      $region88: #{ssl_model_forward.3} parent=83 // pred_fallthru
        _
    $region84: #{ssl_model_forward.3} parent=5 // pred_fallthru
      _
  $region6: #{ssl_model_forward.3} parent=0 // loop_footer
    %s24 = sadd.s32 1, %s20
  $region7: #{ssl_model_forward.3} parent=0 // loop_footer_branch
    %19 = sbr.rel target = $region3
  $region8: #{ssl_model_forward.3} parent=0 // loop_exit
    _

</llo_original>
